<compile_context>
chip_gen: v7x
topology: tpu7x:2x2x1
jax: 0.10.0
libtpu: 0.0.40
codegen_flags: <defaults>
</compile_context>

<pallas_src>
import functools
import math

import jax
import jax.numpy as jnp
import numpy as np
from jax.experimental import pallas as pl
from jax.experimental.pallas import tpu as pltpu


# ----------------------------------------------------------------------------
# Pallas kernel: fused-weight cross attention for one (n, q-tile) grid step.
# All per-head matmuls are clean 2-D dots with K,N in {E, S_pad}.
# ----------------------------------------------------------------------------
def _mha_fused_kernel(q_ref, kvt_ref, m_ref, kvw_ref, c_ref, bconst_ref, o_ref,
                      *, num_heads, mxu_dtype):
    q = q_ref[0]                # (Tq, E)  mxu_dtype
    kvt = kvt_ref[0]            # (E, S)   mxu_dtype   (kv_pe transposed)
    c_all = c_ref[0]            # (H, S)   f32  (key-side bias; -1e30 on padding)
    Tq, E = q.shape

    acc = jnp.zeros((Tq, E), jnp.float32)
    for h in range(num_heads):
        # (Tq,E)@(E,E): q_pe @ M_h
        qm = jnp.dot(q, m_ref[h], preferred_element_type=jnp.float32)
        # (Tq,E)@(E,S): scores (scale already folded into M_h / u_h)
        s = jnp.dot(qm.astype(mxu_dtype), kvt,
                    preferred_element_type=jnp.float32)
        s = s + c_all[h][None, :]
        # Numerically stable softmax; divide -> EUP approx reciprocal.
        s = s - jnp.max(s, axis=-1, keepdims=True)
        p = jnp.exp(s)
        p = p * pl.reciprocal(jnp.sum(p, axis=-1, keepdims=True), approx=True)
        # (Tq,S)@(S,E): P_h @ (kv_pe @ W'_h); head merge is the running sum.
        acc = acc + jnp.dot(p.astype(mxu_dtype), kvw_ref[h],
                            preferred_element_type=jnp.float32)

    o_ref[0] = (acc + bconst_ref[...]).astype(o_ref.dtype)


# ----------------------------------------------------------------------------
# Wrapper
# ----------------------------------------------------------------------------
def _default_tiling(S_pad, q_block, vmem_limit_bytes):
    vmem_cap = None
    try:
        vmem_cap = int(getattr(pltpu.get_tpu_info(), "vmem_capacity_bytes"))
    except Exception:
        vmem_cap = None
    small_vmem = True if vmem_cap is None else (vmem_cap <= 64 * 1024 * 1024)
    cap = 64 * 1024 * 1024 if vmem_cap is None else vmem_cap

    if q_block is None:
        q_block = 256 if small_vmem else 512          # feed 2 TCs / amortize steps
        q_block = min(q_block, S_pad)
        while S_pad % q_block:
            q_block //= 2
    if vmem_limit_bytes is None:
        vmem_limit_bytes = min(96 * 1024 * 1024,
                               max(32 * 1024 * 1024, cap - 24 * 1024 * 1024))
    return q_block, int(vmem_limit_bytes)


def mha_across_feat_pallas(x_nchw, y_nchw, params, *, num_heads=8, mode=0,
                           with_pe=True, q_block=None,
                           mxu_dtype=jnp.bfloat16,
                           single_buffer_invariants=True,
                           vmem_limit_bytes=None):
    """Forward of MHAAcrossFeat (modes 0/1). Inputs are (N, C, H, W)."""
    N, C, Hsp, Wsp = x_nchw.shape
    E = C
    S = Hsp * Wsp
    assert E % num_heads == 0
    hd = E // num_heads

    if mode == 0:        # out, _ = mha(y, x, x)
        q_src, kv_src = y_nchw, x_nchw
    elif mode == 1:      # out, _ = mha(x, y, y)
        q_src, kv_src = x_nchw, y_nchw
    else:
        raise NotImplementedError("only mode 0 / mode 1 are implemented")

    # --- layout glue: ONE transpose each way ---------------------------------
    # NCHW -> (N, S, E); s = h*W + w, e = c  (matches permute(2,3,0,1).view).
    q_nse = jnp.transpose(q_src, (0, 2, 3, 1)).reshape(N, S, E).astype(jnp.float32)
    kv_nse = jnp.transpose(kv_src, (0, 2, 3, 1)).reshape(N, S, E).astype(jnp.float32)

    if with_pe:
        pe = params["pe"][:S].astype(jnp.float32)     # (S, E)
        q_pe = q_nse + pe[None]
        kv_pe = kv_nse + pe[None]
    else:
        q_pe, kv_pe = q_nse, kv_nse

    # --- pad S to a multiple of 128 (lane-dense score / P tiles) -------------
    S_pad = max(128, ((S + 127) // 128) * 128)
    pad = S_pad - S
    if pad:
        q_pe = jnp.pad(q_pe, ((0, 0), (0, pad), (0, 0)))
        kv_pe = jnp.pad(kv_pe, ((0, 0), (0, pad), (0, 0)))

    # --- fused weight prep (f32, one-time, wrapper-side) ---------------------
    w_in = params["in_proj_weight"].astype(jnp.float32)    # (3E, E)
    b_in = params["in_proj_bias"].astype(jnp.float32)      # (3E,)
    w_out = params["out_proj_weight"].astype(jnp.float32)  # (E, E)
    b_out = params["out_proj_bias"].astype(jnp.float32)    # (E,)

    wq = w_in[:E].T.reshape(E, num_heads, hd)              # Wq_h = wq[:, h, :]
    wk = w_in[E:2 * E].T.reshape(E, num_heads, hd)
    wv = w_in[2 * E:].T.reshape(E, num_heads, hd)
    wo = w_out.T.reshape(num_heads, hd, E)                 # Wo_h = wo[h]
    bq = b_in[:E].reshape(num_heads, hd)
    bv = b_in[2 * E:]

    scale = 1.0 / math.sqrt(hd)
    m_h = jnp.einsum('ehd,fhd->hef', wq, wk) * scale       # (H, E, E)
    wp_h = jnp.einsum('ehd,hdf->hef', wv, wo)              # (H, E, E)
    u_h = jnp.einsum('ehd,hd->he', wk, bq) * scale         # (H, E)
    b_const = (bv @ w_out.T + b_out).reshape(1, E)         # (1, E) f32

    # --- KV-side work hoisted out of the q-tile loop (plain XLA, once) -------
    kvt = jnp.swapaxes(kv_pe, 1, 2).astype(mxu_dtype)                   # (N, E, S_pad)
    kvw = jnp.einsum('nse,hef->nhsf', kv_pe, wp_h).astype(mxu_dtype)    # (N, H, S_pad, E)
    kvw = kvw.reshape(N * num_heads, S_pad, E)
    c = jnp.einsum('nse,he->nhs', kv_pe, u_h).astype(jnp.float32)       # (N, H, S_pad)
    if pad:
        key_idx = jnp.arange(S_pad, dtype=jnp.int32)
        c = jnp.where(key_idx[None, None, :] < S, c, jnp.float32(-1e30))

    q_in = q_pe.astype(mxu_dtype)                                       # (N, S_pad, E)
    m_in = m_h.astype(mxu_dtype)                                        # (H, E, E)

    # --- generation-aware tiling ---------------------------------------------
    q_block, vmem_limit_bytes = _default_tiling(S_pad, q_block, vmem_limit_bytes)
    assert S_pad % q_block == 0 and (q_block == S_pad or q_block % 8 == 0)

    inv_kwargs = {}
    if single_buffer_invariants:
        # Inputs whose block index is constant across the fast qi axis.
        inv_kwargs = dict(pipeline_mode=pl.Buffered(1))

    grid = (N, S_pad // q_block)
    in_specs = [
        pl.BlockSpec((1, q_block, E), lambda n, qi: (n, qi, 0)),              # q rows
        pl.BlockSpec((1, E, S_pad), lambda n, qi: (n, 0, 0), **inv_kwargs),   # kv^T
        pl.BlockSpec((num_heads, E, E), lambda n, qi: (0, 0, 0), **inv_kwargs),    # M_h
        pl.BlockSpec((num_heads, S_pad, E), lambda n, qi: (n, 0, 0), **inv_kwargs),  # kv@W'_h
        pl.BlockSpec((1, num_heads, S_pad), lambda n, qi: (n, 0, 0), **inv_kwargs),  # key bias
        pl.BlockSpec((1, E), lambda n, qi: (0, 0), **inv_kwargs),             # b_const
    ]
    out_spec = pl.BlockSpec((1, q_block, E), lambda n, qi: (n, qi, 0))

    kernel = functools.partial(_mha_fused_kernel, num_heads=num_heads,
                               mxu_dtype=mxu_dtype)

    out_pad = pl.pallas_call(
        kernel,
        out_shape=jax.ShapeDtypeStruct((N, S_pad, E), x_nchw.dtype),
        grid_spec=pltpu.PrefetchScalarGridSpec(
            num_scalar_prefetch=0,
            grid=grid,
            in_specs=in_specs,
            out_specs=out_spec,
        ),
        compiler_params=pltpu.CompilerParams(
            dimension_semantics=("parallel", "parallel"),
            vmem_limit_bytes=vmem_limit_bytes),
    )(q_in, kvt, m_in, kvw, c, b_const)

    out_nse = out_pad[:, :S]
    # (N, S, E) -> (N, C, H, W)  (== view(H,W,N,C).permute(2,3,0,1))
    return jnp.transpose(out_nse.reshape(N, Hsp, Wsp, C), (0, 3, 1, 2))


# ----------------------------------------------------------------------------
# Deterministic parameter construction (module shapes; random biases so the
# bias code paths are exercised — nn.MultiheadAttention zero-inits them).
# ----------------------------------------------------------------------------
def make_params(key, embed_dim, num_heads=8, max_len=10000):
    E = embed_dim
    k1, k2, k3, k4 = jax.random.split(key, 4)
    limit_in = math.sqrt(6.0 / (E + 3 * E))
    in_proj_weight = jax.random.uniform(k1, (3 * E, E), jnp.float32,
                                        -limit_in, limit_in)
    limit_out = math.sqrt(1.0 / E)
    out_proj_weight = jax.random.uniform(k2, (E, E), jnp.float32,
                                         -limit_out, limit_out)
    in_proj_bias = 0.02 * jax.random.normal(k3, (3 * E,), jnp.float32)
    out_proj_bias = 0.02 * jax.random.normal(k4, (E,), jnp.float32)

    position = jnp.arange(max_len, dtype=jnp.float32)[:, None]
    div_term = jnp.exp(jnp.arange(0, E, 2, dtype=jnp.float32)
                       * (-math.log(10000.0) / E))
    pe = jnp.zeros((max_len, E), jnp.float32)
    pe = pe.at[:, 0::2].set(jnp.sin(position * div_term))
    pe = pe.at[:, 1::2].set(jnp.cos(position * div_term))

    return {
        "in_proj_weight": in_proj_weight,
        "in_proj_bias": in_proj_bias,
        "out_proj_weight": out_proj_weight,
        "out_proj_bias": out_proj_bias,
        "pe": pe,
    }


# ----------------------------------------------------------------------------
# Pure-JAX reference (mirrors the PyTorch module forward, eval mode)
# ----------------------------------------------------------------------------
def reference_forward(x_nchw, y_nchw, params, *, num_heads=8, mode=0,
                      with_pe=True):
    N, C, Hsp, Wsp = x_nchw.shape
    E, S, hd = C, Hsp * Wsp, C // num_heads
    x = jnp.transpose(x_nchw, (2, 3, 0, 1)).reshape(S, N, E)
    y = jnp.transpose(y_nchw, (2, 3, 0, 1)).reshape(S, N, E)
    if with_pe:
        x = x + params["pe"][:S][:, None, :]
        y = y + params["pe"][:S][:, None, :]
    if mode == 0:
        query, key = y, x
    elif mode == 1:
        query, key = x, y
    else:
        raise NotImplementedError
    w_in, b_in = params["in_proj_weight"], params["in_proj_bias"]
    q = query @ w_in[:E].T + b_in[:E]
    k = key @ w_in[E:2 * E].T + b_in[E:2 * E]
    v = key @ w_in[2 * E:].T + b_in[2 * E:]

    def split(t):                                   # (S,N,E) -> (N,H,S,hd)
        return jnp.transpose(t.reshape(S, N, num_heads, hd), (1, 2, 0, 3))

    qh, kh, vh = split(q), split(k), split(v)
    s = jnp.einsum('nhsd,nhtd->nhst', qh, kh) / math.sqrt(hd)
    p = jax.nn.softmax(s, axis=-1)
    o = jnp.einsum('nhst,nhtd->nhsd', p, vh)
    o = jnp.transpose(o, (2, 0, 1, 3)).reshape(S, N, E)
    o = o @ params["out_proj_weight"].T + params["out_proj_bias"]
    return jnp.transpose(o.reshape(Hsp, Wsp, N, C), (2, 3, 0, 1))


if __name__ == "__main__":
    # Module defaults: embed_dim=128, num_heads=8; small spatial size -> S=16
    # (padded to 128 inside the wrapper, exercising the key-mask path).
    N, C, Hsp, Wsp = 2, 128, 4, 4
    num_heads = 8

    key = jax.random.PRNGKey(0)
    kx, ky, kp = jax.random.split(key, 3)
    x = jax.random.normal(kx, (N, C, Hsp, Wsp), jnp.float32)
    y = jax.random.normal(ky, (N, C, Hsp, Wsp), jnp.float32)
    params = make_params(kp, C, num_heads=num_heads, max_len=10000)

    def run(single_buffer):
        # mode 0 with auto tiling (single q tile), mode 1 with an explicit
        # multi-tile q grid to exercise the KV-invariant reuse path.
        o0 = mha_across_feat_pallas(x, y, params, num_heads=num_heads, mode=0,
                                    with_pe=True,
                                    single_buffer_invariants=single_buffer)
        o1 = mha_across_feat_pallas(x, y, params, num_heads=num_heads, mode=1,
                                    with_pe=True, q_block=64,
                                    single_buffer_invariants=single_buffer)
        return jax.block_until_ready(o0), jax.block_until_ready(o1)

    try:
        out0, out1 = run(True)
    except Exception:
        # TODO(synk): pl.Buffered(1) single-buffering of grid-invariant inputs
        # is jax-version dependent; fall back to default double buffering.
        out0, out1 = run(False)

    ref0 = reference_forward(x, y, params, num_heads=num_heads, mode=0,
                             with_pe=True)
    ref1 = reference_forward(x, y, params, num_heads=num_heads, mode=1,
                             with_pe=True)
    # bf16 MXU operands + fused weights -> tolerance looser than a pure-f32 run.
    np.testing.assert_allclose(np.asarray(out0), np.asarray(ref0),
                               rtol=5e-2, atol=5e-2)
    np.testing.assert_allclose(np.asarray(out1), np.asarray(ref1),
                               rtol=5e-2, atol=5e-2)
    assert out0.shape == (N, C, Hsp, Wsp) and out1.shape == (N, C, Hsp, Wsp)
    print("KERNEL_OK")
</pallas_src>

<mosaic_0001>
module attributes {stable_mosaic.version = 11 : i64} {
  func.func @_mha_fused_kernel(%arg0: i32, %arg1: i32, %arg2: memref<1x128x128xbf16, #tpu.memory_space<vmem>>, %arg3: memref<1x128x128xbf16, #tpu.memory_space<vmem>>, %arg4: memref<8x128x128xbf16, #tpu.memory_space<vmem>>, %arg5: memref<8x128x128xbf16, #tpu.memory_space<vmem>>, %arg6: memref<1x8x128xf32, #tpu.memory_space<vmem>>, %arg7: memref<1x128xf32, #tpu.memory_space<vmem>>, %arg8: memref<1x128x128xf32, #tpu.memory_space<vmem>>) attributes {dimension_semantics = [#tpu.dimension_semantics<parallel>, #tpu.dimension_semantics<parallel>], iteration_bounds = array<i64: 2, 1>, scalar_prefetch = 0 : i64, scratch_operands = 0 : i64, tpu.core_type = #tpu.core_type<tc>, window_params = [{transform_indices = @transform_0, window_bounds = array<i64: 1, 128, 128>}, {pipeline_mode = #tpu.pipeline_mode<synchronous>, transform_indices = @transform_1, window_bounds = array<i64: 1, 128, 128>}, {pipeline_mode = #tpu.pipeline_mode<synchronous>, transform_indices = @transform_2, window_bounds = array<i64: 8, 128, 128>}, {pipeline_mode = #tpu.pipeline_mode<synchronous>, transform_indices = @transform_3, window_bounds = array<i64: 8, 128, 128>}, {pipeline_mode = #tpu.pipeline_mode<synchronous>, transform_indices = @transform_4, window_bounds = array<i64: 1, 8, 128>}, {pipeline_mode = #tpu.pipeline_mode<synchronous>, transform_indices = @transform_5, window_bounds = array<i64: 1, 128>}, {transform_indices = @transform_6, window_bounds = array<i64: 1, 128, 128>}]} {
    %c0 = arith.constant 0 : index
    %c0_0 = arith.constant 0 : index
    %c0_1 = arith.constant 0 : index
    %0 = vector.load %arg2[%c0, %c0_0, %c0_1] : memref<1x128x128xbf16, #tpu.memory_space<vmem>>, vector<1x128x128xbf16>
    %1 = vector.shape_cast %0 : vector<1x128x128xbf16> to vector<128x128xbf16>
    %c0_2 = arith.constant 0 : index
    %c0_3 = arith.constant 0 : index
    %c0_4 = arith.constant 0 : index
    %2 = vector.load %arg3[%c0_2, %c0_3, %c0_4] : memref<1x128x128xbf16, #tpu.memory_space<vmem>>, vector<1x128x128xbf16>
    %3 = vector.shape_cast %2 : vector<1x128x128xbf16> to vector<128x128xbf16>
    %c0_5 = arith.constant 0 : index
    %c0_6 = arith.constant 0 : index
    %c0_7 = arith.constant 0 : index
    %4 = vector.load %arg6[%c0_5, %c0_6, %c0_7] : memref<1x8x128xf32, #tpu.memory_space<vmem>>, vector<1x8x128xf32>
    %5 = vector.shape_cast %4 : vector<1x8x128xf32> to vector<8x128xf32>
    %cst = arith.constant 0.000000e+00 : f32
    %6 = vector.broadcast %cst : f32 to vector<128x128xf32>
    %c0_8 = arith.constant 0 : index
    %c0_9 = arith.constant 0 : index
    %c0_10 = arith.constant 0 : index
    %7 = vector.load %arg4[%c0_8, %c0_9, %c0_10] : memref<8x128x128xbf16, #tpu.memory_space<vmem>>, vector<1x128x128xbf16>
    %8 = vector.shape_cast %7 : vector<1x128x128xbf16> to vector<128x128xbf16>
    %cst_11 = arith.constant dense<0.000000e+00> : vector<128x128xf32>
    %9 = tpu.matmul %1, %8, %cst_11 {dimension_numbers = #tpu.dot_dimension_numbers<[1], [0], [0], [1], [0, 0, 1, 1], [], []>} : vector<128x128xbf16>, vector<128x128xbf16>, vector<128x128xf32> -> vector<128x128xf32>
    %10 = arith.truncf %9 : vector<128x128xf32> to vector<128x128xbf16>
    %cst_12 = arith.constant dense<0.000000e+00> : vector<128x128xf32>
    %11 = tpu.matmul %10, %3, %cst_12 {dimension_numbers = #tpu.dot_dimension_numbers<[1], [0], [0], [1], [0, 0, 1, 1], [], []>} : vector<128x128xbf16>, vector<128x128xbf16>, vector<128x128xf32> -> vector<128x128xf32>
    %12 = vector.extract_strided_slice %5 {offsets = [0, 0], sizes = [1, 128], strides = [1, 1]} : vector<8x128xf32> to vector<1x128xf32>
    %13 = vector.shape_cast %12 : vector<1x128xf32> to vector<128xf32>
    %14 = vector.shape_cast %13 : vector<128xf32> to vector<1x128xf32>
    %15 = vector.broadcast %14 : vector<1x128xf32> to vector<128x128xf32>
    %16 = arith.addf %11, %15 : vector<128x128xf32>
    %cst_13 = arith.constant dense<0xFF800000> : vector<128xf32>
    %17 = vector.multi_reduction <maximumf>, %16, %cst_13 [1] : vector<128x128xf32> to vector<128xf32>
    %18 = vector.shape_cast %17 : vector<128xf32> to vector<128x1xf32>
    %19 = vector.broadcast %18 : vector<128x1xf32> to vector<128x128xf32>
    %20 = arith.subf %16, %19 : vector<128x128xf32>
    %21 = math.exp %20 : vector<128x128xf32>
    %cst_14 = arith.constant dense<0.000000e+00> : vector<128xf32>
    %22 = vector.multi_reduction <add>, %21, %cst_14 [1] : vector<128x128xf32> to vector<128xf32>
    %23 = vector.shape_cast %22 : vector<128xf32> to vector<128x1xf32>
    %24 = tpu.reciprocal %23 {approx = true} : vector<128x1xf32> -> vector<128x1xf32>
    %25 = vector.broadcast %24 : vector<128x1xf32> to vector<128x128xf32>
    %26 = arith.mulf %21, %25 : vector<128x128xf32>
    %27 = arith.truncf %26 : vector<128x128xf32> to vector<128x128xbf16>
    %c0_15 = arith.constant 0 : index
    %c0_16 = arith.constant 0 : index
    %c0_17 = arith.constant 0 : index
    %28 = vector.load %arg5[%c0_15, %c0_16, %c0_17] : memref<8x128x128xbf16, #tpu.memory_space<vmem>>, vector<1x128x128xbf16>
    %29 = vector.shape_cast %28 : vector<1x128x128xbf16> to vector<128x128xbf16>
    %cst_18 = arith.constant dense<0.000000e+00> : vector<128x128xf32>
    %30 = tpu.matmul %27, %29, %cst_18 {dimension_numbers = #tpu.dot_dimension_numbers<[1], [0], [0], [1], [0, 0, 1, 1], [], []>} : vector<128x128xbf16>, vector<128x128xbf16>, vector<128x128xf32> -> vector<128x128xf32>
    %31 = arith.addf %6, %30 : vector<128x128xf32>
    %c1 = arith.constant 1 : index
    %c0_19 = arith.constant 0 : index
    %c0_20 = arith.constant 0 : index
    %32 = vector.load %arg4[%c1, %c0_19, %c0_20] : memref<8x128x128xbf16, #tpu.memory_space<vmem>>, vector<1x128x128xbf16>
    %33 = vector.shape_cast %32 : vector<1x128x128xbf16> to vector<128x128xbf16>
    %cst_21 = arith.constant dense<0.000000e+00> : vector<128x128xf32>
    %34 = tpu.matmul %1, %33, %cst_21 {dimension_numbers = #tpu.dot_dimension_numbers<[1], [0], [0], [1], [0, 0, 1, 1], [], []>} : vector<128x128xbf16>, vector<128x128xbf16>, vector<128x128xf32> -> vector<128x128xf32>
    %35 = arith.truncf %34 : vector<128x128xf32> to vector<128x128xbf16>
    %cst_22 = arith.constant dense<0.000000e+00> : vector<128x128xf32>
    %36 = tpu.matmul %35, %3, %cst_22 {dimension_numbers = #tpu.dot_dimension_numbers<[1], [0], [0], [1], [0, 0, 1, 1], [], []>} : vector<128x128xbf16>, vector<128x128xbf16>, vector<128x128xf32> -> vector<128x128xf32>
    %37 = vector.extract_strided_slice %5 {offsets = [1, 0], sizes = [1, 128], strides = [1, 1]} : vector<8x128xf32> to vector<1x128xf32>
    %38 = vector.shape_cast %37 : vector<1x128xf32> to vector<128xf32>
    %39 = vector.shape_cast %38 : vector<128xf32> to vector<1x128xf32>
    %40 = vector.broadcast %39 : vector<1x128xf32> to vector<128x128xf32>
    %41 = arith.addf %36, %40 : vector<128x128xf32>
    %cst_23 = arith.constant dense<0xFF800000> : vector<128xf32>
    %42 = vector.multi_reduction <maximumf>, %41, %cst_23 [1] : vector<128x128xf32> to vector<128xf32>
    %43 = vector.shape_cast %42 : vector<128xf32> to vector<128x1xf32>
    %44 = vector.broadcast %43 : vector<128x1xf32> to vector<128x128xf32>
    %45 = arith.subf %41, %44 : vector<128x128xf32>
    %46 = math.exp %45 : vector<128x128xf32>
    %cst_24 = arith.constant dense<0.000000e+00> : vector<128xf32>
    %47 = vector.multi_reduction <add>, %46, %cst_24 [1] : vector<128x128xf32> to vector<128xf32>
    %48 = vector.shape_cast %47 : vector<128xf32> to vector<128x1xf32>
    %49 = tpu.reciprocal %48 {approx = true} : vector<128x1xf32> -> vector<128x1xf32>
    %50 = vector.broadcast %49 : vector<128x1xf32> to vector<128x128xf32>
    %51 = arith.mulf %46, %50 : vector<128x128xf32>
    %52 = arith.truncf %51 : vector<128x128xf32> to vector<128x128xbf16>
    %c1_25 = arith.constant 1 : index
    %c0_26 = arith.constant 0 : index
    %c0_27 = arith.constant 0 : index
    %53 = vector.load %arg5[%c1_25, %c0_26, %c0_27] : memref<8x128x128xbf16, #tpu.memory_space<vmem>>, vector<1x128x128xbf16>
    %54 = vector.shape_cast %53 : vector<1x128x128xbf16> to vector<128x128xbf16>
    %cst_28 = arith.constant dense<0.000000e+00> : vector<128x128xf32>
    %55 = tpu.matmul %52, %54, %cst_28 {dimension_numbers = #tpu.dot_dimension_numbers<[1], [0], [0], [1], [0, 0, 1, 1], [], []>} : vector<128x128xbf16>, vector<128x128xbf16>, vector<128x128xf32> -> vector<128x128xf32>
    %56 = arith.addf %31, %55 : vector<128x128xf32>
    %c2 = arith.constant 2 : index
    %c0_29 = arith.constant 0 : index
    %c0_30 = arith.constant 0 : index
    %57 = vector.load %arg4[%c2, %c0_29, %c0_30] : memref<8x128x128xbf16, #tpu.memory_space<vmem>>, vector<1x128x128xbf16>
    %58 = vector.shape_cast %57 : vector<1x128x128xbf16> to vector<128x128xbf16>
    %cst_31 = arith.constant dense<0.000000e+00> : vector<128x128xf32>
    %59 = tpu.matmul %1, %58, %cst_31 {dimension_numbers = #tpu.dot_dimension_numbers<[1], [0], [0], [1], [0, 0, 1, 1], [], []>} : vector<128x128xbf16>, vector<128x128xbf16>, vector<128x128xf32> -> vector<128x128xf32>
    %60 = arith.truncf %59 : vector<128x128xf32> to vector<128x128xbf16>
    %cst_32 = arith.constant dense<0.000000e+00> : vector<128x128xf32>
    %61 = tpu.matmul %60, %3, %cst_32 {dimension_numbers = #tpu.dot_dimension_numbers<[1], [0], [0], [1], [0, 0, 1, 1], [], []>} : vector<128x128xbf16>, vector<128x128xbf16>, vector<128x128xf32> -> vector<128x128xf32>
    %62 = vector.extract_strided_slice %5 {offsets = [2, 0], sizes = [1, 128], strides = [1, 1]} : vector<8x128xf32> to vector<1x128xf32>
    %63 = vector.shape_cast %62 : vector<1x128xf32> to vector<128xf32>
    %64 = vector.shape_cast %63 : vector<128xf32> to vector<1x128xf32>
    %65 = vector.broadcast %64 : vector<1x128xf32> to vector<128x128xf32>
    %66 = arith.addf %61, %65 : vector<128x128xf32>
    %cst_33 = arith.constant dense<0xFF800000> : vector<128xf32>
    %67 = vector.multi_reduction <maximumf>, %66, %cst_33 [1] : vector<128x128xf32> to vector<128xf32>
    %68 = vector.shape_cast %67 : vector<128xf32> to vector<128x1xf32>
    %69 = vector.broadcast %68 : vector<128x1xf32> to vector<128x128xf32>
    %70 = arith.subf %66, %69 : vector<128x128xf32>
    %71 = math.exp %70 : vector<128x128xf32>
    %cst_34 = arith.constant dense<0.000000e+00> : vector<128xf32>
    %72 = vector.multi_reduction <add>, %71, %cst_34 [1] : vector<128x128xf32> to vector<128xf32>
    %73 = vector.shape_cast %72 : vector<128xf32> to vector<128x1xf32>
    %74 = tpu.reciprocal %73 {approx = true} : vector<128x1xf32> -> vector<128x1xf32>
    %75 = vector.broadcast %74 : vector<128x1xf32> to vector<128x128xf32>
    %76 = arith.mulf %71, %75 : vector<128x128xf32>
    %77 = arith.truncf %76 : vector<128x128xf32> to vector<128x128xbf16>
    %c2_35 = arith.constant 2 : index
    %c0_36 = arith.constant 0 : index
    %c0_37 = arith.constant 0 : index
    %78 = vector.load %arg5[%c2_35, %c0_36, %c0_37] : memref<8x128x128xbf16, #tpu.memory_space<vmem>>, vector<1x128x128xbf16>
    %79 = vector.shape_cast %78 : vector<1x128x128xbf16> to vector<128x128xbf16>
    %cst_38 = arith.constant dense<0.000000e+00> : vector<128x128xf32>
    %80 = tpu.matmul %77, %79, %cst_38 {dimension_numbers = #tpu.dot_dimension_numbers<[1], [0], [0], [1], [0, 0, 1, 1], [], []>} : vector<128x128xbf16>, vector<128x128xbf16>, vector<128x128xf32> -> vector<128x128xf32>
    %81 = arith.addf %56, %80 : vector<128x128xf32>
    %c3 = arith.constant 3 : index
    %c0_39 = arith.constant 0 : index
    %c0_40 = arith.constant 0 : index
    %82 = vector.load %arg4[%c3, %c0_39, %c0_40] : memref<8x128x128xbf16, #tpu.memory_space<vmem>>, vector<1x128x128xbf16>
    %83 = vector.shape_cast %82 : vector<1x128x128xbf16> to vector<128x128xbf16>
    %cst_41 = arith.constant dense<0.000000e+00> : vector<128x128xf32>
    %84 = tpu.matmul %1, %83, %cst_41 {dimension_numbers = #tpu.dot_dimension_numbers<[1], [0], [0], [1], [0, 0, 1, 1], [], []>} : vector<128x128xbf16>, vector<128x128xbf16>, vector<128x128xf32> -> vector<128x128xf32>
    %85 = arith.truncf %84 : vector<128x128xf32> to vector<128x128xbf16>
    %cst_42 = arith.constant dense<0.000000e+00> : vector<128x128xf32>
    %86 = tpu.matmul %85, %3, %cst_42 {dimension_numbers = #tpu.dot_dimension_numbers<[1], [0], [0], [1], [0, 0, 1, 1], [], []>} : vector<128x128xbf16>, vector<128x128xbf16>, vector<128x128xf32> -> vector<128x128xf32>
    %87 = vector.extract_strided_slice %5 {offsets = [3, 0], sizes = [1, 128], strides = [1, 1]} : vector<8x128xf32> to vector<1x128xf32>
    %88 = vector.shape_cast %87 : vector<1x128xf32> to vector<128xf32>
    %89 = vector.shape_cast %88 : vector<128xf32> to vector<1x128xf32>
    %90 = vector.broadcast %89 : vector<1x128xf32> to vector<128x128xf32>
    %91 = arith.addf %86, %90 : vector<128x128xf32>
    %cst_43 = arith.constant dense<0xFF800000> : vector<128xf32>
    %92 = vector.multi_reduction <maximumf>, %91, %cst_43 [1] : vector<128x128xf32> to vector<128xf32>
    %93 = vector.shape_cast %92 : vector<128xf32> to vector<128x1xf32>
    %94 = vector.broadcast %93 : vector<128x1xf32> to vector<128x128xf32>
    %95 = arith.subf %91, %94 : vector<128x128xf32>
    %96 = math.exp %95 : vector<128x128xf32>
    %cst_44 = arith.constant dense<0.000000e+00> : vector<128xf32>
    %97 = vector.multi_reduction <add>, %96, %cst_44 [1] : vector<128x128xf32> to vector<128xf32>
    %98 = vector.shape_cast %97 : vector<128xf32> to vector<128x1xf32>
    %99 = tpu.reciprocal %98 {approx = true} : vector<128x1xf32> -> vector<128x1xf32>
    %100 = vector.broadcast %99 : vector<128x1xf32> to vector<128x128xf32>
    %101 = arith.mulf %96, %100 : vector<128x128xf32>
    %102 = arith.truncf %101 : vector<128x128xf32> to vector<128x128xbf16>
    %c3_45 = arith.constant 3 : index
    %c0_46 = arith.constant 0 : index
    %c0_47 = arith.constant 0 : index
    %103 = vector.load %arg5[%c3_45, %c0_46, %c0_47] : memref<8x128x128xbf16, #tpu.memory_space<vmem>>, vector<1x128x128xbf16>
    %104 = vector.shape_cast %103 : vector<1x128x128xbf16> to vector<128x128xbf16>
    %cst_48 = arith.constant dense<0.000000e+00> : vector<128x128xf32>
    %105 = tpu.matmul %102, %104, %cst_48 {dimension_numbers = #tpu.dot_dimension_numbers<[1], [0], [0], [1], [0, 0, 1, 1], [], []>} : vector<128x128xbf16>, vector<128x128xbf16>, vector<128x128xf32> -> vector<128x128xf32>
    %106 = arith.addf %81, %105 : vector<128x128xf32>
    %c4 = arith.constant 4 : index
    %c0_49 = arith.constant 0 : index
    %c0_50 = arith.constant 0 : index
    %107 = vector.load %arg4[%c4, %c0_49, %c0_50] : memref<8x128x128xbf16, #tpu.memory_space<vmem>>, vector<1x128x128xbf16>
    %108 = vector.shape_cast %107 : vector<1x128x128xbf16> to vector<128x128xbf16>
    %cst_51 = arith.constant dense<0.000000e+00> : vector<128x128xf32>
    %109 = tpu.matmul %1, %108, %cst_51 {dimension_numbers = #tpu.dot_dimension_numbers<[1], [0], [0], [1], [0, 0, 1, 1], [], []>} : vector<128x128xbf16>, vector<128x128xbf16>, vector<128x128xf32> -> vector<128x128xf32>
    %110 = arith.truncf %109 : vector<128x128xf32> to vector<128x128xbf16>
    %cst_52 = arith.constant dense<0.000000e+00> : vector<128x128xf32>
    %111 = tpu.matmul %110, %3, %cst_52 {dimension_numbers = #tpu.dot_dimension_numbers<[1], [0], [0], [1], [0, 0, 1, 1], [], []>} : vector<128x128xbf16>, vector<128x128xbf16>, vector<128x128xf32> -> vector<128x128xf32>
    %112 = vector.extract_strided_slice %5 {offsets = [4, 0], sizes = [1, 128], strides = [1, 1]} : vector<8x128xf32> to vector<1x128xf32>
    %113 = vector.shape_cast %112 : vector<1x128xf32> to vector<128xf32>
    %114 = vector.shape_cast %113 : vector<128xf32> to vector<1x128xf32>
    %115 = vector.broadcast %114 : vector<1x128xf32> to vector<128x128xf32>
    %116 = arith.addf %111, %115 : vector<128x128xf32>
    %cst_53 = arith.constant dense<0xFF800000> : vector<128xf32>
    %117 = vector.multi_reduction <maximumf>, %116, %cst_53 [1] : vector<128x128xf32> to vector<128xf32>
    %118 = vector.shape_cast %117 : vector<128xf32> to vector<128x1xf32>
    %119 = vector.broadcast %118 : vector<128x1xf32> to vector<128x128xf32>
    %120 = arith.subf %116, %119 : vector<128x128xf32>
    %121 = math.exp %120 : vector<128x128xf32>
    %cst_54 = arith.constant dense<0.000000e+00> : vector<128xf32>
    %122 = vector.multi_reduction <add>, %121, %cst_54 [1] : vector<128x128xf32> to vector<128xf32>
    %123 = vector.shape_cast %122 : vector<128xf32> to vector<128x1xf32>
    %124 = tpu.reciprocal %123 {approx = true} : vector<128x1xf32> -> vector<128x1xf32>
    %125 = vector.broadcast %124 : vector<128x1xf32> to vector<128x128xf32>
    %126 = arith.mulf %121, %125 : vector<128x128xf32>
    %127 = arith.truncf %126 : vector<128x128xf32> to vector<128x128xbf16>
    %c4_55 = arith.constant 4 : index
    %c0_56 = arith.constant 0 : index
    %c0_57 = arith.constant 0 : index
    %128 = vector.load %arg5[%c4_55, %c0_56, %c0_57] : memref<8x128x128xbf16, #tpu.memory_space<vmem>>, vector<1x128x128xbf16>
    %129 = vector.shape_cast %128 : vector<1x128x128xbf16> to vector<128x128xbf16>
    %cst_58 = arith.constant dense<0.000000e+00> : vector<128x128xf32>
    %130 = tpu.matmul %127, %129, %cst_58 {dimension_numbers = #tpu.dot_dimension_numbers<[1], [0], [0], [1], [0, 0, 1, 1], [], []>} : vector<128x128xbf16>, vector<128x128xbf16>, vector<128x128xf32> -> vector<128x128xf32>
    %131 = arith.addf %106, %130 : vector<128x128xf32>
    %c5 = arith.constant 5 : index
    %c0_59 = arith.constant 0 : index
    %c0_60 = arith.constant 0 : index
    %132 = vector.load %arg4[%c5, %c0_59, %c0_60] : memref<8x128x128xbf16, #tpu.memory_space<vmem>>, vector<1x128x128xbf16>
    %133 = vector.shape_cast %132 : vector<1x128x128xbf16> to vector<128x128xbf16>
    %cst_61 = arith.constant dense<0.000000e+00> : vector<128x128xf32>
    %134 = tpu.matmul %1, %133, %cst_61 {dimension_numbers = #tpu.dot_dimension_numbers<[1], [0], [0], [1], [0, 0, 1, 1], [], []>} : vector<128x128xbf16>, vector<128x128xbf16>, vector<128x128xf32> -> vector<128x128xf32>
    %135 = arith.truncf %134 : vector<128x128xf32> to vector<128x128xbf16>
    %cst_62 = arith.constant dense<0.000000e+00> : vector<128x128xf32>
    %136 = tpu.matmul %135, %3, %cst_62 {dimension_numbers = #tpu.dot_dimension_numbers<[1], [0], [0], [1], [0, 0, 1, 1], [], []>} : vector<128x128xbf16>, vector<128x128xbf16>, vector<128x128xf32> -> vector<128x128xf32>
    %137 = vector.extract_strided_slice %5 {offsets = [5, 0], sizes = [1, 128], strides = [1, 1]} : vector<8x128xf32> to vector<1x128xf32>
    %138 = vector.shape_cast %137 : vector<1x128xf32> to vector<128xf32>
    %139 = vector.shape_cast %138 : vector<128xf32> to vector<1x128xf32>
    %140 = vector.broadcast %139 : vector<1x128xf32> to vector<128x128xf32>
    %141 = arith.addf %136, %140 : vector<128x128xf32>
    %cst_63 = arith.constant dense<0xFF800000> : vector<128xf32>
    %142 = vector.multi_reduction <maximumf>, %141, %cst_63 [1] : vector<128x128xf32> to vector<128xf32>
    %143 = vector.shape_cast %142 : vector<128xf32> to vector<128x1xf32>
    %144 = vector.broadcast %143 : vector<128x1xf32> to vector<128x128xf32>
    %145 = arith.subf %141, %144 : vector<128x128xf32>
    %146 = math.exp %145 : vector<128x128xf32>
    %cst_64 = arith.constant dense<0.000000e+00> : vector<128xf32>
    %147 = vector.multi_reduction <add>, %146, %cst_64 [1] : vector<128x128xf32> to vector<128xf32>
    %148 = vector.shape_cast %147 : vector<128xf32> to vector<128x1xf32>
    %149 = tpu.reciprocal %148 {approx = true} : vector<128x1xf32> -> vector<128x1xf32>
    %150 = vector.broadcast %149 : vector<128x1xf32> to vector<128x128xf32>
    %151 = arith.mulf %146, %150 : vector<128x128xf32>
    %152 = arith.truncf %151 : vector<128x128xf32> to vector<128x128xbf16>
    %c5_65 = arith.constant 5 : index
    %c0_66 = arith.constant 0 : index
    %c0_67 = arith.constant 0 : index
    %153 = vector.load %arg5[%c5_65, %c0_66, %c0_67] : memref<8x128x128xbf16, #tpu.memory_space<vmem>>, vector<1x128x128xbf16>
    %154 = vector.shape_cast %153 : vector<1x128x128xbf16> to vector<128x128xbf16>
    %cst_68 = arith.constant dense<0.000000e+00> : vector<128x128xf32>
    %155 = tpu.matmul %152, %154, %cst_68 {dimension_numbers = #tpu.dot_dimension_numbers<[1], [0], [0], [1], [0, 0, 1, 1], [], []>} : vector<128x128xbf16>, vector<128x128xbf16>, vector<128x128xf32> -> vector<128x128xf32>
    %156 = arith.addf %131, %155 : vector<128x128xf32>
    %c6 = arith.constant 6 : index
    %c0_69 = arith.constant 0 : index
    %c0_70 = arith.constant 0 : index
    %157 = vector.load %arg4[%c6, %c0_69, %c0_70] : memref<8x128x128xbf16, #tpu.memory_space<vmem>>, vector<1x128x128xbf16>
    %158 = vector.shape_cast %157 : vector<1x128x128xbf16> to vector<128x128xbf16>
    %cst_71 = arith.constant dense<0.000000e+00> : vector<128x128xf32>
    %159 = tpu.matmul %1, %158, %cst_71 {dimension_numbers = #tpu.dot_dimension_numbers<[1], [0], [0], [1], [0, 0, 1, 1], [], []>} : vector<128x128xbf16>, vector<128x128xbf16>, vector<128x128xf32> -> vector<128x128xf32>
    %160 = arith.truncf %159 : vector<128x128xf32> to vector<128x128xbf16>
    %cst_72 = arith.constant dense<0.000000e+00> : vector<128x128xf32>
    %161 = tpu.matmul %160, %3, %cst_72 {dimension_numbers = #tpu.dot_dimension_numbers<[1], [0], [0], [1], [0, 0, 1, 1], [], []>} : vector<128x128xbf16>, vector<128x128xbf16>, vector<128x128xf32> -> vector<128x128xf32>
    %162 = vector.extract_strided_slice %5 {offsets = [6, 0], sizes = [1, 128], strides = [1, 1]} : vector<8x128xf32> to vector<1x128xf32>
    %163 = vector.shape_cast %162 : vector<1x128xf32> to vector<128xf32>
    %164 = vector.shape_cast %163 : vector<128xf32> to vector<1x128xf32>
    %165 = vector.broadcast %164 : vector<1x128xf32> to vector<128x128xf32>
    %166 = arith.addf %161, %165 : vector<128x128xf32>
    %cst_73 = arith.constant dense<0xFF800000> : vector<128xf32>
    %167 = vector.multi_reduction <maximumf>, %166, %cst_73 [1] : vector<128x128xf32> to vector<128xf32>
    %168 = vector.shape_cast %167 : vector<128xf32> to vector<128x1xf32>
    %169 = vector.broadcast %168 : vector<128x1xf32> to vector<128x128xf32>
    %170 = arith.subf %166, %169 : vector<128x128xf32>
    %171 = math.exp %170 : vector<128x128xf32>
    %cst_74 = arith.constant dense<0.000000e+00> : vector<128xf32>
    %172 = vector.multi_reduction <add>, %171, %cst_74 [1] : vector<128x128xf32> to vector<128xf32>
    %173 = vector.shape_cast %172 : vector<128xf32> to vector<128x1xf32>
    %174 = tpu.reciprocal %173 {approx = true} : vector<128x1xf32> -> vector<128x1xf32>
    %175 = vector.broadcast %174 : vector<128x1xf32> to vector<128x128xf32>
    %176 = arith.mulf %171, %175 : vector<128x128xf32>
    %177 = arith.truncf %176 : vector<128x128xf32> to vector<128x128xbf16>
    %c6_75 = arith.constant 6 : index
    %c0_76 = arith.constant 0 : index
    %c0_77 = arith.constant 0 : index
    %178 = vector.load %arg5[%c6_75, %c0_76, %c0_77] : memref<8x128x128xbf16, #tpu.memory_space<vmem>>, vector<1x128x128xbf16>
    %179 = vector.shape_cast %178 : vector<1x128x128xbf16> to vector<128x128xbf16>
    %cst_78 = arith.constant dense<0.000000e+00> : vector<128x128xf32>
    %180 = tpu.matmul %177, %179, %cst_78 {dimension_numbers = #tpu.dot_dimension_numbers<[1], [0], [0], [1], [0, 0, 1, 1], [], []>} : vector<128x128xbf16>, vector<128x128xbf16>, vector<128x128xf32> -> vector<128x128xf32>
    %181 = arith.addf %156, %180 : vector<128x128xf32>
    %c7 = arith.constant 7 : index
    %c0_79 = arith.constant 0 : index
    %c0_80 = arith.constant 0 : index
    %182 = vector.load %arg4[%c7, %c0_79, %c0_80] : memref<8x128x128xbf16, #tpu.memory_space<vmem>>, vector<1x128x128xbf16>
    %183 = vector.shape_cast %182 : vector<1x128x128xbf16> to vector<128x128xbf16>
    %cst_81 = arith.constant dense<0.000000e+00> : vector<128x128xf32>
    %184 = tpu.matmul %1, %183, %cst_81 {dimension_numbers = #tpu.dot_dimension_numbers<[1], [0], [0], [1], [0, 0, 1, 1], [], []>} : vector<128x128xbf16>, vector<128x128xbf16>, vector<128x128xf32> -> vector<128x128xf32>
    %185 = arith.truncf %184 : vector<128x128xf32> to vector<128x128xbf16>
    %cst_82 = arith.constant dense<0.000000e+00> : vector<128x128xf32>
    %186 = tpu.matmul %185, %3, %cst_82 {dimension_numbers = #tpu.dot_dimension_numbers<[1], [0], [0], [1], [0, 0, 1, 1], [], []>} : vector<128x128xbf16>, vector<128x128xbf16>, vector<128x128xf32> -> vector<128x128xf32>
    %187 = vector.extract_strided_slice %5 {offsets = [7, 0], sizes = [1, 128], strides = [1, 1]} : vector<8x128xf32> to vector<1x128xf32>
    %188 = vector.shape_cast %187 : vector<1x128xf32> to vector<128xf32>
    %189 = vector.shape_cast %188 : vector<128xf32> to vector<1x128xf32>
    %190 = vector.broadcast %189 : vector<1x128xf32> to vector<128x128xf32>
    %191 = arith.addf %186, %190 : vector<128x128xf32>
    %cst_83 = arith.constant dense<0xFF800000> : vector<128xf32>
    %192 = vector.multi_reduction <maximumf>, %191, %cst_83 [1] : vector<128x128xf32> to vector<128xf32>
    %193 = vector.shape_cast %192 : vector<128xf32> to vector<128x1xf32>
    %194 = vector.broadcast %193 : vector<128x1xf32> to vector<128x128xf32>
    %195 = arith.subf %191, %194 : vector<128x128xf32>
    %196 = math.exp %195 : vector<128x128xf32>
    %cst_84 = arith.constant dense<0.000000e+00> : vector<128xf32>
    %197 = vector.multi_reduction <add>, %196, %cst_84 [1] : vector<128x128xf32> to vector<128xf32>
    %198 = vector.shape_cast %197 : vector<128xf32> to vector<128x1xf32>
    %199 = tpu.reciprocal %198 {approx = true} : vector<128x1xf32> -> vector<128x1xf32>
    %200 = vector.broadcast %199 : vector<128x1xf32> to vector<128x128xf32>
    %201 = arith.mulf %196, %200 : vector<128x128xf32>
    %202 = arith.truncf %201 : vector<128x128xf32> to vector<128x128xbf16>
    %c7_85 = arith.constant 7 : index
    %c0_86 = arith.constant 0 : index
    %c0_87 = arith.constant 0 : index
    %203 = vector.load %arg5[%c7_85, %c0_86, %c0_87] : memref<8x128x128xbf16, #tpu.memory_space<vmem>>, vector<1x128x128xbf16>
    %204 = vector.shape_cast %203 : vector<1x128x128xbf16> to vector<128x128xbf16>
    %cst_88 = arith.constant dense<0.000000e+00> : vector<128x128xf32>
    %205 = tpu.matmul %202, %204, %cst_88 {dimension_numbers = #tpu.dot_dimension_numbers<[1], [0], [0], [1], [0, 0, 1, 1], [], []>} : vector<128x128xbf16>, vector<128x128xbf16>, vector<128x128xf32> -> vector<128x128xf32>
    %206 = arith.addf %181, %205 : vector<128x128xf32>
    %c0_89 = arith.constant 0 : index
    %c0_90 = arith.constant 0 : index
    %207 = vector.load %arg7[%c0_89, %c0_90] : memref<1x128xf32, #tpu.memory_space<vmem>>, vector<1x128xf32>
    %208 = vector.broadcast %207 : vector<1x128xf32> to vector<128x128xf32>
    %209 = arith.addf %206, %208 : vector<128x128xf32>
    %c0_91 = arith.constant 0 : index
    %c0_92 = arith.constant 0 : index
    %c0_93 = arith.constant 0 : index
    %210 = vector.load %arg8[%c0_91, %c0_92, %c0_93] : memref<1x128x128xf32, #tpu.memory_space<vmem>>, vector<1x128x128xf32>
    %211 = vector.shape_cast %210 : vector<1x128x128xf32> to vector<128x128xf32>
    %212 = vector.shape_cast %209 : vector<128x128xf32> to vector<1x128x128xf32>
    tpu.vector_store %arg8[%c0_91, %c0_92, %c0_93], %212 {strides = array<i32>} : memref<1x128x128xf32, #tpu.memory_space<vmem>>, vector<1x128x128xf32>,
    return
  }
  func.func @transform_0(%arg0: i32, %arg1: i32) -> (i32, i32, i32) {
    %c0_i32 = arith.constant 0 : i32
    %c0_i32_0 = arith.constant 0 : i32
    return %arg0, %arg1, %c0_i32 : i32, i32, i32
  }
  func.func @transform_1(%arg0: i32, %arg1: i32) -> (i32, i32, i32) {
    %c0_i32 = arith.constant 0 : i32
    %c0_i32_0 = arith.constant 0 : i32
    %c0_i32_1 = arith.constant 0 : i32
    return %arg0, %c0_i32, %c0_i32_0 : i32, i32, i32
  }
  func.func @transform_2(%arg0: i32, %arg1: i32) -> (i32, i32, i32) {
    %c0_i32 = arith.constant 0 : i32
    %c0_i32_0 = arith.constant 0 : i32
    %c0_i32_1 = arith.constant 0 : i32
    %c0_i32_2 = arith.constant 0 : i32
    return %c0_i32, %c0_i32_0, %c0_i32_1 : i32, i32, i32
  }
  func.func @transform_3(%arg0: i32, %arg1: i32) -> (i32, i32, i32) {
    %c0_i32 = arith.constant 0 : i32
    %c0_i32_0 = arith.constant 0 : i32
    %c0_i32_1 = arith.constant 0 : i32
    return %arg0, %c0_i32, %c0_i32_0 : i32, i32, i32
  }
  func.func @transform_4(%arg0: i32, %arg1: i32) -> (i32, i32, i32) {
    %c0_i32 = arith.constant 0 : i32
    %c0_i32_0 = arith.constant 0 : i32
    %c0_i32_1 = arith.constant 0 : i32
    return %arg0, %c0_i32, %c0_i32_0 : i32, i32, i32
  }
  func.func @transform_5(%arg0: i32, %arg1: i32) -> (i32, i32) {
    %c0_i32 = arith.constant 0 : i32
    %c0_i32_0 = arith.constant 0 : i32
    %c0_i32_1 = arith.constant 0 : i32
    return %c0_i32, %c0_i32_0 : i32, i32
  }
  func.func @transform_6(%arg0: i32, %arg1: i32) -> (i32, i32, i32) {
    %c0_i32 = arith.constant 0 : i32
    %c0_i32_0 = arith.constant 0 : i32
    return %arg0, %arg1, %c0_i32 : i32, i32, i32
  }
}

module attributes {stable_mosaic.version = 11 : i64} {
  func.func @_mha_fused_kernel(%arg0: i32, %arg1: i32, %arg2: memref<1x128x128xbf16, #tpu.memory_space<vmem>>, %arg3: memref<1x128x128xbf16, #tpu.memory_space<vmem>>, %arg4: memref<8x128x128xbf16, #tpu.memory_space<vmem>>, %arg5: memref<8x128x128xbf16, #tpu.memory_space<vmem>>, %arg6: memref<1x8x128xf32, #tpu.memory_space<vmem>>, %arg7: memref<1x128xf32, #tpu.memory_space<vmem>>, %arg8: memref<1x128x128xf32, #tpu.memory_space<vmem>>) attributes {dimension_semantics = [#tpu.dimension_semantics<parallel>, #tpu.dimension_semantics<parallel>], iteration_bounds = array<i64: 2, 1>, scalar_prefetch = 0 : i64, scratch_operands = 0 : i64, tpu.core_type = #tpu.core_type<tc>, window_params = [{transform_indices = @transform_0, window_bounds = array<i64: 1, 128, 128>}, {transform_indices = @transform_1, window_bounds = array<i64: 1, 128, 128>}, {pipeline_mode = #tpu.pipeline_mode<synchronous>, transform_indices = @transform_2, window_bounds = array<i64: 8, 128, 128>}, {transform_indices = @transform_3, window_bounds = array<i64: 8, 128, 128>}, {transform_indices = @transform_4, window_bounds = array<i64: 1, 8, 128>}, {pipeline_mode = #tpu.pipeline_mode<synchronous>, transform_indices = @transform_5, window_bounds = array<i64: 1, 128>}, {transform_indices = @transform_6, window_bounds = array<i64: 1, 128, 128>}]} {
    %c0 = arith.constant 0 : index
    %c0_0 = arith.constant 0 : index
    %c0_1 = arith.constant 0 : index
    %0 = vector.load %arg2[%c0, %c0_0, %c0_1] : memref<1x128x128xbf16, #tpu.memory_space<vmem>>, vector<1x128x128xbf16>
    %1 = vector.shape_cast %0 : vector<1x128x128xbf16> to vector<128x128xbf16>
    %c0_2 = arith.constant 0 : index
    %c0_3 = arith.constant 0 : index
    %c0_4 = arith.constant 0 : index
    %2 = vector.load %arg3[%c0_2, %c0_3, %c0_4] : memref<1x128x128xbf16, #tpu.memory_space<vmem>>, vector<1x128x128xbf16>
    %3 = vector.shape_cast %2 : vector<1x128x128xbf16> to vector<128x128xbf16>
    %c0_5 = arith.constant 0 : index
    %c0_6 = arith.constant 0 : index
    %c0_7 = arith.constant 0 : index
    %4 = vector.load %arg6[%c0_5, %c0_6, %c0_7] : memref<1x8x128xf32, #tpu.memory_space<vmem>>, vector<1x8x128xf32>
    %5 = vector.shape_cast %4 : vector<1x8x128xf32> to vector<8x128xf32>
    %cst = arith.constant 0.000000e+00 : f32
    %6 = vector.broadcast %cst : f32 to vector<128x128xf32>
    %c0_8 = arith.constant 0 : index
    %c0_9 = arith.constant 0 : index
    %c0_10 = arith.constant 0 : index
    %7 = vector.load %arg4[%c0_8, %c0_9, %c0_10] : memref<8x128x128xbf16, #tpu.memory_space<vmem>>, vector<1x128x128xbf16>
    %8 = vector.shape_cast %7 : vector<1x128x128xbf16> to vector<128x128xbf16>
    %cst_11 = arith.constant dense<0.000000e+00> : vector<128x128xf32>
    %9 = tpu.matmul %1, %8, %cst_11 {dimension_numbers = #tpu.dot_dimension_numbers<[1], [0], [0], [1], [0, 0, 1, 1], [], []>} : vector<128x128xbf16>, vector<128x128xbf16>, vector<128x128xf32> -> vector<128x128xf32>
    %10 = arith.truncf %9 : vector<128x128xf32> to vector<128x128xbf16>
    %cst_12 = arith.constant dense<0.000000e+00> : vector<128x128xf32>
    %11 = tpu.matmul %10, %3, %cst_12 {dimension_numbers = #tpu.dot_dimension_numbers<[1], [0], [0], [1], [0, 0, 1, 1], [], []>} : vector<128x128xbf16>, vector<128x128xbf16>, vector<128x128xf32> -> vector<128x128xf32>
    %12 = vector.extract_strided_slice %5 {offsets = [0, 0], sizes = [1, 128], strides = [1, 1]} : vector<8x128xf32> to vector<1x128xf32>
    %13 = vector.shape_cast %12 : vector<1x128xf32> to vector<128xf32>
    %14 = vector.shape_cast %13 : vector<128xf32> to vector<1x128xf32>
    %15 = vector.broadcast %14 : vector<1x128xf32> to vector<128x128xf32>
    %16 = arith.addf %11, %15 : vector<128x128xf32>
    %cst_13 = arith.constant dense<0xFF800000> : vector<128xf32>
    %17 = vector.multi_reduction <maximumf>, %16, %cst_13 [1] : vector<128x128xf32> to vector<128xf32>
    %18 = vector.shape_cast %17 : vector<128xf32> to vector<128x1xf32>
    %19 = vector.broadcast %18 : vector<128x1xf32> to vector<128x128xf32>
    %20 = arith.subf %16, %19 : vector<128x128xf32>
    %21 = math.exp %20 : vector<128x128xf32>
    %cst_14 = arith.constant dense<0.000000e+00> : vector<128xf32>
    %22 = vector.multi_reduction <add>, %21, %cst_14 [1] : vector<128x128xf32> to vector<128xf32>
    %23 = vector.shape_cast %22 : vector<128xf32> to vector<128x1xf32>
    %24 = tpu.reciprocal %23 {approx = true} : vector<128x1xf32> -> vector<128x1xf32>
    %25 = vector.broadcast %24 : vector<128x1xf32> to vector<128x128xf32>
    %26 = arith.mulf %21, %25 : vector<128x128xf32>
    %27 = arith.truncf %26 : vector<128x128xf32> to vector<128x128xbf16>
    %c0_15 = arith.constant 0 : index
    %c0_16 = arith.constant 0 : index
    %c0_17 = arith.constant 0 : index
    %28 = vector.load %arg5[%c0_15, %c0_16, %c0_17] : memref<8x128x128xbf16, #tpu.memory_space<vmem>>, vector<1x128x128xbf16>
    %29 = vector.shape_cast %28 : vector<1x128x128xbf16> to vector<128x128xbf16>
    %cst_18 = arith.constant dense<0.000000e+00> : vector<128x128xf32>
    %30 = tpu.matmul %27, %29, %cst_18 {dimension_numbers = #tpu.dot_dimension_numbers<[1], [0], [0], [1], [0, 0, 1, 1], [], []>} : vector<128x128xbf16>, vector<128x128xbf16>, vector<128x128xf32> -> vector<128x128xf32>
    %31 = arith.addf %6, %30 : vector<128x128xf32>
    %c1 = arith.constant 1 : index
    %c0_19 = arith.constant 0 : index
    %c0_20 = arith.constant 0 : index
    %32 = vector.load %arg4[%c1, %c0_19, %c0_20] : memref<8x128x128xbf16, #tpu.memory_space<vmem>>, vector<1x128x128xbf16>
    %33 = vector.shape_cast %32 : vector<1x128x128xbf16> to vector<128x128xbf16>
    %cst_21 = arith.constant dense<0.000000e+00> : vector<128x128xf32>
    %34 = tpu.matmul %1, %33, %cst_21 {dimension_numbers = #tpu.dot_dimension_numbers<[1], [0], [0], [1], [0, 0, 1, 1], [], []>} : vector<128x128xbf16>, vector<128x128xbf16>, vector<128x128xf32> -> vector<128x128xf32>
    %35 = arith.truncf %34 : vector<128x128xf32> to vector<128x128xbf16>
    %cst_22 = arith.constant dense<0.000000e+00> : vector<128x128xf32>
    %36 = tpu.matmul %35, %3, %cst_22 {dimension_numbers = #tpu.dot_dimension_numbers<[1], [0], [0], [1], [0, 0, 1, 1], [], []>} : vector<128x128xbf16>, vector<128x128xbf16>, vector<128x128xf32> -> vector<128x128xf32>
    %37 = vector.extract_strided_slice %5 {offsets = [1, 0], sizes = [1, 128], strides = [1, 1]} : vector<8x128xf32> to vector<1x128xf32>
    %38 = vector.shape_cast %37 : vector<1x128xf32> to vector<128xf32>
    %39 = vector.shape_cast %38 : vector<128xf32> to vector<1x128xf32>
    %40 = vector.broadcast %39 : vector<1x128xf32> to vector<128x128xf32>
    %41 = arith.addf %36, %40 : vector<128x128xf32>
    %cst_23 = arith.constant dense<0xFF800000> : vector<128xf32>
    %42 = vector.multi_reduction <maximumf>, %41, %cst_23 [1] : vector<128x128xf32> to vector<128xf32>
    %43 = vector.shape_cast %42 : vector<128xf32> to vector<128x1xf32>
    %44 = vector.broadcast %43 : vector<128x1xf32> to vector<128x128xf32>
    %45 = arith.subf %41, %44 : vector<128x128xf32>
    %46 = math.exp %45 : vector<128x128xf32>
    %cst_24 = arith.constant dense<0.000000e+00> : vector<128xf32>
    %47 = vector.multi_reduction <add>, %46, %cst_24 [1] : vector<128x128xf32> to vector<128xf32>
    %48 = vector.shape_cast %47 : vector<128xf32> to vector<128x1xf32>
    %49 = tpu.reciprocal %48 {approx = true} : vector<128x1xf32> -> vector<128x1xf32>
    %50 = vector.broadcast %49 : vector<128x1xf32> to vector<128x128xf32>
    %51 = arith.mulf %46, %50 : vector<128x128xf32>
    %52 = arith.truncf %51 : vector<128x128xf32> to vector<128x128xbf16>
    %c1_25 = arith.constant 1 : index
    %c0_26 = arith.constant 0 : index
    %c0_27 = arith.constant 0 : index
    %53 = vector.load %arg5[%c1_25, %c0_26, %c0_27] : memref<8x128x128xbf16, #tpu.memory_space<vmem>>, vector<1x128x128xbf16>
    %54 = vector.shape_cast %53 : vector<1x128x128xbf16> to vector<128x128xbf16>
    %cst_28 = arith.constant dense<0.000000e+00> : vector<128x128xf32>
    %55 = tpu.matmul %52, %54, %cst_28 {dimension_numbers = #tpu.dot_dimension_numbers<[1], [0], [0], [1], [0, 0, 1, 1], [], []>} : vector<128x128xbf16>, vector<128x128xbf16>, vector<128x128xf32> -> vector<128x128xf32>
    %56 = arith.addf %31, %55 : vector<128x128xf32>
    %c2 = arith.constant 2 : index
    %c0_29 = arith.constant 0 : index
    %c0_30 = arith.constant 0 : index
    %57 = vector.load %arg4[%c2, %c0_29, %c0_30] : memref<8x128x128xbf16, #tpu.memory_space<vmem>>, vector<1x128x128xbf16>
    %58 = vector.shape_cast %57 : vector<1x128x128xbf16> to vector<128x128xbf16>
    %cst_31 = arith.constant dense<0.000000e+00> : vector<128x128xf32>
    %59 = tpu.matmul %1, %58, %cst_31 {dimension_numbers = #tpu.dot_dimension_numbers<[1], [0], [0], [1], [0, 0, 1, 1], [], []>} : vector<128x128xbf16>, vector<128x128xbf16>, vector<128x128xf32> -> vector<128x128xf32>
    %60 = arith.truncf %59 : vector<128x128xf32> to vector<128x128xbf16>
    %cst_32 = arith.constant dense<0.000000e+00> : vector<128x128xf32>
    %61 = tpu.matmul %60, %3, %cst_32 {dimension_numbers = #tpu.dot_dimension_numbers<[1], [0], [0], [1], [0, 0, 1, 1], [], []>} : vector<128x128xbf16>, vector<128x128xbf16>, vector<128x128xf32> -> vector<128x128xf32>
    %62 = vector.extract_strided_slice %5 {offsets = [2, 0], sizes = [1, 128], strides = [1, 1]} : vector<8x128xf32> to vector<1x128xf32>
    %63 = vector.shape_cast %62 : vector<1x128xf32> to vector<128xf32>
    %64 = vector.shape_cast %63 : vector<128xf32> to vector<1x128xf32>
    %65 = vector.broadcast %64 : vector<1x128xf32> to vector<128x128xf32>
    %66 = arith.addf %61, %65 : vector<128x128xf32>
    %cst_33 = arith.constant dense<0xFF800000> : vector<128xf32>
    %67 = vector.multi_reduction <maximumf>, %66, %cst_33 [1] : vector<128x128xf32> to vector<128xf32>
    %68 = vector.shape_cast %67 : vector<128xf32> to vector<128x1xf32>
    %69 = vector.broadcast %68 : vector<128x1xf32> to vector<128x128xf32>
    %70 = arith.subf %66, %69 : vector<128x128xf32>
    %71 = math.exp %70 : vector<128x128xf32>
    %cst_34 = arith.constant dense<0.000000e+00> : vector<128xf32>
    %72 = vector.multi_reduction <add>, %71, %cst_34 [1] : vector<128x128xf32> to vector<128xf32>
    %73 = vector.shape_cast %72 : vector<128xf32> to vector<128x1xf32>
    %74 = tpu.reciprocal %73 {approx = true} : vector<128x1xf32> -> vector<128x1xf32>
    %75 = vector.broadcast %74 : vector<128x1xf32> to vector<128x128xf32>
    %76 = arith.mulf %71, %75 : vector<128x128xf32>
    %77 = arith.truncf %76 : vector<128x128xf32> to vector<128x128xbf16>
    %c2_35 = arith.constant 2 : index
    %c0_36 = arith.constant 0 : index
    %c0_37 = arith.constant 0 : index
    %78 = vector.load %arg5[%c2_35, %c0_36, %c0_37] : memref<8x128x128xbf16, #tpu.memory_space<vmem>>, vector<1x128x128xbf16>
    %79 = vector.shape_cast %78 : vector<1x128x128xbf16> to vector<128x128xbf16>
    %cst_38 = arith.constant dense<0.000000e+00> : vector<128x128xf32>
    %80 = tpu.matmul %77, %79, %cst_38 {dimension_numbers = #tpu.dot_dimension_numbers<[1], [0], [0], [1], [0, 0, 1, 1], [], []>} : vector<128x128xbf16>, vector<128x128xbf16>, vector<128x128xf32> -> vector<128x128xf32>
    %81 = arith.addf %56, %80 : vector<128x128xf32>
    %c3 = arith.constant 3 : index
    %c0_39 = arith.constant 0 : index
    %c0_40 = arith.constant 0 : index
    %82 = vector.load %arg4[%c3, %c0_39, %c0_40] : memref<8x128x128xbf16, #tpu.memory_space<vmem>>, vector<1x128x128xbf16>
    %83 = vector.shape_cast %82 : vector<1x128x128xbf16> to vector<128x128xbf16>
    %cst_41 = arith.constant dense<0.000000e+00> : vector<128x128xf32>
    %84 = tpu.matmul %1, %83, %cst_41 {dimension_numbers = #tpu.dot_dimension_numbers<[1], [0], [0], [1], [0, 0, 1, 1], [], []>} : vector<128x128xbf16>, vector<128x128xbf16>, vector<128x128xf32> -> vector<128x128xf32>
    %85 = arith.truncf %84 : vector<128x128xf32> to vector<128x128xbf16>
    %cst_42 = arith.constant dense<0.000000e+00> : vector<128x128xf32>
    %86 = tpu.matmul %85, %3, %cst_42 {dimension_numbers = #tpu.dot_dimension_numbers<[1], [0], [0], [1], [0, 0, 1, 1], [], []>} : vector<128x128xbf16>, vector<128x128xbf16>, vector<128x128xf32> -> vector<128x128xf32>
    %87 = vector.extract_strided_slice %5 {offsets = [3, 0], sizes = [1, 128], strides = [1, 1]} : vector<8x128xf32> to vector<1x128xf32>
    %88 = vector.shape_cast %87 : vector<1x128xf32> to vector<128xf32>
    %89 = vector.shape_cast %88 : vector<128xf32> to vector<1x128xf32>
    %90 = vector.broadcast %89 : vector<1x128xf32> to vector<128x128xf32>
    %91 = arith.addf %86, %90 : vector<128x128xf32>
    %cst_43 = arith.constant dense<0xFF800000> : vector<128xf32>
    %92 = vector.multi_reduction <maximumf>, %91, %cst_43 [1] : vector<128x128xf32> to vector<128xf32>
    %93 = vector.shape_cast %92 : vector<128xf32> to vector<128x1xf32>
    %94 = vector.broadcast %93 : vector<128x1xf32> to vector<128x128xf32>
    %95 = arith.subf %91, %94 : vector<128x128xf32>
    %96 = math.exp %95 : vector<128x128xf32>
    %cst_44 = arith.constant dense<0.000000e+00> : vector<128xf32>
    %97 = vector.multi_reduction <add>, %96, %cst_44 [1] : vector<128x128xf32> to vector<128xf32>
    %98 = vector.shape_cast %97 : vector<128xf32> to vector<128x1xf32>
    %99 = tpu.reciprocal %98 {approx = true} : vector<128x1xf32> -> vector<128x1xf32>
    %100 = vector.broadcast %99 : vector<128x1xf32> to vector<128x128xf32>
    %101 = arith.mulf %96, %100 : vector<128x128xf32>
    %102 = arith.truncf %101 : vector<128x128xf32> to vector<128x128xbf16>
    %c3_45 = arith.constant 3 : index
    %c0_46 = arith.constant 0 : index
    %c0_47 = arith.constant 0 : index
    %103 = vector.load %arg5[%c3_45, %c0_46, %c0_47] : memref<8x128x128xbf16, #tpu.memory_space<vmem>>, vector<1x128x128xbf16>
    %104 = vector.shape_cast %103 : vector<1x128x128xbf16> to vector<128x128xbf16>
    %cst_48 = arith.constant dense<0.000000e+00> : vector<128x128xf32>
    %105 = tpu.matmul %102, %104, %cst_48 {dimension_numbers = #tpu.dot_dimension_numbers<[1], [0], [0], [1], [0, 0, 1, 1], [], []>} : vector<128x128xbf16>, vector<128x128xbf16>, vector<128x128xf32> -> vector<128x128xf32>
    %106 = arith.addf %81, %105 : vector<128x128xf32>
    %c4 = arith.constant 4 : index
    %c0_49 = arith.constant 0 : index
    %c0_50 = arith.constant 0 : index
    %107 = vector.load %arg4[%c4, %c0_49, %c0_50] : memref<8x128x128xbf16, #tpu.memory_space<vmem>>, vector<1x128x128xbf16>
    %108 = vector.shape_cast %107 : vector<1x128x128xbf16> to vector<128x128xbf16>
    %cst_51 = arith.constant dense<0.000000e+00> : vector<128x128xf32>
    %109 = tpu.matmul %1, %108, %cst_51 {dimension_numbers = #tpu.dot_dimension_numbers<[1], [0], [0], [1], [0, 0, 1, 1], [], []>} : vector<128x128xbf16>, vector<128x128xbf16>, vector<128x128xf32> -> vector<128x128xf32>
    %110 = arith.truncf %109 : vector<128x128xf32> to vector<128x128xbf16>
    %cst_52 = arith.constant dense<0.000000e+00> : vector<128x128xf32>
    %111 = tpu.matmul %110, %3, %cst_52 {dimension_numbers = #tpu.dot_dimension_numbers<[1], [0], [0], [1], [0, 0, 1, 1], [], []>} : vector<128x128xbf16>, vector<128x128xbf16>, vector<128x128xf32> -> vector<128x128xf32>
    %112 = vector.extract_strided_slice %5 {offsets = [4, 0], sizes = [1, 128], strides = [1, 1]} : vector<8x128xf32> to vector<1x128xf32>
    %113 = vector.shape_cast %112 : vector<1x128xf32> to vector<128xf32>
    %114 = vector.shape_cast %113 : vector<128xf32> to vector<1x128xf32>
    %115 = vector.broadcast %114 : vector<1x128xf32> to vector<128x128xf32>
    %116 = arith.addf %111, %115 : vector<128x128xf32>
    %cst_53 = arith.constant dense<0xFF800000> : vector<128xf32>
    %117 = vector.multi_reduction <maximumf>, %116, %cst_53 [1] : vector<128x128xf32> to vector<128xf32>
    %118 = vector.shape_cast %117 : vector<128xf32> to vector<128x1xf32>
    %119 = vector.broadcast %118 : vector<128x1xf32> to vector<128x128xf32>
    %120 = arith.subf %116, %119 : vector<128x128xf32>
    %121 = math.exp %120 : vector<128x128xf32>
    %cst_54 = arith.constant dense<0.000000e+00> : vector<128xf32>
    %122 = vector.multi_reduction <add>, %121, %cst_54 [1] : vector<128x128xf32> to vector<128xf32>
    %123 = vector.shape_cast %122 : vector<128xf32> to vector<128x1xf32>
    %124 = tpu.reciprocal %123 {approx = true} : vector<128x1xf32> -> vector<128x1xf32>
    %125 = vector.broadcast %124 : vector<128x1xf32> to vector<128x128xf32>
    %126 = arith.mulf %121, %125 : vector<128x128xf32>
    %127 = arith.truncf %126 : vector<128x128xf32> to vector<128x128xbf16>
    %c4_55 = arith.constant 4 : index
    %c0_56 = arith.constant 0 : index
    %c0_57 = arith.constant 0 : index
    %128 = vector.load %arg5[%c4_55, %c0_56, %c0_57] : memref<8x128x128xbf16, #tpu.memory_space<vmem>>, vector<1x128x128xbf16>
    %129 = vector.shape_cast %128 : vector<1x128x128xbf16> to vector<128x128xbf16>
    %cst_58 = arith.constant dense<0.000000e+00> : vector<128x128xf32>
    %130 = tpu.matmul %127, %129, %cst_58 {dimension_numbers = #tpu.dot_dimension_numbers<[1], [0], [0], [1], [0, 0, 1, 1], [], []>} : vector<128x128xbf16>, vector<128x128xbf16>, vector<128x128xf32> -> vector<128x128xf32>
    %131 = arith.addf %106, %130 : vector<128x128xf32>
    %c5 = arith.constant 5 : index
    %c0_59 = arith.constant 0 : index
    %c0_60 = arith.constant 0 : index
    %132 = vector.load %arg4[%c5, %c0_59, %c0_60] : memref<8x128x128xbf16, #tpu.memory_space<vmem>>, vector<1x128x128xbf16>
    %133 = vector.shape_cast %132 : vector<1x128x128xbf16> to vector<128x128xbf16>
    %cst_61 = arith.constant dense<0.000000e+00> : vector<128x128xf32>
    %134 = tpu.matmul %1, %133, %cst_61 {dimension_numbers = #tpu.dot_dimension_numbers<[1], [0], [0], [1], [0, 0, 1, 1], [], []>} : vector<128x128xbf16>, vector<128x128xbf16>, vector<128x128xf32> -> vector<128x128xf32>
    %135 = arith.truncf %134 : vector<128x128xf32> to vector<128x128xbf16>
    %cst_62 = arith.constant dense<0.000000e+00> : vector<128x128xf32>
    %136 = tpu.matmul %135, %3, %cst_62 {dimension_numbers = #tpu.dot_dimension_numbers<[1], [0], [0], [1], [0, 0, 1, 1], [], []>} : vector<128x128xbf16>, vector<128x128xbf16>, vector<128x128xf32> -> vector<128x128xf32>
    %137 = vector.extract_strided_slice %5 {offsets = [5, 0], sizes = [1, 128], strides = [1, 1]} : vector<8x128xf32> to vector<1x128xf32>
    %138 = vector.shape_cast %137 : vector<1x128xf32> to vector<128xf32>
    %139 = vector.shape_cast %138 : vector<128xf32> to vector<1x128xf32>
    %140 = vector.broadcast %139 : vector<1x128xf32> to vector<128x128xf32>
    %141 = arith.addf %136, %140 : vector<128x128xf32>
    %cst_63 = arith.constant dense<0xFF800000> : vector<128xf32>
    %142 = vector.multi_reduction <maximumf>, %141, %cst_63 [1] : vector<128x128xf32> to vector<128xf32>
    %143 = vector.shape_cast %142 : vector<128xf32> to vector<128x1xf32>
    %144 = vector.broadcast %143 : vector<128x1xf32> to vector<128x128xf32>
    %145 = arith.subf %141, %144 : vector<128x128xf32>
    %146 = math.exp %145 : vector<128x128xf32>
    %cst_64 = arith.constant dense<0.000000e+00> : vector<128xf32>
    %147 = vector.multi_reduction <add>, %146, %cst_64 [1] : vector<128x128xf32> to vector<128xf32>
    %148 = vector.shape_cast %147 : vector<128xf32> to vector<128x1xf32>
    %149 = tpu.reciprocal %148 {approx = true} : vector<128x1xf32> -> vector<128x1xf32>
    %150 = vector.broadcast %149 : vector<128x1xf32> to vector<128x128xf32>
    %151 = arith.mulf %146, %150 : vector<128x128xf32>
    %152 = arith.truncf %151 : vector<128x128xf32> to vector<128x128xbf16>
    %c5_65 = arith.constant 5 : index
    %c0_66 = arith.constant 0 : index
    %c0_67 = arith.constant 0 : index
    %153 = vector.load %arg5[%c5_65, %c0_66, %c0_67] : memref<8x128x128xbf16, #tpu.memory_space<vmem>>, vector<1x128x128xbf16>
    %154 = vector.shape_cast %153 : vector<1x128x128xbf16> to vector<128x128xbf16>
    %cst_68 = arith.constant dense<0.000000e+00> : vector<128x128xf32>
    %155 = tpu.matmul %152, %154, %cst_68 {dimension_numbers = #tpu.dot_dimension_numbers<[1], [0], [0], [1], [0, 0, 1, 1], [], []>} : vector<128x128xbf16>, vector<128x128xbf16>, vector<128x128xf32> -> vector<128x128xf32>
    %156 = arith.addf %131, %155 : vector<128x128xf32>
    %c6 = arith.constant 6 : index
    %c0_69 = arith.constant 0 : index
    %c0_70 = arith.constant 0 : index
    %157 = vector.load %arg4[%c6, %c0_69, %c0_70] : memref<8x128x128xbf16, #tpu.memory_space<vmem>>, vector<1x128x128xbf16>
    %158 = vector.shape_cast %157 : vector<1x128x128xbf16> to vector<128x128xbf16>
    %cst_71 = arith.constant dense<0.000000e+00> : vector<128x128xf32>
    %159 = tpu.matmul %1, %158, %cst_71 {dimension_numbers = #tpu.dot_dimension_numbers<[1], [0], [0], [1], [0, 0, 1, 1], [], []>} : vector<128x128xbf16>, vector<128x128xbf16>, vector<128x128xf32> -> vector<128x128xf32>
    %160 = arith.truncf %159 : vector<128x128xf32> to vector<128x128xbf16>
    %cst_72 = arith.constant dense<0.000000e+00> : vector<128x128xf32>
    %161 = tpu.matmul %160, %3, %cst_72 {dimension_numbers = #tpu.dot_dimension_numbers<[1], [0], [0], [1], [0, 0, 1, 1], [], []>} : vector<128x128xbf16>, vector<128x128xbf16>, vector<128x128xf32> -> vector<128x128xf32>
    %162 = vector.extract_strided_slice %5 {offsets = [6, 0], sizes = [1, 128], strides = [1, 1]} : vector<8x128xf32> to vector<1x128xf32>
    %163 = vector.shape_cast %162 : vector<1x128xf32> to vector<128xf32>
    %164 = vector.shape_cast %163 : vector<128xf32> to vector<1x128xf32>
    %165 = vector.broadcast %164 : vector<1x128xf32> to vector<128x128xf32>
    %166 = arith.addf %161, %165 : vector<128x128xf32>
    %cst_73 = arith.constant dense<0xFF800000> : vector<128xf32>
    %167 = vector.multi_reduction <maximumf>, %166, %cst_73 [1] : vector<128x128xf32> to vector<128xf32>
    %168 = vector.shape_cast %167 : vector<128xf32> to vector<128x1xf32>
    %169 = vector.broadcast %168 : vector<128x1xf32> to vector<128x128xf32>
    %170 = arith.subf %166, %169 : vector<128x128xf32>
    %171 = math.exp %170 : vector<128x128xf32>
    %cst_74 = arith.constant dense<0.000000e+00> : vector<128xf32>
    %172 = vector.multi_reduction <add>, %171, %cst_74 [1] : vector<128x128xf32> to vector<128xf32>
    %173 = vector.shape_cast %172 : vector<128xf32> to vector<128x1xf32>
    %174 = tpu.reciprocal %173 {approx = true} : vector<128x1xf32> -> vector<128x1xf32>
    %175 = vector.broadcast %174 : vector<128x1xf32> to vector<128x128xf32>
    %176 = arith.mulf %171, %175 : vector<128x128xf32>
    %177 = arith.truncf %176 : vector<128x128xf32> to vector<128x128xbf16>
    %c6_75 = arith.constant 6 : index
    %c0_76 = arith.constant 0 : index
    %c0_77 = arith.constant 0 : index
    %178 = vector.load %arg5[%c6_75, %c0_76, %c0_77] : memref<8x128x128xbf16, #tpu.memory_space<vmem>>, vector<1x128x128xbf16>
    %179 = vector.shape_cast %178 : vector<1x128x128xbf16> to vector<128x128xbf16>
    %cst_78 = arith.constant dense<0.000000e+00> : vector<128x128xf32>
    %180 = tpu.matmul %177, %179, %cst_78 {dimension_numbers = #tpu.dot_dimension_numbers<[1], [0], [0], [1], [0, 0, 1, 1], [], []>} : vector<128x128xbf16>, vector<128x128xbf16>, vector<128x128xf32> -> vector<128x128xf32>
    %181 = arith.addf %156, %180 : vector<128x128xf32>
    %c7 = arith.constant 7 : index
    %c0_79 = arith.constant 0 : index
    %c0_80 = arith.constant 0 : index
    %182 = vector.load %arg4[%c7, %c0_79, %c0_80] : memref<8x128x128xbf16, #tpu.memory_space<vmem>>, vector<1x128x128xbf16>
    %183 = vector.shape_cast %182 : vector<1x128x128xbf16> to vector<128x128xbf16>
    %cst_81 = arith.constant dense<0.000000e+00> : vector<128x128xf32>
    %184 = tpu.matmul %1, %183, %cst_81 {dimension_numbers = #tpu.dot_dimension_numbers<[1], [0], [0], [1], [0, 0, 1, 1], [], []>} : vector<128x128xbf16>, vector<128x128xbf16>, vector<128x128xf32> -> vector<128x128xf32>
    %185 = arith.truncf %184 : vector<128x128xf32> to vector<128x128xbf16>
    %cst_82 = arith.constant dense<0.000000e+00> : vector<128x128xf32>
    %186 = tpu.matmul %185, %3, %cst_82 {dimension_numbers = #tpu.dot_dimension_numbers<[1], [0], [0], [1], [0, 0, 1, 1], [], []>} : vector<128x128xbf16>, vector<128x128xbf16>, vector<128x128xf32> -> vector<128x128xf32>
    %187 = vector.extract_strided_slice %5 {offsets = [7, 0], sizes = [1, 128], strides = [1, 1]} : vector<8x128xf32> to vector<1x128xf32>
    %188 = vector.shape_cast %187 : vector<1x128xf32> to vector<128xf32>
    %189 = vector.shape_cast %188 : vector<128xf32> to vector<1x128xf32>
    %190 = vector.broadcast %189 : vector<1x128xf32> to vector<128x128xf32>
    %191 = arith.addf %186, %190 : vector<128x128xf32>
    %cst_83 = arith.constant dense<0xFF800000> : vector<128xf32>
    %192 = vector.multi_reduction <maximumf>, %191, %cst_83 [1] : vector<128x128xf32> to vector<128xf32>
    %193 = vector.shape_cast %192 : vector<128xf32> to vector<128x1xf32>
    %194 = vector.broadcast %193 : vector<128x1xf32> to vector<128x128xf32>
    %195 = arith.subf %191, %194 : vector<128x128xf32>
    %196 = math.exp %195 : vector<128x128xf32>
    %cst_84 = arith.constant dense<0.000000e+00> : vector<128xf32>
    %197 = vector.multi_reduction <add>, %196, %cst_84 [1] : vector<128x128xf32> to vector<128xf32>
    %198 = vector.shape_cast %197 : vector<128xf32> to vector<128x1xf32>
    %199 = tpu.reciprocal %198 {approx = true} : vector<128x1xf32> -> vector<128x1xf32>
    %200 = vector.broadcast %199 : vector<128x1xf32> to vector<128x128xf32>
    %201 = arith.mulf %196, %200 : vector<128x128xf32>
    %202 = arith.truncf %201 : vector<128x128xf32> to vector<128x128xbf16>
    %c7_85 = arith.constant 7 : index
    %c0_86 = arith.constant 0 : index
    %c0_87 = arith.constant 0 : index
    %203 = vector.load %arg5[%c7_85, %c0_86, %c0_87] : memref<8x128x128xbf16, #tpu.memory_space<vmem>>, vector<1x128x128xbf16>
    %204 = vector.shape_cast %203 : vector<1x128x128xbf16> to vector<128x128xbf16>
    %cst_88 = arith.constant dense<0.000000e+00> : vector<128x128xf32>
    %205 = tpu.matmul %202, %204, %cst_88 {dimension_numbers = #tpu.dot_dimension_numbers<[1], [0], [0], [1], [0, 0, 1, 1], [], []>} : vector<128x128xbf16>, vector<128x128xbf16>, vector<128x128xf32> -> vector<128x128xf32>
    %206 = arith.addf %181, %205 : vector<128x128xf32>
    %c0_89 = arith.constant 0 : index
    %c0_90 = arith.constant 0 : index
    %207 = vector.load %arg7[%c0_89, %c0_90] : memref<1x128xf32, #tpu.memory_space<vmem>>, vector<1x128xf32>
    %208 = vector.broadcast %207 : vector<1x128xf32> to vector<128x128xf32>
    %209 = arith.addf %206, %208 : vector<128x128xf32>
    %c0_91 = arith.constant 0 : index
    %c0_92 = arith.constant 0 : index
    %c0_93 = arith.constant 0 : index
    %210 = vector.load %arg8[%c0_91, %c0_92, %c0_93] : memref<1x128x128xf32, #tpu.memory_space<vmem>>, vector<1x128x128xf32>
    %211 = vector.shape_cast %210 : vector<1x128x128xf32> to vector<128x128xf32>
    %212 = vector.shape_cast %209 : vector<128x128xf32> to vector<1x128x128xf32>
    tpu.vector_store %arg8[%c0_91, %c0_92, %c0_93], %212 {strides = array<i32>} : memref<1x128x128xf32, #tpu.memory_space<vmem>>, vector<1x128x128xf32>,
    return
  }
  func.func @transform_0(%arg0: i32, %arg1: i32) -> (i32, i32, i32) {
    %c0_i32 = arith.constant 0 : i32
    %c0_i32_0 = arith.constant 0 : i32
    return %arg0, %arg1, %c0_i32 : i32, i32, i32
  }
  func.func @transform_1(%arg0: i32, %arg1: i32) -> (i32, i32, i32) {
    %c0_i32 = arith.constant 0 : i32
    %c0_i32_0 = arith.constant 0 : i32
    %c0_i32_1 = arith.constant 0 : i32
    return %arg0, %c0_i32, %c0_i32_0 : i32, i32, i32
  }
  func.func @transform_2(%arg0: i32, %arg1: i32) -> (i32, i32, i32) {
    %c0_i32 = arith.constant 0 : i32
    %c0_i32_0 = arith.constant 0 : i32
    %c0_i32_1 = arith.constant 0 : i32
    %c0_i32_2 = arith.constant 0 : i32
    return %c0_i32, %c0_i32_0, %c0_i32_1 : i32, i32, i32
  }
  func.func @transform_3(%arg0: i32, %arg1: i32) -> (i32, i32, i32) {
    %c0_i32 = arith.constant 0 : i32
    %c0_i32_0 = arith.constant 0 : i32
    %c0_i32_1 = arith.constant 0 : i32
    return %arg0, %c0_i32, %c0_i32_0 : i32, i32, i32
  }
  func.func @transform_4(%arg0: i32, %arg1: i32) -> (i32, i32, i32) {
    %c0_i32 = arith.constant 0 : i32
    %c0_i32_0 = arith.constant 0 : i32
    %c0_i32_1 = arith.constant 0 : i32
    return %arg0, %c0_i32, %c0_i32_0 : i32, i32, i32
  }
  func.func @transform_5(%arg0: i32, %arg1: i32) -> (i32, i32) {
    %c0_i32 = arith.constant 0 : i32
    %c0_i32_0 = arith.constant 0 : i32
    %c0_i32_1 = arith.constant 0 : i32
    return %c0_i32, %c0_i32_0 : i32, i32
  }
  func.func @transform_6(%arg0: i32, %arg1: i32) -> (i32, i32, i32) {
    %c0_i32 = arith.constant 0 : i32
    %c0_i32_0 = arith.constant 0 : i32
    return %arg0, %arg1, %c0_i32 : i32, i32, i32
  }
}

</mosaic_0001>

<llo_original>
// kernel: tpu_custom_call.1
$region0: #{tpu_custom_call.1}
  #allocation0 [shape = 'u32[]', space=smem, size = 0x4, offset = 0x4, fixed_abs, tag = 'smem constant byte address 0x4 - core index']
  #allocation1 [shape = 'u32[144,128]{1,0:T(1,128)}', space=vmem, size = 0x12000, scoped, tag = 'internal scratch']
  %s0 = inlined_call_operand.hbm [shape: bf16[2,128,128], index: 0, kind: input, shape index: {}]
  %s1 = inlined_call_operand.hbm [shape: bf16[2,128,128], index: 1, kind: input, shape index: {}]
  %s2 = inlined_call_operand.hbm [shape: bf16[8,128,128], index: 2, kind: input, shape index: {}]
  %s3 = inlined_call_operand.hbm [shape: bf16[16,128,128], index: 3, kind: input, shape index: {}]
  %s4 = inlined_call_operand.hbm [shape: f32[2,8,128], index: 4, kind: input, shape index: {}]
  %s5 = inlined_call_operand.vmem [shape: f32[1,128], index: 5, kind: input, shape index: {}]
  %s6 = inlined_call_operand.hbm [shape: f32[2,128,128], index: 6, kind: output, shape index: {}]
  %s7 = sld [smem:[#allocation0]]
  $region77: #{tpu_custom_call.1} parent=0
    _
  %s9 = ssub.s32 1, %s7
  %s10 = scalar_select 0, %s9, %s7
  $region1: #{tpu_custom_call.1} parent=0
    #allocation2 [shape = 'u8[65536]{0}', space=vmem, size = 0x10000, scoped, tag = 'input window, operand 0']
    #allocation3 [shape = 's32[2]{0}', space=sflag, size = 0x8, scoped, tag = 'scoped memory for tpu_custom_call.1']
    #allocation4 [shape = 's32[2]{0}', space=sflag, size = 0x8, scoped, tag = 'scoped memory for tpu_custom_call.1']
    #allocation5 [shape = 'u8[32768]{0}', space=vmem, size = 0x8000, scoped, tag = 'input window, operand 1, single buffered']
    #allocation6 [shape = 's32[1]{0}', space=sflag, size = 0x4, scoped, tag = 'scoped memory for tpu_custom_call.1']
    #allocation7 [shape = 'u8[262144]{0}', space=vmem, size = 0x40000, scoped, tag = 'input window, operand 2, single buffered']
    #allocation8 [shape = 'u8[262144]{0}', space=vmem, size = 0x40000, scoped, tag = 'input window, operand 3, single buffered']
    #allocation9 [shape = 's32[1]{0}', space=sflag, size = 0x4, scoped, tag = 'scoped memory for tpu_custom_call.1']
    #allocation10 [shape = 'u8[4096]{0}', space=vmem, size = 0x1000, scoped, tag = 'input window, operand 4, single buffered']
    #allocation11 [shape = 'u8[131072]{0}', space=vmem, size = 0x20000, scoped, tag = 'output window, operand 0']
    %11 = vsyncpa [#allocation3], 0
    %s12 = scalar_lea.sflag [#allocation3], 1
    %13 = vsyncpa %s12, 0
    %14 = vsyncpa [#allocation6], 0
    %15 = vsyncpa [#allocation9], 0
    %16 = vsyncpa [#allocation4], 0
    %s17 = scalar_lea.sflag [#allocation4], 1
    %18 = vsyncpa %s17, 0
    loop: start=0, step=1, limit=4
    $region2: #{tpu_custom_call.1} parent=1 // loop_pre_header
      _
    $region3: #{tpu_custom_call.1} parent=1 // loop_header
      %s20 = sphi 0, %s24
      %p21 = scmp.ge.s32.totalorder %s20, 4
      %s27 = sphi 0, %s39
      %s28 = sphi 0, %s35
      %s29 = sphi 0, %s27
      %s30 = sphi 0, %s28
      %s31 = sphi 0, %s29
      %s32 = sphi 0, %s30
      %s44 = sphi 0, %s46
      %s47 = sphi 0, %s44
      %s48 = sphi 0, %s47
      %s64 = sphi 0, %s48
      %s70 = sphi 0, %s72
      %s73 = sphi 0, %s70
      %s74 = sphi 0, %s73
      %s90 = sphi 0, %s74
      %s94 = sphi 0, %s94
      %s96 = sphi 0, %s94
      %s97 = sphi 0, %s96
      %s111 = sphi 0, %s97
      %s117 = sphi 0, %s119
      %s120 = sphi 0, %s117
      %s121 = sphi 0, %s120
      %s137 = sphi 0, %s121
      %s143 = sphi 0, %s145
      %s146 = sphi 0, %s143
      %s147 = sphi 0, %s146
      %s163 = sphi 0, %s147
      %s167 = sphi 0, %s167
      %s169 = sphi 0, %s167
      %s170 = sphi 0, %s169
      %s184 = sphi 0, %s170
      %s192 = sphi 0, %s194
      %s195 = sphi 0, %s192
      %s196 = sphi 0, %s195
      %s212 = sphi 0, %s196
    $region4: #{tpu_custom_call.1} parent=1 // loop_header_branch
      %23 = sbr.rel (%p21) target = $region8
    $region5: #{tpu_custom_call.1} parent=1 // loop_body
      %s25 = ssub.s32 %s20, 1
      %s26 = ssub.s32 %s20, 2
      %s33 = sadd.s32 1, %s28
      %p34 = scmp.ge.s32.totalorder %s33, 1
      %s35 = scalar_select %p34, 0, %s33
      %s36 = sadd.s32 1, %s27
      %s37 = scalar_select %p34, %s36, %s27
      %p38 = scmp.ge.s32.totalorder %s37, 2
      %s39 = scalar_select %p38, 0, %s37
      %s40 = ssub.s32 %s27, %s39
      %s41 = ssub.s32 %s28, %s35
      %s42 = sor.u32 %s40, %s41
      %p43 = scmp.eq.s32.totalorder %s42, 0
      %s45 = sadd.s32 %s44, 1
      %s46 = scalar_select %p43, %s44, %s45
      %p49 = pneg %p43
      %p50 = scmp.eq.s32.totalorder %s20, 1
      %p51 = por %p49, %p50
      %p52 = scmp.ne.s32.totalorder %s44, %s47
      %p53 = scmp.eq.s32.totalorder %s20, 0
      %p54 = por %p52, %p53
      %p55 = scmp.ne.s32.totalorder %s44, %s47
      %p56 = scmp.eq.s32.totalorder %s25, 1
      %p57 = por %p55, %p56
      %p58 = scmp.ne.s32.totalorder %s47, %s48
      %p59 = scmp.eq.s32.totalorder %s25, 0
      %p60 = por %p58, %p59
      %p61 = scmp.ne.s32.totalorder %s47, %s48
      %p62 = scmp.eq.s32.totalorder %s26, 1
      %p63 = por %p61, %p62
      %p65 = scmp.ne.s32.totalorder %s48, %s64
      %p66 = scmp.eq.s32.totalorder %s26, 0
      %p67 = por %p65, %p66
      %s68 = ssub.s32 %s27, %s39
      %p69 = scmp.eq.s32.totalorder %s68, 0
      %s71 = sadd.s32 %s70, 1
      %s72 = scalar_select %p69, %s70, %s71
      %p75 = pneg %p69
      %p76 = scmp.eq.s32.totalorder %s20, 1
      %p77 = por %p75, %p76
      %p78 = scmp.ne.s32.totalorder %s70, %s73
      %p79 = scmp.eq.s32.totalorder %s20, 0
      %p80 = por %p78, %p79
      %p81 = scmp.ne.s32.totalorder %s70, %s73
      %p82 = scmp.eq.s32.totalorder %s25, 1
      %p83 = por %p81, %p82
      %p84 = scmp.ne.s32.totalorder %s73, %s74
      %p85 = scmp.eq.s32.totalorder %s25, 0
      %p86 = por %p84, %p85
      %p87 = scmp.ne.s32.totalorder %s73, %s74
      %p88 = scmp.eq.s32.totalorder %s26, 1
      %p89 = por %p87, %p88
      %p91 = scmp.ne.s32.totalorder %s74, %s90
      %p92 = scmp.eq.s32.totalorder %s26, 0
      %p93 = por %p91, %p92
      %s95 = sadd.s32 %s94, 1
      %p98 = scmp.eq.s32.totalorder %s20, 1
      %p99 = scmp.ne.s32.totalorder %s94, %s96
      %p100 = scmp.eq.s32.totalorder %s20, 0
      %p101 = por %p99, %p100
      %p102 = scmp.ne.s32.totalorder %s94, %s96
      %p103 = scmp.eq.s32.totalorder %s25, 1
      %p104 = por %p102, %p103
      %p105 = scmp.ne.s32.totalorder %s96, %s97
      %p106 = scmp.eq.s32.totalorder %s25, 0
      %p107 = por %p105, %p106
      %p108 = scmp.ne.s32.totalorder %s96, %s97
      %p109 = scmp.eq.s32.totalorder %s26, 1
      %p110 = por %p108, %p109
      %p112 = scmp.ne.s32.totalorder %s97, %s111
      %p113 = scmp.eq.s32.totalorder %s26, 0
      %p114 = por %p112, %p113
      %s115 = ssub.s32 %s27, %s39
      %p116 = scmp.eq.s32.totalorder %s115, 0
      %s118 = sadd.s32 %s117, 1
      %s119 = scalar_select %p116, %s117, %s118
      %p122 = pneg %p116
      %p123 = scmp.eq.s32.totalorder %s20, 1
      %p124 = por %p122, %p123
      %p125 = scmp.ne.s32.totalorder %s117, %s120
      %p126 = scmp.eq.s32.totalorder %s20, 0
      %p127 = por %p125, %p126
      %p128 = scmp.ne.s32.totalorder %s117, %s120
      %p129 = scmp.eq.s32.totalorder %s25, 1
      %p130 = por %p128, %p129
      %p131 = scmp.ne.s32.totalorder %s120, %s121
      %p132 = scmp.eq.s32.totalorder %s25, 0
      %p133 = por %p131, %p132
      %p134 = scmp.ne.s32.totalorder %s120, %s121
      %p135 = scmp.eq.s32.totalorder %s26, 1
      %p136 = por %p134, %p135
      %p138 = scmp.ne.s32.totalorder %s121, %s137
      %p139 = scmp.eq.s32.totalorder %s26, 0
      %p140 = por %p138, %p139
      %s141 = ssub.s32 %s27, %s39
      %p142 = scmp.eq.s32.totalorder %s141, 0
      %s144 = sadd.s32 %s143, 1
      %s145 = scalar_select %p142, %s143, %s144
      %p148 = pneg %p142
      %p149 = scmp.eq.s32.totalorder %s20, 1
      %p150 = por %p148, %p149
      %p151 = scmp.ne.s32.totalorder %s143, %s146
      %p152 = scmp.eq.s32.totalorder %s20, 0
      %p153 = por %p151, %p152
      %p154 = scmp.ne.s32.totalorder %s143, %s146
      %p155 = scmp.eq.s32.totalorder %s25, 1
      %p156 = por %p154, %p155
      %p157 = scmp.ne.s32.totalorder %s146, %s147
      %p158 = scmp.eq.s32.totalorder %s25, 0
      %p159 = por %p157, %p158
      %p160 = scmp.ne.s32.totalorder %s146, %s147
      %p161 = scmp.eq.s32.totalorder %s26, 1
      %p162 = por %p160, %p161
      %p164 = scmp.ne.s32.totalorder %s147, %s163
      %p165 = scmp.eq.s32.totalorder %s26, 0
      %p166 = por %p164, %p165
      %s168 = sadd.s32 %s167, 1
      %p171 = scmp.eq.s32.totalorder %s20, 1
      %p172 = scmp.ne.s32.totalorder %s167, %s169
      %p173 = scmp.eq.s32.totalorder %s20, 0
      %p174 = por %p172, %p173
      %p175 = scmp.ne.s32.totalorder %s167, %s169
      %p176 = scmp.eq.s32.totalorder %s25, 1
      %p177 = por %p175, %p176
      %p178 = scmp.ne.s32.totalorder %s169, %s170
      %p179 = scmp.eq.s32.totalorder %s25, 0
      %p180 = por %p178, %p179
      %p181 = scmp.ne.s32.totalorder %s169, %s170
      %p182 = scmp.eq.s32.totalorder %s26, 1
      %p183 = por %p181, %p182
      %p185 = scmp.ne.s32.totalorder %s170, %s184
      %p186 = scmp.eq.s32.totalorder %s26, 0
      %p187 = por %p185, %p186
      %s188 = ssub.s32 %s27, %s39
      %s189 = ssub.s32 %s28, %s35
      %s190 = sor.u32 %s188, %s189
      %p191 = scmp.eq.s32.totalorder %s190, 0
      %s193 = sadd.s32 %s192, 1
      %s194 = scalar_select %p191, %s192, %s193
      %p197 = pneg %p191
      %p198 = scmp.eq.s32.totalorder %s20, 1
      %p199 = por %p197, %p198
      %p200 = scmp.ne.s32.totalorder %s192, %s195
      %p201 = scmp.eq.s32.totalorder %s20, 0
      %p202 = por %p200, %p201
      %p203 = scmp.ne.s32.totalorder %s192, %s195
      %p204 = scmp.eq.s32.totalorder %s25, 1
      %p205 = por %p203, %p204
      %p206 = scmp.ne.s32.totalorder %s195, %s196
      %p207 = scmp.eq.s32.totalorder %s25, 0
      %p208 = por %p206, %p207
      %p209 = scmp.ne.s32.totalorder %s195, %s196
      %p210 = scmp.eq.s32.totalorder %s26, 1
      %p211 = por %p209, %p210
      %p213 = scmp.ne.s32.totalorder %s196, %s212
      %p214 = scmp.eq.s32.totalorder %s26, 0
      %p215 = por %p213, %p214
      %p216 = scmp.le.s32.totalorder 1, %s20
      %p217 = scmp.lt.s32.totalorder %s20, 3
      %p218 = pnand %p216, %p217
      %p219 = pneg %p218
      // Predicated region
      $region9: #{tpu_custom_call.1} parent=5 // pred_check
        _
      $region10: #{tpu_custom_call.1} parent=5 // pred_check_branch
        %221 = sbr.rel (%p218) target = $region12
      $region11: #{tpu_custom_call.1} parent=5 // pred_region
        %s222 = ssub.s32 %s20, 1
        // Predicated region
        $region13: #{tpu_custom_call.1} parent=11 // pred_check
          %p223 = pneg %p86
        $region14: #{tpu_custom_call.1} parent=11 // pred_check_branch
          %225 = sbr.rel (%p223) target = $region16
        $region15: #{tpu_custom_call.1} parent=11 // pred_region
          %s227 = ssub.s32 1024, 1024
          %228 = vsyncadd [#allocation6], %s227
          %s229 = smul.addr %s29, 16
          %s230 = smul.addr %s229, 64
          %s231 = scalar_lea.hbm %s1, %s230
          %s232 = sshll.u32 [#allocation5], 4
          %s233 = int_to_ptr.vmem [resolvable:$true] %s232
          %238 = dma.hbm_to_vmem [thread:$0]  %s231, 1024, %s233, [#allocation6], 64, 64, 4
        $region16: #{tpu_custom_call.1} parent=11 // pred_fallthru
          _
        // Predicated region
        $region17: #{tpu_custom_call.1} parent=11 // pred_check
          %p239 = pneg %p107
        $region18: #{tpu_custom_call.1} parent=11 // pred_check_branch
          %241 = sbr.rel (%p239) target = $region20
        $region19: #{tpu_custom_call.1} parent=11 // pred_region
          %s243 = ssub.s32 8192, 8192
          %244 = vsyncadd [#allocation6], %s243
          %s245 = sshll.u32 [#allocation7], 4
          %s246 = int_to_ptr.vmem [resolvable:$true] %s245
          %251 = dma.hbm_to_vmem [thread:$0]  %s2, 8192, %s246, [#allocation6], 64, 64, 4
        $region20: #{tpu_custom_call.1} parent=11 // pred_fallthru
          _
        // Predicated region
        $region21: #{tpu_custom_call.1} parent=11 // pred_check
          %p252 = pneg %p133
        $region22: #{tpu_custom_call.1} parent=11 // pred_check_branch
          %254 = sbr.rel (%p252) target = $region24
        $region23: #{tpu_custom_call.1} parent=11 // pred_region
          %s255 = smul.u32 8, %s29
          %s257 = ssub.s32 8192, 8192
          %258 = vsyncadd [#allocation9], %s257
          %s259 = smul.addr %s255, 16
          %s260 = smul.addr %s259, 64
          %s261 = scalar_lea.hbm %s3, %s260
          %s262 = sshll.u32 [#allocation8], 4
          %s263 = int_to_ptr.vmem [resolvable:$true] %s262
          %268 = dma.hbm_to_vmem [thread:$0]  %s261, 8192, %s263, [#allocation9], 64, 64, 4
        $region24: #{tpu_custom_call.1} parent=11 // pred_fallthru
          _
        // Predicated region
        $region25: #{tpu_custom_call.1} parent=11 // pred_check
          %p269 = pneg %p159
        $region26: #{tpu_custom_call.1} parent=11 // pred_check_branch
          %271 = sbr.rel (%p269) target = $region28
        $region27: #{tpu_custom_call.1} parent=11 // pred_region
          %s273 = ssub.s32 128, 128
          %274 = vsyncadd [#allocation9], %s273
          %s275 = smul.addr %s29, 128
          %s276 = scalar_lea.hbm %s4, %s275
          %s278 = sshll.u32 [#allocation10], 4
          %s279 = int_to_ptr.vmem [resolvable:$true] %s278
          %281 = dma.hbm_to_vmem [thread:$0]  %s276, 128, %s279, [#allocation9]
        $region28: #{tpu_custom_call.1} parent=11 // pred_fallthru
          _
        // Predicated region
        $region29: #{tpu_custom_call.1} parent=11 // pred_check
          %p282 = pneg %p180
        $region30: #{tpu_custom_call.1} parent=11 // pred_check_branch
          %284 = sbr.rel (%p282) target = $region32
        $region31: #{tpu_custom_call.1} parent=11 // pred_region
          _
        $region32: #{tpu_custom_call.1} parent=11 // pred_fallthru
          _
      $region12: #{tpu_custom_call.1} parent=5 // pred_fallthru
        _
      %p285 = scmp.lt.s32.totalorder %s20, 2
      // Predicated region
      $region33: #{tpu_custom_call.1} parent=5 // pred_check
        %p286 = pneg %p285
      $region34: #{tpu_custom_call.1} parent=5 // pred_check_branch
        %288 = sbr.rel (%p286) target = $region36
      $region35: #{tpu_custom_call.1} parent=5 // pred_region
        // Predicated region
        $region37: #{tpu_custom_call.1} parent=35 // pred_check
          %p289 = pneg %p54
        $region38: #{tpu_custom_call.1} parent=35 // pred_check_branch
          %291 = sbr.rel (%p289) target = $region40
        $region39: #{tpu_custom_call.1} parent=35 // pred_region
          %s292 = sand.u32 %s44, 1
          %s293 = scalar_lea.sflag [#allocation3], %s292
          %s294 = sand.u32 %s44, 1
          %s295 = smul.addr %s294, 64
          %s296 = scalar_lea.vmem [#allocation2], %s295
          %s297 = smul.u32 16, %s28
          %s299 = ssub.s32 1024, 1024
          %300 = vsyncadd %s293, %s299
          %s301 = smul.addr %s27, 16
          %s302 = sadd.s32 %s297, %s301
          %s303 = smul.addr %s302, 64
          %s304 = scalar_lea.hbm %s0, %s303
          %s305 = sshll.u32 %s296, 4
          %s306 = int_to_ptr.vmem [resolvable:$true] %s305
          %311 = dma.hbm_to_vmem [thread:$0]  %s304, 1024, %s306, %s293, 64, 64, 4
        $region40: #{tpu_custom_call.1} parent=35 // pred_fallthru
          _
      $region36: #{tpu_custom_call.1} parent=5 // pred_fallthru
        _
      %p312 = scmp.le.s32.totalorder 1, %s20
      %p313 = scmp.lt.s32.totalorder %s20, 3
      %p314 = pnand %p312, %p313
      %p315 = pneg %p314
      // Predicated region
      $region41: #{tpu_custom_call.1} parent=5 // pred_check
        _
      $region42: #{tpu_custom_call.1} parent=5 // pred_check_branch
        %317 = sbr.rel (%p314) target = $region44
      $region43: #{tpu_custom_call.1} parent=5 // pred_region
        %s318 = ssub.s32 %s20, 1
        %s319 = sand.u32 %s47, 1
        %s320 = scalar_lea.sflag [#allocation3], %s319
        %s321 = sand.u32 %s47, 1
        %s322 = smul.addr %s321, 64
        %s323 = scalar_lea.vmem [#allocation2], %s322
        // Predicated region
        $region45: #{tpu_custom_call.1} parent=43 // pred_check
          %p324 = pneg %p60
        $region46: #{tpu_custom_call.1} parent=43 // pred_check_branch
          %326 = sbr.rel (%p324) target = $region48
        $region47: #{tpu_custom_call.1} parent=43 // pred_region
          %327 = dma.done %s320, 1024
        $region48: #{tpu_custom_call.1} parent=43 // pred_fallthru
          _
        // Predicated region
        $region49: #{tpu_custom_call.1} parent=43 // pred_check
          %p328 = pneg %p86
        $region50: #{tpu_custom_call.1} parent=43 // pred_check_branch
          %330 = sbr.rel (%p328) target = $region52
        $region51: #{tpu_custom_call.1} parent=43 // pred_region
          %331 = dma.done [#allocation6], 1024
        $region52: #{tpu_custom_call.1} parent=43 // pred_fallthru
          _
        // Predicated region
        $region53: #{tpu_custom_call.1} parent=43 // pred_check
          %p332 = pneg %p107
        $region54: #{tpu_custom_call.1} parent=43 // pred_check_branch
          %334 = sbr.rel (%p332) target = $region56
        $region55: #{tpu_custom_call.1} parent=43 // pred_region
          %335 = dma.done [#allocation6], 8192
        $region56: #{tpu_custom_call.1} parent=43 // pred_fallthru
          _
        // Predicated region
        $region57: #{tpu_custom_call.1} parent=43 // pred_check
          %p336 = pneg %p133
        $region58: #{tpu_custom_call.1} parent=43 // pred_check_branch
          %338 = sbr.rel (%p336) target = $region60
        $region59: #{tpu_custom_call.1} parent=43 // pred_region
          %339 = dma.done [#allocation9], 8192
        $region60: #{tpu_custom_call.1} parent=43 // pred_fallthru
          _
        // Predicated region
        $region61: #{tpu_custom_call.1} parent=43 // pred_check
          %p340 = pneg %p159
        $region62: #{tpu_custom_call.1} parent=43 // pred_check_branch
          %342 = sbr.rel (%p340) target = $region64
        $region63: #{tpu_custom_call.1} parent=43 // pred_region
          %343 = dma.done [#allocation9], 128
        $region64: #{tpu_custom_call.1} parent=43 // pred_fallthru
          _
        %s344 = sand.u32 %s47, 1
        %s345 = scalar_lea.sflag [#allocation3], %s344
        %s346 = sand.u32 %s47, 1
        %s347 = smul.addr %s346, 64
        %s348 = scalar_lea.vmem [#allocation2], %s347
        %p349 = pneg %p60
        %p350 = pneg %p57
        %p351 = pneg %p86
        %p352 = pneg %p83
        %p353 = pneg %p107
        %p354 = pneg %p104
        %p355 = pneg %p133
        %p356 = pneg %p130
        %p357 = pneg %p159
        %p358 = pneg %p156
        %p359 = pneg %p180
        %p360 = pneg %p177
        %p361 = pneg %p208
        %p362 = pneg %p205
        %s363 = sand.u32 %s195, 1
        %s364 = scalar_lea.sflag [#allocation4], %s363
        %s365 = sand.u32 %s195, 1
        %s366 = smul.addr %s365, 128
        %s367 = scalar_lea.vmem [#allocation11], %s366
        %s368 = smul.u32 16, %s30
        %s369 = smul.u32 8, %s29
        %s370 = smul.u32 16, %s30
        %v372 = vld [vmem:[%s323] sm:$0xf]
        %v373 = vld [vmem:[%s323 + $0x4] sm:$0xf]
        %v374 = vld [vmem:[%s323 + $0x8] sm:$0xf]
        %v375 = vld [vmem:[%s323 + $0xc] sm:$0xf]
        %v376 = vld [vmem:[%s323 + $0x10] sm:$0xf]
        %v377 = vld [vmem:[%s323 + $0x14] sm:$0xf]
        %v378 = vld [vmem:[%s323 + $0x18] sm:$0xf]
        %v379 = vld [vmem:[%s323 + $0x1c] sm:$0xf]
        %v380 = vld [vmem:[%s323 + $0x20] sm:$0xf]
        %v381 = vld [vmem:[%s323 + $0x24] sm:$0xf]
        %v382 = vld [vmem:[%s323 + $0x28] sm:$0xf]
        %v383 = vld [vmem:[%s323 + $0x2c] sm:$0xf]
        %v384 = vld [vmem:[%s323 + $0x30] sm:$0xf]
        %v385 = vld [vmem:[%s323 + $0x34] sm:$0xf]
        %v386 = vld [vmem:[%s323 + $0x38] sm:$0xf]
        %v387 = vld [vmem:[%s323 + $0x3c] sm:$0xf]
        %v388 = vld [vmem:[#allocation5] sm:$0xf]
        %v389 = vld [vmem:[#allocation5 + $0x4] sm:$0xf]
        %v390 = vld [vmem:[#allocation5 + $0x8] sm:$0xf]
        %v391 = vld [vmem:[#allocation5 + $0xc] sm:$0xf]
        %v392 = vld [vmem:[#allocation5 + $0x10] sm:$0xf]
        %v393 = vld [vmem:[#allocation5 + $0x14] sm:$0xf]
        %v394 = vld [vmem:[#allocation5 + $0x18] sm:$0xf]
        %v395 = vld [vmem:[#allocation5 + $0x1c] sm:$0xf]
        %v396 = vld [vmem:[#allocation5 + $0x20] sm:$0xf]
        %v397 = vld [vmem:[#allocation5 + $0x24] sm:$0xf]
        %v398 = vld [vmem:[#allocation5 + $0x28] sm:$0xf]
        %v399 = vld [vmem:[#allocation5 + $0x2c] sm:$0xf]
        %v400 = vld [vmem:[#allocation5 + $0x30] sm:$0xf]
        %v401 = vld [vmem:[#allocation5 + $0x34] sm:$0xf]
        %v402 = vld [vmem:[#allocation5 + $0x38] sm:$0xf]
        %v403 = vld [vmem:[#allocation5 + $0x3c] sm:$0xf]
        %v404 = vld [vmem:[#allocation10] sm:$0xff]
        %v405 = vld [vmem:[#allocation7] sm:$0xf]
        %v406 = vld [vmem:[#allocation7 + $0x4] sm:$0xf]
        %v407 = vld [vmem:[#allocation7 + $0x8] sm:$0xf]
        %v408 = vld [vmem:[#allocation7 + $0xc] sm:$0xf]
        %v409 = vld [vmem:[#allocation7 + $0x10] sm:$0xf]
        %v410 = vld [vmem:[#allocation7 + $0x14] sm:$0xf]
        %v411 = vld [vmem:[#allocation7 + $0x18] sm:$0xf]
        %v412 = vld [vmem:[#allocation7 + $0x1c] sm:$0xf]
        %v413 = vld [vmem:[#allocation7 + $0x20] sm:$0xf]
        %v414 = vld [vmem:[#allocation7 + $0x24] sm:$0xf]
        %v415 = vld [vmem:[#allocation7 + $0x28] sm:$0xf]
        %v416 = vld [vmem:[#allocation7 + $0x2c] sm:$0xf]
        %v417 = vld [vmem:[#allocation7 + $0x30] sm:$0xf]
        %v418 = vld [vmem:[#allocation7 + $0x34] sm:$0xf]
        %v419 = vld [vmem:[#allocation7 + $0x38] sm:$0xf]
        %v420 = vld [vmem:[#allocation7 + $0x3c] sm:$0xf]
        %v437 = vunpack.c.l.b16 %v372
        %v438 = vunpack.c.l.b16 %v373
        %v439 = vunpack.c.l.b16 %v374
        %v440 = vunpack.c.l.b16 %v375
        %v441 = vunpack.c.l.b16 %v376
        %v442 = vunpack.c.l.b16 %v377
        %v443 = vunpack.c.l.b16 %v378
        %v444 = vunpack.c.l.b16 %v379
        %v445 = vunpack.c.l.b16 %v380
        %v446 = vunpack.c.l.b16 %v381
        %v447 = vunpack.c.l.b16 %v382
        %v448 = vunpack.c.l.b16 %v383
        %v449 = vunpack.c.l.b16 %v384
        %v450 = vunpack.c.l.b16 %v385
        %v451 = vunpack.c.l.b16 %v386
        %v452 = vunpack.c.l.b16 %v387
        %v453 = vpack.c.b16 %v438, %v437
        %v454 = vpack.c.b16 %v440, %v439
        %v455 = vpack.c.b16 %v442, %v441
        %v456 = vpack.c.b16 %v444, %v443
        %v457 = vpack.c.b16 %v446, %v445
        %v458 = vpack.c.b16 %v448, %v447
        %v459 = vpack.c.b16 %v450, %v449
        %v460 = vpack.c.b16 %v452, %v451
        %v485 = vunpack.c.l.b16 %v405
        %v486 = vunpack.c.l.b16 %v406
        %v487 = vunpack.c.l.b16 %v407
        %v488 = vunpack.c.l.b16 %v408
        %v489 = vunpack.c.l.b16 %v409
        %v490 = vunpack.c.l.b16 %v410
        %v491 = vunpack.c.l.b16 %v411
        %v492 = vunpack.c.l.b16 %v412
        %v493 = vunpack.c.l.b16 %v413
        %v494 = vunpack.c.l.b16 %v414
        %v495 = vunpack.c.l.b16 %v415
        %v496 = vunpack.c.l.b16 %v416
        %v497 = vunpack.c.l.b16 %v417
        %v498 = vunpack.c.l.b16 %v418
        %v499 = vunpack.c.l.b16 %v419
        %v500 = vunpack.c.l.b16 %v420
        %v501 = vpack.c.b16 %v486, %v485
        %v502 = vpack.c.b16 %v488, %v487
        %v503 = vpack.c.b16 %v490, %v489
        %v504 = vpack.c.b16 %v492, %v491
        %v505 = vpack.c.b16 %v494, %v493
        %v506 = vpack.c.b16 %v496, %v495
        %v507 = vpack.c.b16 %v498, %v497
        %v508 = vpack.c.b16 %v500, %v499
        %517 = vmatprep.subr.bf16.mxu0 0
        %518 = vmatpush1.bf16.msra.mxu0 %v501
        %519 = vmatprep.subr.bf16.mxu0 0
        %520 = vmatpush1.bf16.msra.mxu0 %v502
        %521 = vmatprep.subr.bf16.mxu0 0
        %522 = vmatpush1.bf16.msra.mxu0 %v503
        %523 = vmatprep.subr.bf16.mxu0 0
        %524 = vmatpush1.bf16.msra.mxu0 %v504
        %525 = vmatprep.subr.bf16.mxu0 0
        %526 = vmatpush1.bf16.msra.mxu0 %v505
        %527 = vmatprep.subr.bf16.mxu0 0
        %528 = vmatpush1.bf16.msra.mxu0 %v506
        %529 = vmatprep.subr.bf16.mxu0 0
        %530 = vmatpush1.bf16.msra.mxu0 %v507
        %531 = vmatprep.subr.bf16.mxu0 0
        %532 = vmatpush1.bf16.msra.mxu0 %v508
        %533 = vmatprep.subr.bf16.mxu0 0
        %534 = vmatpush1.bf16.msra.mxu0 0
        %535 = vmatprep.subr.bf16.mxu0 0
        %536 = vmatpush1.bf16.msra.mxu0 0
        %537 = vmatprep.subr.bf16.mxu0 0
        %538 = vmatpush1.bf16.msra.mxu0 0
        %539 = vmatprep.subr.bf16.mxu0 0
        %540 = vmatpush1.bf16.msra.mxu0 0
        %541 = vmatprep.subr.bf16.mxu0 0
        %542 = vmatpush1.bf16.msra.mxu0 0
        %543 = vmatprep.subr.bf16.mxu0 0
        %544 = vmatpush1.bf16.msra.mxu0 0
        %545 = vmatprep.subr.bf16.mxu0 0
        %546 = vmatpush1.bf16.msra.mxu0 0
        %547 = vmatprep.subr.bf16.mxu0 0
        %548 = vmatpush1.bf16.msra.mxu0 0
        %549 = vmatprep.mubr.bf16.mxu0 0
        %550 = vmatmul.mubr.bf16.gmra.mrb[0].mxu0 %v453
        %v551 = vpop.f32.mrb[0].mxu0
        %v552 = vadd.f32 0.0, %v551
        %v553 = vpop.f32.mrb[0].mxu0
        %v554 = vpop.f32.mrb[0].mxu0
        %v555 = vadd.f32 0.0, %v554
        %v556 = vpop.f32.mrb[0].mxu0
        %557 = vmatprep.mubr.bf16.mxu0 0
        %558 = vmatmul.mubr.bf16.gmra.mrb[0].mxu0 %v454
        %v559 = vpop.f32.mrb[0].mxu0
        %v560 = vadd.f32 0.0, %v559
        %v561 = vpop.f32.mrb[0].mxu0
        %v562 = vpop.f32.mrb[0].mxu0
        %v563 = vadd.f32 0.0, %v562
        %v564 = vpop.f32.mrb[0].mxu0
        %565 = vmatprep.mubr.bf16.mxu0 0
        %566 = vmatmul.mubr.bf16.gmra.mrb[0].mxu0 %v455
        %v567 = vpop.f32.mrb[0].mxu0
        %v568 = vadd.f32 0.0, %v567
        %v569 = vpop.f32.mrb[0].mxu0
        %v570 = vpop.f32.mrb[0].mxu0
        %v571 = vadd.f32 0.0, %v570
        %v572 = vpop.f32.mrb[0].mxu0
        %573 = vmatprep.mubr.bf16.mxu0 0
        %574 = vmatmul.mubr.bf16.gmra.mrb[0].mxu0 %v456
        %v575 = vpop.f32.mrb[0].mxu0
        %v576 = vadd.f32 0.0, %v575
        %v577 = vpop.f32.mrb[0].mxu0
        %v578 = vpop.f32.mrb[0].mxu0
        %v579 = vadd.f32 0.0, %v578
        %v580 = vpop.f32.mrb[0].mxu0
        %581 = vmatprep.mubr.bf16.mxu0 0
        %582 = vmatmul.mubr.bf16.gmra.mrb[0].mxu0 %v457
        %v583 = vpop.f32.mrb[0].mxu0
        %v584 = vadd.f32 0.0, %v583
        %v585 = vpop.f32.mrb[0].mxu0
        %v586 = vpop.f32.mrb[0].mxu0
        %v587 = vadd.f32 0.0, %v586
        %v588 = vpop.f32.mrb[0].mxu0
        %589 = vmatprep.mubr.bf16.mxu0 0
        %590 = vmatmul.mubr.bf16.gmra.mrb[0].mxu0 %v458
        %v591 = vpop.f32.mrb[0].mxu0
        %v592 = vadd.f32 0.0, %v591
        %v593 = vpop.f32.mrb[0].mxu0
        %v594 = vpop.f32.mrb[0].mxu0
        %v595 = vadd.f32 0.0, %v594
        %v596 = vpop.f32.mrb[0].mxu0
        %597 = vmatprep.mubr.bf16.mxu0 0
        %598 = vmatmul.mubr.bf16.gmra.mrb[0].mxu0 %v459
        %v599 = vpop.f32.mrb[0].mxu0
        %v600 = vadd.f32 0.0, %v599
        %v601 = vpop.f32.mrb[0].mxu0
        %v602 = vpop.f32.mrb[0].mxu0
        %v603 = vadd.f32 0.0, %v602
        %v604 = vpop.f32.mrb[0].mxu0
        %605 = vmatprep.mubr.bf16.mxu0 0
        %606 = vmatmul.mubr.bf16.gmra.mrb[0].mxu0 %v460
        %v607 = vpop.f32.mrb[0].mxu0
        %v608 = vadd.f32 0.0, %v607
        %v609 = vpop.f32.mrb[0].mxu0
        %v610 = vpop.f32.mrb[0].mxu0
        %v611 = vadd.f32 0.0, %v610
        %v612 = vpop.f32.mrb[0].mxu0
        %613 = vdwg.mxu0
        %v614 = vpack.c.bf16 %v555, %v552
        %v615 = vpack.c.bf16 %v563, %v560
        %v616 = vpack.c.bf16 %v571, %v568
        %v617 = vpack.c.bf16 %v579, %v576
        %v618 = vpack.c.bf16 %v587, %v584
        %v619 = vpack.c.bf16 %v595, %v592
        %v620 = vpack.c.bf16 %v603, %v600
        %v621 = vpack.c.bf16 %v611, %v608
        %v622 = vlaneseq
        %v623 = vshrl.u32 %v622, 7
        %v624 = vsub.s32 0, %v623
        %v625 = vrot.slane %v404, %v624
        %v642 = vunpack.c.l.b16 %v388
        %v643 = vunpack.c.l.b16 %v389
        %v644 = vunpack.c.l.b16 %v390
        %v645 = vunpack.c.l.b16 %v391
        %v646 = vunpack.c.l.b16 %v392
        %v647 = vunpack.c.l.b16 %v393
        %v648 = vunpack.c.l.b16 %v394
        %v649 = vunpack.c.l.b16 %v395
        %v650 = vunpack.c.l.b16 %v396
        %v651 = vunpack.c.l.b16 %v397
        %v652 = vunpack.c.l.b16 %v398
        %v653 = vunpack.c.l.b16 %v399
        %v654 = vunpack.c.l.b16 %v400
        %v655 = vunpack.c.l.b16 %v401
        %v656 = vunpack.c.l.b16 %v402
        %v657 = vunpack.c.l.b16 %v403
        %v658 = vpack.c.b16 %v643, %v642
        %v659 = vpack.c.b16 %v645, %v644
        %v660 = vpack.c.b16 %v647, %v646
        %v661 = vpack.c.b16 %v649, %v648
        %v662 = vpack.c.b16 %v651, %v650
        %v663 = vpack.c.b16 %v653, %v652
        %v664 = vpack.c.b16 %v655, %v654
        %v665 = vpack.c.b16 %v657, %v656
        %674 = vmatprep.subr.bf16.mxu0 0
        %675 = vmatpush1.bf16.msra.mxu0 %v658
        %676 = vmatprep.subr.bf16.mxu0 0
        %677 = vmatpush1.bf16.msra.mxu0 %v659
        %678 = vmatprep.subr.bf16.mxu0 0
        %679 = vmatpush1.bf16.msra.mxu0 %v660
        %680 = vmatprep.subr.bf16.mxu0 0
        %681 = vmatpush1.bf16.msra.mxu0 %v661
        %682 = vmatprep.subr.bf16.mxu0 0
        %683 = vmatpush1.bf16.msra.mxu0 %v662
        %684 = vmatprep.subr.bf16.mxu0 0
        %685 = vmatpush1.bf16.msra.mxu0 %v663
        %686 = vmatprep.subr.bf16.mxu0 0
        %687 = vmatpush1.bf16.msra.mxu0 %v664
        %688 = vmatprep.subr.bf16.mxu0 0
        %689 = vmatpush1.bf16.msra.mxu0 %v665
        %690 = vmatprep.subr.bf16.mxu0 0
        %691 = vmatpush1.bf16.msra.mxu0 0
        %692 = vmatprep.subr.bf16.mxu0 0
        %693 = vmatpush1.bf16.msra.mxu0 0
        %694 = vmatprep.subr.bf16.mxu0 0
        %695 = vmatpush1.bf16.msra.mxu0 0
        %696 = vmatprep.subr.bf16.mxu0 0
        %697 = vmatpush1.bf16.msra.mxu0 0
        %698 = vmatprep.subr.bf16.mxu0 0
        %699 = vmatpush1.bf16.msra.mxu0 0
        %700 = vmatprep.subr.bf16.mxu0 0
        %701 = vmatpush1.bf16.msra.mxu0 0
        %702 = vmatprep.subr.bf16.mxu0 0
        %703 = vmatpush1.bf16.msra.mxu0 0
        %704 = vmatprep.subr.bf16.mxu0 0
        %705 = vmatpush1.bf16.msra.mxu0 0
        %706 = vmatprep.mubr.bf16.mxu0 0
        %707 = vmatmul.mubr.bf16.gmra.mrb[0].mxu0 %v614
        %v708 = vpop.f32.mrb[0].mxu0
        %v709 = vadd.f32 %v625, %v708
        %v710 = vpop.f32.mrb[0].mxu0
        %v711 = vpop.f32.mrb[0].mxu0
        %v712 = vadd.f32 %v625, %v711
        %v713 = vpop.f32.mrb[0].mxu0
        %714 = vmatprep.mubr.bf16.mxu0 0
        %715 = vmatmul.mubr.bf16.gmra.mrb[0].mxu0 %v615
        %v716 = vpop.f32.mrb[0].mxu0
        %v717 = vadd.f32 %v625, %v716
        %v718 = vpop.f32.mrb[0].mxu0
        %v719 = vpop.f32.mrb[0].mxu0
        %v720 = vadd.f32 %v625, %v719
        %v721 = vpop.f32.mrb[0].mxu0
        %722 = vmatprep.mubr.bf16.mxu0 0
        %723 = vmatmul.mubr.bf16.gmra.mrb[0].mxu0 %v616
        %v724 = vpop.f32.mrb[0].mxu0
        %v725 = vadd.f32 %v625, %v724
        %v726 = vpop.f32.mrb[0].mxu0
        %v727 = vpop.f32.mrb[0].mxu0
        %v728 = vadd.f32 %v625, %v727
        %v729 = vpop.f32.mrb[0].mxu0
        %730 = vmatprep.mubr.bf16.mxu0 0
        %731 = vmatmul.mubr.bf16.gmra.mrb[0].mxu0 %v617
        %v732 = vpop.f32.mrb[0].mxu0
        %v733 = vadd.f32 %v625, %v732
        %v734 = vpop.f32.mrb[0].mxu0
        %v735 = vpop.f32.mrb[0].mxu0
        %v736 = vadd.f32 %v625, %v735
        %v737 = vpop.f32.mrb[0].mxu0
        %738 = vmatprep.mubr.bf16.mxu0 0
        %739 = vmatmul.mubr.bf16.gmra.mrb[0].mxu0 %v618
        %v740 = vpop.f32.mrb[0].mxu0
        %v741 = vadd.f32 %v625, %v740
        %v742 = vpop.f32.mrb[0].mxu0
        %v743 = vpop.f32.mrb[0].mxu0
        %v744 = vadd.f32 %v625, %v743
        %v745 = vpop.f32.mrb[0].mxu0
        %746 = vmatprep.mubr.bf16.mxu0 0
        %747 = vmatmul.mubr.bf16.gmra.mrb[0].mxu0 %v619
        %v748 = vpop.f32.mrb[0].mxu0
        %v749 = vadd.f32 %v625, %v748
        %v750 = vpop.f32.mrb[0].mxu0
        %v751 = vpop.f32.mrb[0].mxu0
        %v752 = vadd.f32 %v625, %v751
        %v753 = vpop.f32.mrb[0].mxu0
        %754 = vmatprep.mubr.bf16.mxu0 0
        %755 = vmatmul.mubr.bf16.gmra.mrb[0].mxu0 %v620
        %v756 = vpop.f32.mrb[0].mxu0
        %v757 = vadd.f32 %v625, %v756
        %v758 = vpop.f32.mrb[0].mxu0
        %v759 = vpop.f32.mrb[0].mxu0
        %v760 = vadd.f32 %v625, %v759
        %v761 = vpop.f32.mrb[0].mxu0
        %762 = vmatprep.mubr.bf16.mxu0 0
        %763 = vmatmul.mubr.bf16.gmra.mrb[0].mxu0 %v621
        %v764 = vpop.f32.mrb[0].mxu0
        %v765 = vadd.f32 %v625, %v764
        %v766 = vpop.f32.mrb[0].mxu0
        %v767 = vpop.f32.mrb[0].mxu0
        %v768 = vadd.f32 %v625, %v767
        %v769 = vpop.f32.mrb[0].mxu0
        %770 = vdwg.mxu0
        %771 = vmax.xlane.f32.xlu0 %v709
        %v772 = vpop.xlane.xlu0 %771
        %773 = vmax.xlane.f32.xlu0 %v712
        %v774 = vpop.xlane.xlu0 %773
        %775 = vmax.xlane.f32.xlu0 %v717
        %v776 = vpop.xlane.xlu0 %775
        %777 = vmax.xlane.f32.xlu0 %v720
        %v778 = vpop.xlane.xlu0 %777
        %779 = vmax.xlane.f32.xlu0 %v725
        %v780 = vpop.xlane.xlu0 %779
        %781 = vmax.xlane.f32.xlu0 %v728
        %v782 = vpop.xlane.xlu0 %781
        %783 = vmax.xlane.f32.xlu0 %v733
        %v784 = vpop.xlane.xlu0 %783
        %785 = vmax.xlane.f32.xlu0 %v736
        %v786 = vpop.xlane.xlu0 %785
        %787 = vmax.xlane.f32.xlu0 %v741
        %v788 = vpop.xlane.xlu0 %787
        %789 = vmax.xlane.f32.xlu0 %v744
        %v790 = vpop.xlane.xlu0 %789
        %791 = vmax.xlane.f32.xlu0 %v749
        %v792 = vpop.xlane.xlu0 %791
        %793 = vmax.xlane.f32.xlu0 %v752
        %v794 = vpop.xlane.xlu0 %793
        %795 = vmax.xlane.f32.xlu0 %v757
        %v796 = vpop.xlane.xlu0 %795
        %797 = vmax.xlane.f32.xlu0 %v760
        %v798 = vpop.xlane.xlu0 %797
        %799 = vmax.xlane.f32.xlu0 %v765
        %v800 = vpop.xlane.xlu0 %799
        %801 = vmax.xlane.f32.xlu0 %v768
        %v802 = vpop.xlane.xlu0 %801
        %v803 = vsub.f32 %v709, %v772
        %v804 = vsub.f32 %v712, %v774
        %v805 = vsub.f32 %v717, %v776
        %v806 = vsub.f32 %v720, %v778
        %v807 = vsub.f32 %v725, %v780
        %v808 = vsub.f32 %v728, %v782
        %v809 = vsub.f32 %v733, %v784
        %v810 = vsub.f32 %v736, %v786
        %v811 = vsub.f32 %v741, %v788
        %v812 = vsub.f32 %v744, %v790
        %v813 = vsub.f32 %v749, %v792
        %v814 = vsub.f32 %v752, %v794
        %v815 = vsub.f32 %v757, %v796
        %v816 = vsub.f32 %v760, %v798
        %v817 = vsub.f32 %v765, %v800
        %v818 = vsub.f32 %v768, %v802
        %v819 = vmul.f32 %v803, 1.442695
        %v820 = vpow.pop %v819
        %v821 = vmul.f32 %v804, 1.442695
        %v822 = vpow.pop %v821
        %v823 = vmul.f32 %v805, 1.442695
        %v824 = vpow.pop %v823
        %v825 = vmul.f32 %v806, 1.442695
        %v826 = vpow.pop %v825
        %v827 = vmul.f32 %v807, 1.442695
        %v828 = vpow.pop %v827
        %v829 = vmul.f32 %v808, 1.442695
        %v830 = vpow.pop %v829
        %v831 = vmul.f32 %v809, 1.442695
        %v832 = vpow.pop %v831
        %v833 = vmul.f32 %v810, 1.442695
        %v834 = vpow.pop %v833
        %v835 = vmul.f32 %v811, 1.442695
        %v836 = vpow.pop %v835
        %v837 = vmul.f32 %v812, 1.442695
        %v838 = vpow.pop %v837
        %v839 = vmul.f32 %v813, 1.442695
        %v840 = vpow.pop %v839
        %v841 = vmul.f32 %v814, 1.442695
        %v842 = vpow.pop %v841
        %v843 = vmul.f32 %v815, 1.442695
        %v844 = vpow.pop %v843
        %v845 = vmul.f32 %v816, 1.442695
        %v846 = vpow.pop %v845
        %v847 = vmul.f32 %v817, 1.442695
        %v848 = vpow.pop %v847
        %v849 = vmul.f32 %v818, 1.442695
        %v850 = vpow.pop %v849
        %851 = vadd.xlane.f32.xlu0 %v820
        %v852 = vpop.xlane.xlu0 %851
        %853 = vadd.xlane.f32.xlu0 %v822
        %v854 = vpop.xlane.xlu0 %853
        %855 = vadd.xlane.f32.xlu0 %v824
        %v856 = vpop.xlane.xlu0 %855
        %857 = vadd.xlane.f32.xlu0 %v826
        %v858 = vpop.xlane.xlu0 %857
        %859 = vadd.xlane.f32.xlu0 %v828
        %v860 = vpop.xlane.xlu0 %859
        %861 = vadd.xlane.f32.xlu0 %v830
        %v862 = vpop.xlane.xlu0 %861
        %863 = vadd.xlane.f32.xlu0 %v832
        %v864 = vpop.xlane.xlu0 %863
        %865 = vadd.xlane.f32.xlu0 %v834
        %v866 = vpop.xlane.xlu0 %865
        %867 = vadd.xlane.f32.xlu0 %v836
        %v868 = vpop.xlane.xlu0 %867
        %869 = vadd.xlane.f32.xlu0 %v838
        %v870 = vpop.xlane.xlu0 %869
        %871 = vadd.xlane.f32.xlu0 %v840
        %v872 = vpop.xlane.xlu0 %871
        %873 = vadd.xlane.f32.xlu0 %v842
        %v874 = vpop.xlane.xlu0 %873
        %875 = vadd.xlane.f32.xlu0 %v844
        %v876 = vpop.xlane.xlu0 %875
        %877 = vadd.xlane.f32.xlu0 %v846
        %v878 = vpop.xlane.xlu0 %877
        %879 = vadd.xlane.f32.xlu0 %v848
        %v880 = vpop.xlane.xlu0 %879
        %881 = vadd.xlane.f32.xlu0 %v850
        %v882 = vpop.xlane.xlu0 %881
        %v883 = vrcp.pop %v852
        %v884 = vrcp.pop %v854
        %v885 = vrcp.pop %v856
        %v886 = vrcp.pop %v858
        %v887 = vrcp.pop %v860
        %v888 = vrcp.pop %v862
        %v889 = vrcp.pop %v864
        %v890 = vrcp.pop %v866
        %v891 = vrcp.pop %v868
        %v892 = vrcp.pop %v870
        %v893 = vrcp.pop %v872
        %v894 = vrcp.pop %v874
        %v895 = vrcp.pop %v876
        %v896 = vrcp.pop %v878
        %v897 = vrcp.pop %v880
        %v898 = vrcp.pop %v882
        %v899 = vmul.f32 %v820, %v883
        %v900 = vmul.f32 %v822, %v884
        %v901 = vmul.f32 %v824, %v885
        %v902 = vmul.f32 %v826, %v886
        %v903 = vmul.f32 %v828, %v887
        %v904 = vmul.f32 %v830, %v888
        %v905 = vmul.f32 %v832, %v889
        %v906 = vmul.f32 %v834, %v890
        %v907 = vmul.f32 %v836, %v891
        %v908 = vmul.f32 %v838, %v892
        %v909 = vmul.f32 %v840, %v893
        %v910 = vmul.f32 %v842, %v894
        %v911 = vmul.f32 %v844, %v895
        %v912 = vmul.f32 %v846, %v896
        %v913 = vmul.f32 %v848, %v897
        %v914 = vmul.f32 %v850, %v898
        %v915 = vpack.c.bf16 %v900, %v899
        %v916 = vpack.c.bf16 %v902, %v901
        %v917 = vpack.c.bf16 %v904, %v903
        %v918 = vpack.c.bf16 %v906, %v905
        %v919 = vpack.c.bf16 %v908, %v907
        %v920 = vpack.c.bf16 %v910, %v909
        %v921 = vpack.c.bf16 %v912, %v911
        %v922 = vpack.c.bf16 %v914, %v913
        %v923 = vld [vmem:[#allocation8] sm:$0xf]
        %v924 = vld [vmem:[#allocation8 + $0x4] sm:$0xf]
        %v925 = vld [vmem:[#allocation8 + $0x8] sm:$0xf]
        %v926 = vld [vmem:[#allocation8 + $0xc] sm:$0xf]
        %v927 = vld [vmem:[#allocation8 + $0x10] sm:$0xf]
        %v928 = vld [vmem:[#allocation8 + $0x14] sm:$0xf]
        %v929 = vld [vmem:[#allocation8 + $0x18] sm:$0xf]
        %v930 = vld [vmem:[#allocation8 + $0x1c] sm:$0xf]
        %v931 = vld [vmem:[#allocation8 + $0x20] sm:$0xf]
        %v932 = vld [vmem:[#allocation8 + $0x24] sm:$0xf]
        %v933 = vld [vmem:[#allocation8 + $0x28] sm:$0xf]
        %v934 = vld [vmem:[#allocation8 + $0x2c] sm:$0xf]
        %v935 = vld [vmem:[#allocation8 + $0x30] sm:$0xf]
        %v936 = vld [vmem:[#allocation8 + $0x34] sm:$0xf]
        %v937 = vld [vmem:[#allocation8 + $0x38] sm:$0xf]
        %v938 = vld [vmem:[#allocation8 + $0x3c] sm:$0xf]
        %s939 = scalar_lea.vmem [#allocation7], 64
        %v940 = vld [vmem:[%s939] sm:$0xf]
        %v941 = vld [vmem:[%s939 + $0x4] sm:$0xf]
        %v942 = vld [vmem:[%s939 + $0x8] sm:$0xf]
        %v943 = vld [vmem:[%s939 + $0xc] sm:$0xf]
        %v944 = vld [vmem:[%s939 + $0x10] sm:$0xf]
        %v945 = vld [vmem:[%s939 + $0x14] sm:$0xf]
        %v946 = vld [vmem:[%s939 + $0x18] sm:$0xf]
        %v947 = vld [vmem:[%s939 + $0x1c] sm:$0xf]
        %v948 = vld [vmem:[%s939 + $0x20] sm:$0xf]
        %v949 = vld [vmem:[%s939 + $0x24] sm:$0xf]
        %v950 = vld [vmem:[%s939 + $0x28] sm:$0xf]
        %v951 = vld [vmem:[%s939 + $0x2c] sm:$0xf]
        %v952 = vld [vmem:[%s939 + $0x30] sm:$0xf]
        %v953 = vld [vmem:[%s939 + $0x34] sm:$0xf]
        %v954 = vld [vmem:[%s939 + $0x38] sm:$0xf]
        %v955 = vld [vmem:[%s939 + $0x3c] sm:$0xf]
        %v972 = vunpack.c.l.b16 %v940
        %v973 = vunpack.c.l.b16 %v941
        %v974 = vunpack.c.l.b16 %v942
        %v975 = vunpack.c.l.b16 %v943
        %v976 = vunpack.c.l.b16 %v944
        %v977 = vunpack.c.l.b16 %v945
        %v978 = vunpack.c.l.b16 %v946
        %v979 = vunpack.c.l.b16 %v947
        %v980 = vunpack.c.l.b16 %v948
        %v981 = vunpack.c.l.b16 %v949
        %v982 = vunpack.c.l.b16 %v950
        %v983 = vunpack.c.l.b16 %v951
        %v984 = vunpack.c.l.b16 %v952
        %v985 = vunpack.c.l.b16 %v953
        %v986 = vunpack.c.l.b16 %v954
        %v987 = vunpack.c.l.b16 %v955
        %v988 = vpack.c.b16 %v973, %v972
        %v989 = vpack.c.b16 %v975, %v974
        %v990 = vpack.c.b16 %v977, %v976
        %v991 = vpack.c.b16 %v979, %v978
        %v992 = vpack.c.b16 %v981, %v980
        %v993 = vpack.c.b16 %v983, %v982
        %v994 = vpack.c.b16 %v985, %v984
        %v995 = vpack.c.b16 %v987, %v986
        %1004 = vmatprep.subr.bf16.mxu0 0
        %1005 = vmatpush1.bf16.msra.mxu0 %v988
        %1006 = vmatprep.subr.bf16.mxu0 0
        %1007 = vmatpush1.bf16.msra.mxu0 %v989
        %1008 = vmatprep.subr.bf16.mxu0 0
        %1009 = vmatpush1.bf16.msra.mxu0 %v990
        %1010 = vmatprep.subr.bf16.mxu0 0
        %1011 = vmatpush1.bf16.msra.mxu0 %v991
        %1012 = vmatprep.subr.bf16.mxu0 0
        %1013 = vmatpush1.bf16.msra.mxu0 %v992
        %1014 = vmatprep.subr.bf16.mxu0 0
        %1015 = vmatpush1.bf16.msra.mxu0 %v993
        %1016 = vmatprep.subr.bf16.mxu0 0
        %1017 = vmatpush1.bf16.msra.mxu0 %v994
        %1018 = vmatprep.subr.bf16.mxu0 0
        %1019 = vmatpush1.bf16.msra.mxu0 %v995
        %1020 = vmatprep.subr.bf16.mxu0 0
        %1021 = vmatpush1.bf16.msra.mxu0 0
        %1022 = vmatprep.subr.bf16.mxu0 0
        %1023 = vmatpush1.bf16.msra.mxu0 0
        %1024 = vmatprep.subr.bf16.mxu0 0
        %1025 = vmatpush1.bf16.msra.mxu0 0
        %1026 = vmatprep.subr.bf16.mxu0 0
        %1027 = vmatpush1.bf16.msra.mxu0 0
        %1028 = vmatprep.subr.bf16.mxu0 0
        %1029 = vmatpush1.bf16.msra.mxu0 0
        %1030 = vmatprep.subr.bf16.mxu0 0
        %1031 = vmatpush1.bf16.msra.mxu0 0
        %1032 = vmatprep.subr.bf16.mxu0 0
        %1033 = vmatpush1.bf16.msra.mxu0 0
        %1034 = vmatprep.subr.bf16.mxu0 0
        %1035 = vmatpush1.bf16.msra.mxu0 0
        %1036 = vmatprep.mubr.bf16.mxu0 0
        %1037 = vmatmul.mubr.bf16.gmra.mrb[0].mxu0 %v453
        %v1038 = vpop.f32.mrb[0].mxu0
        %v1039 = vadd.f32 0.0, %v1038
        %v1040 = vpop.f32.mrb[0].mxu0
        %v1041 = vpop.f32.mrb[0].mxu0
        %v1042 = vadd.f32 0.0, %v1041
        %v1043 = vpop.f32.mrb[0].mxu0
        %1044 = vmatprep.mubr.bf16.mxu0 0
        %1045 = vmatmul.mubr.bf16.gmra.mrb[0].mxu0 %v454
        %v1046 = vpop.f32.mrb[0].mxu0
        %v1047 = vadd.f32 0.0, %v1046
        %v1048 = vpop.f32.mrb[0].mxu0
        %v1049 = vpop.f32.mrb[0].mxu0
        %v1050 = vadd.f32 0.0, %v1049
        %v1051 = vpop.f32.mrb[0].mxu0
        %1052 = vmatprep.mubr.bf16.mxu0 0
        %1053 = vmatmul.mubr.bf16.gmra.mrb[0].mxu0 %v455
        %v1054 = vpop.f32.mrb[0].mxu0
        %v1055 = vadd.f32 0.0, %v1054
        %v1056 = vpop.f32.mrb[0].mxu0
        %v1057 = vpop.f32.mrb[0].mxu0
        %v1058 = vadd.f32 0.0, %v1057
        %v1059 = vpop.f32.mrb[0].mxu0
        %1060 = vmatprep.mubr.bf16.mxu0 0
        %1061 = vmatmul.mubr.bf16.gmra.mrb[0].mxu0 %v456
        %v1062 = vpop.f32.mrb[0].mxu0
        %v1063 = vadd.f32 0.0, %v1062
        %v1064 = vpop.f32.mrb[0].mxu0
        %v1065 = vpop.f32.mrb[0].mxu0
        %v1066 = vadd.f32 0.0, %v1065
        %v1067 = vpop.f32.mrb[0].mxu0
        %1068 = vmatprep.mubr.bf16.mxu0 0
        %1069 = vmatmul.mubr.bf16.gmra.mrb[0].mxu0 %v457
        %v1070 = vpop.f32.mrb[0].mxu0
        %v1071 = vadd.f32 0.0, %v1070
        %v1072 = vpop.f32.mrb[0].mxu0
        %v1073 = vpop.f32.mrb[0].mxu0
        %v1074 = vadd.f32 0.0, %v1073
        %v1075 = vpop.f32.mrb[0].mxu0
        %1076 = vmatprep.mubr.bf16.mxu0 0
        %1077 = vmatmul.mubr.bf16.gmra.mrb[0].mxu0 %v458
        %v1078 = vpop.f32.mrb[0].mxu0
        %v1079 = vadd.f32 0.0, %v1078
        %v1080 = vpop.f32.mrb[0].mxu0
        %v1081 = vpop.f32.mrb[0].mxu0
        %v1082 = vadd.f32 0.0, %v1081
        %v1083 = vpop.f32.mrb[0].mxu0
        %1084 = vmatprep.mubr.bf16.mxu0 0
        %1085 = vmatmul.mubr.bf16.gmra.mrb[0].mxu0 %v459
        %v1086 = vpop.f32.mrb[0].mxu0
        %v1087 = vadd.f32 0.0, %v1086
        %v1088 = vpop.f32.mrb[0].mxu0
        %v1089 = vpop.f32.mrb[0].mxu0
        %v1090 = vadd.f32 0.0, %v1089
        %v1091 = vpop.f32.mrb[0].mxu0
        %1092 = vmatprep.mubr.bf16.mxu0 0
        %1093 = vmatmul.mubr.bf16.gmra.mrb[0].mxu0 %v460
        %v1094 = vpop.f32.mrb[0].mxu0
        %v1095 = vadd.f32 0.0, %v1094
        %v1096 = vpop.f32.mrb[0].mxu0
        %v1097 = vpop.f32.mrb[0].mxu0
        %v1098 = vadd.f32 0.0, %v1097
        %v1099 = vpop.f32.mrb[0].mxu0
        %1100 = vdwg.mxu0
        %v1101 = vpack.c.bf16 %v1042, %v1039
        %v1102 = vpack.c.bf16 %v1050, %v1047
        %v1103 = vpack.c.bf16 %v1058, %v1055
        %v1104 = vpack.c.bf16 %v1066, %v1063
        %v1105 = vpack.c.bf16 %v1074, %v1071
        %v1106 = vpack.c.bf16 %v1082, %v1079
        %v1107 = vpack.c.bf16 %v1090, %v1087
        %v1108 = vpack.c.bf16 %v1098, %v1095
        %v1109 = vlaneseq
        %v1110 = vshrl.u32 %v1109, 7
        %v1111 = vsub.s32 1, %v1110
        %v1112 = vrot.slane %v404, %v1111
        %1113 = vmatprep.subr.bf16.mxu0 0
        %1114 = vmatpush1.bf16.msra.mxu0 %v658
        %1115 = vmatprep.subr.bf16.mxu0 0
        %1116 = vmatpush1.bf16.msra.mxu0 %v659
        %1117 = vmatprep.subr.bf16.mxu0 0
        %1118 = vmatpush1.bf16.msra.mxu0 %v660
        %1119 = vmatprep.subr.bf16.mxu0 0
        %1120 = vmatpush1.bf16.msra.mxu0 %v661
        %1121 = vmatprep.subr.bf16.mxu0 0
        %1122 = vmatpush1.bf16.msra.mxu0 %v662
        %1123 = vmatprep.subr.bf16.mxu0 0
        %1124 = vmatpush1.bf16.msra.mxu0 %v663
        %1125 = vmatprep.subr.bf16.mxu0 0
        %1126 = vmatpush1.bf16.msra.mxu0 %v664
        %1127 = vmatprep.subr.bf16.mxu0 0
        %1128 = vmatpush1.bf16.msra.mxu0 %v665
        %1129 = vmatprep.subr.bf16.mxu0 0
        %1130 = vmatpush1.bf16.msra.mxu0 0
        %1131 = vmatprep.subr.bf16.mxu0 0
        %1132 = vmatpush1.bf16.msra.mxu0 0
        %1133 = vmatprep.subr.bf16.mxu0 0
        %1134 = vmatpush1.bf16.msra.mxu0 0
        %1135 = vmatprep.subr.bf16.mxu0 0
        %1136 = vmatpush1.bf16.msra.mxu0 0
        %1137 = vmatprep.subr.bf16.mxu0 0
        %1138 = vmatpush1.bf16.msra.mxu0 0
        %1139 = vmatprep.subr.bf16.mxu0 0
        %1140 = vmatpush1.bf16.msra.mxu0 0
        %1141 = vmatprep.subr.bf16.mxu0 0
        %1142 = vmatpush1.bf16.msra.mxu0 0
        %1143 = vmatprep.subr.bf16.mxu0 0
        %1144 = vmatpush1.bf16.msra.mxu0 0
        %1145 = vmatprep.mubr.bf16.mxu0 0
        %1146 = vmatmul.mubr.bf16.gmra.mrb[0].mxu0 %v1101
        %v1147 = vpop.f32.mrb[0].mxu0
        %v1148 = vadd.f32 %v1112, %v1147
        %v1149 = vpop.f32.mrb[0].mxu0
        %v1150 = vpop.f32.mrb[0].mxu0
        %v1151 = vadd.f32 %v1112, %v1150
        %v1152 = vpop.f32.mrb[0].mxu0
        %1153 = vmatprep.mubr.bf16.mxu0 0
        %1154 = vmatmul.mubr.bf16.gmra.mrb[0].mxu0 %v1102
        %v1155 = vpop.f32.mrb[0].mxu0
        %v1156 = vadd.f32 %v1112, %v1155
        %v1157 = vpop.f32.mrb[0].mxu0
        %v1158 = vpop.f32.mrb[0].mxu0
        %v1159 = vadd.f32 %v1112, %v1158
        %v1160 = vpop.f32.mrb[0].mxu0
        %1161 = vmatprep.mubr.bf16.mxu0 0
        %1162 = vmatmul.mubr.bf16.gmra.mrb[0].mxu0 %v1103
        %v1163 = vpop.f32.mrb[0].mxu0
        %v1164 = vadd.f32 %v1112, %v1163
        %v1165 = vpop.f32.mrb[0].mxu0
        %v1166 = vpop.f32.mrb[0].mxu0
        %v1167 = vadd.f32 %v1112, %v1166
        %v1168 = vpop.f32.mrb[0].mxu0
        %1169 = vmatprep.mubr.bf16.mxu0 0
        %1170 = vmatmul.mubr.bf16.gmra.mrb[0].mxu0 %v1104
        %v1171 = vpop.f32.mrb[0].mxu0
        %v1172 = vadd.f32 %v1112, %v1171
        %v1173 = vpop.f32.mrb[0].mxu0
        %v1174 = vpop.f32.mrb[0].mxu0
        %v1175 = vadd.f32 %v1112, %v1174
        %v1176 = vpop.f32.mrb[0].mxu0
        %1177 = vmatprep.mubr.bf16.mxu0 0
        %1178 = vmatmul.mubr.bf16.gmra.mrb[0].mxu0 %v1105
        %v1179 = vpop.f32.mrb[0].mxu0
        %v1180 = vadd.f32 %v1112, %v1179
        %v1181 = vpop.f32.mrb[0].mxu0
        %v1182 = vpop.f32.mrb[0].mxu0
        %v1183 = vadd.f32 %v1112, %v1182
        %v1184 = vpop.f32.mrb[0].mxu0
        %1185 = vmatprep.mubr.bf16.mxu0 0
        %1186 = vmatmul.mubr.bf16.gmra.mrb[0].mxu0 %v1106
        %v1187 = vpop.f32.mrb[0].mxu0
        %v1188 = vadd.f32 %v1112, %v1187
        %v1189 = vpop.f32.mrb[0].mxu0
        %v1190 = vpop.f32.mrb[0].mxu0
        %v1191 = vadd.f32 %v1112, %v1190
        %v1192 = vpop.f32.mrb[0].mxu0
        %1193 = vmatprep.mubr.bf16.mxu0 0
        %1194 = vmatmul.mubr.bf16.gmra.mrb[0].mxu0 %v1107
        %v1195 = vpop.f32.mrb[0].mxu0
        %v1196 = vadd.f32 %v1112, %v1195
        %v1197 = vpop.f32.mrb[0].mxu0
        %v1198 = vpop.f32.mrb[0].mxu0
        %v1199 = vadd.f32 %v1112, %v1198
        %v1200 = vpop.f32.mrb[0].mxu0
        %1201 = vmatprep.mubr.bf16.mxu0 0
        %1202 = vmatmul.mubr.bf16.gmra.mrb[0].mxu0 %v1108
        %v1203 = vpop.f32.mrb[0].mxu0
        %v1204 = vadd.f32 %v1112, %v1203
        %v1205 = vpop.f32.mrb[0].mxu0
        %v1206 = vpop.f32.mrb[0].mxu0
        %v1207 = vadd.f32 %v1112, %v1206
        %v1208 = vpop.f32.mrb[0].mxu0
        %1209 = vdwg.mxu0
        %1210 = vmax.xlane.f32.xlu0 %v1148
        %v1211 = vpop.xlane.xlu0 %1210
        %1212 = vmax.xlane.f32.xlu0 %v1151
        %v1213 = vpop.xlane.xlu0 %1212
        %1214 = vmax.xlane.f32.xlu0 %v1156
        %v1215 = vpop.xlane.xlu0 %1214
        %1216 = vmax.xlane.f32.xlu0 %v1159
        %v1217 = vpop.xlane.xlu0 %1216
        %1218 = vmax.xlane.f32.xlu0 %v1164
        %v1219 = vpop.xlane.xlu0 %1218
        %1220 = vmax.xlane.f32.xlu0 %v1167
        %v1221 = vpop.xlane.xlu0 %1220
        %1222 = vmax.xlane.f32.xlu0 %v1172
        %v1223 = vpop.xlane.xlu0 %1222
        %1224 = vmax.xlane.f32.xlu0 %v1175
        %v1225 = vpop.xlane.xlu0 %1224
        %1226 = vmax.xlane.f32.xlu0 %v1180
        %v1227 = vpop.xlane.xlu0 %1226
        %1228 = vmax.xlane.f32.xlu0 %v1183
        %v1229 = vpop.xlane.xlu0 %1228
        %1230 = vmax.xlane.f32.xlu0 %v1188
        %v1231 = vpop.xlane.xlu0 %1230
        %1232 = vmax.xlane.f32.xlu0 %v1191
        %v1233 = vpop.xlane.xlu0 %1232
        %1234 = vmax.xlane.f32.xlu0 %v1196
        %v1235 = vpop.xlane.xlu0 %1234
        %1236 = vmax.xlane.f32.xlu0 %v1199
        %v1237 = vpop.xlane.xlu0 %1236
        %1238 = vmax.xlane.f32.xlu0 %v1204
        %v1239 = vpop.xlane.xlu0 %1238
        %1240 = vmax.xlane.f32.xlu0 %v1207
        %v1241 = vpop.xlane.xlu0 %1240
        %v1242 = vsub.f32 %v1148, %v1211
        %v1243 = vsub.f32 %v1151, %v1213
        %v1244 = vsub.f32 %v1156, %v1215
        %v1245 = vsub.f32 %v1159, %v1217
        %v1246 = vsub.f32 %v1164, %v1219
        %v1247 = vsub.f32 %v1167, %v1221
        %v1248 = vsub.f32 %v1172, %v1223
        %v1249 = vsub.f32 %v1175, %v1225
        %v1250 = vsub.f32 %v1180, %v1227
        %v1251 = vsub.f32 %v1183, %v1229
        %v1252 = vsub.f32 %v1188, %v1231
        %v1253 = vsub.f32 %v1191, %v1233
        %v1254 = vsub.f32 %v1196, %v1235
        %v1255 = vsub.f32 %v1199, %v1237
        %v1256 = vsub.f32 %v1204, %v1239
        %v1257 = vsub.f32 %v1207, %v1241
        %v1258 = vmul.f32 %v1242, 1.442695
        %v1259 = vpow.pop %v1258
        %v1260 = vmul.f32 %v1243, 1.442695
        %v1261 = vpow.pop %v1260
        %v1262 = vmul.f32 %v1244, 1.442695
        %v1263 = vpow.pop %v1262
        %v1264 = vmul.f32 %v1245, 1.442695
        %v1265 = vpow.pop %v1264
        %v1266 = vmul.f32 %v1246, 1.442695
        %v1267 = vpow.pop %v1266
        %v1268 = vmul.f32 %v1247, 1.442695
        %v1269 = vpow.pop %v1268
        %v1270 = vmul.f32 %v1248, 1.442695
        %v1271 = vpow.pop %v1270
        %v1272 = vmul.f32 %v1249, 1.442695
        %v1273 = vpow.pop %v1272
        %v1274 = vmul.f32 %v1250, 1.442695
        %v1275 = vpow.pop %v1274
        %v1276 = vmul.f32 %v1251, 1.442695
        %v1277 = vpow.pop %v1276
        %v1278 = vmul.f32 %v1252, 1.442695
        %v1279 = vpow.pop %v1278
        %v1280 = vmul.f32 %v1253, 1.442695
        %v1281 = vpow.pop %v1280
        %v1282 = vmul.f32 %v1254, 1.442695
        %v1283 = vpow.pop %v1282
        %v1284 = vmul.f32 %v1255, 1.442695
        %v1285 = vpow.pop %v1284
        %v1286 = vmul.f32 %v1256, 1.442695
        %v1287 = vpow.pop %v1286
        %v1288 = vmul.f32 %v1257, 1.442695
        %v1289 = vpow.pop %v1288
        %1290 = vadd.xlane.f32.xlu0 %v1259
        %v1291 = vpop.xlane.xlu0 %1290
        %1292 = vadd.xlane.f32.xlu0 %v1261
        %v1293 = vpop.xlane.xlu0 %1292
        %1294 = vadd.xlane.f32.xlu0 %v1263
        %v1295 = vpop.xlane.xlu0 %1294
        %1296 = vadd.xlane.f32.xlu0 %v1265
        %v1297 = vpop.xlane.xlu0 %1296
        %1298 = vadd.xlane.f32.xlu0 %v1267
        %v1299 = vpop.xlane.xlu0 %1298
        %1300 = vadd.xlane.f32.xlu0 %v1269
        %v1301 = vpop.xlane.xlu0 %1300
        %1302 = vadd.xlane.f32.xlu0 %v1271
        %v1303 = vpop.xlane.xlu0 %1302
        %1304 = vadd.xlane.f32.xlu0 %v1273
        %v1305 = vpop.xlane.xlu0 %1304
        %1306 = vadd.xlane.f32.xlu0 %v1275
        %v1307 = vpop.xlane.xlu0 %1306
        %1308 = vadd.xlane.f32.xlu0 %v1277
        %v1309 = vpop.xlane.xlu0 %1308
        %1310 = vadd.xlane.f32.xlu0 %v1279
        %v1311 = vpop.xlane.xlu0 %1310
        %1312 = vadd.xlane.f32.xlu0 %v1281
        %v1313 = vpop.xlane.xlu0 %1312
        %1314 = vadd.xlane.f32.xlu0 %v1283
        %v1315 = vpop.xlane.xlu0 %1314
        %1316 = vadd.xlane.f32.xlu0 %v1285
        %v1317 = vpop.xlane.xlu0 %1316
        %1318 = vadd.xlane.f32.xlu0 %v1287
        %v1319 = vpop.xlane.xlu0 %1318
        %1320 = vadd.xlane.f32.xlu0 %v1289
        %v1321 = vpop.xlane.xlu0 %1320
        %v1322 = vrcp.pop %v1291
        %v1323 = vrcp.pop %v1293
        %v1324 = vrcp.pop %v1295
        %v1325 = vrcp.pop %v1297
        %v1326 = vrcp.pop %v1299
        %v1327 = vrcp.pop %v1301
        %v1328 = vrcp.pop %v1303
        %v1329 = vrcp.pop %v1305
        %v1330 = vrcp.pop %v1307
        %v1331 = vrcp.pop %v1309
        %v1332 = vrcp.pop %v1311
        %v1333 = vrcp.pop %v1313
        %v1334 = vrcp.pop %v1315
        %v1335 = vrcp.pop %v1317
        %v1336 = vrcp.pop %v1319
        %v1337 = vrcp.pop %v1321
        %v1338 = vmul.f32 %v1259, %v1322
        %v1339 = vmul.f32 %v1261, %v1323
        %v1340 = vmul.f32 %v1263, %v1324
        %v1341 = vmul.f32 %v1265, %v1325
        %v1342 = vmul.f32 %v1267, %v1326
        %v1343 = vmul.f32 %v1269, %v1327
        %v1344 = vmul.f32 %v1271, %v1328
        %v1345 = vmul.f32 %v1273, %v1329
        %v1346 = vmul.f32 %v1275, %v1330
        %v1347 = vmul.f32 %v1277, %v1331
        %v1348 = vmul.f32 %v1279, %v1332
        %v1349 = vmul.f32 %v1281, %v1333
        %v1350 = vmul.f32 %v1283, %v1334
        %v1351 = vmul.f32 %v1285, %v1335
        %v1352 = vmul.f32 %v1287, %v1336
        %v1353 = vmul.f32 %v1289, %v1337
        %v1354 = vpack.c.bf16 %v1339, %v1338
        %v1355 = vpack.c.bf16 %v1341, %v1340
        %v1356 = vpack.c.bf16 %v1343, %v1342
        %v1357 = vpack.c.bf16 %v1345, %v1344
        %v1358 = vpack.c.bf16 %v1347, %v1346
        %v1359 = vpack.c.bf16 %v1349, %v1348
        %v1360 = vpack.c.bf16 %v1351, %v1350
        %v1361 = vpack.c.bf16 %v1353, %v1352
        %s1362 = scalar_lea.vmem [#allocation8], 64
        %v1363 = vld [vmem:[%s1362] sm:$0xf]
        %v1364 = vld [vmem:[%s1362 + $0x4] sm:$0xf]
        %v1365 = vld [vmem:[%s1362 + $0x8] sm:$0xf]
        %v1366 = vld [vmem:[%s1362 + $0xc] sm:$0xf]
        %v1367 = vld [vmem:[%s1362 + $0x10] sm:$0xf]
        %v1368 = vld [vmem:[%s1362 + $0x14] sm:$0xf]
        %v1369 = vld [vmem:[%s1362 + $0x18] sm:$0xf]
        %v1370 = vld [vmem:[%s1362 + $0x1c] sm:$0xf]
        %v1371 = vld [vmem:[%s1362 + $0x20] sm:$0xf]
        %v1372 = vld [vmem:[%s1362 + $0x24] sm:$0xf]
        %v1373 = vld [vmem:[%s1362 + $0x28] sm:$0xf]
        %v1374 = vld [vmem:[%s1362 + $0x2c] sm:$0xf]
        %v1375 = vld [vmem:[%s1362 + $0x30] sm:$0xf]
        %v1376 = vld [vmem:[%s1362 + $0x34] sm:$0xf]
        %v1377 = vld [vmem:[%s1362 + $0x38] sm:$0xf]
        %v1378 = vld [vmem:[%s1362 + $0x3c] sm:$0xf]
        %v1395 = vunpack.c.l.b16 %v1363
        %v1396 = vunpack.c.l.b16 %v1364
        %v1397 = vunpack.c.l.b16 %v1365
        %v1398 = vunpack.c.l.b16 %v1366
        %v1399 = vunpack.c.l.b16 %v1367
        %v1400 = vunpack.c.l.b16 %v1368
        %v1401 = vunpack.c.l.b16 %v1369
        %v1402 = vunpack.c.l.b16 %v1370
        %v1403 = vunpack.c.l.b16 %v1371
        %v1404 = vunpack.c.l.b16 %v1372
        %v1405 = vunpack.c.l.b16 %v1373
        %v1406 = vunpack.c.l.b16 %v1374
        %v1407 = vunpack.c.l.b16 %v1375
        %v1408 = vunpack.c.l.b16 %v1376
        %v1409 = vunpack.c.l.b16 %v1377
        %v1410 = vunpack.c.l.b16 %v1378
        %v1411 = vpack.c.b16 %v1396, %v1395
        %v1412 = vpack.c.b16 %v1398, %v1397
        %v1413 = vpack.c.b16 %v1400, %v1399
        %v1414 = vpack.c.b16 %v1402, %v1401
        %v1415 = vpack.c.b16 %v1404, %v1403
        %v1416 = vpack.c.b16 %v1406, %v1405
        %v1417 = vpack.c.b16 %v1408, %v1407
        %v1418 = vpack.c.b16 %v1410, %v1409
        %1427 = vmatprep.subr.bf16.mxu0 0
        %1428 = vmatpush1.bf16.msra.mxu0 %v1411
        %1429 = vmatprep.subr.bf16.mxu0 0
        %1430 = vmatpush1.bf16.msra.mxu0 %v1412
        %1431 = vmatprep.subr.bf16.mxu0 0
        %1432 = vmatpush1.bf16.msra.mxu0 %v1413
        %1433 = vmatprep.subr.bf16.mxu0 0
        %1434 = vmatpush1.bf16.msra.mxu0 %v1414
        %1435 = vmatprep.subr.bf16.mxu0 0
        %1436 = vmatpush1.bf16.msra.mxu0 %v1415
        %1437 = vmatprep.subr.bf16.mxu0 0
        %1438 = vmatpush1.bf16.msra.mxu0 %v1416
        %1439 = vmatprep.subr.bf16.mxu0 0
        %1440 = vmatpush1.bf16.msra.mxu0 %v1417
        %1441 = vmatprep.subr.bf16.mxu0 0
        %1442 = vmatpush1.bf16.msra.mxu0 %v1418
        %1443 = vmatprep.subr.bf16.mxu0 0
        %1444 = vmatpush1.bf16.msra.mxu0 0
        %1445 = vmatprep.subr.bf16.mxu0 0
        %1446 = vmatpush1.bf16.msra.mxu0 0
        %1447 = vmatprep.subr.bf16.mxu0 0
        %1448 = vmatpush1.bf16.msra.mxu0 0
        %1449 = vmatprep.subr.bf16.mxu0 0
        %1450 = vmatpush1.bf16.msra.mxu0 0
        %1451 = vmatprep.subr.bf16.mxu0 0
        %1452 = vmatpush1.bf16.msra.mxu0 0
        %1453 = vmatprep.subr.bf16.mxu0 0
        %1454 = vmatpush1.bf16.msra.mxu0 0
        %1455 = vmatprep.subr.bf16.mxu0 0
        %1456 = vmatpush1.bf16.msra.mxu0 0
        %1457 = vmatprep.subr.bf16.mxu0 0
        %1458 = vmatpush1.bf16.msra.mxu0 0
        %1459 = vmatprep.mubr.bf16.mxu0 0
        %1460 = vmatmul.mubr.bf16.gmra.mrb[0].mxu0 %v1354
        %v1461 = vpop.f32.mrb[0].mxu0
        %v1462 = vadd.f32 0.0, %v1461
        %v1463 = vpop.f32.mrb[0].mxu0
        %v1464 = vpop.f32.mrb[0].mxu0
        %v1465 = vadd.f32 0.0, %v1464
        %v1466 = vpop.f32.mrb[0].mxu0
        %1467 = vmatprep.mubr.bf16.mxu0 0
        %1468 = vmatmul.mubr.bf16.gmra.mrb[0].mxu0 %v1355
        %v1469 = vpop.f32.mrb[0].mxu0
        %v1470 = vadd.f32 0.0, %v1469
        %v1471 = vpop.f32.mrb[0].mxu0
        %v1472 = vpop.f32.mrb[0].mxu0
        %v1473 = vadd.f32 0.0, %v1472
        %v1474 = vpop.f32.mrb[0].mxu0
        %1475 = vmatprep.mubr.bf16.mxu0 0
        %1476 = vmatmul.mubr.bf16.gmra.mrb[0].mxu0 %v1356
        %v1477 = vpop.f32.mrb[0].mxu0
        %v1478 = vadd.f32 0.0, %v1477
        %v1479 = vpop.f32.mrb[0].mxu0
        %v1480 = vpop.f32.mrb[0].mxu0
        %v1481 = vadd.f32 0.0, %v1480
        %v1482 = vpop.f32.mrb[0].mxu0
        %1483 = vmatprep.mubr.bf16.mxu0 0
        %1484 = vmatmul.mubr.bf16.gmra.mrb[0].mxu0 %v1357
        %v1485 = vpop.f32.mrb[0].mxu0
        %v1486 = vadd.f32 0.0, %v1485
        %v1487 = vpop.f32.mrb[0].mxu0
        %v1488 = vpop.f32.mrb[0].mxu0
        %v1489 = vadd.f32 0.0, %v1488
        %v1490 = vpop.f32.mrb[0].mxu0
        %1491 = vmatprep.mubr.bf16.mxu0 0
        %1492 = vmatmul.mubr.bf16.gmra.mrb[0].mxu0 %v1358
        %v1493 = vpop.f32.mrb[0].mxu0
        %v1494 = vadd.f32 0.0, %v1493
        %v1495 = vpop.f32.mrb[0].mxu0
        %v1496 = vpop.f32.mrb[0].mxu0
        %v1497 = vadd.f32 0.0, %v1496
        %v1498 = vpop.f32.mrb[0].mxu0
        %1499 = vmatprep.mubr.bf16.mxu0 0
        %1500 = vmatmul.mubr.bf16.gmra.mrb[0].mxu0 %v1359
        %v1501 = vpop.f32.mrb[0].mxu0
        %v1502 = vadd.f32 0.0, %v1501
        %v1503 = vpop.f32.mrb[0].mxu0
        %v1504 = vpop.f32.mrb[0].mxu0
        %v1505 = vadd.f32 0.0, %v1504
        %v1506 = vpop.f32.mrb[0].mxu0
        %1507 = vmatprep.mubr.bf16.mxu0 0
        %1508 = vmatmul.mubr.bf16.gmra.mrb[0].mxu0 %v1360
        %v1509 = vpop.f32.mrb[0].mxu0
        %v1510 = vadd.f32 0.0, %v1509
        %v1511 = vpop.f32.mrb[0].mxu0
        %v1512 = vpop.f32.mrb[0].mxu0
        %v1513 = vadd.f32 0.0, %v1512
        %v1514 = vpop.f32.mrb[0].mxu0
        %1515 = vmatprep.mubr.bf16.mxu0 0
        %1516 = vmatmul.mubr.bf16.gmra.mrb[0].mxu0 %v1361
        %v1517 = vpop.f32.mrb[0].mxu0
        %v1518 = vadd.f32 0.0, %v1517
        %v1519 = vpop.f32.mrb[0].mxu0
        %v1520 = vpop.f32.mrb[0].mxu0
        %v1521 = vadd.f32 0.0, %v1520
        %v1522 = vpop.f32.mrb[0].mxu0
        %1523 = vdwg.mxu0
        %v1540 = vunpack.c.l.b16 %v923
        %v1541 = vunpack.c.l.b16 %v924
        %v1542 = vunpack.c.l.b16 %v925
        %v1543 = vunpack.c.l.b16 %v926
        %v1544 = vunpack.c.l.b16 %v927
        %v1545 = vunpack.c.l.b16 %v928
        %v1546 = vunpack.c.l.b16 %v929
        %v1547 = vunpack.c.l.b16 %v930
        %v1548 = vunpack.c.l.b16 %v931
        %v1549 = vunpack.c.l.b16 %v932
        %v1550 = vunpack.c.l.b16 %v933
        %v1551 = vunpack.c.l.b16 %v934
        %v1552 = vunpack.c.l.b16 %v935
        %v1553 = vunpack.c.l.b16 %v936
        %v1554 = vunpack.c.l.b16 %v937
        %v1555 = vunpack.c.l.b16 %v938
        %v1556 = vpack.c.b16 %v1541, %v1540
        %v1557 = vpack.c.b16 %v1543, %v1542
        %v1558 = vpack.c.b16 %v1545, %v1544
        %v1559 = vpack.c.b16 %v1547, %v1546
        %v1560 = vpack.c.b16 %v1549, %v1548
        %v1561 = vpack.c.b16 %v1551, %v1550
        %v1562 = vpack.c.b16 %v1553, %v1552
        %v1563 = vpack.c.b16 %v1555, %v1554
        %1572 = vmatprep.subr.bf16.mxu0 0
        %1573 = vmatpush1.bf16.msra.mxu0 %v1556
        %1574 = vmatprep.subr.bf16.mxu0 0
        %1575 = vmatpush1.bf16.msra.mxu0 %v1557
        %1576 = vmatprep.subr.bf16.mxu0 0
        %1577 = vmatpush1.bf16.msra.mxu0 %v1558
        %1578 = vmatprep.subr.bf16.mxu0 0
        %1579 = vmatpush1.bf16.msra.mxu0 %v1559
        %1580 = vmatprep.subr.bf16.mxu0 0
        %1581 = vmatpush1.bf16.msra.mxu0 %v1560
        %1582 = vmatprep.subr.bf16.mxu0 0
        %1583 = vmatpush1.bf16.msra.mxu0 %v1561
        %1584 = vmatprep.subr.bf16.mxu0 0
        %1585 = vmatpush1.bf16.msra.mxu0 %v1562
        %1586 = vmatprep.subr.bf16.mxu0 0
        %1587 = vmatpush1.bf16.msra.mxu0 %v1563
        %1588 = vmatprep.subr.bf16.mxu0 0
        %1589 = vmatpush1.bf16.msra.mxu0 0
        %1590 = vmatprep.subr.bf16.mxu0 0
        %1591 = vmatpush1.bf16.msra.mxu0 0
        %1592 = vmatprep.subr.bf16.mxu0 0
        %1593 = vmatpush1.bf16.msra.mxu0 0
        %1594 = vmatprep.subr.bf16.mxu0 0
        %1595 = vmatpush1.bf16.msra.mxu0 0
        %1596 = vmatprep.subr.bf16.mxu0 0
        %1597 = vmatpush1.bf16.msra.mxu0 0
        %1598 = vmatprep.subr.bf16.mxu0 0
        %1599 = vmatpush1.bf16.msra.mxu0 0
        %1600 = vmatprep.subr.bf16.mxu0 0
        %1601 = vmatpush1.bf16.msra.mxu0 0
        %1602 = vmatprep.subr.bf16.mxu0 0
        %1603 = vmatpush1.bf16.msra.mxu0 0
        %1604 = vmatprep.mubr.bf16.mxu0 0
        %1605 = vmatmul.mubr.bf16.gmra.mrb[0].mxu0 %v915
        %v1606 = vpop.f32.mrb[0].mxu0
        %v1607 = vadd.f32 %v1462, %v1606
        %v1608 = vpop.f32.mrb[0].mxu0
        %v1609 = vpop.f32.mrb[0].mxu0
        %v1610 = vadd.f32 %v1465, %v1609
        %v1611 = vpop.f32.mrb[0].mxu0
        %1612 = vmatprep.mubr.bf16.mxu0 0
        %1613 = vmatmul.mubr.bf16.gmra.mrb[0].mxu0 %v916
        %v1614 = vpop.f32.mrb[0].mxu0
        %v1615 = vadd.f32 %v1470, %v1614
        %v1616 = vpop.f32.mrb[0].mxu0
        %v1617 = vpop.f32.mrb[0].mxu0
        %v1618 = vadd.f32 %v1473, %v1617
        %v1619 = vpop.f32.mrb[0].mxu0
        %1620 = vmatprep.mubr.bf16.mxu0 0
        %1621 = vmatmul.mubr.bf16.gmra.mrb[0].mxu0 %v917
        %v1622 = vpop.f32.mrb[0].mxu0
        %v1623 = vadd.f32 %v1478, %v1622
        %v1624 = vpop.f32.mrb[0].mxu0
        %v1625 = vpop.f32.mrb[0].mxu0
        %v1626 = vadd.f32 %v1481, %v1625
        %v1627 = vpop.f32.mrb[0].mxu0
        %1628 = vmatprep.mubr.bf16.mxu0 0
        %1629 = vmatmul.mubr.bf16.gmra.mrb[0].mxu0 %v918
        %v1630 = vpop.f32.mrb[0].mxu0
        %v1631 = vadd.f32 %v1486, %v1630
        %v1632 = vpop.f32.mrb[0].mxu0
        %v1633 = vpop.f32.mrb[0].mxu0
        %v1634 = vadd.f32 %v1489, %v1633
        %v1635 = vpop.f32.mrb[0].mxu0
        %1636 = vmatprep.mubr.bf16.mxu0 0
        %1637 = vmatmul.mubr.bf16.gmra.mrb[0].mxu0 %v919
        %v1638 = vpop.f32.mrb[0].mxu0
        %v1639 = vadd.f32 %v1494, %v1638
        %v1640 = vpop.f32.mrb[0].mxu0
        %v1641 = vpop.f32.mrb[0].mxu0
        %v1642 = vadd.f32 %v1497, %v1641
        %v1643 = vpop.f32.mrb[0].mxu0
        %1644 = vmatprep.mubr.bf16.mxu0 0
        %1645 = vmatmul.mubr.bf16.gmra.mrb[0].mxu0 %v920
        %v1646 = vpop.f32.mrb[0].mxu0
        %v1647 = vadd.f32 %v1502, %v1646
        %v1648 = vpop.f32.mrb[0].mxu0
        %v1649 = vpop.f32.mrb[0].mxu0
        %v1650 = vadd.f32 %v1505, %v1649
        %v1651 = vpop.f32.mrb[0].mxu0
        %1652 = vmatprep.mubr.bf16.mxu0 0
        %1653 = vmatmul.mubr.bf16.gmra.mrb[0].mxu0 %v921
        %v1654 = vpop.f32.mrb[0].mxu0
        %v1655 = vadd.f32 %v1510, %v1654
        %v1656 = vpop.f32.mrb[0].mxu0
        %v1657 = vpop.f32.mrb[0].mxu0
        %v1658 = vadd.f32 %v1513, %v1657
        %v1659 = vpop.f32.mrb[0].mxu0
        %1660 = vmatprep.mubr.bf16.mxu0 0
        %1661 = vmatmul.mubr.bf16.gmra.mrb[0].mxu0 %v922
        %v1662 = vpop.f32.mrb[0].mxu0
        %v1663 = vadd.f32 %v1518, %v1662
        %v1664 = vpop.f32.mrb[0].mxu0
        %v1665 = vpop.f32.mrb[0].mxu0
        %v1666 = vadd.f32 %v1521, %v1665
        %v1667 = vpop.f32.mrb[0].mxu0
        %1668 = vdwg.mxu0
        %s1669 = scalar_lea.vmem [#allocation7], 128
        %v1670 = vld [vmem:[%s1669] sm:$0xf]
        %v1671 = vld [vmem:[%s1669 + $0x4] sm:$0xf]
        %v1672 = vld [vmem:[%s1669 + $0x8] sm:$0xf]
        %v1673 = vld [vmem:[%s1669 + $0xc] sm:$0xf]
        %v1674 = vld [vmem:[%s1669 + $0x10] sm:$0xf]
        %v1675 = vld [vmem:[%s1669 + $0x14] sm:$0xf]
        %v1676 = vld [vmem:[%s1669 + $0x18] sm:$0xf]
        %v1677 = vld [vmem:[%s1669 + $0x1c] sm:$0xf]
        %v1678 = vld [vmem:[%s1669 + $0x20] sm:$0xf]
        %v1679 = vld [vmem:[%s1669 + $0x24] sm:$0xf]
        %v1680 = vld [vmem:[%s1669 + $0x28] sm:$0xf]
        %v1681 = vld [vmem:[%s1669 + $0x2c] sm:$0xf]
        %v1682 = vld [vmem:[%s1669 + $0x30] sm:$0xf]
        %v1683 = vld [vmem:[%s1669 + $0x34] sm:$0xf]
        %v1684 = vld [vmem:[%s1669 + $0x38] sm:$0xf]
        %v1685 = vld [vmem:[%s1669 + $0x3c] sm:$0xf]
        %v1702 = vunpack.c.l.b16 %v1670
        %v1703 = vunpack.c.l.b16 %v1671
        %v1704 = vunpack.c.l.b16 %v1672
        %v1705 = vunpack.c.l.b16 %v1673
        %v1706 = vunpack.c.l.b16 %v1674
        %v1707 = vunpack.c.l.b16 %v1675
        %v1708 = vunpack.c.l.b16 %v1676
        %v1709 = vunpack.c.l.b16 %v1677
        %v1710 = vunpack.c.l.b16 %v1678
        %v1711 = vunpack.c.l.b16 %v1679
        %v1712 = vunpack.c.l.b16 %v1680
        %v1713 = vunpack.c.l.b16 %v1681
        %v1714 = vunpack.c.l.b16 %v1682
        %v1715 = vunpack.c.l.b16 %v1683
        %v1716 = vunpack.c.l.b16 %v1684
        %v1717 = vunpack.c.l.b16 %v1685
        %v1718 = vpack.c.b16 %v1703, %v1702
        %v1719 = vpack.c.b16 %v1705, %v1704
        %v1720 = vpack.c.b16 %v1707, %v1706
        %v1721 = vpack.c.b16 %v1709, %v1708
        %v1722 = vpack.c.b16 %v1711, %v1710
        %v1723 = vpack.c.b16 %v1713, %v1712
        %v1724 = vpack.c.b16 %v1715, %v1714
        %v1725 = vpack.c.b16 %v1717, %v1716
        %1734 = vmatprep.subr.bf16.mxu0 0
        %1735 = vmatpush1.bf16.msra.mxu0 %v1718
        %1736 = vmatprep.subr.bf16.mxu0 0
        %1737 = vmatpush1.bf16.msra.mxu0 %v1719
        %1738 = vmatprep.subr.bf16.mxu0 0
        %1739 = vmatpush1.bf16.msra.mxu0 %v1720
        %1740 = vmatprep.subr.bf16.mxu0 0
        %1741 = vmatpush1.bf16.msra.mxu0 %v1721
        %1742 = vmatprep.subr.bf16.mxu0 0
        %1743 = vmatpush1.bf16.msra.mxu0 %v1722
        %1744 = vmatprep.subr.bf16.mxu0 0
        %1745 = vmatpush1.bf16.msra.mxu0 %v1723
        %1746 = vmatprep.subr.bf16.mxu0 0
        %1747 = vmatpush1.bf16.msra.mxu0 %v1724
        %1748 = vmatprep.subr.bf16.mxu0 0
        %1749 = vmatpush1.bf16.msra.mxu0 %v1725
        %1750 = vmatprep.subr.bf16.mxu0 0
        %1751 = vmatpush1.bf16.msra.mxu0 0
        %1752 = vmatprep.subr.bf16.mxu0 0
        %1753 = vmatpush1.bf16.msra.mxu0 0
        %1754 = vmatprep.subr.bf16.mxu0 0
        %1755 = vmatpush1.bf16.msra.mxu0 0
        %1756 = vmatprep.subr.bf16.mxu0 0
        %1757 = vmatpush1.bf16.msra.mxu0 0
        %1758 = vmatprep.subr.bf16.mxu0 0
        %1759 = vmatpush1.bf16.msra.mxu0 0
        %1760 = vmatprep.subr.bf16.mxu0 0
        %1761 = vmatpush1.bf16.msra.mxu0 0
        %1762 = vmatprep.subr.bf16.mxu0 0
        %1763 = vmatpush1.bf16.msra.mxu0 0
        %1764 = vmatprep.subr.bf16.mxu0 0
        %1765 = vmatpush1.bf16.msra.mxu0 0
        %1766 = vmatprep.mubr.bf16.mxu0 0
        %1767 = vmatmul.mubr.bf16.gmra.mrb[0].mxu0 %v453
        %v1768 = vpop.f32.mrb[0].mxu0
        %v1769 = vadd.f32 0.0, %v1768
        %v1770 = vpop.f32.mrb[0].mxu0
        %v1771 = vpop.f32.mrb[0].mxu0
        %v1772 = vadd.f32 0.0, %v1771
        %v1773 = vpop.f32.mrb[0].mxu0
        %1774 = vmatprep.mubr.bf16.mxu0 0
        %1775 = vmatmul.mubr.bf16.gmra.mrb[0].mxu0 %v454
        %v1776 = vpop.f32.mrb[0].mxu0
        %v1777 = vadd.f32 0.0, %v1776
        %v1778 = vpop.f32.mrb[0].mxu0
        %v1779 = vpop.f32.mrb[0].mxu0
        %v1780 = vadd.f32 0.0, %v1779
        %v1781 = vpop.f32.mrb[0].mxu0
        %1782 = vmatprep.mubr.bf16.mxu0 0
        %1783 = vmatmul.mubr.bf16.gmra.mrb[0].mxu0 %v455
        %v1784 = vpop.f32.mrb[0].mxu0
        %v1785 = vadd.f32 0.0, %v1784
        %v1786 = vpop.f32.mrb[0].mxu0
        %v1787 = vpop.f32.mrb[0].mxu0
        %v1788 = vadd.f32 0.0, %v1787
        %v1789 = vpop.f32.mrb[0].mxu0
        %1790 = vmatprep.mubr.bf16.mxu0 0
        %1791 = vmatmul.mubr.bf16.gmra.mrb[0].mxu0 %v456
        %v1792 = vpop.f32.mrb[0].mxu0
        %v1793 = vadd.f32 0.0, %v1792
        %v1794 = vpop.f32.mrb[0].mxu0
        %v1795 = vpop.f32.mrb[0].mxu0
        %v1796 = vadd.f32 0.0, %v1795
        %v1797 = vpop.f32.mrb[0].mxu0
        %1798 = vmatprep.mubr.bf16.mxu0 0
        %1799 = vmatmul.mubr.bf16.gmra.mrb[0].mxu0 %v457
        %v1800 = vpop.f32.mrb[0].mxu0
        %v1801 = vadd.f32 0.0, %v1800
        %v1802 = vpop.f32.mrb[0].mxu0
        %v1803 = vpop.f32.mrb[0].mxu0
        %v1804 = vadd.f32 0.0, %v1803
        %v1805 = vpop.f32.mrb[0].mxu0
        %1806 = vmatprep.mubr.bf16.mxu0 0
        %1807 = vmatmul.mubr.bf16.gmra.mrb[0].mxu0 %v458
        %v1808 = vpop.f32.mrb[0].mxu0
        %v1809 = vadd.f32 0.0, %v1808
        %v1810 = vpop.f32.mrb[0].mxu0
        %v1811 = vpop.f32.mrb[0].mxu0
        %v1812 = vadd.f32 0.0, %v1811
        %v1813 = vpop.f32.mrb[0].mxu0
        %1814 = vmatprep.mubr.bf16.mxu0 0
        %1815 = vmatmul.mubr.bf16.gmra.mrb[0].mxu0 %v459
        %v1816 = vpop.f32.mrb[0].mxu0
        %v1817 = vadd.f32 0.0, %v1816
        %v1818 = vpop.f32.mrb[0].mxu0
        %v1819 = vpop.f32.mrb[0].mxu0
        %v1820 = vadd.f32 0.0, %v1819
        %v1821 = vpop.f32.mrb[0].mxu0
        %1822 = vmatprep.mubr.bf16.mxu0 0
        %1823 = vmatmul.mubr.bf16.gmra.mrb[0].mxu0 %v460
        %v1824 = vpop.f32.mrb[0].mxu0
        %v1825 = vadd.f32 0.0, %v1824
        %v1826 = vpop.f32.mrb[0].mxu0
        %v1827 = vpop.f32.mrb[0].mxu0
        %v1828 = vadd.f32 0.0, %v1827
        %v1829 = vpop.f32.mrb[0].mxu0
        %1830 = vdwg.mxu0
        %v1831 = vpack.c.bf16 %v1772, %v1769
        %v1832 = vpack.c.bf16 %v1780, %v1777
        %v1833 = vpack.c.bf16 %v1788, %v1785
        %v1834 = vpack.c.bf16 %v1796, %v1793
        %v1835 = vpack.c.bf16 %v1804, %v1801
        %v1836 = vpack.c.bf16 %v1812, %v1809
        %v1837 = vpack.c.bf16 %v1820, %v1817
        %v1838 = vpack.c.bf16 %v1828, %v1825
        %v1839 = vlaneseq
        %v1840 = vshrl.u32 %v1839, 7
        %v1841 = vsub.s32 2, %v1840
        %v1842 = vrot.slane %v404, %v1841
        %1843 = vmatprep.subr.bf16.mxu0 0
        %1844 = vmatpush1.bf16.msra.mxu0 %v658
        %1845 = vmatprep.subr.bf16.mxu0 0
        %1846 = vmatpush1.bf16.msra.mxu0 %v659
        %1847 = vmatprep.subr.bf16.mxu0 0
        %1848 = vmatpush1.bf16.msra.mxu0 %v660
        %1849 = vmatprep.subr.bf16.mxu0 0
        %1850 = vmatpush1.bf16.msra.mxu0 %v661
        %1851 = vmatprep.subr.bf16.mxu0 0
        %1852 = vmatpush1.bf16.msra.mxu0 %v662
        %1853 = vmatprep.subr.bf16.mxu0 0
        %1854 = vmatpush1.bf16.msra.mxu0 %v663
        %1855 = vmatprep.subr.bf16.mxu0 0
        %1856 = vmatpush1.bf16.msra.mxu0 %v664
        %1857 = vmatprep.subr.bf16.mxu0 0
        %1858 = vmatpush1.bf16.msra.mxu0 %v665
        %1859 = vmatprep.subr.bf16.mxu0 0
        %1860 = vmatpush1.bf16.msra.mxu0 0
        %1861 = vmatprep.subr.bf16.mxu0 0
        %1862 = vmatpush1.bf16.msra.mxu0 0
        %1863 = vmatprep.subr.bf16.mxu0 0
        %1864 = vmatpush1.bf16.msra.mxu0 0
        %1865 = vmatprep.subr.bf16.mxu0 0
        %1866 = vmatpush1.bf16.msra.mxu0 0
        %1867 = vmatprep.subr.bf16.mxu0 0
        %1868 = vmatpush1.bf16.msra.mxu0 0
        %1869 = vmatprep.subr.bf16.mxu0 0
        %1870 = vmatpush1.bf16.msra.mxu0 0
        %1871 = vmatprep.subr.bf16.mxu0 0
        %1872 = vmatpush1.bf16.msra.mxu0 0
        %1873 = vmatprep.subr.bf16.mxu0 0
        %1874 = vmatpush1.bf16.msra.mxu0 0
        %1875 = vmatprep.mubr.bf16.mxu0 0
        %1876 = vmatmul.mubr.bf16.gmra.mrb[0].mxu0 %v1831
        %v1877 = vpop.f32.mrb[0].mxu0
        %v1878 = vadd.f32 %v1842, %v1877
        %v1879 = vpop.f32.mrb[0].mxu0
        %v1880 = vpop.f32.mrb[0].mxu0
        %v1881 = vadd.f32 %v1842, %v1880
        %v1882 = vpop.f32.mrb[0].mxu0
        %1883 = vmatprep.mubr.bf16.mxu0 0
        %1884 = vmatmul.mubr.bf16.gmra.mrb[0].mxu0 %v1832
        %v1885 = vpop.f32.mrb[0].mxu0
        %v1886 = vadd.f32 %v1842, %v1885
        %v1887 = vpop.f32.mrb[0].mxu0
        %v1888 = vpop.f32.mrb[0].mxu0
        %v1889 = vadd.f32 %v1842, %v1888
        %v1890 = vpop.f32.mrb[0].mxu0
        %1891 = vmatprep.mubr.bf16.mxu0 0
        %1892 = vmatmul.mubr.bf16.gmra.mrb[0].mxu0 %v1833
        %v1893 = vpop.f32.mrb[0].mxu0
        %v1894 = vadd.f32 %v1842, %v1893
        %v1895 = vpop.f32.mrb[0].mxu0
        %v1896 = vpop.f32.mrb[0].mxu0
        %v1897 = vadd.f32 %v1842, %v1896
        %v1898 = vpop.f32.mrb[0].mxu0
        %1899 = vmatprep.mubr.bf16.mxu0 0
        %1900 = vmatmul.mubr.bf16.gmra.mrb[0].mxu0 %v1834
        %v1901 = vpop.f32.mrb[0].mxu0
        %v1902 = vadd.f32 %v1842, %v1901
        %v1903 = vpop.f32.mrb[0].mxu0
        %v1904 = vpop.f32.mrb[0].mxu0
        %v1905 = vadd.f32 %v1842, %v1904
        %v1906 = vpop.f32.mrb[0].mxu0
        %1907 = vmatprep.mubr.bf16.mxu0 0
        %1908 = vmatmul.mubr.bf16.gmra.mrb[0].mxu0 %v1835
        %v1909 = vpop.f32.mrb[0].mxu0
        %v1910 = vadd.f32 %v1842, %v1909
        %v1911 = vpop.f32.mrb[0].mxu0
        %v1912 = vpop.f32.mrb[0].mxu0
        %v1913 = vadd.f32 %v1842, %v1912
        %v1914 = vpop.f32.mrb[0].mxu0
        %1915 = vmatprep.mubr.bf16.mxu0 0
        %1916 = vmatmul.mubr.bf16.gmra.mrb[0].mxu0 %v1836
        %v1917 = vpop.f32.mrb[0].mxu0
        %v1918 = vadd.f32 %v1842, %v1917
        %v1919 = vpop.f32.mrb[0].mxu0
        %v1920 = vpop.f32.mrb[0].mxu0
        %v1921 = vadd.f32 %v1842, %v1920
        %v1922 = vpop.f32.mrb[0].mxu0
        %1923 = vmatprep.mubr.bf16.mxu0 0
        %1924 = vmatmul.mubr.bf16.gmra.mrb[0].mxu0 %v1837
        %v1925 = vpop.f32.mrb[0].mxu0
        %v1926 = vadd.f32 %v1842, %v1925
        %v1927 = vpop.f32.mrb[0].mxu0
        %v1928 = vpop.f32.mrb[0].mxu0
        %v1929 = vadd.f32 %v1842, %v1928
        %v1930 = vpop.f32.mrb[0].mxu0
        %1931 = vmatprep.mubr.bf16.mxu0 0
        %1932 = vmatmul.mubr.bf16.gmra.mrb[0].mxu0 %v1838
        %v1933 = vpop.f32.mrb[0].mxu0
        %v1934 = vadd.f32 %v1842, %v1933
        %v1935 = vpop.f32.mrb[0].mxu0
        %v1936 = vpop.f32.mrb[0].mxu0
        %v1937 = vadd.f32 %v1842, %v1936
        %v1938 = vpop.f32.mrb[0].mxu0
        %1939 = vdwg.mxu0
        %1940 = vmax.xlane.f32.xlu0 %v1878
        %v1941 = vpop.xlane.xlu0 %1940
        %1942 = vmax.xlane.f32.xlu0 %v1881
        %v1943 = vpop.xlane.xlu0 %1942
        %1944 = vmax.xlane.f32.xlu0 %v1886
        %v1945 = vpop.xlane.xlu0 %1944
        %1946 = vmax.xlane.f32.xlu0 %v1889
        %v1947 = vpop.xlane.xlu0 %1946
        %1948 = vmax.xlane.f32.xlu0 %v1894
        %v1949 = vpop.xlane.xlu0 %1948
        %1950 = vmax.xlane.f32.xlu0 %v1897
        %v1951 = vpop.xlane.xlu0 %1950
        %1952 = vmax.xlane.f32.xlu0 %v1902
        %v1953 = vpop.xlane.xlu0 %1952
        %1954 = vmax.xlane.f32.xlu0 %v1905
        %v1955 = vpop.xlane.xlu0 %1954
        %1956 = vmax.xlane.f32.xlu0 %v1910
        %v1957 = vpop.xlane.xlu0 %1956
        %1958 = vmax.xlane.f32.xlu0 %v1913
        %v1959 = vpop.xlane.xlu0 %1958
        %1960 = vmax.xlane.f32.xlu0 %v1918
        %v1961 = vpop.xlane.xlu0 %1960
        %1962 = vmax.xlane.f32.xlu0 %v1921
        %v1963 = vpop.xlane.xlu0 %1962
        %1964 = vmax.xlane.f32.xlu0 %v1926
        %v1965 = vpop.xlane.xlu0 %1964
        %1966 = vmax.xlane.f32.xlu0 %v1929
        %v1967 = vpop.xlane.xlu0 %1966
        %1968 = vmax.xlane.f32.xlu0 %v1934
        %v1969 = vpop.xlane.xlu0 %1968
        %1970 = vmax.xlane.f32.xlu0 %v1937
        %v1971 = vpop.xlane.xlu0 %1970
        %v1972 = vsub.f32 %v1878, %v1941
        %v1973 = vsub.f32 %v1881, %v1943
        %v1974 = vsub.f32 %v1886, %v1945
        %v1975 = vsub.f32 %v1889, %v1947
        %v1976 = vsub.f32 %v1894, %v1949
        %v1977 = vsub.f32 %v1897, %v1951
        %v1978 = vsub.f32 %v1902, %v1953
        %v1979 = vsub.f32 %v1905, %v1955
        %v1980 = vsub.f32 %v1910, %v1957
        %v1981 = vsub.f32 %v1913, %v1959
        %v1982 = vsub.f32 %v1918, %v1961
        %v1983 = vsub.f32 %v1921, %v1963
        %v1984 = vsub.f32 %v1926, %v1965
        %v1985 = vsub.f32 %v1929, %v1967
        %v1986 = vsub.f32 %v1934, %v1969
        %v1987 = vsub.f32 %v1937, %v1971
        %v1988 = vmul.f32 %v1972, 1.442695
        %v1989 = vpow.pop %v1988
        %v1990 = vmul.f32 %v1973, 1.442695
        %v1991 = vpow.pop %v1990
        %v1992 = vmul.f32 %v1974, 1.442695
        %v1993 = vpow.pop %v1992
        %v1994 = vmul.f32 %v1975, 1.442695
        %v1995 = vpow.pop %v1994
        %v1996 = vmul.f32 %v1976, 1.442695
        %v1997 = vpow.pop %v1996
        %v1998 = vmul.f32 %v1977, 1.442695
        %v1999 = vpow.pop %v1998
        %v2000 = vmul.f32 %v1978, 1.442695
        %v2001 = vpow.pop %v2000
        %v2002 = vmul.f32 %v1979, 1.442695
        %v2003 = vpow.pop %v2002
        %v2004 = vmul.f32 %v1980, 1.442695
        %v2005 = vpow.pop %v2004
        %v2006 = vmul.f32 %v1981, 1.442695
        %v2007 = vpow.pop %v2006
        %v2008 = vmul.f32 %v1982, 1.442695
        %v2009 = vpow.pop %v2008
        %v2010 = vmul.f32 %v1983, 1.442695
        %v2011 = vpow.pop %v2010
        %v2012 = vmul.f32 %v1984, 1.442695
        %v2013 = vpow.pop %v2012
        %v2014 = vmul.f32 %v1985, 1.442695
        %v2015 = vpow.pop %v2014
        %v2016 = vmul.f32 %v1986, 1.442695
        %v2017 = vpow.pop %v2016
        %v2018 = vmul.f32 %v1987, 1.442695
        %v2019 = vpow.pop %v2018
        %2020 = vadd.xlane.f32.xlu0 %v1989
        %v2021 = vpop.xlane.xlu0 %2020
        %2022 = vadd.xlane.f32.xlu0 %v1991
        %v2023 = vpop.xlane.xlu0 %2022
        %2024 = vadd.xlane.f32.xlu0 %v1993
        %v2025 = vpop.xlane.xlu0 %2024
        %2026 = vadd.xlane.f32.xlu0 %v1995
        %v2027 = vpop.xlane.xlu0 %2026
        %2028 = vadd.xlane.f32.xlu0 %v1997
        %v2029 = vpop.xlane.xlu0 %2028
        %2030 = vadd.xlane.f32.xlu0 %v1999
        %v2031 = vpop.xlane.xlu0 %2030
        %2032 = vadd.xlane.f32.xlu0 %v2001
        %v2033 = vpop.xlane.xlu0 %2032
        %2034 = vadd.xlane.f32.xlu0 %v2003
        %v2035 = vpop.xlane.xlu0 %2034
        %2036 = vadd.xlane.f32.xlu0 %v2005
        %v2037 = vpop.xlane.xlu0 %2036
        %2038 = vadd.xlane.f32.xlu0 %v2007
        %v2039 = vpop.xlane.xlu0 %2038
        %2040 = vadd.xlane.f32.xlu0 %v2009
        %v2041 = vpop.xlane.xlu0 %2040
        %2042 = vadd.xlane.f32.xlu0 %v2011
        %v2043 = vpop.xlane.xlu0 %2042
        %2044 = vadd.xlane.f32.xlu0 %v2013
        %v2045 = vpop.xlane.xlu0 %2044
        %2046 = vadd.xlane.f32.xlu0 %v2015
        %v2047 = vpop.xlane.xlu0 %2046
        %2048 = vadd.xlane.f32.xlu0 %v2017
        %v2049 = vpop.xlane.xlu0 %2048
        %2050 = vadd.xlane.f32.xlu0 %v2019
        %v2051 = vpop.xlane.xlu0 %2050
        %v2052 = vrcp.pop %v2021
        %v2053 = vrcp.pop %v2023
        %v2054 = vrcp.pop %v2025
        %v2055 = vrcp.pop %v2027
        %v2056 = vrcp.pop %v2029
        %v2057 = vrcp.pop %v2031
        %v2058 = vrcp.pop %v2033
        %v2059 = vrcp.pop %v2035
        %v2060 = vrcp.pop %v2037
        %v2061 = vrcp.pop %v2039
        %v2062 = vrcp.pop %v2041
        %v2063 = vrcp.pop %v2043
        %v2064 = vrcp.pop %v2045
        %v2065 = vrcp.pop %v2047
        %v2066 = vrcp.pop %v2049
        %v2067 = vrcp.pop %v2051
        %v2068 = vmul.f32 %v1989, %v2052
        %v2069 = vmul.f32 %v1991, %v2053
        %v2070 = vmul.f32 %v1993, %v2054
        %v2071 = vmul.f32 %v1995, %v2055
        %v2072 = vmul.f32 %v1997, %v2056
        %v2073 = vmul.f32 %v1999, %v2057
        %v2074 = vmul.f32 %v2001, %v2058
        %v2075 = vmul.f32 %v2003, %v2059
        %v2076 = vmul.f32 %v2005, %v2060
        %v2077 = vmul.f32 %v2007, %v2061
        %v2078 = vmul.f32 %v2009, %v2062
        %v2079 = vmul.f32 %v2011, %v2063
        %v2080 = vmul.f32 %v2013, %v2064
        %v2081 = vmul.f32 %v2015, %v2065
        %v2082 = vmul.f32 %v2017, %v2066
        %v2083 = vmul.f32 %v2019, %v2067
        %v2084 = vpack.c.bf16 %v2069, %v2068
        %v2085 = vpack.c.bf16 %v2071, %v2070
        %v2086 = vpack.c.bf16 %v2073, %v2072
        %v2087 = vpack.c.bf16 %v2075, %v2074
        %v2088 = vpack.c.bf16 %v2077, %v2076
        %v2089 = vpack.c.bf16 %v2079, %v2078
        %v2090 = vpack.c.bf16 %v2081, %v2080
        %v2091 = vpack.c.bf16 %v2083, %v2082
        %s2092 = scalar_lea.vmem [#allocation8], 128
        %v2093 = vld [vmem:[%s2092] sm:$0xf]
        %v2094 = vld [vmem:[%s2092 + $0x4] sm:$0xf]
        %v2095 = vld [vmem:[%s2092 + $0x8] sm:$0xf]
        %v2096 = vld [vmem:[%s2092 + $0xc] sm:$0xf]
        %v2097 = vld [vmem:[%s2092 + $0x10] sm:$0xf]
        %v2098 = vld [vmem:[%s2092 + $0x14] sm:$0xf]
        %v2099 = vld [vmem:[%s2092 + $0x18] sm:$0xf]
        %v2100 = vld [vmem:[%s2092 + $0x1c] sm:$0xf]
        %v2101 = vld [vmem:[%s2092 + $0x20] sm:$0xf]
        %v2102 = vld [vmem:[%s2092 + $0x24] sm:$0xf]
        %v2103 = vld [vmem:[%s2092 + $0x28] sm:$0xf]
        %v2104 = vld [vmem:[%s2092 + $0x2c] sm:$0xf]
        %v2105 = vld [vmem:[%s2092 + $0x30] sm:$0xf]
        %v2106 = vld [vmem:[%s2092 + $0x34] sm:$0xf]
        %v2107 = vld [vmem:[%s2092 + $0x38] sm:$0xf]
        %v2108 = vld [vmem:[%s2092 + $0x3c] sm:$0xf]
        %v2125 = vunpack.c.l.b16 %v2093
        %v2126 = vunpack.c.l.b16 %v2094
        %v2127 = vunpack.c.l.b16 %v2095
        %v2128 = vunpack.c.l.b16 %v2096
        %v2129 = vunpack.c.l.b16 %v2097
        %v2130 = vunpack.c.l.b16 %v2098
        %v2131 = vunpack.c.l.b16 %v2099
        %v2132 = vunpack.c.l.b16 %v2100
        %v2133 = vunpack.c.l.b16 %v2101
        %v2134 = vunpack.c.l.b16 %v2102
        %v2135 = vunpack.c.l.b16 %v2103
        %v2136 = vunpack.c.l.b16 %v2104
        %v2137 = vunpack.c.l.b16 %v2105
        %v2138 = vunpack.c.l.b16 %v2106
        %v2139 = vunpack.c.l.b16 %v2107
        %v2140 = vunpack.c.l.b16 %v2108
        %v2141 = vpack.c.b16 %v2126, %v2125
        %v2142 = vpack.c.b16 %v2128, %v2127
        %v2143 = vpack.c.b16 %v2130, %v2129
        %v2144 = vpack.c.b16 %v2132, %v2131
        %v2145 = vpack.c.b16 %v2134, %v2133
        %v2146 = vpack.c.b16 %v2136, %v2135
        %v2147 = vpack.c.b16 %v2138, %v2137
        %v2148 = vpack.c.b16 %v2140, %v2139
        %2157 = vmatprep.subr.bf16.mxu0 0
        %2158 = vmatpush1.bf16.msra.mxu0 %v2141
        %2159 = vmatprep.subr.bf16.mxu0 0
        %2160 = vmatpush1.bf16.msra.mxu0 %v2142
        %2161 = vmatprep.subr.bf16.mxu0 0
        %2162 = vmatpush1.bf16.msra.mxu0 %v2143
        %2163 = vmatprep.subr.bf16.mxu0 0
        %2164 = vmatpush1.bf16.msra.mxu0 %v2144
        %2165 = vmatprep.subr.bf16.mxu0 0
        %2166 = vmatpush1.bf16.msra.mxu0 %v2145
        %2167 = vmatprep.subr.bf16.mxu0 0
        %2168 = vmatpush1.bf16.msra.mxu0 %v2146
        %2169 = vmatprep.subr.bf16.mxu0 0
        %2170 = vmatpush1.bf16.msra.mxu0 %v2147
        %2171 = vmatprep.subr.bf16.mxu0 0
        %2172 = vmatpush1.bf16.msra.mxu0 %v2148
        %2173 = vmatprep.subr.bf16.mxu0 0
        %2174 = vmatpush1.bf16.msra.mxu0 0
        %2175 = vmatprep.subr.bf16.mxu0 0
        %2176 = vmatpush1.bf16.msra.mxu0 0
        %2177 = vmatprep.subr.bf16.mxu0 0
        %2178 = vmatpush1.bf16.msra.mxu0 0
        %2179 = vmatprep.subr.bf16.mxu0 0
        %2180 = vmatpush1.bf16.msra.mxu0 0
        %2181 = vmatprep.subr.bf16.mxu0 0
        %2182 = vmatpush1.bf16.msra.mxu0 0
        %2183 = vmatprep.subr.bf16.mxu0 0
        %2184 = vmatpush1.bf16.msra.mxu0 0
        %2185 = vmatprep.subr.bf16.mxu0 0
        %2186 = vmatpush1.bf16.msra.mxu0 0
        %2187 = vmatprep.subr.bf16.mxu0 0
        %2188 = vmatpush1.bf16.msra.mxu0 0
        %2189 = vmatprep.mubr.bf16.mxu0 0
        %2190 = vmatmul.mubr.bf16.gmra.mrb[0].mxu0 %v2084
        %v2191 = vpop.f32.mrb[0].mxu0
        %v2192 = vadd.f32 0.0, %v2191
        %v2193 = vpop.f32.mrb[0].mxu0
        %v2194 = vpop.f32.mrb[0].mxu0
        %v2195 = vadd.f32 0.0, %v2194
        %v2196 = vpop.f32.mrb[0].mxu0
        %2197 = vmatprep.mubr.bf16.mxu0 0
        %2198 = vmatmul.mubr.bf16.gmra.mrb[0].mxu0 %v2085
        %v2199 = vpop.f32.mrb[0].mxu0
        %v2200 = vadd.f32 0.0, %v2199
        %v2201 = vpop.f32.mrb[0].mxu0
        %v2202 = vpop.f32.mrb[0].mxu0
        %v2203 = vadd.f32 0.0, %v2202
        %v2204 = vpop.f32.mrb[0].mxu0
        %2205 = vmatprep.mubr.bf16.mxu0 0
        %2206 = vmatmul.mubr.bf16.gmra.mrb[0].mxu0 %v2086
        %v2207 = vpop.f32.mrb[0].mxu0
        %v2208 = vadd.f32 0.0, %v2207
        %v2209 = vpop.f32.mrb[0].mxu0
        %v2210 = vpop.f32.mrb[0].mxu0
        %v2211 = vadd.f32 0.0, %v2210
        %v2212 = vpop.f32.mrb[0].mxu0
        %2213 = vmatprep.mubr.bf16.mxu0 0
        %2214 = vmatmul.mubr.bf16.gmra.mrb[0].mxu0 %v2087
        %v2215 = vpop.f32.mrb[0].mxu0
        %v2216 = vadd.f32 0.0, %v2215
        %v2217 = vpop.f32.mrb[0].mxu0
        %v2218 = vpop.f32.mrb[0].mxu0
        %v2219 = vadd.f32 0.0, %v2218
        %v2220 = vpop.f32.mrb[0].mxu0
        %2221 = vmatprep.mubr.bf16.mxu0 0
        %2222 = vmatmul.mubr.bf16.gmra.mrb[0].mxu0 %v2088
        %v2223 = vpop.f32.mrb[0].mxu0
        %v2224 = vadd.f32 0.0, %v2223
        %v2225 = vpop.f32.mrb[0].mxu0
        %v2226 = vpop.f32.mrb[0].mxu0
        %v2227 = vadd.f32 0.0, %v2226
        %v2228 = vpop.f32.mrb[0].mxu0
        %2229 = vmatprep.mubr.bf16.mxu0 0
        %2230 = vmatmul.mubr.bf16.gmra.mrb[0].mxu0 %v2089
        %v2231 = vpop.f32.mrb[0].mxu0
        %v2232 = vadd.f32 0.0, %v2231
        %v2233 = vpop.f32.mrb[0].mxu0
        %v2234 = vpop.f32.mrb[0].mxu0
        %v2235 = vadd.f32 0.0, %v2234
        %v2236 = vpop.f32.mrb[0].mxu0
        %2237 = vmatprep.mubr.bf16.mxu0 0
        %2238 = vmatmul.mubr.bf16.gmra.mrb[0].mxu0 %v2090
        %v2239 = vpop.f32.mrb[0].mxu0
        %v2240 = vadd.f32 0.0, %v2239
        %v2241 = vpop.f32.mrb[0].mxu0
        %v2242 = vpop.f32.mrb[0].mxu0
        %v2243 = vadd.f32 0.0, %v2242
        %v2244 = vpop.f32.mrb[0].mxu0
        %2245 = vmatprep.mubr.bf16.mxu0 0
        %2246 = vmatmul.mubr.bf16.gmra.mrb[0].mxu0 %v2091
        %v2247 = vpop.f32.mrb[0].mxu0
        %v2248 = vadd.f32 0.0, %v2247
        %v2249 = vpop.f32.mrb[0].mxu0
        %v2250 = vpop.f32.mrb[0].mxu0
        %v2251 = vadd.f32 0.0, %v2250
        %v2252 = vpop.f32.mrb[0].mxu0
        %2253 = vdwg.mxu0
        %v2254 = vadd.f32 %v1607, %v2192
        %v2255 = vadd.f32 %v1610, %v2195
        %v2256 = vadd.f32 %v1615, %v2200
        %v2257 = vadd.f32 %v1618, %v2203
        %v2258 = vadd.f32 %v1623, %v2208
        %v2259 = vadd.f32 %v1626, %v2211
        %v2260 = vadd.f32 %v1631, %v2216
        %v2261 = vadd.f32 %v1634, %v2219
        %v2262 = vadd.f32 %v1639, %v2224
        %v2263 = vadd.f32 %v1642, %v2227
        %v2264 = vadd.f32 %v1647, %v2232
        %v2265 = vadd.f32 %v1650, %v2235
        %v2266 = vadd.f32 %v1655, %v2240
        %v2267 = vadd.f32 %v1658, %v2243
        %v2268 = vadd.f32 %v1663, %v2248
        %v2269 = vadd.f32 %v1666, %v2251
        %s2270 = scalar_lea.vmem [#allocation7], 192
        %v2271 = vld [vmem:[%s2270] sm:$0xf]
        %v2272 = vld [vmem:[%s2270 + $0x4] sm:$0xf]
        %v2273 = vld [vmem:[%s2270 + $0x8] sm:$0xf]
        %v2274 = vld [vmem:[%s2270 + $0xc] sm:$0xf]
        %v2275 = vld [vmem:[%s2270 + $0x10] sm:$0xf]
        %v2276 = vld [vmem:[%s2270 + $0x14] sm:$0xf]
        %v2277 = vld [vmem:[%s2270 + $0x18] sm:$0xf]
        %v2278 = vld [vmem:[%s2270 + $0x1c] sm:$0xf]
        %v2279 = vld [vmem:[%s2270 + $0x20] sm:$0xf]
        %v2280 = vld [vmem:[%s2270 + $0x24] sm:$0xf]
        %v2281 = vld [vmem:[%s2270 + $0x28] sm:$0xf]
        %v2282 = vld [vmem:[%s2270 + $0x2c] sm:$0xf]
        %v2283 = vld [vmem:[%s2270 + $0x30] sm:$0xf]
        %v2284 = vld [vmem:[%s2270 + $0x34] sm:$0xf]
        %v2285 = vld [vmem:[%s2270 + $0x38] sm:$0xf]
        %v2286 = vld [vmem:[%s2270 + $0x3c] sm:$0xf]
        %v2303 = vunpack.c.l.b16 %v2271
        %v2304 = vunpack.c.l.b16 %v2272
        %v2305 = vunpack.c.l.b16 %v2273
        %v2306 = vunpack.c.l.b16 %v2274
        %v2307 = vunpack.c.l.b16 %v2275
        %v2308 = vunpack.c.l.b16 %v2276
        %v2309 = vunpack.c.l.b16 %v2277
        %v2310 = vunpack.c.l.b16 %v2278
        %v2311 = vunpack.c.l.b16 %v2279
        %v2312 = vunpack.c.l.b16 %v2280
        %v2313 = vunpack.c.l.b16 %v2281
        %v2314 = vunpack.c.l.b16 %v2282
        %v2315 = vunpack.c.l.b16 %v2283
        %v2316 = vunpack.c.l.b16 %v2284
        %v2317 = vunpack.c.l.b16 %v2285
        %v2318 = vunpack.c.l.b16 %v2286
        %v2319 = vpack.c.b16 %v2304, %v2303
        %v2320 = vpack.c.b16 %v2306, %v2305
        %v2321 = vpack.c.b16 %v2308, %v2307
        %v2322 = vpack.c.b16 %v2310, %v2309
        %v2323 = vpack.c.b16 %v2312, %v2311
        %v2324 = vpack.c.b16 %v2314, %v2313
        %v2325 = vpack.c.b16 %v2316, %v2315
        %v2326 = vpack.c.b16 %v2318, %v2317
        %2335 = vmatprep.subr.bf16.mxu0 0
        %2336 = vmatpush1.bf16.msra.mxu0 %v2319
        %2337 = vmatprep.subr.bf16.mxu0 0
        %2338 = vmatpush1.bf16.msra.mxu0 %v2320
        %2339 = vmatprep.subr.bf16.mxu0 0
        %2340 = vmatpush1.bf16.msra.mxu0 %v2321
        %2341 = vmatprep.subr.bf16.mxu0 0
        %2342 = vmatpush1.bf16.msra.mxu0 %v2322
        %2343 = vmatprep.subr.bf16.mxu0 0
        %2344 = vmatpush1.bf16.msra.mxu0 %v2323
        %2345 = vmatprep.subr.bf16.mxu0 0
        %2346 = vmatpush1.bf16.msra.mxu0 %v2324
        %2347 = vmatprep.subr.bf16.mxu0 0
        %2348 = vmatpush1.bf16.msra.mxu0 %v2325
        %2349 = vmatprep.subr.bf16.mxu0 0
        %2350 = vmatpush1.bf16.msra.mxu0 %v2326
        %2351 = vmatprep.subr.bf16.mxu0 0
        %2352 = vmatpush1.bf16.msra.mxu0 0
        %2353 = vmatprep.subr.bf16.mxu0 0
        %2354 = vmatpush1.bf16.msra.mxu0 0
        %2355 = vmatprep.subr.bf16.mxu0 0
        %2356 = vmatpush1.bf16.msra.mxu0 0
        %2357 = vmatprep.subr.bf16.mxu0 0
        %2358 = vmatpush1.bf16.msra.mxu0 0
        %2359 = vmatprep.subr.bf16.mxu0 0
        %2360 = vmatpush1.bf16.msra.mxu0 0
        %2361 = vmatprep.subr.bf16.mxu0 0
        %2362 = vmatpush1.bf16.msra.mxu0 0
        %2363 = vmatprep.subr.bf16.mxu0 0
        %2364 = vmatpush1.bf16.msra.mxu0 0
        %2365 = vmatprep.subr.bf16.mxu0 0
        %2366 = vmatpush1.bf16.msra.mxu0 0
        %2367 = vmatprep.mubr.bf16.mxu0 0
        %2368 = vmatmul.mubr.bf16.gmra.mrb[0].mxu0 %v453
        %v2369 = vpop.f32.mrb[0].mxu0
        %v2370 = vadd.f32 0.0, %v2369
        %v2371 = vpop.f32.mrb[0].mxu0
        %v2372 = vpop.f32.mrb[0].mxu0
        %v2373 = vadd.f32 0.0, %v2372
        %v2374 = vpop.f32.mrb[0].mxu0
        %2375 = vmatprep.mubr.bf16.mxu0 0
        %2376 = vmatmul.mubr.bf16.gmra.mrb[0].mxu0 %v454
        %v2377 = vpop.f32.mrb[0].mxu0
        %v2378 = vadd.f32 0.0, %v2377
        %v2379 = vpop.f32.mrb[0].mxu0
        %v2380 = vpop.f32.mrb[0].mxu0
        %v2381 = vadd.f32 0.0, %v2380
        %v2382 = vpop.f32.mrb[0].mxu0
        %2383 = vmatprep.mubr.bf16.mxu0 0
        %2384 = vmatmul.mubr.bf16.gmra.mrb[0].mxu0 %v455
        %v2385 = vpop.f32.mrb[0].mxu0
        %v2386 = vadd.f32 0.0, %v2385
        %v2387 = vpop.f32.mrb[0].mxu0
        %v2388 = vpop.f32.mrb[0].mxu0
        %v2389 = vadd.f32 0.0, %v2388
        %v2390 = vpop.f32.mrb[0].mxu0
        %2391 = vmatprep.mubr.bf16.mxu0 0
        %2392 = vmatmul.mubr.bf16.gmra.mrb[0].mxu0 %v456
        %v2393 = vpop.f32.mrb[0].mxu0
        %v2394 = vadd.f32 0.0, %v2393
        %v2395 = vpop.f32.mrb[0].mxu0
        %v2396 = vpop.f32.mrb[0].mxu0
        %v2397 = vadd.f32 0.0, %v2396
        %v2398 = vpop.f32.mrb[0].mxu0
        %2399 = vmatprep.mubr.bf16.mxu0 0
        %2400 = vmatmul.mubr.bf16.gmra.mrb[0].mxu0 %v457
        %v2401 = vpop.f32.mrb[0].mxu0
        %v2402 = vadd.f32 0.0, %v2401
        %v2403 = vpop.f32.mrb[0].mxu0
        %v2404 = vpop.f32.mrb[0].mxu0
        %v2405 = vadd.f32 0.0, %v2404
        %v2406 = vpop.f32.mrb[0].mxu0
        %2407 = vmatprep.mubr.bf16.mxu0 0
        %2408 = vmatmul.mubr.bf16.gmra.mrb[0].mxu0 %v458
        %v2409 = vpop.f32.mrb[0].mxu0
        %v2410 = vadd.f32 0.0, %v2409
        %v2411 = vpop.f32.mrb[0].mxu0
        %v2412 = vpop.f32.mrb[0].mxu0
        %v2413 = vadd.f32 0.0, %v2412
        %v2414 = vpop.f32.mrb[0].mxu0
        %2415 = vmatprep.mubr.bf16.mxu0 0
        %2416 = vmatmul.mubr.bf16.gmra.mrb[0].mxu0 %v459
        %v2417 = vpop.f32.mrb[0].mxu0
        %v2418 = vadd.f32 0.0, %v2417
        %v2419 = vpop.f32.mrb[0].mxu0
        %v2420 = vpop.f32.mrb[0].mxu0
        %v2421 = vadd.f32 0.0, %v2420
        %v2422 = vpop.f32.mrb[0].mxu0
        %2423 = vmatprep.mubr.bf16.mxu0 0
        %2424 = vmatmul.mubr.bf16.gmra.mrb[0].mxu0 %v460
        %v2425 = vpop.f32.mrb[0].mxu0
        %v2426 = vadd.f32 0.0, %v2425
        %v2427 = vpop.f32.mrb[0].mxu0
        %v2428 = vpop.f32.mrb[0].mxu0
        %v2429 = vadd.f32 0.0, %v2428
        %v2430 = vpop.f32.mrb[0].mxu0
        %2431 = vdwg.mxu0
        %v2432 = vpack.c.bf16 %v2373, %v2370
        %v2433 = vpack.c.bf16 %v2381, %v2378
        %v2434 = vpack.c.bf16 %v2389, %v2386
        %v2435 = vpack.c.bf16 %v2397, %v2394
        %v2436 = vpack.c.bf16 %v2405, %v2402
        %v2437 = vpack.c.bf16 %v2413, %v2410
        %v2438 = vpack.c.bf16 %v2421, %v2418
        %v2439 = vpack.c.bf16 %v2429, %v2426
        %v2440 = vlaneseq
        %v2441 = vshrl.u32 %v2440, 7
        %v2442 = vsub.s32 3, %v2441
        %v2443 = vrot.slane %v404, %v2442
        %2444 = vmatprep.subr.bf16.mxu0 0
        %2445 = vmatpush1.bf16.msra.mxu0 %v658
        %2446 = vmatprep.subr.bf16.mxu0 0
        %2447 = vmatpush1.bf16.msra.mxu0 %v659
        %2448 = vmatprep.subr.bf16.mxu0 0
        %2449 = vmatpush1.bf16.msra.mxu0 %v660
        %2450 = vmatprep.subr.bf16.mxu0 0
        %2451 = vmatpush1.bf16.msra.mxu0 %v661
        %2452 = vmatprep.subr.bf16.mxu0 0
        %2453 = vmatpush1.bf16.msra.mxu0 %v662
        %2454 = vmatprep.subr.bf16.mxu0 0
        %2455 = vmatpush1.bf16.msra.mxu0 %v663
        %2456 = vmatprep.subr.bf16.mxu0 0
        %2457 = vmatpush1.bf16.msra.mxu0 %v664
        %2458 = vmatprep.subr.bf16.mxu0 0
        %2459 = vmatpush1.bf16.msra.mxu0 %v665
        %2460 = vmatprep.subr.bf16.mxu0 0
        %2461 = vmatpush1.bf16.msra.mxu0 0
        %2462 = vmatprep.subr.bf16.mxu0 0
        %2463 = vmatpush1.bf16.msra.mxu0 0
        %2464 = vmatprep.subr.bf16.mxu0 0
        %2465 = vmatpush1.bf16.msra.mxu0 0
        %2466 = vmatprep.subr.bf16.mxu0 0
        %2467 = vmatpush1.bf16.msra.mxu0 0
        %2468 = vmatprep.subr.bf16.mxu0 0
        %2469 = vmatpush1.bf16.msra.mxu0 0
        %2470 = vmatprep.subr.bf16.mxu0 0
        %2471 = vmatpush1.bf16.msra.mxu0 0
        %2472 = vmatprep.subr.bf16.mxu0 0
        %2473 = vmatpush1.bf16.msra.mxu0 0
        %2474 = vmatprep.subr.bf16.mxu0 0
        %2475 = vmatpush1.bf16.msra.mxu0 0
        %2476 = vmatprep.mubr.bf16.mxu0 0
        %2477 = vmatmul.mubr.bf16.gmra.mrb[0].mxu0 %v2432
        %v2478 = vpop.f32.mrb[0].mxu0
        %v2479 = vadd.f32 %v2443, %v2478
        %v2480 = vpop.f32.mrb[0].mxu0
        %v2481 = vpop.f32.mrb[0].mxu0
        %v2482 = vadd.f32 %v2443, %v2481
        %v2483 = vpop.f32.mrb[0].mxu0
        %2484 = vmatprep.mubr.bf16.mxu0 0
        %2485 = vmatmul.mubr.bf16.gmra.mrb[0].mxu0 %v2433
        %v2486 = vpop.f32.mrb[0].mxu0
        %v2487 = vadd.f32 %v2443, %v2486
        %v2488 = vpop.f32.mrb[0].mxu0
        %v2489 = vpop.f32.mrb[0].mxu0
        %v2490 = vadd.f32 %v2443, %v2489
        %v2491 = vpop.f32.mrb[0].mxu0
        %2492 = vmatprep.mubr.bf16.mxu0 0
        %2493 = vmatmul.mubr.bf16.gmra.mrb[0].mxu0 %v2434
        %v2494 = vpop.f32.mrb[0].mxu0
        %v2495 = vadd.f32 %v2443, %v2494
        %v2496 = vpop.f32.mrb[0].mxu0
        %v2497 = vpop.f32.mrb[0].mxu0
        %v2498 = vadd.f32 %v2443, %v2497
        %v2499 = vpop.f32.mrb[0].mxu0
        %2500 = vmatprep.mubr.bf16.mxu0 0
        %2501 = vmatmul.mubr.bf16.gmra.mrb[0].mxu0 %v2435
        %v2502 = vpop.f32.mrb[0].mxu0
        %v2503 = vadd.f32 %v2443, %v2502
        %v2504 = vpop.f32.mrb[0].mxu0
        %v2505 = vpop.f32.mrb[0].mxu0
        %v2506 = vadd.f32 %v2443, %v2505
        %v2507 = vpop.f32.mrb[0].mxu0
        %2508 = vmatprep.mubr.bf16.mxu0 0
        %2509 = vmatmul.mubr.bf16.gmra.mrb[0].mxu0 %v2436
        %v2510 = vpop.f32.mrb[0].mxu0
        %v2511 = vadd.f32 %v2443, %v2510
        %v2512 = vpop.f32.mrb[0].mxu0
        %v2513 = vpop.f32.mrb[0].mxu0
        %v2514 = vadd.f32 %v2443, %v2513
        %v2515 = vpop.f32.mrb[0].mxu0
        %2516 = vmatprep.mubr.bf16.mxu0 0
        %2517 = vmatmul.mubr.bf16.gmra.mrb[0].mxu0 %v2437
        %v2518 = vpop.f32.mrb[0].mxu0
        %v2519 = vadd.f32 %v2443, %v2518
        %v2520 = vpop.f32.mrb[0].mxu0
        %v2521 = vpop.f32.mrb[0].mxu0
        %v2522 = vadd.f32 %v2443, %v2521
        %v2523 = vpop.f32.mrb[0].mxu0
        %2524 = vmatprep.mubr.bf16.mxu0 0
        %2525 = vmatmul.mubr.bf16.gmra.mrb[0].mxu0 %v2438
        %v2526 = vpop.f32.mrb[0].mxu0
        %v2527 = vadd.f32 %v2443, %v2526
        %v2528 = vpop.f32.mrb[0].mxu0
        %v2529 = vpop.f32.mrb[0].mxu0
        %v2530 = vadd.f32 %v2443, %v2529
        %v2531 = vpop.f32.mrb[0].mxu0
        %2532 = vmatprep.mubr.bf16.mxu0 0
        %2533 = vmatmul.mubr.bf16.gmra.mrb[0].mxu0 %v2439
        %v2534 = vpop.f32.mrb[0].mxu0
        %v2535 = vadd.f32 %v2443, %v2534
        %v2536 = vpop.f32.mrb[0].mxu0
        %v2537 = vpop.f32.mrb[0].mxu0
        %v2538 = vadd.f32 %v2443, %v2537
        %v2539 = vpop.f32.mrb[0].mxu0
        %2540 = vdwg.mxu0
        %2541 = vmax.xlane.f32.xlu0 %v2479
        %v2542 = vpop.xlane.xlu0 %2541
        %2543 = vmax.xlane.f32.xlu0 %v2482
        %v2544 = vpop.xlane.xlu0 %2543
        %2545 = vmax.xlane.f32.xlu0 %v2487
        %v2546 = vpop.xlane.xlu0 %2545
        %2547 = vmax.xlane.f32.xlu0 %v2490
        %v2548 = vpop.xlane.xlu0 %2547
        %2549 = vmax.xlane.f32.xlu0 %v2495
        %v2550 = vpop.xlane.xlu0 %2549
        %2551 = vmax.xlane.f32.xlu0 %v2498
        %v2552 = vpop.xlane.xlu0 %2551
        %2553 = vmax.xlane.f32.xlu0 %v2503
        %v2554 = vpop.xlane.xlu0 %2553
        %2555 = vmax.xlane.f32.xlu0 %v2506
        %v2556 = vpop.xlane.xlu0 %2555
        %2557 = vmax.xlane.f32.xlu0 %v2511
        %v2558 = vpop.xlane.xlu0 %2557
        %2559 = vmax.xlane.f32.xlu0 %v2514
        %v2560 = vpop.xlane.xlu0 %2559
        %2561 = vmax.xlane.f32.xlu0 %v2519
        %v2562 = vpop.xlane.xlu0 %2561
        %2563 = vmax.xlane.f32.xlu0 %v2522
        %v2564 = vpop.xlane.xlu0 %2563
        %2565 = vmax.xlane.f32.xlu0 %v2527
        %v2566 = vpop.xlane.xlu0 %2565
        %2567 = vmax.xlane.f32.xlu0 %v2530
        %v2568 = vpop.xlane.xlu0 %2567
        %2569 = vmax.xlane.f32.xlu0 %v2535
        %v2570 = vpop.xlane.xlu0 %2569
        %2571 = vmax.xlane.f32.xlu0 %v2538
        %v2572 = vpop.xlane.xlu0 %2571
        %v2573 = vsub.f32 %v2479, %v2542
        %v2574 = vsub.f32 %v2482, %v2544
        %v2575 = vsub.f32 %v2487, %v2546
        %v2576 = vsub.f32 %v2490, %v2548
        %v2577 = vsub.f32 %v2495, %v2550
        %v2578 = vsub.f32 %v2498, %v2552
        %v2579 = vsub.f32 %v2503, %v2554
        %v2580 = vsub.f32 %v2506, %v2556
        %v2581 = vsub.f32 %v2511, %v2558
        %v2582 = vsub.f32 %v2514, %v2560
        %v2583 = vsub.f32 %v2519, %v2562
        %v2584 = vsub.f32 %v2522, %v2564
        %v2585 = vsub.f32 %v2527, %v2566
        %v2586 = vsub.f32 %v2530, %v2568
        %v2587 = vsub.f32 %v2535, %v2570
        %v2588 = vsub.f32 %v2538, %v2572
        %v2589 = vmul.f32 %v2573, 1.442695
        %v2590 = vpow.pop %v2589
        %v2591 = vmul.f32 %v2574, 1.442695
        %v2592 = vpow.pop %v2591
        %v2593 = vmul.f32 %v2575, 1.442695
        %v2594 = vpow.pop %v2593
        %v2595 = vmul.f32 %v2576, 1.442695
        %v2596 = vpow.pop %v2595
        %v2597 = vmul.f32 %v2577, 1.442695
        %v2598 = vpow.pop %v2597
        %v2599 = vmul.f32 %v2578, 1.442695
        %v2600 = vpow.pop %v2599
        %v2601 = vmul.f32 %v2579, 1.442695
        %v2602 = vpow.pop %v2601
        %v2603 = vmul.f32 %v2580, 1.442695
        %v2604 = vpow.pop %v2603
        %v2605 = vmul.f32 %v2581, 1.442695
        %v2606 = vpow.pop %v2605
        %v2607 = vmul.f32 %v2582, 1.442695
        %v2608 = vpow.pop %v2607
        %v2609 = vmul.f32 %v2583, 1.442695
        %v2610 = vpow.pop %v2609
        %v2611 = vmul.f32 %v2584, 1.442695
        %v2612 = vpow.pop %v2611
        %v2613 = vmul.f32 %v2585, 1.442695
        %v2614 = vpow.pop %v2613
        %v2615 = vmul.f32 %v2586, 1.442695
        %v2616 = vpow.pop %v2615
        %v2617 = vmul.f32 %v2587, 1.442695
        %v2618 = vpow.pop %v2617
        %v2619 = vmul.f32 %v2588, 1.442695
        %v2620 = vpow.pop %v2619
        %2621 = vadd.xlane.f32.xlu0 %v2590
        %v2622 = vpop.xlane.xlu0 %2621
        %2623 = vadd.xlane.f32.xlu0 %v2592
        %v2624 = vpop.xlane.xlu0 %2623
        %2625 = vadd.xlane.f32.xlu0 %v2594
        %v2626 = vpop.xlane.xlu0 %2625
        %2627 = vadd.xlane.f32.xlu0 %v2596
        %v2628 = vpop.xlane.xlu0 %2627
        %2629 = vadd.xlane.f32.xlu0 %v2598
        %v2630 = vpop.xlane.xlu0 %2629
        %2631 = vadd.xlane.f32.xlu0 %v2600
        %v2632 = vpop.xlane.xlu0 %2631
        %2633 = vadd.xlane.f32.xlu0 %v2602
        %v2634 = vpop.xlane.xlu0 %2633
        %2635 = vadd.xlane.f32.xlu0 %v2604
        %v2636 = vpop.xlane.xlu0 %2635
        %2637 = vadd.xlane.f32.xlu0 %v2606
        %v2638 = vpop.xlane.xlu0 %2637
        %2639 = vadd.xlane.f32.xlu0 %v2608
        %v2640 = vpop.xlane.xlu0 %2639
        %2641 = vadd.xlane.f32.xlu0 %v2610
        %v2642 = vpop.xlane.xlu0 %2641
        %2643 = vadd.xlane.f32.xlu0 %v2612
        %v2644 = vpop.xlane.xlu0 %2643
        %2645 = vadd.xlane.f32.xlu0 %v2614
        %v2646 = vpop.xlane.xlu0 %2645
        %2647 = vadd.xlane.f32.xlu0 %v2616
        %v2648 = vpop.xlane.xlu0 %2647
        %2649 = vadd.xlane.f32.xlu0 %v2618
        %v2650 = vpop.xlane.xlu0 %2649
        %2651 = vadd.xlane.f32.xlu0 %v2620
        %v2652 = vpop.xlane.xlu0 %2651
        %v2653 = vrcp.pop %v2622
        %v2654 = vrcp.pop %v2624
        %v2655 = vrcp.pop %v2626
        %v2656 = vrcp.pop %v2628
        %v2657 = vrcp.pop %v2630
        %v2658 = vrcp.pop %v2632
        %v2659 = vrcp.pop %v2634
        %v2660 = vrcp.pop %v2636
        %v2661 = vrcp.pop %v2638
        %v2662 = vrcp.pop %v2640
        %v2663 = vrcp.pop %v2642
        %v2664 = vrcp.pop %v2644
        %v2665 = vrcp.pop %v2646
        %v2666 = vrcp.pop %v2648
        %v2667 = vrcp.pop %v2650
        %v2668 = vrcp.pop %v2652
        %v2669 = vmul.f32 %v2590, %v2653
        %v2670 = vmul.f32 %v2592, %v2654
        %v2671 = vmul.f32 %v2594, %v2655
        %v2672 = vmul.f32 %v2596, %v2656
        %v2673 = vmul.f32 %v2598, %v2657
        %v2674 = vmul.f32 %v2600, %v2658
        %v2675 = vmul.f32 %v2602, %v2659
        %v2676 = vmul.f32 %v2604, %v2660
        %v2677 = vmul.f32 %v2606, %v2661
        %v2678 = vmul.f32 %v2608, %v2662
        %v2679 = vmul.f32 %v2610, %v2663
        %v2680 = vmul.f32 %v2612, %v2664
        %v2681 = vmul.f32 %v2614, %v2665
        %v2682 = vmul.f32 %v2616, %v2666
        %v2683 = vmul.f32 %v2618, %v2667
        %v2684 = vmul.f32 %v2620, %v2668
        %v2685 = vpack.c.bf16 %v2670, %v2669
        %v2686 = vpack.c.bf16 %v2672, %v2671
        %v2687 = vpack.c.bf16 %v2674, %v2673
        %v2688 = vpack.c.bf16 %v2676, %v2675
        %v2689 = vpack.c.bf16 %v2678, %v2677
        %v2690 = vpack.c.bf16 %v2680, %v2679
        %v2691 = vpack.c.bf16 %v2682, %v2681
        %v2692 = vpack.c.bf16 %v2684, %v2683
        %s2693 = scalar_lea.vmem [#allocation8], 192
        %v2694 = vld [vmem:[%s2693] sm:$0xf]
        %v2695 = vld [vmem:[%s2693 + $0x4] sm:$0xf]
        %v2696 = vld [vmem:[%s2693 + $0x8] sm:$0xf]
        %v2697 = vld [vmem:[%s2693 + $0xc] sm:$0xf]
        %v2698 = vld [vmem:[%s2693 + $0x10] sm:$0xf]
        %v2699 = vld [vmem:[%s2693 + $0x14] sm:$0xf]
        %v2700 = vld [vmem:[%s2693 + $0x18] sm:$0xf]
        %v2701 = vld [vmem:[%s2693 + $0x1c] sm:$0xf]
        %v2702 = vld [vmem:[%s2693 + $0x20] sm:$0xf]
        %v2703 = vld [vmem:[%s2693 + $0x24] sm:$0xf]
        %v2704 = vld [vmem:[%s2693 + $0x28] sm:$0xf]
        %v2705 = vld [vmem:[%s2693 + $0x2c] sm:$0xf]
        %v2706 = vld [vmem:[%s2693 + $0x30] sm:$0xf]
        %v2707 = vld [vmem:[%s2693 + $0x34] sm:$0xf]
        %v2708 = vld [vmem:[%s2693 + $0x38] sm:$0xf]
        %v2709 = vld [vmem:[%s2693 + $0x3c] sm:$0xf]
        %v2726 = vunpack.c.l.b16 %v2694
        %v2727 = vunpack.c.l.b16 %v2695
        %v2728 = vunpack.c.l.b16 %v2696
        %v2729 = vunpack.c.l.b16 %v2697
        %v2730 = vunpack.c.l.b16 %v2698
        %v2731 = vunpack.c.l.b16 %v2699
        %v2732 = vunpack.c.l.b16 %v2700
        %v2733 = vunpack.c.l.b16 %v2701
        %v2734 = vunpack.c.l.b16 %v2702
        %v2735 = vunpack.c.l.b16 %v2703
        %v2736 = vunpack.c.l.b16 %v2704
        %v2737 = vunpack.c.l.b16 %v2705
        %v2738 = vunpack.c.l.b16 %v2706
        %v2739 = vunpack.c.l.b16 %v2707
        %v2740 = vunpack.c.l.b16 %v2708
        %v2741 = vunpack.c.l.b16 %v2709
        %v2742 = vpack.c.b16 %v2727, %v2726
        %v2743 = vpack.c.b16 %v2729, %v2728
        %v2744 = vpack.c.b16 %v2731, %v2730
        %v2745 = vpack.c.b16 %v2733, %v2732
        %v2746 = vpack.c.b16 %v2735, %v2734
        %v2747 = vpack.c.b16 %v2737, %v2736
        %v2748 = vpack.c.b16 %v2739, %v2738
        %v2749 = vpack.c.b16 %v2741, %v2740
        %2758 = vmatprep.subr.bf16.mxu0 0
        %2759 = vmatpush1.bf16.msra.mxu0 %v2742
        %2760 = vmatprep.subr.bf16.mxu0 0
        %2761 = vmatpush1.bf16.msra.mxu0 %v2743
        %2762 = vmatprep.subr.bf16.mxu0 0
        %2763 = vmatpush1.bf16.msra.mxu0 %v2744
        %2764 = vmatprep.subr.bf16.mxu0 0
        %2765 = vmatpush1.bf16.msra.mxu0 %v2745
        %2766 = vmatprep.subr.bf16.mxu0 0
        %2767 = vmatpush1.bf16.msra.mxu0 %v2746
        %2768 = vmatprep.subr.bf16.mxu0 0
        %2769 = vmatpush1.bf16.msra.mxu0 %v2747
        %2770 = vmatprep.subr.bf16.mxu0 0
        %2771 = vmatpush1.bf16.msra.mxu0 %v2748
        %2772 = vmatprep.subr.bf16.mxu0 0
        %2773 = vmatpush1.bf16.msra.mxu0 %v2749
        %2774 = vmatprep.subr.bf16.mxu0 0
        %2775 = vmatpush1.bf16.msra.mxu0 0
        %2776 = vmatprep.subr.bf16.mxu0 0
        %2777 = vmatpush1.bf16.msra.mxu0 0
        %2778 = vmatprep.subr.bf16.mxu0 0
        %2779 = vmatpush1.bf16.msra.mxu0 0
        %2780 = vmatprep.subr.bf16.mxu0 0
        %2781 = vmatpush1.bf16.msra.mxu0 0
        %2782 = vmatprep.subr.bf16.mxu0 0
        %2783 = vmatpush1.bf16.msra.mxu0 0
        %2784 = vmatprep.subr.bf16.mxu0 0
        %2785 = vmatpush1.bf16.msra.mxu0 0
        %2786 = vmatprep.subr.bf16.mxu0 0
        %2787 = vmatpush1.bf16.msra.mxu0 0
        %2788 = vmatprep.subr.bf16.mxu0 0
        %2789 = vmatpush1.bf16.msra.mxu0 0
        %2790 = vmatprep.mubr.bf16.mxu0 0
        %2791 = vmatmul.mubr.bf16.gmra.mrb[0].mxu0 %v2685
        %v2792 = vpop.f32.mrb[0].mxu0
        %v2793 = vadd.f32 0.0, %v2792
        %v2794 = vpop.f32.mrb[0].mxu0
        %v2795 = vpop.f32.mrb[0].mxu0
        %v2796 = vadd.f32 0.0, %v2795
        %v2797 = vpop.f32.mrb[0].mxu0
        %2798 = vmatprep.mubr.bf16.mxu0 0
        %2799 = vmatmul.mubr.bf16.gmra.mrb[0].mxu0 %v2686
        %v2800 = vpop.f32.mrb[0].mxu0
        %v2801 = vadd.f32 0.0, %v2800
        %v2802 = vpop.f32.mrb[0].mxu0
        %v2803 = vpop.f32.mrb[0].mxu0
        %v2804 = vadd.f32 0.0, %v2803
        %v2805 = vpop.f32.mrb[0].mxu0
        %2806 = vmatprep.mubr.bf16.mxu0 0
        %2807 = vmatmul.mubr.bf16.gmra.mrb[0].mxu0 %v2687
        %v2808 = vpop.f32.mrb[0].mxu0
        %v2809 = vadd.f32 0.0, %v2808
        %v2810 = vpop.f32.mrb[0].mxu0
        %v2811 = vpop.f32.mrb[0].mxu0
        %v2812 = vadd.f32 0.0, %v2811
        %v2813 = vpop.f32.mrb[0].mxu0
        %2814 = vmatprep.mubr.bf16.mxu0 0
        %2815 = vmatmul.mubr.bf16.gmra.mrb[0].mxu0 %v2688
        %v2816 = vpop.f32.mrb[0].mxu0
        %v2817 = vadd.f32 0.0, %v2816
        %v2818 = vpop.f32.mrb[0].mxu0
        %v2819 = vpop.f32.mrb[0].mxu0
        %v2820 = vadd.f32 0.0, %v2819
        %v2821 = vpop.f32.mrb[0].mxu0
        %2822 = vmatprep.mubr.bf16.mxu0 0
        %2823 = vmatmul.mubr.bf16.gmra.mrb[0].mxu0 %v2689
        %v2824 = vpop.f32.mrb[0].mxu0
        %v2825 = vadd.f32 0.0, %v2824
        %v2826 = vpop.f32.mrb[0].mxu0
        %v2827 = vpop.f32.mrb[0].mxu0
        %v2828 = vadd.f32 0.0, %v2827
        %v2829 = vpop.f32.mrb[0].mxu0
        %2830 = vmatprep.mubr.bf16.mxu0 0
        %2831 = vmatmul.mubr.bf16.gmra.mrb[0].mxu0 %v2690
        %v2832 = vpop.f32.mrb[0].mxu0
        %v2833 = vadd.f32 0.0, %v2832
        %v2834 = vpop.f32.mrb[0].mxu0
        %v2835 = vpop.f32.mrb[0].mxu0
        %v2836 = vadd.f32 0.0, %v2835
        %v2837 = vpop.f32.mrb[0].mxu0
        %2838 = vmatprep.mubr.bf16.mxu0 0
        %2839 = vmatmul.mubr.bf16.gmra.mrb[0].mxu0 %v2691
        %v2840 = vpop.f32.mrb[0].mxu0
        %v2841 = vadd.f32 0.0, %v2840
        %v2842 = vpop.f32.mrb[0].mxu0
        %v2843 = vpop.f32.mrb[0].mxu0
        %v2844 = vadd.f32 0.0, %v2843
        %v2845 = vpop.f32.mrb[0].mxu0
        %2846 = vmatprep.mubr.bf16.mxu0 0
        %2847 = vmatmul.mubr.bf16.gmra.mrb[0].mxu0 %v2692
        %v2848 = vpop.f32.mrb[0].mxu0
        %v2849 = vadd.f32 0.0, %v2848
        %v2850 = vpop.f32.mrb[0].mxu0
        %v2851 = vpop.f32.mrb[0].mxu0
        %v2852 = vadd.f32 0.0, %v2851
        %v2853 = vpop.f32.mrb[0].mxu0
        %2854 = vdwg.mxu0
        %v2855 = vadd.f32 %v2254, %v2793
        %v2856 = vadd.f32 %v2255, %v2796
        %v2857 = vadd.f32 %v2256, %v2801
        %v2858 = vadd.f32 %v2257, %v2804
        %v2859 = vadd.f32 %v2258, %v2809
        %v2860 = vadd.f32 %v2259, %v2812
        %v2861 = vadd.f32 %v2260, %v2817
        %v2862 = vadd.f32 %v2261, %v2820
        %v2863 = vadd.f32 %v2262, %v2825
        %v2864 = vadd.f32 %v2263, %v2828
        %v2865 = vadd.f32 %v2264, %v2833
        %v2866 = vadd.f32 %v2265, %v2836
        %v2867 = vadd.f32 %v2266, %v2841
        %v2868 = vadd.f32 %v2267, %v2844
        %v2869 = vadd.f32 %v2268, %v2849
        %v2870 = vadd.f32 %v2269, %v2852
        %s2871 = scalar_lea.vmem [#allocation7], 256
        %v2872 = vld [vmem:[%s2871] sm:$0xf]
        %v2873 = vld [vmem:[%s2871 + $0x4] sm:$0xf]
        %v2874 = vld [vmem:[%s2871 + $0x8] sm:$0xf]
        %v2875 = vld [vmem:[%s2871 + $0xc] sm:$0xf]
        %v2876 = vld [vmem:[%s2871 + $0x10] sm:$0xf]
        %v2877 = vld [vmem:[%s2871 + $0x14] sm:$0xf]
        %v2878 = vld [vmem:[%s2871 + $0x18] sm:$0xf]
        %v2879 = vld [vmem:[%s2871 + $0x1c] sm:$0xf]
        %v2880 = vld [vmem:[%s2871 + $0x20] sm:$0xf]
        %v2881 = vld [vmem:[%s2871 + $0x24] sm:$0xf]
        %v2882 = vld [vmem:[%s2871 + $0x28] sm:$0xf]
        %v2883 = vld [vmem:[%s2871 + $0x2c] sm:$0xf]
        %v2884 = vld [vmem:[%s2871 + $0x30] sm:$0xf]
        %v2885 = vld [vmem:[%s2871 + $0x34] sm:$0xf]
        %v2886 = vld [vmem:[%s2871 + $0x38] sm:$0xf]
        %v2887 = vld [vmem:[%s2871 + $0x3c] sm:$0xf]
        %v2904 = vunpack.c.l.b16 %v2872
        %v2905 = vunpack.c.l.b16 %v2873
        %v2906 = vunpack.c.l.b16 %v2874
        %v2907 = vunpack.c.l.b16 %v2875
        %v2908 = vunpack.c.l.b16 %v2876
        %v2909 = vunpack.c.l.b16 %v2877
        %v2910 = vunpack.c.l.b16 %v2878
        %v2911 = vunpack.c.l.b16 %v2879
        %v2912 = vunpack.c.l.b16 %v2880
        %v2913 = vunpack.c.l.b16 %v2881
        %v2914 = vunpack.c.l.b16 %v2882
        %v2915 = vunpack.c.l.b16 %v2883
        %v2916 = vunpack.c.l.b16 %v2884
        %v2917 = vunpack.c.l.b16 %v2885
        %v2918 = vunpack.c.l.b16 %v2886
        %v2919 = vunpack.c.l.b16 %v2887
        %v2920 = vpack.c.b16 %v2905, %v2904
        %v2921 = vpack.c.b16 %v2907, %v2906
        %v2922 = vpack.c.b16 %v2909, %v2908
        %v2923 = vpack.c.b16 %v2911, %v2910
        %v2924 = vpack.c.b16 %v2913, %v2912
        %v2925 = vpack.c.b16 %v2915, %v2914
        %v2926 = vpack.c.b16 %v2917, %v2916
        %v2927 = vpack.c.b16 %v2919, %v2918
        %2936 = vmatprep.subr.bf16.mxu0 0
        %2937 = vmatpush1.bf16.msra.mxu0 %v2920
        %2938 = vmatprep.subr.bf16.mxu0 0
        %2939 = vmatpush1.bf16.msra.mxu0 %v2921
        %2940 = vmatprep.subr.bf16.mxu0 0
        %2941 = vmatpush1.bf16.msra.mxu0 %v2922
        %2942 = vmatprep.subr.bf16.mxu0 0
        %2943 = vmatpush1.bf16.msra.mxu0 %v2923
        %2944 = vmatprep.subr.bf16.mxu0 0
        %2945 = vmatpush1.bf16.msra.mxu0 %v2924
        %2946 = vmatprep.subr.bf16.mxu0 0
        %2947 = vmatpush1.bf16.msra.mxu0 %v2925
        %2948 = vmatprep.subr.bf16.mxu0 0
        %2949 = vmatpush1.bf16.msra.mxu0 %v2926
        %2950 = vmatprep.subr.bf16.mxu0 0
        %2951 = vmatpush1.bf16.msra.mxu0 %v2927
        %2952 = vmatprep.subr.bf16.mxu0 0
        %2953 = vmatpush1.bf16.msra.mxu0 0
        %2954 = vmatprep.subr.bf16.mxu0 0
        %2955 = vmatpush1.bf16.msra.mxu0 0
        %2956 = vmatprep.subr.bf16.mxu0 0
        %2957 = vmatpush1.bf16.msra.mxu0 0
        %2958 = vmatprep.subr.bf16.mxu0 0
        %2959 = vmatpush1.bf16.msra.mxu0 0
        %2960 = vmatprep.subr.bf16.mxu0 0
        %2961 = vmatpush1.bf16.msra.mxu0 0
        %2962 = vmatprep.subr.bf16.mxu0 0
        %2963 = vmatpush1.bf16.msra.mxu0 0
        %2964 = vmatprep.subr.bf16.mxu0 0
        %2965 = vmatpush1.bf16.msra.mxu0 0
        %2966 = vmatprep.subr.bf16.mxu0 0
        %2967 = vmatpush1.bf16.msra.mxu0 0
        %2968 = vmatprep.mubr.bf16.mxu0 0
        %2969 = vmatmul.mubr.bf16.gmra.mrb[0].mxu0 %v453
        %v2970 = vpop.f32.mrb[0].mxu0
        %v2971 = vadd.f32 0.0, %v2970
        %v2972 = vpop.f32.mrb[0].mxu0
        %v2973 = vpop.f32.mrb[0].mxu0
        %v2974 = vadd.f32 0.0, %v2973
        %v2975 = vpop.f32.mrb[0].mxu0
        %2976 = vmatprep.mubr.bf16.mxu0 0
        %2977 = vmatmul.mubr.bf16.gmra.mrb[0].mxu0 %v454
        %v2978 = vpop.f32.mrb[0].mxu0
        %v2979 = vadd.f32 0.0, %v2978
        %v2980 = vpop.f32.mrb[0].mxu0
        %v2981 = vpop.f32.mrb[0].mxu0
        %v2982 = vadd.f32 0.0, %v2981
        %v2983 = vpop.f32.mrb[0].mxu0
        %2984 = vmatprep.mubr.bf16.mxu0 0
        %2985 = vmatmul.mubr.bf16.gmra.mrb[0].mxu0 %v455
        %v2986 = vpop.f32.mrb[0].mxu0
        %v2987 = vadd.f32 0.0, %v2986
        %v2988 = vpop.f32.mrb[0].mxu0
        %v2989 = vpop.f32.mrb[0].mxu0
        %v2990 = vadd.f32 0.0, %v2989
        %v2991 = vpop.f32.mrb[0].mxu0
        %2992 = vmatprep.mubr.bf16.mxu0 0
        %2993 = vmatmul.mubr.bf16.gmra.mrb[0].mxu0 %v456
        %v2994 = vpop.f32.mrb[0].mxu0
        %v2995 = vadd.f32 0.0, %v2994
        %v2996 = vpop.f32.mrb[0].mxu0
        %v2997 = vpop.f32.mrb[0].mxu0
        %v2998 = vadd.f32 0.0, %v2997
        %v2999 = vpop.f32.mrb[0].mxu0
        %3000 = vmatprep.mubr.bf16.mxu0 0
        %3001 = vmatmul.mubr.bf16.gmra.mrb[0].mxu0 %v457
        %v3002 = vpop.f32.mrb[0].mxu0
        %v3003 = vadd.f32 0.0, %v3002
        %v3004 = vpop.f32.mrb[0].mxu0
        %v3005 = vpop.f32.mrb[0].mxu0
        %v3006 = vadd.f32 0.0, %v3005
        %v3007 = vpop.f32.mrb[0].mxu0
        %3008 = vmatprep.mubr.bf16.mxu0 0
        %3009 = vmatmul.mubr.bf16.gmra.mrb[0].mxu0 %v458
        %v3010 = vpop.f32.mrb[0].mxu0
        %v3011 = vadd.f32 0.0, %v3010
        %v3012 = vpop.f32.mrb[0].mxu0
        %v3013 = vpop.f32.mrb[0].mxu0
        %v3014 = vadd.f32 0.0, %v3013
        %v3015 = vpop.f32.mrb[0].mxu0
        %3016 = vmatprep.mubr.bf16.mxu0 0
        %3017 = vmatmul.mubr.bf16.gmra.mrb[0].mxu0 %v459
        %v3018 = vpop.f32.mrb[0].mxu0
        %v3019 = vadd.f32 0.0, %v3018
        %v3020 = vpop.f32.mrb[0].mxu0
        %v3021 = vpop.f32.mrb[0].mxu0
        %v3022 = vadd.f32 0.0, %v3021
        %v3023 = vpop.f32.mrb[0].mxu0
        %3024 = vmatprep.mubr.bf16.mxu0 0
        %3025 = vmatmul.mubr.bf16.gmra.mrb[0].mxu0 %v460
        %v3026 = vpop.f32.mrb[0].mxu0
        %v3027 = vadd.f32 0.0, %v3026
        %v3028 = vpop.f32.mrb[0].mxu0
        %v3029 = vpop.f32.mrb[0].mxu0
        %v3030 = vadd.f32 0.0, %v3029
        %v3031 = vpop.f32.mrb[0].mxu0
        %3032 = vdwg.mxu0
        %v3033 = vpack.c.bf16 %v2974, %v2971
        %v3034 = vpack.c.bf16 %v2982, %v2979
        %v3035 = vpack.c.bf16 %v2990, %v2987
        %v3036 = vpack.c.bf16 %v2998, %v2995
        %v3037 = vpack.c.bf16 %v3006, %v3003
        %v3038 = vpack.c.bf16 %v3014, %v3011
        %v3039 = vpack.c.bf16 %v3022, %v3019
        %v3040 = vpack.c.bf16 %v3030, %v3027
        %v3041 = vlaneseq
        %v3042 = vshrl.u32 %v3041, 7
        %v3043 = vsub.s32 4, %v3042
        %v3044 = vrot.slane %v404, %v3043
        %3045 = vmatprep.subr.bf16.mxu0 0
        %3046 = vmatpush1.bf16.msra.mxu0 %v658
        %3047 = vmatprep.subr.bf16.mxu0 0
        %3048 = vmatpush1.bf16.msra.mxu0 %v659
        %3049 = vmatprep.subr.bf16.mxu0 0
        %3050 = vmatpush1.bf16.msra.mxu0 %v660
        %3051 = vmatprep.subr.bf16.mxu0 0
        %3052 = vmatpush1.bf16.msra.mxu0 %v661
        %3053 = vmatprep.subr.bf16.mxu0 0
        %3054 = vmatpush1.bf16.msra.mxu0 %v662
        %3055 = vmatprep.subr.bf16.mxu0 0
        %3056 = vmatpush1.bf16.msra.mxu0 %v663
        %3057 = vmatprep.subr.bf16.mxu0 0
        %3058 = vmatpush1.bf16.msra.mxu0 %v664
        %3059 = vmatprep.subr.bf16.mxu0 0
        %3060 = vmatpush1.bf16.msra.mxu0 %v665
        %3061 = vmatprep.subr.bf16.mxu0 0
        %3062 = vmatpush1.bf16.msra.mxu0 0
        %3063 = vmatprep.subr.bf16.mxu0 0
        %3064 = vmatpush1.bf16.msra.mxu0 0
        %3065 = vmatprep.subr.bf16.mxu0 0
        %3066 = vmatpush1.bf16.msra.mxu0 0
        %3067 = vmatprep.subr.bf16.mxu0 0
        %3068 = vmatpush1.bf16.msra.mxu0 0
        %3069 = vmatprep.subr.bf16.mxu0 0
        %3070 = vmatpush1.bf16.msra.mxu0 0
        %3071 = vmatprep.subr.bf16.mxu0 0
        %3072 = vmatpush1.bf16.msra.mxu0 0
        %3073 = vmatprep.subr.bf16.mxu0 0
        %3074 = vmatpush1.bf16.msra.mxu0 0
        %3075 = vmatprep.subr.bf16.mxu0 0
        %3076 = vmatpush1.bf16.msra.mxu0 0
        %3077 = vmatprep.mubr.bf16.mxu0 0
        %3078 = vmatmul.mubr.bf16.gmra.mrb[0].mxu0 %v3033
        %v3079 = vpop.f32.mrb[0].mxu0
        %v3080 = vadd.f32 %v3044, %v3079
        %v3081 = vpop.f32.mrb[0].mxu0
        %v3082 = vpop.f32.mrb[0].mxu0
        %v3083 = vadd.f32 %v3044, %v3082
        %v3084 = vpop.f32.mrb[0].mxu0
        %3085 = vmatprep.mubr.bf16.mxu0 0
        %3086 = vmatmul.mubr.bf16.gmra.mrb[0].mxu0 %v3034
        %v3087 = vpop.f32.mrb[0].mxu0
        %v3088 = vadd.f32 %v3044, %v3087
        %v3089 = vpop.f32.mrb[0].mxu0
        %v3090 = vpop.f32.mrb[0].mxu0
        %v3091 = vadd.f32 %v3044, %v3090
        %v3092 = vpop.f32.mrb[0].mxu0
        %3093 = vmatprep.mubr.bf16.mxu0 0
        %3094 = vmatmul.mubr.bf16.gmra.mrb[0].mxu0 %v3035
        %v3095 = vpop.f32.mrb[0].mxu0
        %v3096 = vadd.f32 %v3044, %v3095
        %v3097 = vpop.f32.mrb[0].mxu0
        %v3098 = vpop.f32.mrb[0].mxu0
        %v3099 = vadd.f32 %v3044, %v3098
        %v3100 = vpop.f32.mrb[0].mxu0
        %3101 = vmatprep.mubr.bf16.mxu0 0
        %3102 = vmatmul.mubr.bf16.gmra.mrb[0].mxu0 %v3036
        %v3103 = vpop.f32.mrb[0].mxu0
        %v3104 = vadd.f32 %v3044, %v3103
        %v3105 = vpop.f32.mrb[0].mxu0
        %v3106 = vpop.f32.mrb[0].mxu0
        %v3107 = vadd.f32 %v3044, %v3106
        %v3108 = vpop.f32.mrb[0].mxu0
        %3109 = vmatprep.mubr.bf16.mxu0 0
        %3110 = vmatmul.mubr.bf16.gmra.mrb[0].mxu0 %v3037
        %v3111 = vpop.f32.mrb[0].mxu0
        %v3112 = vadd.f32 %v3044, %v3111
        %v3113 = vpop.f32.mrb[0].mxu0
        %v3114 = vpop.f32.mrb[0].mxu0
        %v3115 = vadd.f32 %v3044, %v3114
        %v3116 = vpop.f32.mrb[0].mxu0
        %3117 = vmatprep.mubr.bf16.mxu0 0
        %3118 = vmatmul.mubr.bf16.gmra.mrb[0].mxu0 %v3038
        %v3119 = vpop.f32.mrb[0].mxu0
        %v3120 = vadd.f32 %v3044, %v3119
        %v3121 = vpop.f32.mrb[0].mxu0
        %v3122 = vpop.f32.mrb[0].mxu0
        %v3123 = vadd.f32 %v3044, %v3122
        %v3124 = vpop.f32.mrb[0].mxu0
        %3125 = vmatprep.mubr.bf16.mxu0 0
        %3126 = vmatmul.mubr.bf16.gmra.mrb[0].mxu0 %v3039
        %v3127 = vpop.f32.mrb[0].mxu0
        %v3128 = vadd.f32 %v3044, %v3127
        %v3129 = vpop.f32.mrb[0].mxu0
        %v3130 = vpop.f32.mrb[0].mxu0
        %v3131 = vadd.f32 %v3044, %v3130
        %v3132 = vpop.f32.mrb[0].mxu0
        %3133 = vmatprep.mubr.bf16.mxu0 0
        %3134 = vmatmul.mubr.bf16.gmra.mrb[0].mxu0 %v3040
        %v3135 = vpop.f32.mrb[0].mxu0
        %v3136 = vadd.f32 %v3044, %v3135
        %v3137 = vpop.f32.mrb[0].mxu0
        %v3138 = vpop.f32.mrb[0].mxu0
        %v3139 = vadd.f32 %v3044, %v3138
        %v3140 = vpop.f32.mrb[0].mxu0
        %3141 = vdwg.mxu0
        %3142 = vmax.xlane.f32.xlu0 %v3080
        %v3143 = vpop.xlane.xlu0 %3142
        %3144 = vmax.xlane.f32.xlu0 %v3083
        %v3145 = vpop.xlane.xlu0 %3144
        %3146 = vmax.xlane.f32.xlu0 %v3088
        %v3147 = vpop.xlane.xlu0 %3146
        %3148 = vmax.xlane.f32.xlu0 %v3091
        %v3149 = vpop.xlane.xlu0 %3148
        %3150 = vmax.xlane.f32.xlu0 %v3096
        %v3151 = vpop.xlane.xlu0 %3150
        %3152 = vmax.xlane.f32.xlu0 %v3099
        %v3153 = vpop.xlane.xlu0 %3152
        %3154 = vmax.xlane.f32.xlu0 %v3104
        %v3155 = vpop.xlane.xlu0 %3154
        %3156 = vmax.xlane.f32.xlu0 %v3107
        %v3157 = vpop.xlane.xlu0 %3156
        %3158 = vmax.xlane.f32.xlu0 %v3112
        %v3159 = vpop.xlane.xlu0 %3158
        %3160 = vmax.xlane.f32.xlu0 %v3115
        %v3161 = vpop.xlane.xlu0 %3160
        %3162 = vmax.xlane.f32.xlu0 %v3120
        %v3163 = vpop.xlane.xlu0 %3162
        %3164 = vmax.xlane.f32.xlu0 %v3123
        %v3165 = vpop.xlane.xlu0 %3164
        %3166 = vmax.xlane.f32.xlu0 %v3128
        %v3167 = vpop.xlane.xlu0 %3166
        %3168 = vmax.xlane.f32.xlu0 %v3131
        %v3169 = vpop.xlane.xlu0 %3168
        %3170 = vmax.xlane.f32.xlu0 %v3136
        %v3171 = vpop.xlane.xlu0 %3170
        %3172 = vmax.xlane.f32.xlu0 %v3139
        %v3173 = vpop.xlane.xlu0 %3172
        %v3174 = vsub.f32 %v3080, %v3143
        %v3175 = vsub.f32 %v3083, %v3145
        %v3176 = vsub.f32 %v3088, %v3147
        %v3177 = vsub.f32 %v3091, %v3149
        %v3178 = vsub.f32 %v3096, %v3151
        %v3179 = vsub.f32 %v3099, %v3153
        %v3180 = vsub.f32 %v3104, %v3155
        %v3181 = vsub.f32 %v3107, %v3157
        %v3182 = vsub.f32 %v3112, %v3159
        %v3183 = vsub.f32 %v3115, %v3161
        %v3184 = vsub.f32 %v3120, %v3163
        %v3185 = vsub.f32 %v3123, %v3165
        %v3186 = vsub.f32 %v3128, %v3167
        %v3187 = vsub.f32 %v3131, %v3169
        %v3188 = vsub.f32 %v3136, %v3171
        %v3189 = vsub.f32 %v3139, %v3173
        %v3190 = vmul.f32 %v3174, 1.442695
        %v3191 = vpow.pop %v3190
        %v3192 = vmul.f32 %v3175, 1.442695
        %v3193 = vpow.pop %v3192
        %v3194 = vmul.f32 %v3176, 1.442695
        %v3195 = vpow.pop %v3194
        %v3196 = vmul.f32 %v3177, 1.442695
        %v3197 = vpow.pop %v3196
        %v3198 = vmul.f32 %v3178, 1.442695
        %v3199 = vpow.pop %v3198
        %v3200 = vmul.f32 %v3179, 1.442695
        %v3201 = vpow.pop %v3200
        %v3202 = vmul.f32 %v3180, 1.442695
        %v3203 = vpow.pop %v3202
        %v3204 = vmul.f32 %v3181, 1.442695
        %v3205 = vpow.pop %v3204
        %v3206 = vmul.f32 %v3182, 1.442695
        %v3207 = vpow.pop %v3206
        %v3208 = vmul.f32 %v3183, 1.442695
        %v3209 = vpow.pop %v3208
        %v3210 = vmul.f32 %v3184, 1.442695
        %v3211 = vpow.pop %v3210
        %v3212 = vmul.f32 %v3185, 1.442695
        %v3213 = vpow.pop %v3212
        %v3214 = vmul.f32 %v3186, 1.442695
        %v3215 = vpow.pop %v3214
        %v3216 = vmul.f32 %v3187, 1.442695
        %v3217 = vpow.pop %v3216
        %v3218 = vmul.f32 %v3188, 1.442695
        %v3219 = vpow.pop %v3218
        %v3220 = vmul.f32 %v3189, 1.442695
        %v3221 = vpow.pop %v3220
        %3222 = vadd.xlane.f32.xlu0 %v3191
        %v3223 = vpop.xlane.xlu0 %3222
        %3224 = vadd.xlane.f32.xlu0 %v3193
        %v3225 = vpop.xlane.xlu0 %3224
        %3226 = vadd.xlane.f32.xlu0 %v3195
        %v3227 = vpop.xlane.xlu0 %3226
        %3228 = vadd.xlane.f32.xlu0 %v3197
        %v3229 = vpop.xlane.xlu0 %3228
        %3230 = vadd.xlane.f32.xlu0 %v3199
        %v3231 = vpop.xlane.xlu0 %3230
        %3232 = vadd.xlane.f32.xlu0 %v3201
        %v3233 = vpop.xlane.xlu0 %3232
        %3234 = vadd.xlane.f32.xlu0 %v3203
        %v3235 = vpop.xlane.xlu0 %3234
        %3236 = vadd.xlane.f32.xlu0 %v3205
        %v3237 = vpop.xlane.xlu0 %3236
        %3238 = vadd.xlane.f32.xlu0 %v3207
        %v3239 = vpop.xlane.xlu0 %3238
        %3240 = vadd.xlane.f32.xlu0 %v3209
        %v3241 = vpop.xlane.xlu0 %3240
        %3242 = vadd.xlane.f32.xlu0 %v3211
        %v3243 = vpop.xlane.xlu0 %3242
        %3244 = vadd.xlane.f32.xlu0 %v3213
        %v3245 = vpop.xlane.xlu0 %3244
        %3246 = vadd.xlane.f32.xlu0 %v3215
        %v3247 = vpop.xlane.xlu0 %3246
        %3248 = vadd.xlane.f32.xlu0 %v3217
        %v3249 = vpop.xlane.xlu0 %3248
        %3250 = vadd.xlane.f32.xlu0 %v3219
        %v3251 = vpop.xlane.xlu0 %3250
        %3252 = vadd.xlane.f32.xlu0 %v3221
        %v3253 = vpop.xlane.xlu0 %3252
        %v3254 = vrcp.pop %v3223
        %v3255 = vrcp.pop %v3225
        %v3256 = vrcp.pop %v3227
        %v3257 = vrcp.pop %v3229
        %v3258 = vrcp.pop %v3231
        %v3259 = vrcp.pop %v3233
        %v3260 = vrcp.pop %v3235
        %v3261 = vrcp.pop %v3237
        %v3262 = vrcp.pop %v3239
        %v3263 = vrcp.pop %v3241
        %v3264 = vrcp.pop %v3243
        %v3265 = vrcp.pop %v3245
        %v3266 = vrcp.pop %v3247
        %v3267 = vrcp.pop %v3249
        %v3268 = vrcp.pop %v3251
        %v3269 = vrcp.pop %v3253
        %v3270 = vmul.f32 %v3191, %v3254
        %v3271 = vmul.f32 %v3193, %v3255
        %v3272 = vmul.f32 %v3195, %v3256
        %v3273 = vmul.f32 %v3197, %v3257
        %v3274 = vmul.f32 %v3199, %v3258
        %v3275 = vmul.f32 %v3201, %v3259
        %v3276 = vmul.f32 %v3203, %v3260
        %v3277 = vmul.f32 %v3205, %v3261
        %v3278 = vmul.f32 %v3207, %v3262
        %v3279 = vmul.f32 %v3209, %v3263
        %v3280 = vmul.f32 %v3211, %v3264
        %v3281 = vmul.f32 %v3213, %v3265
        %v3282 = vmul.f32 %v3215, %v3266
        %v3283 = vmul.f32 %v3217, %v3267
        %v3284 = vmul.f32 %v3219, %v3268
        %v3285 = vmul.f32 %v3221, %v3269
        %v3286 = vpack.c.bf16 %v3271, %v3270
        %v3287 = vpack.c.bf16 %v3273, %v3272
        %v3288 = vpack.c.bf16 %v3275, %v3274
        %v3289 = vpack.c.bf16 %v3277, %v3276
        %v3290 = vpack.c.bf16 %v3279, %v3278
        %v3291 = vpack.c.bf16 %v3281, %v3280
        %v3292 = vpack.c.bf16 %v3283, %v3282
        %v3293 = vpack.c.bf16 %v3285, %v3284
        %s3294 = scalar_lea.vmem [#allocation8], 256
        %v3295 = vld [vmem:[%s3294] sm:$0xf]
        %v3296 = vld [vmem:[%s3294 + $0x4] sm:$0xf]
        %v3297 = vld [vmem:[%s3294 + $0x8] sm:$0xf]
        %v3298 = vld [vmem:[%s3294 + $0xc] sm:$0xf]
        %v3299 = vld [vmem:[%s3294 + $0x10] sm:$0xf]
        %v3300 = vld [vmem:[%s3294 + $0x14] sm:$0xf]
        %v3301 = vld [vmem:[%s3294 + $0x18] sm:$0xf]
        %v3302 = vld [vmem:[%s3294 + $0x1c] sm:$0xf]
        %v3303 = vld [vmem:[%s3294 + $0x20] sm:$0xf]
        %v3304 = vld [vmem:[%s3294 + $0x24] sm:$0xf]
        %v3305 = vld [vmem:[%s3294 + $0x28] sm:$0xf]
        %v3306 = vld [vmem:[%s3294 + $0x2c] sm:$0xf]
        %v3307 = vld [vmem:[%s3294 + $0x30] sm:$0xf]
        %v3308 = vld [vmem:[%s3294 + $0x34] sm:$0xf]
        %v3309 = vld [vmem:[%s3294 + $0x38] sm:$0xf]
        %v3310 = vld [vmem:[%s3294 + $0x3c] sm:$0xf]
        %v3327 = vunpack.c.l.b16 %v3295
        %v3328 = vunpack.c.l.b16 %v3296
        %v3329 = vunpack.c.l.b16 %v3297
        %v3330 = vunpack.c.l.b16 %v3298
        %v3331 = vunpack.c.l.b16 %v3299
        %v3332 = vunpack.c.l.b16 %v3300
        %v3333 = vunpack.c.l.b16 %v3301
        %v3334 = vunpack.c.l.b16 %v3302
        %v3335 = vunpack.c.l.b16 %v3303
        %v3336 = vunpack.c.l.b16 %v3304
        %v3337 = vunpack.c.l.b16 %v3305
        %v3338 = vunpack.c.l.b16 %v3306
        %v3339 = vunpack.c.l.b16 %v3307
        %v3340 = vunpack.c.l.b16 %v3308
        %v3341 = vunpack.c.l.b16 %v3309
        %v3342 = vunpack.c.l.b16 %v3310
        %v3343 = vpack.c.b16 %v3328, %v3327
        %v3344 = vpack.c.b16 %v3330, %v3329
        %v3345 = vpack.c.b16 %v3332, %v3331
        %v3346 = vpack.c.b16 %v3334, %v3333
        %v3347 = vpack.c.b16 %v3336, %v3335
        %v3348 = vpack.c.b16 %v3338, %v3337
        %v3349 = vpack.c.b16 %v3340, %v3339
        %v3350 = vpack.c.b16 %v3342, %v3341
        %3359 = vmatprep.subr.bf16.mxu0 0
        %3360 = vmatpush1.bf16.msra.mxu0 %v3343
        %3361 = vmatprep.subr.bf16.mxu0 0
        %3362 = vmatpush1.bf16.msra.mxu0 %v3344
        %3363 = vmatprep.subr.bf16.mxu0 0
        %3364 = vmatpush1.bf16.msra.mxu0 %v3345
        %3365 = vmatprep.subr.bf16.mxu0 0
        %3366 = vmatpush1.bf16.msra.mxu0 %v3346
        %3367 = vmatprep.subr.bf16.mxu0 0
        %3368 = vmatpush1.bf16.msra.mxu0 %v3347
        %3369 = vmatprep.subr.bf16.mxu0 0
        %3370 = vmatpush1.bf16.msra.mxu0 %v3348
        %3371 = vmatprep.subr.bf16.mxu0 0
        %3372 = vmatpush1.bf16.msra.mxu0 %v3349
        %3373 = vmatprep.subr.bf16.mxu0 0
        %3374 = vmatpush1.bf16.msra.mxu0 %v3350
        %3375 = vmatprep.subr.bf16.mxu0 0
        %3376 = vmatpush1.bf16.msra.mxu0 0
        %3377 = vmatprep.subr.bf16.mxu0 0
        %3378 = vmatpush1.bf16.msra.mxu0 0
        %3379 = vmatprep.subr.bf16.mxu0 0
        %3380 = vmatpush1.bf16.msra.mxu0 0
        %3381 = vmatprep.subr.bf16.mxu0 0
        %3382 = vmatpush1.bf16.msra.mxu0 0
        %3383 = vmatprep.subr.bf16.mxu0 0
        %3384 = vmatpush1.bf16.msra.mxu0 0
        %3385 = vmatprep.subr.bf16.mxu0 0
        %3386 = vmatpush1.bf16.msra.mxu0 0
        %3387 = vmatprep.subr.bf16.mxu0 0
        %3388 = vmatpush1.bf16.msra.mxu0 0
        %3389 = vmatprep.subr.bf16.mxu0 0
        %3390 = vmatpush1.bf16.msra.mxu0 0
        %3391 = vmatprep.mubr.bf16.mxu0 0
        %3392 = vmatmul.mubr.bf16.gmra.mrb[0].mxu0 %v3286
        %v3393 = vpop.f32.mrb[0].mxu0
        %v3394 = vadd.f32 0.0, %v3393
        %v3395 = vpop.f32.mrb[0].mxu0
        %v3396 = vpop.f32.mrb[0].mxu0
        %v3397 = vadd.f32 0.0, %v3396
        %v3398 = vpop.f32.mrb[0].mxu0
        %3399 = vmatprep.mubr.bf16.mxu0 0
        %3400 = vmatmul.mubr.bf16.gmra.mrb[0].mxu0 %v3287
        %v3401 = vpop.f32.mrb[0].mxu0
        %v3402 = vadd.f32 0.0, %v3401
        %v3403 = vpop.f32.mrb[0].mxu0
        %v3404 = vpop.f32.mrb[0].mxu0
        %v3405 = vadd.f32 0.0, %v3404
        %v3406 = vpop.f32.mrb[0].mxu0
        %3407 = vmatprep.mubr.bf16.mxu0 0
        %3408 = vmatmul.mubr.bf16.gmra.mrb[0].mxu0 %v3288
        %v3409 = vpop.f32.mrb[0].mxu0
        %v3410 = vadd.f32 0.0, %v3409
        %v3411 = vpop.f32.mrb[0].mxu0
        %v3412 = vpop.f32.mrb[0].mxu0
        %v3413 = vadd.f32 0.0, %v3412
        %v3414 = vpop.f32.mrb[0].mxu0
        %3415 = vmatprep.mubr.bf16.mxu0 0
        %3416 = vmatmul.mubr.bf16.gmra.mrb[0].mxu0 %v3289
        %v3417 = vpop.f32.mrb[0].mxu0
        %v3418 = vadd.f32 0.0, %v3417
        %v3419 = vpop.f32.mrb[0].mxu0
        %v3420 = vpop.f32.mrb[0].mxu0
        %v3421 = vadd.f32 0.0, %v3420
        %v3422 = vpop.f32.mrb[0].mxu0
        %3423 = vmatprep.mubr.bf16.mxu0 0
        %3424 = vmatmul.mubr.bf16.gmra.mrb[0].mxu0 %v3290
        %v3425 = vpop.f32.mrb[0].mxu0
        %v3426 = vadd.f32 0.0, %v3425
        %v3427 = vpop.f32.mrb[0].mxu0
        %v3428 = vpop.f32.mrb[0].mxu0
        %v3429 = vadd.f32 0.0, %v3428
        %v3430 = vpop.f32.mrb[0].mxu0
        %3431 = vmatprep.mubr.bf16.mxu0 0
        %3432 = vmatmul.mubr.bf16.gmra.mrb[0].mxu0 %v3291
        %v3433 = vpop.f32.mrb[0].mxu0
        %v3434 = vadd.f32 0.0, %v3433
        %v3435 = vpop.f32.mrb[0].mxu0
        %v3436 = vpop.f32.mrb[0].mxu0
        %v3437 = vadd.f32 0.0, %v3436
        %v3438 = vpop.f32.mrb[0].mxu0
        %3439 = vmatprep.mubr.bf16.mxu0 0
        %3440 = vmatmul.mubr.bf16.gmra.mrb[0].mxu0 %v3292
        %v3441 = vpop.f32.mrb[0].mxu0
        %v3442 = vadd.f32 0.0, %v3441
        %v3443 = vpop.f32.mrb[0].mxu0
        %v3444 = vpop.f32.mrb[0].mxu0
        %v3445 = vadd.f32 0.0, %v3444
        %v3446 = vpop.f32.mrb[0].mxu0
        %3447 = vmatprep.mubr.bf16.mxu0 0
        %3448 = vmatmul.mubr.bf16.gmra.mrb[0].mxu0 %v3293
        %v3449 = vpop.f32.mrb[0].mxu0
        %v3450 = vadd.f32 0.0, %v3449
        %v3451 = vpop.f32.mrb[0].mxu0
        %v3452 = vpop.f32.mrb[0].mxu0
        %v3453 = vadd.f32 0.0, %v3452
        %v3454 = vpop.f32.mrb[0].mxu0
        %3455 = vdwg.mxu0
        %v3456 = vadd.f32 %v2855, %v3394
        %v3457 = vadd.f32 %v2856, %v3397
        %v3458 = vadd.f32 %v2857, %v3402
        %v3459 = vadd.f32 %v2858, %v3405
        %v3460 = vadd.f32 %v2859, %v3410
        %v3461 = vadd.f32 %v2860, %v3413
        %v3462 = vadd.f32 %v2861, %v3418
        %v3463 = vadd.f32 %v2862, %v3421
        %v3464 = vadd.f32 %v2863, %v3426
        %v3465 = vadd.f32 %v2864, %v3429
        %v3466 = vadd.f32 %v2865, %v3434
        %v3467 = vadd.f32 %v2866, %v3437
        %v3468 = vadd.f32 %v2867, %v3442
        %v3469 = vadd.f32 %v2868, %v3445
        %v3470 = vadd.f32 %v2869, %v3450
        %v3471 = vadd.f32 %v2870, %v3453
        %s3472 = scalar_lea.vmem [#allocation7], 320
        %v3473 = vld [vmem:[%s3472] sm:$0xf]
        %v3474 = vld [vmem:[%s3472 + $0x4] sm:$0xf]
        %v3475 = vld [vmem:[%s3472 + $0x8] sm:$0xf]
        %v3476 = vld [vmem:[%s3472 + $0xc] sm:$0xf]
        %v3477 = vld [vmem:[%s3472 + $0x10] sm:$0xf]
        %v3478 = vld [vmem:[%s3472 + $0x14] sm:$0xf]
        %v3479 = vld [vmem:[%s3472 + $0x18] sm:$0xf]
        %v3480 = vld [vmem:[%s3472 + $0x1c] sm:$0xf]
        %v3481 = vld [vmem:[%s3472 + $0x20] sm:$0xf]
        %v3482 = vld [vmem:[%s3472 + $0x24] sm:$0xf]
        %v3483 = vld [vmem:[%s3472 + $0x28] sm:$0xf]
        %v3484 = vld [vmem:[%s3472 + $0x2c] sm:$0xf]
        %v3485 = vld [vmem:[%s3472 + $0x30] sm:$0xf]
        %v3486 = vld [vmem:[%s3472 + $0x34] sm:$0xf]
        %v3487 = vld [vmem:[%s3472 + $0x38] sm:$0xf]
        %v3488 = vld [vmem:[%s3472 + $0x3c] sm:$0xf]
        %v3505 = vunpack.c.l.b16 %v3473
        %v3506 = vunpack.c.l.b16 %v3474
        %v3507 = vunpack.c.l.b16 %v3475
        %v3508 = vunpack.c.l.b16 %v3476
        %v3509 = vunpack.c.l.b16 %v3477
        %v3510 = vunpack.c.l.b16 %v3478
        %v3511 = vunpack.c.l.b16 %v3479
        %v3512 = vunpack.c.l.b16 %v3480
        %v3513 = vunpack.c.l.b16 %v3481
        %v3514 = vunpack.c.l.b16 %v3482
        %v3515 = vunpack.c.l.b16 %v3483
        %v3516 = vunpack.c.l.b16 %v3484
        %v3517 = vunpack.c.l.b16 %v3485
        %v3518 = vunpack.c.l.b16 %v3486
        %v3519 = vunpack.c.l.b16 %v3487
        %v3520 = vunpack.c.l.b16 %v3488
        %v3521 = vpack.c.b16 %v3506, %v3505
        %v3522 = vpack.c.b16 %v3508, %v3507
        %v3523 = vpack.c.b16 %v3510, %v3509
        %v3524 = vpack.c.b16 %v3512, %v3511
        %v3525 = vpack.c.b16 %v3514, %v3513
        %v3526 = vpack.c.b16 %v3516, %v3515
        %v3527 = vpack.c.b16 %v3518, %v3517
        %v3528 = vpack.c.b16 %v3520, %v3519
        %3537 = vmatprep.subr.bf16.mxu0 0
        %3538 = vmatpush1.bf16.msra.mxu0 %v3521
        %3539 = vmatprep.subr.bf16.mxu0 0
        %3540 = vmatpush1.bf16.msra.mxu0 %v3522
        %3541 = vmatprep.subr.bf16.mxu0 0
        %3542 = vmatpush1.bf16.msra.mxu0 %v3523
        %3543 = vmatprep.subr.bf16.mxu0 0
        %3544 = vmatpush1.bf16.msra.mxu0 %v3524
        %3545 = vmatprep.subr.bf16.mxu0 0
        %3546 = vmatpush1.bf16.msra.mxu0 %v3525
        %3547 = vmatprep.subr.bf16.mxu0 0
        %3548 = vmatpush1.bf16.msra.mxu0 %v3526
        %3549 = vmatprep.subr.bf16.mxu0 0
        %3550 = vmatpush1.bf16.msra.mxu0 %v3527
        %3551 = vmatprep.subr.bf16.mxu0 0
        %3552 = vmatpush1.bf16.msra.mxu0 %v3528
        %3553 = vmatprep.subr.bf16.mxu0 0
        %3554 = vmatpush1.bf16.msra.mxu0 0
        %3555 = vmatprep.subr.bf16.mxu0 0
        %3556 = vmatpush1.bf16.msra.mxu0 0
        %3557 = vmatprep.subr.bf16.mxu0 0
        %3558 = vmatpush1.bf16.msra.mxu0 0
        %3559 = vmatprep.subr.bf16.mxu0 0
        %3560 = vmatpush1.bf16.msra.mxu0 0
        %3561 = vmatprep.subr.bf16.mxu0 0
        %3562 = vmatpush1.bf16.msra.mxu0 0
        %3563 = vmatprep.subr.bf16.mxu0 0
        %3564 = vmatpush1.bf16.msra.mxu0 0
        %3565 = vmatprep.subr.bf16.mxu0 0
        %3566 = vmatpush1.bf16.msra.mxu0 0
        %3567 = vmatprep.subr.bf16.mxu0 0
        %3568 = vmatpush1.bf16.msra.mxu0 0
        %3569 = vmatprep.mubr.bf16.mxu0 0
        %3570 = vmatmul.mubr.bf16.gmra.mrb[0].mxu0 %v453
        %v3571 = vpop.f32.mrb[0].mxu0
        %v3572 = vadd.f32 0.0, %v3571
        %v3573 = vpop.f32.mrb[0].mxu0
        %v3574 = vpop.f32.mrb[0].mxu0
        %v3575 = vadd.f32 0.0, %v3574
        %v3576 = vpop.f32.mrb[0].mxu0
        %3577 = vmatprep.mubr.bf16.mxu0 0
        %3578 = vmatmul.mubr.bf16.gmra.mrb[0].mxu0 %v454
        %v3579 = vpop.f32.mrb[0].mxu0
        %v3580 = vadd.f32 0.0, %v3579
        %v3581 = vpop.f32.mrb[0].mxu0
        %v3582 = vpop.f32.mrb[0].mxu0
        %v3583 = vadd.f32 0.0, %v3582
        %v3584 = vpop.f32.mrb[0].mxu0
        %3585 = vmatprep.mubr.bf16.mxu0 0
        %3586 = vmatmul.mubr.bf16.gmra.mrb[0].mxu0 %v455
        %v3587 = vpop.f32.mrb[0].mxu0
        %v3588 = vadd.f32 0.0, %v3587
        %v3589 = vpop.f32.mrb[0].mxu0
        %v3590 = vpop.f32.mrb[0].mxu0
        %v3591 = vadd.f32 0.0, %v3590
        %v3592 = vpop.f32.mrb[0].mxu0
        %3593 = vmatprep.mubr.bf16.mxu0 0
        %3594 = vmatmul.mubr.bf16.gmra.mrb[0].mxu0 %v456
        %v3595 = vpop.f32.mrb[0].mxu0
        %v3596 = vadd.f32 0.0, %v3595
        %v3597 = vpop.f32.mrb[0].mxu0
        %v3598 = vpop.f32.mrb[0].mxu0
        %v3599 = vadd.f32 0.0, %v3598
        %v3600 = vpop.f32.mrb[0].mxu0
        %3601 = vmatprep.mubr.bf16.mxu0 0
        %3602 = vmatmul.mubr.bf16.gmra.mrb[0].mxu0 %v457
        %v3603 = vpop.f32.mrb[0].mxu0
        %v3604 = vadd.f32 0.0, %v3603
        %v3605 = vpop.f32.mrb[0].mxu0
        %v3606 = vpop.f32.mrb[0].mxu0
        %v3607 = vadd.f32 0.0, %v3606
        %v3608 = vpop.f32.mrb[0].mxu0
        %3609 = vmatprep.mubr.bf16.mxu0 0
        %3610 = vmatmul.mubr.bf16.gmra.mrb[0].mxu0 %v458
        %v3611 = vpop.f32.mrb[0].mxu0
        %v3612 = vadd.f32 0.0, %v3611
        %v3613 = vpop.f32.mrb[0].mxu0
        %v3614 = vpop.f32.mrb[0].mxu0
        %v3615 = vadd.f32 0.0, %v3614
        %v3616 = vpop.f32.mrb[0].mxu0
        %3617 = vmatprep.mubr.bf16.mxu0 0
        %3618 = vmatmul.mubr.bf16.gmra.mrb[0].mxu0 %v459
        %v3619 = vpop.f32.mrb[0].mxu0
        %v3620 = vadd.f32 0.0, %v3619
        %v3621 = vpop.f32.mrb[0].mxu0
        %v3622 = vpop.f32.mrb[0].mxu0
        %v3623 = vadd.f32 0.0, %v3622
        %v3624 = vpop.f32.mrb[0].mxu0
        %3625 = vmatprep.mubr.bf16.mxu0 0
        %3626 = vmatmul.mubr.bf16.gmra.mrb[0].mxu0 %v460
        %v3627 = vpop.f32.mrb[0].mxu0
        %v3628 = vadd.f32 0.0, %v3627
        %v3629 = vpop.f32.mrb[0].mxu0
        %v3630 = vpop.f32.mrb[0].mxu0
        %v3631 = vadd.f32 0.0, %v3630
        %v3632 = vpop.f32.mrb[0].mxu0
        %3633 = vdwg.mxu0
        %v3634 = vpack.c.bf16 %v3575, %v3572
        %v3635 = vpack.c.bf16 %v3583, %v3580
        %v3636 = vpack.c.bf16 %v3591, %v3588
        %v3637 = vpack.c.bf16 %v3599, %v3596
        %v3638 = vpack.c.bf16 %v3607, %v3604
        %v3639 = vpack.c.bf16 %v3615, %v3612
        %v3640 = vpack.c.bf16 %v3623, %v3620
        %v3641 = vpack.c.bf16 %v3631, %v3628
        %v3642 = vlaneseq
        %v3643 = vshrl.u32 %v3642, 7
        %v3644 = vsub.s32 5, %v3643
        %v3645 = vrot.slane %v404, %v3644
        %3646 = vmatprep.subr.bf16.mxu0 0
        %3647 = vmatpush1.bf16.msra.mxu0 %v658
        %3648 = vmatprep.subr.bf16.mxu0 0
        %3649 = vmatpush1.bf16.msra.mxu0 %v659
        %3650 = vmatprep.subr.bf16.mxu0 0
        %3651 = vmatpush1.bf16.msra.mxu0 %v660
        %3652 = vmatprep.subr.bf16.mxu0 0
        %3653 = vmatpush1.bf16.msra.mxu0 %v661
        %3654 = vmatprep.subr.bf16.mxu0 0
        %3655 = vmatpush1.bf16.msra.mxu0 %v662
        %3656 = vmatprep.subr.bf16.mxu0 0
        %3657 = vmatpush1.bf16.msra.mxu0 %v663
        %3658 = vmatprep.subr.bf16.mxu0 0
        %3659 = vmatpush1.bf16.msra.mxu0 %v664
        %3660 = vmatprep.subr.bf16.mxu0 0
        %3661 = vmatpush1.bf16.msra.mxu0 %v665
        %3662 = vmatprep.subr.bf16.mxu0 0
        %3663 = vmatpush1.bf16.msra.mxu0 0
        %3664 = vmatprep.subr.bf16.mxu0 0
        %3665 = vmatpush1.bf16.msra.mxu0 0
        %3666 = vmatprep.subr.bf16.mxu0 0
        %3667 = vmatpush1.bf16.msra.mxu0 0
        %3668 = vmatprep.subr.bf16.mxu0 0
        %3669 = vmatpush1.bf16.msra.mxu0 0
        %3670 = vmatprep.subr.bf16.mxu0 0
        %3671 = vmatpush1.bf16.msra.mxu0 0
        %3672 = vmatprep.subr.bf16.mxu0 0
        %3673 = vmatpush1.bf16.msra.mxu0 0
        %3674 = vmatprep.subr.bf16.mxu0 0
        %3675 = vmatpush1.bf16.msra.mxu0 0
        %3676 = vmatprep.subr.bf16.mxu0 0
        %3677 = vmatpush1.bf16.msra.mxu0 0
        %3678 = vmatprep.mubr.bf16.mxu0 0
        %3679 = vmatmul.mubr.bf16.gmra.mrb[0].mxu0 %v3634
        %v3680 = vpop.f32.mrb[0].mxu0
        %v3681 = vadd.f32 %v3645, %v3680
        %v3682 = vpop.f32.mrb[0].mxu0
        %v3683 = vpop.f32.mrb[0].mxu0
        %v3684 = vadd.f32 %v3645, %v3683
        %v3685 = vpop.f32.mrb[0].mxu0
        %3686 = vmatprep.mubr.bf16.mxu0 0
        %3687 = vmatmul.mubr.bf16.gmra.mrb[0].mxu0 %v3635
        %v3688 = vpop.f32.mrb[0].mxu0
        %v3689 = vadd.f32 %v3645, %v3688
        %v3690 = vpop.f32.mrb[0].mxu0
        %v3691 = vpop.f32.mrb[0].mxu0
        %v3692 = vadd.f32 %v3645, %v3691
        %v3693 = vpop.f32.mrb[0].mxu0
        %3694 = vmatprep.mubr.bf16.mxu0 0
        %3695 = vmatmul.mubr.bf16.gmra.mrb[0].mxu0 %v3636
        %v3696 = vpop.f32.mrb[0].mxu0
        %v3697 = vadd.f32 %v3645, %v3696
        %v3698 = vpop.f32.mrb[0].mxu0
        %v3699 = vpop.f32.mrb[0].mxu0
        %v3700 = vadd.f32 %v3645, %v3699
        %v3701 = vpop.f32.mrb[0].mxu0
        %3702 = vmatprep.mubr.bf16.mxu0 0
        %3703 = vmatmul.mubr.bf16.gmra.mrb[0].mxu0 %v3637
        %v3704 = vpop.f32.mrb[0].mxu0
        %v3705 = vadd.f32 %v3645, %v3704
        %v3706 = vpop.f32.mrb[0].mxu0
        %v3707 = vpop.f32.mrb[0].mxu0
        %v3708 = vadd.f32 %v3645, %v3707
        %v3709 = vpop.f32.mrb[0].mxu0
        %3710 = vmatprep.mubr.bf16.mxu0 0
        %3711 = vmatmul.mubr.bf16.gmra.mrb[0].mxu0 %v3638
        %v3712 = vpop.f32.mrb[0].mxu0
        %v3713 = vadd.f32 %v3645, %v3712
        %v3714 = vpop.f32.mrb[0].mxu0
        %v3715 = vpop.f32.mrb[0].mxu0
        %v3716 = vadd.f32 %v3645, %v3715
        %v3717 = vpop.f32.mrb[0].mxu0
        %3718 = vmatprep.mubr.bf16.mxu0 0
        %3719 = vmatmul.mubr.bf16.gmra.mrb[0].mxu0 %v3639
        %v3720 = vpop.f32.mrb[0].mxu0
        %v3721 = vadd.f32 %v3645, %v3720
        %v3722 = vpop.f32.mrb[0].mxu0
        %v3723 = vpop.f32.mrb[0].mxu0
        %v3724 = vadd.f32 %v3645, %v3723
        %v3725 = vpop.f32.mrb[0].mxu0
        %3726 = vmatprep.mubr.bf16.mxu0 0
        %3727 = vmatmul.mubr.bf16.gmra.mrb[0].mxu0 %v3640
        %v3728 = vpop.f32.mrb[0].mxu0
        %v3729 = vadd.f32 %v3645, %v3728
        %v3730 = vpop.f32.mrb[0].mxu0
        %v3731 = vpop.f32.mrb[0].mxu0
        %v3732 = vadd.f32 %v3645, %v3731
        %v3733 = vpop.f32.mrb[0].mxu0
        %3734 = vmatprep.mubr.bf16.mxu0 0
        %3735 = vmatmul.mubr.bf16.gmra.mrb[0].mxu0 %v3641
        %v3736 = vpop.f32.mrb[0].mxu0
        %v3737 = vadd.f32 %v3645, %v3736
        %v3738 = vpop.f32.mrb[0].mxu0
        %v3739 = vpop.f32.mrb[0].mxu0
        %v3740 = vadd.f32 %v3645, %v3739
        %v3741 = vpop.f32.mrb[0].mxu0
        %3742 = vdwg.mxu0
        %3743 = vmax.xlane.f32.xlu0 %v3681
        %v3744 = vpop.xlane.xlu0 %3743
        %3745 = vmax.xlane.f32.xlu0 %v3684
        %v3746 = vpop.xlane.xlu0 %3745
        %3747 = vmax.xlane.f32.xlu0 %v3689
        %v3748 = vpop.xlane.xlu0 %3747
        %3749 = vmax.xlane.f32.xlu0 %v3692
        %v3750 = vpop.xlane.xlu0 %3749
        %3751 = vmax.xlane.f32.xlu0 %v3697
        %v3752 = vpop.xlane.xlu0 %3751
        %3753 = vmax.xlane.f32.xlu0 %v3700
        %v3754 = vpop.xlane.xlu0 %3753
        %3755 = vmax.xlane.f32.xlu0 %v3705
        %v3756 = vpop.xlane.xlu0 %3755
        %3757 = vmax.xlane.f32.xlu0 %v3708
        %v3758 = vpop.xlane.xlu0 %3757
        %3759 = vmax.xlane.f32.xlu0 %v3713
        %v3760 = vpop.xlane.xlu0 %3759
        %3761 = vmax.xlane.f32.xlu0 %v3716
        %v3762 = vpop.xlane.xlu0 %3761
        %3763 = vmax.xlane.f32.xlu0 %v3721
        %v3764 = vpop.xlane.xlu0 %3763
        %3765 = vmax.xlane.f32.xlu0 %v3724
        %v3766 = vpop.xlane.xlu0 %3765
        %3767 = vmax.xlane.f32.xlu0 %v3729
        %v3768 = vpop.xlane.xlu0 %3767
        %3769 = vmax.xlane.f32.xlu0 %v3732
        %v3770 = vpop.xlane.xlu0 %3769
        %3771 = vmax.xlane.f32.xlu0 %v3737
        %v3772 = vpop.xlane.xlu0 %3771
        %3773 = vmax.xlane.f32.xlu0 %v3740
        %v3774 = vpop.xlane.xlu0 %3773
        %v3775 = vsub.f32 %v3681, %v3744
        %v3776 = vsub.f32 %v3684, %v3746
        %v3777 = vsub.f32 %v3689, %v3748
        %v3778 = vsub.f32 %v3692, %v3750
        %v3779 = vsub.f32 %v3697, %v3752
        %v3780 = vsub.f32 %v3700, %v3754
        %v3781 = vsub.f32 %v3705, %v3756
        %v3782 = vsub.f32 %v3708, %v3758
        %v3783 = vsub.f32 %v3713, %v3760
        %v3784 = vsub.f32 %v3716, %v3762
        %v3785 = vsub.f32 %v3721, %v3764
        %v3786 = vsub.f32 %v3724, %v3766
        %v3787 = vsub.f32 %v3729, %v3768
        %v3788 = vsub.f32 %v3732, %v3770
        %v3789 = vsub.f32 %v3737, %v3772
        %v3790 = vsub.f32 %v3740, %v3774
        %v3791 = vmul.f32 %v3775, 1.442695
        %v3792 = vpow.pop %v3791
        %v3793 = vmul.f32 %v3776, 1.442695
        %v3794 = vpow.pop %v3793
        %v3795 = vmul.f32 %v3777, 1.442695
        %v3796 = vpow.pop %v3795
        %v3797 = vmul.f32 %v3778, 1.442695
        %v3798 = vpow.pop %v3797
        %v3799 = vmul.f32 %v3779, 1.442695
        %v3800 = vpow.pop %v3799
        %v3801 = vmul.f32 %v3780, 1.442695
        %v3802 = vpow.pop %v3801
        %v3803 = vmul.f32 %v3781, 1.442695
        %v3804 = vpow.pop %v3803
        %v3805 = vmul.f32 %v3782, 1.442695
        %v3806 = vpow.pop %v3805
        %v3807 = vmul.f32 %v3783, 1.442695
        %v3808 = vpow.pop %v3807
        %v3809 = vmul.f32 %v3784, 1.442695
        %v3810 = vpow.pop %v3809
        %v3811 = vmul.f32 %v3785, 1.442695
        %v3812 = vpow.pop %v3811
        %v3813 = vmul.f32 %v3786, 1.442695
        %v3814 = vpow.pop %v3813
        %v3815 = vmul.f32 %v3787, 1.442695
        %v3816 = vpow.pop %v3815
        %v3817 = vmul.f32 %v3788, 1.442695
        %v3818 = vpow.pop %v3817
        %v3819 = vmul.f32 %v3789, 1.442695
        %v3820 = vpow.pop %v3819
        %v3821 = vmul.f32 %v3790, 1.442695
        %v3822 = vpow.pop %v3821
        %3823 = vadd.xlane.f32.xlu0 %v3792
        %v3824 = vpop.xlane.xlu0 %3823
        %3825 = vadd.xlane.f32.xlu0 %v3794
        %v3826 = vpop.xlane.xlu0 %3825
        %3827 = vadd.xlane.f32.xlu0 %v3796
        %v3828 = vpop.xlane.xlu0 %3827
        %3829 = vadd.xlane.f32.xlu0 %v3798
        %v3830 = vpop.xlane.xlu0 %3829
        %3831 = vadd.xlane.f32.xlu0 %v3800
        %v3832 = vpop.xlane.xlu0 %3831
        %3833 = vadd.xlane.f32.xlu0 %v3802
        %v3834 = vpop.xlane.xlu0 %3833
        %3835 = vadd.xlane.f32.xlu0 %v3804
        %v3836 = vpop.xlane.xlu0 %3835
        %3837 = vadd.xlane.f32.xlu0 %v3806
        %v3838 = vpop.xlane.xlu0 %3837
        %3839 = vadd.xlane.f32.xlu0 %v3808
        %v3840 = vpop.xlane.xlu0 %3839
        %3841 = vadd.xlane.f32.xlu0 %v3810
        %v3842 = vpop.xlane.xlu0 %3841
        %3843 = vadd.xlane.f32.xlu0 %v3812
        %v3844 = vpop.xlane.xlu0 %3843
        %3845 = vadd.xlane.f32.xlu0 %v3814
        %v3846 = vpop.xlane.xlu0 %3845
        %3847 = vadd.xlane.f32.xlu0 %v3816
        %v3848 = vpop.xlane.xlu0 %3847
        %3849 = vadd.xlane.f32.xlu0 %v3818
        %v3850 = vpop.xlane.xlu0 %3849
        %3851 = vadd.xlane.f32.xlu0 %v3820
        %v3852 = vpop.xlane.xlu0 %3851
        %3853 = vadd.xlane.f32.xlu0 %v3822
        %v3854 = vpop.xlane.xlu0 %3853
        %v3855 = vrcp.pop %v3824
        %v3856 = vrcp.pop %v3826
        %v3857 = vrcp.pop %v3828
        %v3858 = vrcp.pop %v3830
        %v3859 = vrcp.pop %v3832
        %v3860 = vrcp.pop %v3834
        %v3861 = vrcp.pop %v3836
        %v3862 = vrcp.pop %v3838
        %v3863 = vrcp.pop %v3840
        %v3864 = vrcp.pop %v3842
        %v3865 = vrcp.pop %v3844
        %v3866 = vrcp.pop %v3846
        %v3867 = vrcp.pop %v3848
        %v3868 = vrcp.pop %v3850
        %v3869 = vrcp.pop %v3852
        %v3870 = vrcp.pop %v3854
        %v3871 = vmul.f32 %v3792, %v3855
        %v3872 = vmul.f32 %v3794, %v3856
        %v3873 = vmul.f32 %v3796, %v3857
        %v3874 = vmul.f32 %v3798, %v3858
        %v3875 = vmul.f32 %v3800, %v3859
        %v3876 = vmul.f32 %v3802, %v3860
        %v3877 = vmul.f32 %v3804, %v3861
        %v3878 = vmul.f32 %v3806, %v3862
        %v3879 = vmul.f32 %v3808, %v3863
        %v3880 = vmul.f32 %v3810, %v3864
        %v3881 = vmul.f32 %v3812, %v3865
        %v3882 = vmul.f32 %v3814, %v3866
        %v3883 = vmul.f32 %v3816, %v3867
        %v3884 = vmul.f32 %v3818, %v3868
        %v3885 = vmul.f32 %v3820, %v3869
        %v3886 = vmul.f32 %v3822, %v3870
        %v3887 = vpack.c.bf16 %v3872, %v3871
        %v3888 = vpack.c.bf16 %v3874, %v3873
        %v3889 = vpack.c.bf16 %v3876, %v3875
        %v3890 = vpack.c.bf16 %v3878, %v3877
        %v3891 = vpack.c.bf16 %v3880, %v3879
        %v3892 = vpack.c.bf16 %v3882, %v3881
        %v3893 = vpack.c.bf16 %v3884, %v3883
        %v3894 = vpack.c.bf16 %v3886, %v3885
        %s3895 = scalar_lea.vmem [#allocation8], 320
        %v3896 = vld [vmem:[%s3895] sm:$0xf]
        %v3897 = vld [vmem:[%s3895 + $0x4] sm:$0xf]
        %v3898 = vld [vmem:[%s3895 + $0x8] sm:$0xf]
        %v3899 = vld [vmem:[%s3895 + $0xc] sm:$0xf]
        %v3900 = vld [vmem:[%s3895 + $0x10] sm:$0xf]
        %v3901 = vld [vmem:[%s3895 + $0x14] sm:$0xf]
        %v3902 = vld [vmem:[%s3895 + $0x18] sm:$0xf]
        %v3903 = vld [vmem:[%s3895 + $0x1c] sm:$0xf]
        %v3904 = vld [vmem:[%s3895 + $0x20] sm:$0xf]
        %v3905 = vld [vmem:[%s3895 + $0x24] sm:$0xf]
        %v3906 = vld [vmem:[%s3895 + $0x28] sm:$0xf]
        %v3907 = vld [vmem:[%s3895 + $0x2c] sm:$0xf]
        %v3908 = vld [vmem:[%s3895 + $0x30] sm:$0xf]
        %v3909 = vld [vmem:[%s3895 + $0x34] sm:$0xf]
        %v3910 = vld [vmem:[%s3895 + $0x38] sm:$0xf]
        %v3911 = vld [vmem:[%s3895 + $0x3c] sm:$0xf]
        %v3928 = vunpack.c.l.b16 %v3896
        %v3929 = vunpack.c.l.b16 %v3897
        %v3930 = vunpack.c.l.b16 %v3898
        %v3931 = vunpack.c.l.b16 %v3899
        %v3932 = vunpack.c.l.b16 %v3900
        %v3933 = vunpack.c.l.b16 %v3901
        %v3934 = vunpack.c.l.b16 %v3902
        %v3935 = vunpack.c.l.b16 %v3903
        %v3936 = vunpack.c.l.b16 %v3904
        %v3937 = vunpack.c.l.b16 %v3905
        %v3938 = vunpack.c.l.b16 %v3906
        %v3939 = vunpack.c.l.b16 %v3907
        %v3940 = vunpack.c.l.b16 %v3908
        %v3941 = vunpack.c.l.b16 %v3909
        %v3942 = vunpack.c.l.b16 %v3910
        %v3943 = vunpack.c.l.b16 %v3911
        %v3944 = vpack.c.b16 %v3929, %v3928
        %v3945 = vpack.c.b16 %v3931, %v3930
        %v3946 = vpack.c.b16 %v3933, %v3932
        %v3947 = vpack.c.b16 %v3935, %v3934
        %v3948 = vpack.c.b16 %v3937, %v3936
        %v3949 = vpack.c.b16 %v3939, %v3938
        %v3950 = vpack.c.b16 %v3941, %v3940
        %v3951 = vpack.c.b16 %v3943, %v3942
        %3960 = vmatprep.subr.bf16.mxu0 0
        %3961 = vmatpush1.bf16.msra.mxu0 %v3944
        %3962 = vmatprep.subr.bf16.mxu0 0
        %3963 = vmatpush1.bf16.msra.mxu0 %v3945
        %3964 = vmatprep.subr.bf16.mxu0 0
        %3965 = vmatpush1.bf16.msra.mxu0 %v3946
        %3966 = vmatprep.subr.bf16.mxu0 0
        %3967 = vmatpush1.bf16.msra.mxu0 %v3947
        %3968 = vmatprep.subr.bf16.mxu0 0
        %3969 = vmatpush1.bf16.msra.mxu0 %v3948
        %3970 = vmatprep.subr.bf16.mxu0 0
        %3971 = vmatpush1.bf16.msra.mxu0 %v3949
        %3972 = vmatprep.subr.bf16.mxu0 0
        %3973 = vmatpush1.bf16.msra.mxu0 %v3950
        %3974 = vmatprep.subr.bf16.mxu0 0
        %3975 = vmatpush1.bf16.msra.mxu0 %v3951
        %3976 = vmatprep.subr.bf16.mxu0 0
        %3977 = vmatpush1.bf16.msra.mxu0 0
        %3978 = vmatprep.subr.bf16.mxu0 0
        %3979 = vmatpush1.bf16.msra.mxu0 0
        %3980 = vmatprep.subr.bf16.mxu0 0
        %3981 = vmatpush1.bf16.msra.mxu0 0
        %3982 = vmatprep.subr.bf16.mxu0 0
        %3983 = vmatpush1.bf16.msra.mxu0 0
        %3984 = vmatprep.subr.bf16.mxu0 0
        %3985 = vmatpush1.bf16.msra.mxu0 0
        %3986 = vmatprep.subr.bf16.mxu0 0
        %3987 = vmatpush1.bf16.msra.mxu0 0
        %3988 = vmatprep.subr.bf16.mxu0 0
        %3989 = vmatpush1.bf16.msra.mxu0 0
        %3990 = vmatprep.subr.bf16.mxu0 0
        %3991 = vmatpush1.bf16.msra.mxu0 0
        %3992 = vmatprep.mubr.bf16.mxu0 0
        %3993 = vmatmul.mubr.bf16.gmra.mrb[0].mxu0 %v3887
        %v3994 = vpop.f32.mrb[0].mxu0
        %v3995 = vadd.f32 0.0, %v3994
        %v3996 = vpop.f32.mrb[0].mxu0
        %v3997 = vpop.f32.mrb[0].mxu0
        %v3998 = vadd.f32 0.0, %v3997
        %v3999 = vpop.f32.mrb[0].mxu0
        %4000 = vmatprep.mubr.bf16.mxu0 0
        %4001 = vmatmul.mubr.bf16.gmra.mrb[0].mxu0 %v3888
        %v4002 = vpop.f32.mrb[0].mxu0
        %v4003 = vadd.f32 0.0, %v4002
        %v4004 = vpop.f32.mrb[0].mxu0
        %v4005 = vpop.f32.mrb[0].mxu0
        %v4006 = vadd.f32 0.0, %v4005
        %v4007 = vpop.f32.mrb[0].mxu0
        %4008 = vmatprep.mubr.bf16.mxu0 0
        %4009 = vmatmul.mubr.bf16.gmra.mrb[0].mxu0 %v3889
        %v4010 = vpop.f32.mrb[0].mxu0
        %v4011 = vadd.f32 0.0, %v4010
        %v4012 = vpop.f32.mrb[0].mxu0
        %v4013 = vpop.f32.mrb[0].mxu0
        %v4014 = vadd.f32 0.0, %v4013
        %v4015 = vpop.f32.mrb[0].mxu0
        %4016 = vmatprep.mubr.bf16.mxu0 0
        %4017 = vmatmul.mubr.bf16.gmra.mrb[0].mxu0 %v3890
        %v4018 = vpop.f32.mrb[0].mxu0
        %v4019 = vadd.f32 0.0, %v4018
        %v4020 = vpop.f32.mrb[0].mxu0
        %v4021 = vpop.f32.mrb[0].mxu0
        %v4022 = vadd.f32 0.0, %v4021
        %v4023 = vpop.f32.mrb[0].mxu0
        %4024 = vmatprep.mubr.bf16.mxu0 0
        %4025 = vmatmul.mubr.bf16.gmra.mrb[0].mxu0 %v3891
        %v4026 = vpop.f32.mrb[0].mxu0
        %v4027 = vadd.f32 0.0, %v4026
        %v4028 = vpop.f32.mrb[0].mxu0
        %v4029 = vpop.f32.mrb[0].mxu0
        %v4030 = vadd.f32 0.0, %v4029
        %v4031 = vpop.f32.mrb[0].mxu0
        %4032 = vmatprep.mubr.bf16.mxu0 0
        %4033 = vmatmul.mubr.bf16.gmra.mrb[0].mxu0 %v3892
        %v4034 = vpop.f32.mrb[0].mxu0
        %v4035 = vadd.f32 0.0, %v4034
        %v4036 = vpop.f32.mrb[0].mxu0
        %v4037 = vpop.f32.mrb[0].mxu0
        %v4038 = vadd.f32 0.0, %v4037
        %v4039 = vpop.f32.mrb[0].mxu0
        %4040 = vmatprep.mubr.bf16.mxu0 0
        %4041 = vmatmul.mubr.bf16.gmra.mrb[0].mxu0 %v3893
        %v4042 = vpop.f32.mrb[0].mxu0
        %v4043 = vadd.f32 0.0, %v4042
        %v4044 = vpop.f32.mrb[0].mxu0
        %v4045 = vpop.f32.mrb[0].mxu0
        %v4046 = vadd.f32 0.0, %v4045
        %v4047 = vpop.f32.mrb[0].mxu0
        %4048 = vmatprep.mubr.bf16.mxu0 0
        %4049 = vmatmul.mubr.bf16.gmra.mrb[0].mxu0 %v3894
        %v4050 = vpop.f32.mrb[0].mxu0
        %v4051 = vadd.f32 0.0, %v4050
        %v4052 = vpop.f32.mrb[0].mxu0
        %v4053 = vpop.f32.mrb[0].mxu0
        %v4054 = vadd.f32 0.0, %v4053
        %v4055 = vpop.f32.mrb[0].mxu0
        %4056 = vdwg.mxu0
        %v4057 = vadd.f32 %v3456, %v3995
        %v4058 = vadd.f32 %v3457, %v3998
        %v4059 = vadd.f32 %v3458, %v4003
        %v4060 = vadd.f32 %v3459, %v4006
        %v4061 = vadd.f32 %v3460, %v4011
        %v4062 = vadd.f32 %v3461, %v4014
        %v4063 = vadd.f32 %v3462, %v4019
        %v4064 = vadd.f32 %v3463, %v4022
        %v4065 = vadd.f32 %v3464, %v4027
        %v4066 = vadd.f32 %v3465, %v4030
        %v4067 = vadd.f32 %v3466, %v4035
        %v4068 = vadd.f32 %v3467, %v4038
        %v4069 = vadd.f32 %v3468, %v4043
        %v4070 = vadd.f32 %v3469, %v4046
        %v4071 = vadd.f32 %v3470, %v4051
        %v4072 = vadd.f32 %v3471, %v4054
        %s4073 = scalar_lea.vmem [#allocation7], 384
        %v4074 = vld [vmem:[%s4073] sm:$0xf]
        %v4075 = vld [vmem:[%s4073 + $0x4] sm:$0xf]
        %v4076 = vld [vmem:[%s4073 + $0x8] sm:$0xf]
        %v4077 = vld [vmem:[%s4073 + $0xc] sm:$0xf]
        %v4078 = vld [vmem:[%s4073 + $0x10] sm:$0xf]
        %v4079 = vld [vmem:[%s4073 + $0x14] sm:$0xf]
        %v4080 = vld [vmem:[%s4073 + $0x18] sm:$0xf]
        %v4081 = vld [vmem:[%s4073 + $0x1c] sm:$0xf]
        %v4082 = vld [vmem:[%s4073 + $0x20] sm:$0xf]
        %v4083 = vld [vmem:[%s4073 + $0x24] sm:$0xf]
        %v4084 = vld [vmem:[%s4073 + $0x28] sm:$0xf]
        %v4085 = vld [vmem:[%s4073 + $0x2c] sm:$0xf]
        %v4086 = vld [vmem:[%s4073 + $0x30] sm:$0xf]
        %v4087 = vld [vmem:[%s4073 + $0x34] sm:$0xf]
        %v4088 = vld [vmem:[%s4073 + $0x38] sm:$0xf]
        %v4089 = vld [vmem:[%s4073 + $0x3c] sm:$0xf]
        %v4106 = vunpack.c.l.b16 %v4074
        %v4107 = vunpack.c.l.b16 %v4075
        %v4108 = vunpack.c.l.b16 %v4076
        %v4109 = vunpack.c.l.b16 %v4077
        %v4110 = vunpack.c.l.b16 %v4078
        %v4111 = vunpack.c.l.b16 %v4079
        %v4112 = vunpack.c.l.b16 %v4080
        %v4113 = vunpack.c.l.b16 %v4081
        %v4114 = vunpack.c.l.b16 %v4082
        %v4115 = vunpack.c.l.b16 %v4083
        %v4116 = vunpack.c.l.b16 %v4084
        %v4117 = vunpack.c.l.b16 %v4085
        %v4118 = vunpack.c.l.b16 %v4086
        %v4119 = vunpack.c.l.b16 %v4087
        %v4120 = vunpack.c.l.b16 %v4088
        %v4121 = vunpack.c.l.b16 %v4089
        %v4122 = vpack.c.b16 %v4107, %v4106
        %v4123 = vpack.c.b16 %v4109, %v4108
        %v4124 = vpack.c.b16 %v4111, %v4110
        %v4125 = vpack.c.b16 %v4113, %v4112
        %v4126 = vpack.c.b16 %v4115, %v4114
        %v4127 = vpack.c.b16 %v4117, %v4116
        %v4128 = vpack.c.b16 %v4119, %v4118
        %v4129 = vpack.c.b16 %v4121, %v4120
        %4138 = vmatprep.subr.bf16.mxu0 0
        %4139 = vmatpush1.bf16.msra.mxu0 %v4122
        %4140 = vmatprep.subr.bf16.mxu0 0
        %4141 = vmatpush1.bf16.msra.mxu0 %v4123
        %4142 = vmatprep.subr.bf16.mxu0 0
        %4143 = vmatpush1.bf16.msra.mxu0 %v4124
        %4144 = vmatprep.subr.bf16.mxu0 0
        %4145 = vmatpush1.bf16.msra.mxu0 %v4125
        %4146 = vmatprep.subr.bf16.mxu0 0
        %4147 = vmatpush1.bf16.msra.mxu0 %v4126
        %4148 = vmatprep.subr.bf16.mxu0 0
        %4149 = vmatpush1.bf16.msra.mxu0 %v4127
        %4150 = vmatprep.subr.bf16.mxu0 0
        %4151 = vmatpush1.bf16.msra.mxu0 %v4128
        %4152 = vmatprep.subr.bf16.mxu0 0
        %4153 = vmatpush1.bf16.msra.mxu0 %v4129
        %4154 = vmatprep.subr.bf16.mxu0 0
        %4155 = vmatpush1.bf16.msra.mxu0 0
        %4156 = vmatprep.subr.bf16.mxu0 0
        %4157 = vmatpush1.bf16.msra.mxu0 0
        %4158 = vmatprep.subr.bf16.mxu0 0
        %4159 = vmatpush1.bf16.msra.mxu0 0
        %4160 = vmatprep.subr.bf16.mxu0 0
        %4161 = vmatpush1.bf16.msra.mxu0 0
        %4162 = vmatprep.subr.bf16.mxu0 0
        %4163 = vmatpush1.bf16.msra.mxu0 0
        %4164 = vmatprep.subr.bf16.mxu0 0
        %4165 = vmatpush1.bf16.msra.mxu0 0
        %4166 = vmatprep.subr.bf16.mxu0 0
        %4167 = vmatpush1.bf16.msra.mxu0 0
        %4168 = vmatprep.subr.bf16.mxu0 0
        %4169 = vmatpush1.bf16.msra.mxu0 0
        %4170 = vmatprep.mubr.bf16.mxu0 0
        %4171 = vmatmul.mubr.bf16.gmra.mrb[0].mxu0 %v453
        %v4172 = vpop.f32.mrb[0].mxu0
        %v4173 = vadd.f32 0.0, %v4172
        %v4174 = vpop.f32.mrb[0].mxu0
        %v4175 = vpop.f32.mrb[0].mxu0
        %v4176 = vadd.f32 0.0, %v4175
        %v4177 = vpop.f32.mrb[0].mxu0
        %4178 = vmatprep.mubr.bf16.mxu0 0
        %4179 = vmatmul.mubr.bf16.gmra.mrb[0].mxu0 %v454
        %v4180 = vpop.f32.mrb[0].mxu0
        %v4181 = vadd.f32 0.0, %v4180
        %v4182 = vpop.f32.mrb[0].mxu0
        %v4183 = vpop.f32.mrb[0].mxu0
        %v4184 = vadd.f32 0.0, %v4183
        %v4185 = vpop.f32.mrb[0].mxu0
        %4186 = vmatprep.mubr.bf16.mxu0 0
        %4187 = vmatmul.mubr.bf16.gmra.mrb[0].mxu0 %v455
        %v4188 = vpop.f32.mrb[0].mxu0
        %v4189 = vadd.f32 0.0, %v4188
        %v4190 = vpop.f32.mrb[0].mxu0
        %v4191 = vpop.f32.mrb[0].mxu0
        %v4192 = vadd.f32 0.0, %v4191
        %v4193 = vpop.f32.mrb[0].mxu0
        %4194 = vmatprep.mubr.bf16.mxu0 0
        %4195 = vmatmul.mubr.bf16.gmra.mrb[0].mxu0 %v456
        %v4196 = vpop.f32.mrb[0].mxu0
        %v4197 = vadd.f32 0.0, %v4196
        %v4198 = vpop.f32.mrb[0].mxu0
        %v4199 = vpop.f32.mrb[0].mxu0
        %v4200 = vadd.f32 0.0, %v4199
        %v4201 = vpop.f32.mrb[0].mxu0
        %4202 = vmatprep.mubr.bf16.mxu0 0
        %4203 = vmatmul.mubr.bf16.gmra.mrb[0].mxu0 %v457
        %v4204 = vpop.f32.mrb[0].mxu0
        %v4205 = vadd.f32 0.0, %v4204
        %v4206 = vpop.f32.mrb[0].mxu0
        %v4207 = vpop.f32.mrb[0].mxu0
        %v4208 = vadd.f32 0.0, %v4207
        %v4209 = vpop.f32.mrb[0].mxu0
        %4210 = vmatprep.mubr.bf16.mxu0 0
        %4211 = vmatmul.mubr.bf16.gmra.mrb[0].mxu0 %v458
        %v4212 = vpop.f32.mrb[0].mxu0
        %v4213 = vadd.f32 0.0, %v4212
        %v4214 = vpop.f32.mrb[0].mxu0
        %v4215 = vpop.f32.mrb[0].mxu0
        %v4216 = vadd.f32 0.0, %v4215
        %v4217 = vpop.f32.mrb[0].mxu0
        %4218 = vmatprep.mubr.bf16.mxu0 0
        %4219 = vmatmul.mubr.bf16.gmra.mrb[0].mxu0 %v459
        %v4220 = vpop.f32.mrb[0].mxu0
        %v4221 = vadd.f32 0.0, %v4220
        %v4222 = vpop.f32.mrb[0].mxu0
        %v4223 = vpop.f32.mrb[0].mxu0
        %v4224 = vadd.f32 0.0, %v4223
        %v4225 = vpop.f32.mrb[0].mxu0
        %4226 = vmatprep.mubr.bf16.mxu0 0
        %4227 = vmatmul.mubr.bf16.gmra.mrb[0].mxu0 %v460
        %v4228 = vpop.f32.mrb[0].mxu0
        %v4229 = vadd.f32 0.0, %v4228
        %v4230 = vpop.f32.mrb[0].mxu0
        %v4231 = vpop.f32.mrb[0].mxu0
        %v4232 = vadd.f32 0.0, %v4231
        %v4233 = vpop.f32.mrb[0].mxu0
        %4234 = vdwg.mxu0
        %v4235 = vpack.c.bf16 %v4176, %v4173
        %v4236 = vpack.c.bf16 %v4184, %v4181
        %v4237 = vpack.c.bf16 %v4192, %v4189
        %v4238 = vpack.c.bf16 %v4200, %v4197
        %v4239 = vpack.c.bf16 %v4208, %v4205
        %v4240 = vpack.c.bf16 %v4216, %v4213
        %v4241 = vpack.c.bf16 %v4224, %v4221
        %v4242 = vpack.c.bf16 %v4232, %v4229
        %v4243 = vlaneseq
        %v4244 = vshrl.u32 %v4243, 7
        %v4245 = vsub.s32 6, %v4244
        %v4246 = vrot.slane %v404, %v4245
        %4247 = vmatprep.subr.bf16.mxu0 0
        %4248 = vmatpush1.bf16.msra.mxu0 %v658
        %4249 = vmatprep.subr.bf16.mxu0 0
        %4250 = vmatpush1.bf16.msra.mxu0 %v659
        %4251 = vmatprep.subr.bf16.mxu0 0
        %4252 = vmatpush1.bf16.msra.mxu0 %v660
        %4253 = vmatprep.subr.bf16.mxu0 0
        %4254 = vmatpush1.bf16.msra.mxu0 %v661
        %4255 = vmatprep.subr.bf16.mxu0 0
        %4256 = vmatpush1.bf16.msra.mxu0 %v662
        %4257 = vmatprep.subr.bf16.mxu0 0
        %4258 = vmatpush1.bf16.msra.mxu0 %v663
        %4259 = vmatprep.subr.bf16.mxu0 0
        %4260 = vmatpush1.bf16.msra.mxu0 %v664
        %4261 = vmatprep.subr.bf16.mxu0 0
        %4262 = vmatpush1.bf16.msra.mxu0 %v665
        %4263 = vmatprep.subr.bf16.mxu0 0
        %4264 = vmatpush1.bf16.msra.mxu0 0
        %4265 = vmatprep.subr.bf16.mxu0 0
        %4266 = vmatpush1.bf16.msra.mxu0 0
        %4267 = vmatprep.subr.bf16.mxu0 0
        %4268 = vmatpush1.bf16.msra.mxu0 0
        %4269 = vmatprep.subr.bf16.mxu0 0
        %4270 = vmatpush1.bf16.msra.mxu0 0
        %4271 = vmatprep.subr.bf16.mxu0 0
        %4272 = vmatpush1.bf16.msra.mxu0 0
        %4273 = vmatprep.subr.bf16.mxu0 0
        %4274 = vmatpush1.bf16.msra.mxu0 0
        %4275 = vmatprep.subr.bf16.mxu0 0
        %4276 = vmatpush1.bf16.msra.mxu0 0
        %4277 = vmatprep.subr.bf16.mxu0 0
        %4278 = vmatpush1.bf16.msra.mxu0 0
        %4279 = vmatprep.mubr.bf16.mxu0 0
        %4280 = vmatmul.mubr.bf16.gmra.mrb[0].mxu0 %v4235
        %v4281 = vpop.f32.mrb[0].mxu0
        %v4282 = vadd.f32 %v4246, %v4281
        %v4283 = vpop.f32.mrb[0].mxu0
        %v4284 = vpop.f32.mrb[0].mxu0
        %v4285 = vadd.f32 %v4246, %v4284
        %v4286 = vpop.f32.mrb[0].mxu0
        %4287 = vmatprep.mubr.bf16.mxu0 0
        %4288 = vmatmul.mubr.bf16.gmra.mrb[0].mxu0 %v4236
        %v4289 = vpop.f32.mrb[0].mxu0
        %v4290 = vadd.f32 %v4246, %v4289
        %v4291 = vpop.f32.mrb[0].mxu0
        %v4292 = vpop.f32.mrb[0].mxu0
        %v4293 = vadd.f32 %v4246, %v4292
        %v4294 = vpop.f32.mrb[0].mxu0
        %4295 = vmatprep.mubr.bf16.mxu0 0
        %4296 = vmatmul.mubr.bf16.gmra.mrb[0].mxu0 %v4237
        %v4297 = vpop.f32.mrb[0].mxu0
        %v4298 = vadd.f32 %v4246, %v4297
        %v4299 = vpop.f32.mrb[0].mxu0
        %v4300 = vpop.f32.mrb[0].mxu0
        %v4301 = vadd.f32 %v4246, %v4300
        %v4302 = vpop.f32.mrb[0].mxu0
        %4303 = vmatprep.mubr.bf16.mxu0 0
        %4304 = vmatmul.mubr.bf16.gmra.mrb[0].mxu0 %v4238
        %v4305 = vpop.f32.mrb[0].mxu0
        %v4306 = vadd.f32 %v4246, %v4305
        %v4307 = vpop.f32.mrb[0].mxu0
        %v4308 = vpop.f32.mrb[0].mxu0
        %v4309 = vadd.f32 %v4246, %v4308
        %v4310 = vpop.f32.mrb[0].mxu0
        %4311 = vmatprep.mubr.bf16.mxu0 0
        %4312 = vmatmul.mubr.bf16.gmra.mrb[0].mxu0 %v4239
        %v4313 = vpop.f32.mrb[0].mxu0
        %v4314 = vadd.f32 %v4246, %v4313
        %v4315 = vpop.f32.mrb[0].mxu0
        %v4316 = vpop.f32.mrb[0].mxu0
        %v4317 = vadd.f32 %v4246, %v4316
        %v4318 = vpop.f32.mrb[0].mxu0
        %4319 = vmatprep.mubr.bf16.mxu0 0
        %4320 = vmatmul.mubr.bf16.gmra.mrb[0].mxu0 %v4240
        %v4321 = vpop.f32.mrb[0].mxu0
        %v4322 = vadd.f32 %v4246, %v4321
        %v4323 = vpop.f32.mrb[0].mxu0
        %v4324 = vpop.f32.mrb[0].mxu0
        %v4325 = vadd.f32 %v4246, %v4324
        %v4326 = vpop.f32.mrb[0].mxu0
        %4327 = vmatprep.mubr.bf16.mxu0 0
        %4328 = vmatmul.mubr.bf16.gmra.mrb[0].mxu0 %v4241
        %v4329 = vpop.f32.mrb[0].mxu0
        %v4330 = vadd.f32 %v4246, %v4329
        %v4331 = vpop.f32.mrb[0].mxu0
        %v4332 = vpop.f32.mrb[0].mxu0
        %v4333 = vadd.f32 %v4246, %v4332
        %v4334 = vpop.f32.mrb[0].mxu0
        %4335 = vmatprep.mubr.bf16.mxu0 0
        %4336 = vmatmul.mubr.bf16.gmra.mrb[0].mxu0 %v4242
        %v4337 = vpop.f32.mrb[0].mxu0
        %v4338 = vadd.f32 %v4246, %v4337
        %v4339 = vpop.f32.mrb[0].mxu0
        %v4340 = vpop.f32.mrb[0].mxu0
        %v4341 = vadd.f32 %v4246, %v4340
        %v4342 = vpop.f32.mrb[0].mxu0
        %4343 = vdwg.mxu0
        %4344 = vmax.xlane.f32.xlu0 %v4282
        %v4345 = vpop.xlane.xlu0 %4344
        %4346 = vmax.xlane.f32.xlu0 %v4285
        %v4347 = vpop.xlane.xlu0 %4346
        %4348 = vmax.xlane.f32.xlu0 %v4290
        %v4349 = vpop.xlane.xlu0 %4348
        %4350 = vmax.xlane.f32.xlu0 %v4293
        %v4351 = vpop.xlane.xlu0 %4350
        %4352 = vmax.xlane.f32.xlu0 %v4298
        %v4353 = vpop.xlane.xlu0 %4352
        %4354 = vmax.xlane.f32.xlu0 %v4301
        %v4355 = vpop.xlane.xlu0 %4354
        %4356 = vmax.xlane.f32.xlu0 %v4306
        %v4357 = vpop.xlane.xlu0 %4356
        %4358 = vmax.xlane.f32.xlu0 %v4309
        %v4359 = vpop.xlane.xlu0 %4358
        %4360 = vmax.xlane.f32.xlu0 %v4314
        %v4361 = vpop.xlane.xlu0 %4360
        %4362 = vmax.xlane.f32.xlu0 %v4317
        %v4363 = vpop.xlane.xlu0 %4362
        %4364 = vmax.xlane.f32.xlu0 %v4322
        %v4365 = vpop.xlane.xlu0 %4364
        %4366 = vmax.xlane.f32.xlu0 %v4325
        %v4367 = vpop.xlane.xlu0 %4366
        %4368 = vmax.xlane.f32.xlu0 %v4330
        %v4369 = vpop.xlane.xlu0 %4368
        %4370 = vmax.xlane.f32.xlu0 %v4333
        %v4371 = vpop.xlane.xlu0 %4370
        %4372 = vmax.xlane.f32.xlu0 %v4338
        %v4373 = vpop.xlane.xlu0 %4372
        %4374 = vmax.xlane.f32.xlu0 %v4341
        %v4375 = vpop.xlane.xlu0 %4374
        %v4376 = vsub.f32 %v4282, %v4345
        %v4377 = vsub.f32 %v4285, %v4347
        %v4378 = vsub.f32 %v4290, %v4349
        %v4379 = vsub.f32 %v4293, %v4351
        %v4380 = vsub.f32 %v4298, %v4353
        %v4381 = vsub.f32 %v4301, %v4355
        %v4382 = vsub.f32 %v4306, %v4357
        %v4383 = vsub.f32 %v4309, %v4359
        %v4384 = vsub.f32 %v4314, %v4361
        %v4385 = vsub.f32 %v4317, %v4363
        %v4386 = vsub.f32 %v4322, %v4365
        %v4387 = vsub.f32 %v4325, %v4367
        %v4388 = vsub.f32 %v4330, %v4369
        %v4389 = vsub.f32 %v4333, %v4371
        %v4390 = vsub.f32 %v4338, %v4373
        %v4391 = vsub.f32 %v4341, %v4375
        %v4392 = vmul.f32 %v4376, 1.442695
        %v4393 = vpow.pop %v4392
        %v4394 = vmul.f32 %v4377, 1.442695
        %v4395 = vpow.pop %v4394
        %v4396 = vmul.f32 %v4378, 1.442695
        %v4397 = vpow.pop %v4396
        %v4398 = vmul.f32 %v4379, 1.442695
        %v4399 = vpow.pop %v4398
        %v4400 = vmul.f32 %v4380, 1.442695
        %v4401 = vpow.pop %v4400
        %v4402 = vmul.f32 %v4381, 1.442695
        %v4403 = vpow.pop %v4402
        %v4404 = vmul.f32 %v4382, 1.442695
        %v4405 = vpow.pop %v4404
        %v4406 = vmul.f32 %v4383, 1.442695
        %v4407 = vpow.pop %v4406
        %v4408 = vmul.f32 %v4384, 1.442695
        %v4409 = vpow.pop %v4408
        %v4410 = vmul.f32 %v4385, 1.442695
        %v4411 = vpow.pop %v4410
        %v4412 = vmul.f32 %v4386, 1.442695
        %v4413 = vpow.pop %v4412
        %v4414 = vmul.f32 %v4387, 1.442695
        %v4415 = vpow.pop %v4414
        %v4416 = vmul.f32 %v4388, 1.442695
        %v4417 = vpow.pop %v4416
        %v4418 = vmul.f32 %v4389, 1.442695
        %v4419 = vpow.pop %v4418
        %v4420 = vmul.f32 %v4390, 1.442695
        %v4421 = vpow.pop %v4420
        %v4422 = vmul.f32 %v4391, 1.442695
        %v4423 = vpow.pop %v4422
        %4424 = vadd.xlane.f32.xlu0 %v4393
        %v4425 = vpop.xlane.xlu0 %4424
        %4426 = vadd.xlane.f32.xlu0 %v4395
        %v4427 = vpop.xlane.xlu0 %4426
        %4428 = vadd.xlane.f32.xlu0 %v4397
        %v4429 = vpop.xlane.xlu0 %4428
        %4430 = vadd.xlane.f32.xlu0 %v4399
        %v4431 = vpop.xlane.xlu0 %4430
        %4432 = vadd.xlane.f32.xlu0 %v4401
        %v4433 = vpop.xlane.xlu0 %4432
        %4434 = vadd.xlane.f32.xlu0 %v4403
        %v4435 = vpop.xlane.xlu0 %4434
        %4436 = vadd.xlane.f32.xlu0 %v4405
        %v4437 = vpop.xlane.xlu0 %4436
        %4438 = vadd.xlane.f32.xlu0 %v4407
        %v4439 = vpop.xlane.xlu0 %4438
        %4440 = vadd.xlane.f32.xlu0 %v4409
        %v4441 = vpop.xlane.xlu0 %4440
        %4442 = vadd.xlane.f32.xlu0 %v4411
        %v4443 = vpop.xlane.xlu0 %4442
        %4444 = vadd.xlane.f32.xlu0 %v4413
        %v4445 = vpop.xlane.xlu0 %4444
        %4446 = vadd.xlane.f32.xlu0 %v4415
        %v4447 = vpop.xlane.xlu0 %4446
        %4448 = vadd.xlane.f32.xlu0 %v4417
        %v4449 = vpop.xlane.xlu0 %4448
        %4450 = vadd.xlane.f32.xlu0 %v4419
        %v4451 = vpop.xlane.xlu0 %4450
        %4452 = vadd.xlane.f32.xlu0 %v4421
        %v4453 = vpop.xlane.xlu0 %4452
        %4454 = vadd.xlane.f32.xlu0 %v4423
        %v4455 = vpop.xlane.xlu0 %4454
        %v4456 = vrcp.pop %v4425
        %v4457 = vrcp.pop %v4427
        %v4458 = vrcp.pop %v4429
        %v4459 = vrcp.pop %v4431
        %v4460 = vrcp.pop %v4433
        %v4461 = vrcp.pop %v4435
        %v4462 = vrcp.pop %v4437
        %v4463 = vrcp.pop %v4439
        %v4464 = vrcp.pop %v4441
        %v4465 = vrcp.pop %v4443
        %v4466 = vrcp.pop %v4445
        %v4467 = vrcp.pop %v4447
        %v4468 = vrcp.pop %v4449
        %v4469 = vrcp.pop %v4451
        %v4470 = vrcp.pop %v4453
        %v4471 = vrcp.pop %v4455
        %v4472 = vmul.f32 %v4393, %v4456
        %v4473 = vmul.f32 %v4395, %v4457
        %v4474 = vmul.f32 %v4397, %v4458
        %v4475 = vmul.f32 %v4399, %v4459
        %v4476 = vmul.f32 %v4401, %v4460
        %v4477 = vmul.f32 %v4403, %v4461
        %v4478 = vmul.f32 %v4405, %v4462
        %v4479 = vmul.f32 %v4407, %v4463
        %v4480 = vmul.f32 %v4409, %v4464
        %v4481 = vmul.f32 %v4411, %v4465
        %v4482 = vmul.f32 %v4413, %v4466
        %v4483 = vmul.f32 %v4415, %v4467
        %v4484 = vmul.f32 %v4417, %v4468
        %v4485 = vmul.f32 %v4419, %v4469
        %v4486 = vmul.f32 %v4421, %v4470
        %v4487 = vmul.f32 %v4423, %v4471
        %v4488 = vpack.c.bf16 %v4473, %v4472
        %v4489 = vpack.c.bf16 %v4475, %v4474
        %v4490 = vpack.c.bf16 %v4477, %v4476
        %v4491 = vpack.c.bf16 %v4479, %v4478
        %v4492 = vpack.c.bf16 %v4481, %v4480
        %v4493 = vpack.c.bf16 %v4483, %v4482
        %v4494 = vpack.c.bf16 %v4485, %v4484
        %v4495 = vpack.c.bf16 %v4487, %v4486
        %s4496 = scalar_lea.vmem [#allocation8], 384
        %v4497 = vld [vmem:[%s4496] sm:$0xf]
        %v4498 = vld [vmem:[%s4496 + $0x4] sm:$0xf]
        %v4499 = vld [vmem:[%s4496 + $0x8] sm:$0xf]
        %v4500 = vld [vmem:[%s4496 + $0xc] sm:$0xf]
        %v4501 = vld [vmem:[%s4496 + $0x10] sm:$0xf]
        %v4502 = vld [vmem:[%s4496 + $0x14] sm:$0xf]
        %v4503 = vld [vmem:[%s4496 + $0x18] sm:$0xf]
        %v4504 = vld [vmem:[%s4496 + $0x1c] sm:$0xf]
        %v4505 = vld [vmem:[%s4496 + $0x20] sm:$0xf]
        %v4506 = vld [vmem:[%s4496 + $0x24] sm:$0xf]
        %v4507 = vld [vmem:[%s4496 + $0x28] sm:$0xf]
        %v4508 = vld [vmem:[%s4496 + $0x2c] sm:$0xf]
        %v4509 = vld [vmem:[%s4496 + $0x30] sm:$0xf]
        %v4510 = vld [vmem:[%s4496 + $0x34] sm:$0xf]
        %v4511 = vld [vmem:[%s4496 + $0x38] sm:$0xf]
        %v4512 = vld [vmem:[%s4496 + $0x3c] sm:$0xf]
        %v4529 = vunpack.c.l.b16 %v4497
        %v4530 = vunpack.c.l.b16 %v4498
        %v4531 = vunpack.c.l.b16 %v4499
        %v4532 = vunpack.c.l.b16 %v4500
        %v4533 = vunpack.c.l.b16 %v4501
        %v4534 = vunpack.c.l.b16 %v4502
        %v4535 = vunpack.c.l.b16 %v4503
        %v4536 = vunpack.c.l.b16 %v4504
        %v4537 = vunpack.c.l.b16 %v4505
        %v4538 = vunpack.c.l.b16 %v4506
        %v4539 = vunpack.c.l.b16 %v4507
        %v4540 = vunpack.c.l.b16 %v4508
        %v4541 = vunpack.c.l.b16 %v4509
        %v4542 = vunpack.c.l.b16 %v4510
        %v4543 = vunpack.c.l.b16 %v4511
        %v4544 = vunpack.c.l.b16 %v4512
        %v4545 = vpack.c.b16 %v4530, %v4529
        %v4546 = vpack.c.b16 %v4532, %v4531
        %v4547 = vpack.c.b16 %v4534, %v4533
        %v4548 = vpack.c.b16 %v4536, %v4535
        %v4549 = vpack.c.b16 %v4538, %v4537
        %v4550 = vpack.c.b16 %v4540, %v4539
        %v4551 = vpack.c.b16 %v4542, %v4541
        %v4552 = vpack.c.b16 %v4544, %v4543
        %4561 = vmatprep.subr.bf16.mxu0 0
        %4562 = vmatpush1.bf16.msra.mxu0 %v4545
        %4563 = vmatprep.subr.bf16.mxu0 0
        %4564 = vmatpush1.bf16.msra.mxu0 %v4546
        %4565 = vmatprep.subr.bf16.mxu0 0
        %4566 = vmatpush1.bf16.msra.mxu0 %v4547
        %4567 = vmatprep.subr.bf16.mxu0 0
        %4568 = vmatpush1.bf16.msra.mxu0 %v4548
        %4569 = vmatprep.subr.bf16.mxu0 0
        %4570 = vmatpush1.bf16.msra.mxu0 %v4549
        %4571 = vmatprep.subr.bf16.mxu0 0
        %4572 = vmatpush1.bf16.msra.mxu0 %v4550
        %4573 = vmatprep.subr.bf16.mxu0 0
        %4574 = vmatpush1.bf16.msra.mxu0 %v4551
        %4575 = vmatprep.subr.bf16.mxu0 0
        %4576 = vmatpush1.bf16.msra.mxu0 %v4552
        %4577 = vmatprep.subr.bf16.mxu0 0
        %4578 = vmatpush1.bf16.msra.mxu0 0
        %4579 = vmatprep.subr.bf16.mxu0 0
        %4580 = vmatpush1.bf16.msra.mxu0 0
        %4581 = vmatprep.subr.bf16.mxu0 0
        %4582 = vmatpush1.bf16.msra.mxu0 0
        %4583 = vmatprep.subr.bf16.mxu0 0
        %4584 = vmatpush1.bf16.msra.mxu0 0
        %4585 = vmatprep.subr.bf16.mxu0 0
        %4586 = vmatpush1.bf16.msra.mxu0 0
        %4587 = vmatprep.subr.bf16.mxu0 0
        %4588 = vmatpush1.bf16.msra.mxu0 0
        %4589 = vmatprep.subr.bf16.mxu0 0
        %4590 = vmatpush1.bf16.msra.mxu0 0
        %4591 = vmatprep.subr.bf16.mxu0 0
        %4592 = vmatpush1.bf16.msra.mxu0 0
        %4593 = vmatprep.mubr.bf16.mxu0 0
        %4594 = vmatmul.mubr.bf16.gmra.mrb[0].mxu0 %v4488
        %v4595 = vpop.f32.mrb[0].mxu0
        %v4596 = vadd.f32 0.0, %v4595
        %v4597 = vpop.f32.mrb[0].mxu0
        %v4598 = vpop.f32.mrb[0].mxu0
        %v4599 = vadd.f32 0.0, %v4598
        %v4600 = vpop.f32.mrb[0].mxu0
        %4601 = vmatprep.mubr.bf16.mxu0 0
        %4602 = vmatmul.mubr.bf16.gmra.mrb[0].mxu0 %v4489
        %v4603 = vpop.f32.mrb[0].mxu0
        %v4604 = vadd.f32 0.0, %v4603
        %v4605 = vpop.f32.mrb[0].mxu0
        %v4606 = vpop.f32.mrb[0].mxu0
        %v4607 = vadd.f32 0.0, %v4606
        %v4608 = vpop.f32.mrb[0].mxu0
        %4609 = vmatprep.mubr.bf16.mxu0 0
        %4610 = vmatmul.mubr.bf16.gmra.mrb[0].mxu0 %v4490
        %v4611 = vpop.f32.mrb[0].mxu0
        %v4612 = vadd.f32 0.0, %v4611
        %v4613 = vpop.f32.mrb[0].mxu0
        %v4614 = vpop.f32.mrb[0].mxu0
        %v4615 = vadd.f32 0.0, %v4614
        %v4616 = vpop.f32.mrb[0].mxu0
        %4617 = vmatprep.mubr.bf16.mxu0 0
        %4618 = vmatmul.mubr.bf16.gmra.mrb[0].mxu0 %v4491
        %v4619 = vpop.f32.mrb[0].mxu0
        %v4620 = vadd.f32 0.0, %v4619
        %v4621 = vpop.f32.mrb[0].mxu0
        %v4622 = vpop.f32.mrb[0].mxu0
        %v4623 = vadd.f32 0.0, %v4622
        %v4624 = vpop.f32.mrb[0].mxu0
        %4625 = vmatprep.mubr.bf16.mxu0 0
        %4626 = vmatmul.mubr.bf16.gmra.mrb[0].mxu0 %v4492
        %v4627 = vpop.f32.mrb[0].mxu0
        %v4628 = vadd.f32 0.0, %v4627
        %v4629 = vpop.f32.mrb[0].mxu0
        %v4630 = vpop.f32.mrb[0].mxu0
        %v4631 = vadd.f32 0.0, %v4630
        %v4632 = vpop.f32.mrb[0].mxu0
        %4633 = vmatprep.mubr.bf16.mxu0 0
        %4634 = vmatmul.mubr.bf16.gmra.mrb[0].mxu0 %v4493
        %v4635 = vpop.f32.mrb[0].mxu0
        %v4636 = vadd.f32 0.0, %v4635
        %v4637 = vpop.f32.mrb[0].mxu0
        %v4638 = vpop.f32.mrb[0].mxu0
        %v4639 = vadd.f32 0.0, %v4638
        %v4640 = vpop.f32.mrb[0].mxu0
        %4641 = vmatprep.mubr.bf16.mxu0 0
        %4642 = vmatmul.mubr.bf16.gmra.mrb[0].mxu0 %v4494
        %v4643 = vpop.f32.mrb[0].mxu0
        %v4644 = vadd.f32 0.0, %v4643
        %v4645 = vpop.f32.mrb[0].mxu0
        %v4646 = vpop.f32.mrb[0].mxu0
        %v4647 = vadd.f32 0.0, %v4646
        %v4648 = vpop.f32.mrb[0].mxu0
        %4649 = vmatprep.mubr.bf16.mxu0 0
        %4650 = vmatmul.mubr.bf16.gmra.mrb[0].mxu0 %v4495
        %v4651 = vpop.f32.mrb[0].mxu0
        %v4652 = vadd.f32 0.0, %v4651
        %v4653 = vpop.f32.mrb[0].mxu0
        %v4654 = vpop.f32.mrb[0].mxu0
        %v4655 = vadd.f32 0.0, %v4654
        %v4656 = vpop.f32.mrb[0].mxu0
        %4657 = vdwg.mxu0
        %v4658 = vadd.f32 %v4057, %v4596
        %v4659 = vadd.f32 %v4058, %v4599
        %v4660 = vadd.f32 %v4059, %v4604
        %v4661 = vadd.f32 %v4060, %v4607
        %v4662 = vadd.f32 %v4061, %v4612
        %v4663 = vadd.f32 %v4062, %v4615
        %v4664 = vadd.f32 %v4063, %v4620
        %v4665 = vadd.f32 %v4064, %v4623
        %v4666 = vadd.f32 %v4065, %v4628
        %v4667 = vadd.f32 %v4066, %v4631
        %v4668 = vadd.f32 %v4067, %v4636
        %v4669 = vadd.f32 %v4068, %v4639
        %v4670 = vadd.f32 %v4069, %v4644
        %v4671 = vadd.f32 %v4070, %v4647
        %v4672 = vadd.f32 %v4071, %v4652
        %v4673 = vadd.f32 %v4072, %v4655
        %s4674 = scalar_lea.vmem [#allocation7], 448
        %v4675 = vld [vmem:[%s4674] sm:$0xf]
        %v4676 = vld [vmem:[%s4674 + $0x4] sm:$0xf]
        %v4677 = vld [vmem:[%s4674 + $0x8] sm:$0xf]
        %v4678 = vld [vmem:[%s4674 + $0xc] sm:$0xf]
        %v4679 = vld [vmem:[%s4674 + $0x10] sm:$0xf]
        %v4680 = vld [vmem:[%s4674 + $0x14] sm:$0xf]
        %v4681 = vld [vmem:[%s4674 + $0x18] sm:$0xf]
        %v4682 = vld [vmem:[%s4674 + $0x1c] sm:$0xf]
        %v4683 = vld [vmem:[%s4674 + $0x20] sm:$0xf]
        %v4684 = vld [vmem:[%s4674 + $0x24] sm:$0xf]
        %v4685 = vld [vmem:[%s4674 + $0x28] sm:$0xf]
        %v4686 = vld [vmem:[%s4674 + $0x2c] sm:$0xf]
        %v4687 = vld [vmem:[%s4674 + $0x30] sm:$0xf]
        %v4688 = vld [vmem:[%s4674 + $0x34] sm:$0xf]
        %v4689 = vld [vmem:[%s4674 + $0x38] sm:$0xf]
        %v4690 = vld [vmem:[%s4674 + $0x3c] sm:$0xf]
        %v4707 = vunpack.c.l.b16 %v4675
        %v4708 = vunpack.c.l.b16 %v4676
        %v4709 = vunpack.c.l.b16 %v4677
        %v4710 = vunpack.c.l.b16 %v4678
        %v4711 = vunpack.c.l.b16 %v4679
        %v4712 = vunpack.c.l.b16 %v4680
        %v4713 = vunpack.c.l.b16 %v4681
        %v4714 = vunpack.c.l.b16 %v4682
        %v4715 = vunpack.c.l.b16 %v4683
        %v4716 = vunpack.c.l.b16 %v4684
        %v4717 = vunpack.c.l.b16 %v4685
        %v4718 = vunpack.c.l.b16 %v4686
        %v4719 = vunpack.c.l.b16 %v4687
        %v4720 = vunpack.c.l.b16 %v4688
        %v4721 = vunpack.c.l.b16 %v4689
        %v4722 = vunpack.c.l.b16 %v4690
        %v4723 = vpack.c.b16 %v4708, %v4707
        %v4724 = vpack.c.b16 %v4710, %v4709
        %v4725 = vpack.c.b16 %v4712, %v4711
        %v4726 = vpack.c.b16 %v4714, %v4713
        %v4727 = vpack.c.b16 %v4716, %v4715
        %v4728 = vpack.c.b16 %v4718, %v4717
        %v4729 = vpack.c.b16 %v4720, %v4719
        %v4730 = vpack.c.b16 %v4722, %v4721
        %4739 = vmatprep.subr.bf16.mxu0 0
        %4740 = vmatpush1.bf16.msra.mxu0 %v4723
        %4741 = vmatprep.subr.bf16.mxu0 0
        %4742 = vmatpush1.bf16.msra.mxu0 %v4724
        %4743 = vmatprep.subr.bf16.mxu0 0
        %4744 = vmatpush1.bf16.msra.mxu0 %v4725
        %4745 = vmatprep.subr.bf16.mxu0 0
        %4746 = vmatpush1.bf16.msra.mxu0 %v4726
        %4747 = vmatprep.subr.bf16.mxu0 0
        %4748 = vmatpush1.bf16.msra.mxu0 %v4727
        %4749 = vmatprep.subr.bf16.mxu0 0
        %4750 = vmatpush1.bf16.msra.mxu0 %v4728
        %4751 = vmatprep.subr.bf16.mxu0 0
        %4752 = vmatpush1.bf16.msra.mxu0 %v4729
        %4753 = vmatprep.subr.bf16.mxu0 0
        %4754 = vmatpush1.bf16.msra.mxu0 %v4730
        %4755 = vmatprep.subr.bf16.mxu0 0
        %4756 = vmatpush1.bf16.msra.mxu0 0
        %4757 = vmatprep.subr.bf16.mxu0 0
        %4758 = vmatpush1.bf16.msra.mxu0 0
        %4759 = vmatprep.subr.bf16.mxu0 0
        %4760 = vmatpush1.bf16.msra.mxu0 0
        %4761 = vmatprep.subr.bf16.mxu0 0
        %4762 = vmatpush1.bf16.msra.mxu0 0
        %4763 = vmatprep.subr.bf16.mxu0 0
        %4764 = vmatpush1.bf16.msra.mxu0 0
        %4765 = vmatprep.subr.bf16.mxu0 0
        %4766 = vmatpush1.bf16.msra.mxu0 0
        %4767 = vmatprep.subr.bf16.mxu0 0
        %4768 = vmatpush1.bf16.msra.mxu0 0
        %4769 = vmatprep.subr.bf16.mxu0 0
        %4770 = vmatpush1.bf16.msra.mxu0 0
        %4771 = vmatprep.mubr.bf16.mxu0 0
        %4772 = vmatmul.mubr.bf16.gmra.mrb[0].mxu0 %v453
        %v4773 = vpop.f32.mrb[0].mxu0
        %v4774 = vadd.f32 0.0, %v4773
        %v4775 = vpop.f32.mrb[0].mxu0
        %v4776 = vpop.f32.mrb[0].mxu0
        %v4777 = vadd.f32 0.0, %v4776
        %v4778 = vpop.f32.mrb[0].mxu0
        %4779 = vmatprep.mubr.bf16.mxu0 0
        %4780 = vmatmul.mubr.bf16.gmra.mrb[0].mxu0 %v454
        %v4781 = vpop.f32.mrb[0].mxu0
        %v4782 = vadd.f32 0.0, %v4781
        %v4783 = vpop.f32.mrb[0].mxu0
        %v4784 = vpop.f32.mrb[0].mxu0
        %v4785 = vadd.f32 0.0, %v4784
        %v4786 = vpop.f32.mrb[0].mxu0
        %4787 = vmatprep.mubr.bf16.mxu0 0
        %4788 = vmatmul.mubr.bf16.gmra.mrb[0].mxu0 %v455
        %v4789 = vpop.f32.mrb[0].mxu0
        %v4790 = vadd.f32 0.0, %v4789
        %v4791 = vpop.f32.mrb[0].mxu0
        %v4792 = vpop.f32.mrb[0].mxu0
        %v4793 = vadd.f32 0.0, %v4792
        %v4794 = vpop.f32.mrb[0].mxu0
        %4795 = vmatprep.mubr.bf16.mxu0 0
        %4796 = vmatmul.mubr.bf16.gmra.mrb[0].mxu0 %v456
        %v4797 = vpop.f32.mrb[0].mxu0
        %v4798 = vadd.f32 0.0, %v4797
        %v4799 = vpop.f32.mrb[0].mxu0
        %v4800 = vpop.f32.mrb[0].mxu0
        %v4801 = vadd.f32 0.0, %v4800
        %v4802 = vpop.f32.mrb[0].mxu0
        %4803 = vmatprep.mubr.bf16.mxu0 0
        %4804 = vmatmul.mubr.bf16.gmra.mrb[0].mxu0 %v457
        %v4805 = vpop.f32.mrb[0].mxu0
        %v4806 = vadd.f32 0.0, %v4805
        %v4807 = vpop.f32.mrb[0].mxu0
        %v4808 = vpop.f32.mrb[0].mxu0
        %v4809 = vadd.f32 0.0, %v4808
        %v4810 = vpop.f32.mrb[0].mxu0
        %4811 = vmatprep.mubr.bf16.mxu0 0
        %4812 = vmatmul.mubr.bf16.gmra.mrb[0].mxu0 %v458
        %v4813 = vpop.f32.mrb[0].mxu0
        %v4814 = vadd.f32 0.0, %v4813
        %v4815 = vpop.f32.mrb[0].mxu0
        %v4816 = vpop.f32.mrb[0].mxu0
        %v4817 = vadd.f32 0.0, %v4816
        %v4818 = vpop.f32.mrb[0].mxu0
        %4819 = vmatprep.mubr.bf16.mxu0 0
        %4820 = vmatmul.mubr.bf16.gmra.mrb[0].mxu0 %v459
        %v4821 = vpop.f32.mrb[0].mxu0
        %v4822 = vadd.f32 0.0, %v4821
        %v4823 = vpop.f32.mrb[0].mxu0
        %v4824 = vpop.f32.mrb[0].mxu0
        %v4825 = vadd.f32 0.0, %v4824
        %v4826 = vpop.f32.mrb[0].mxu0
        %4827 = vmatprep.mubr.bf16.mxu0 0
        %4828 = vmatmul.mubr.bf16.gmra.mrb[0].mxu0 %v460
        %v4829 = vpop.f32.mrb[0].mxu0
        %v4830 = vadd.f32 0.0, %v4829
        %v4831 = vpop.f32.mrb[0].mxu0
        %v4832 = vpop.f32.mrb[0].mxu0
        %v4833 = vadd.f32 0.0, %v4832
        %v4834 = vpop.f32.mrb[0].mxu0
        %4835 = vdwg.mxu0
        %v4836 = vpack.c.bf16 %v4777, %v4774
        %v4837 = vpack.c.bf16 %v4785, %v4782
        %v4838 = vpack.c.bf16 %v4793, %v4790
        %v4839 = vpack.c.bf16 %v4801, %v4798
        %v4840 = vpack.c.bf16 %v4809, %v4806
        %v4841 = vpack.c.bf16 %v4817, %v4814
        %v4842 = vpack.c.bf16 %v4825, %v4822
        %v4843 = vpack.c.bf16 %v4833, %v4830
        %v4844 = vlaneseq
        %v4845 = vshrl.u32 %v4844, 7
        %v4846 = vsub.s32 7, %v4845
        %v4847 = vrot.slane %v404, %v4846
        %4848 = vmatprep.subr.bf16.mxu0 0
        %4849 = vmatpush1.bf16.msra.mxu0 %v658
        %4850 = vmatprep.subr.bf16.mxu0 0
        %4851 = vmatpush1.bf16.msra.mxu0 %v659
        %4852 = vmatprep.subr.bf16.mxu0 0
        %4853 = vmatpush1.bf16.msra.mxu0 %v660
        %4854 = vmatprep.subr.bf16.mxu0 0
        %4855 = vmatpush1.bf16.msra.mxu0 %v661
        %4856 = vmatprep.subr.bf16.mxu0 0
        %4857 = vmatpush1.bf16.msra.mxu0 %v662
        %4858 = vmatprep.subr.bf16.mxu0 0
        %4859 = vmatpush1.bf16.msra.mxu0 %v663
        %4860 = vmatprep.subr.bf16.mxu0 0
        %4861 = vmatpush1.bf16.msra.mxu0 %v664
        %4862 = vmatprep.subr.bf16.mxu0 0
        %4863 = vmatpush1.bf16.msra.mxu0 %v665
        %4864 = vmatprep.subr.bf16.mxu0 0
        %4865 = vmatpush1.bf16.msra.mxu0 0
        %4866 = vmatprep.subr.bf16.mxu0 0
        %4867 = vmatpush1.bf16.msra.mxu0 0
        %4868 = vmatprep.subr.bf16.mxu0 0
        %4869 = vmatpush1.bf16.msra.mxu0 0
        %4870 = vmatprep.subr.bf16.mxu0 0
        %4871 = vmatpush1.bf16.msra.mxu0 0
        %4872 = vmatprep.subr.bf16.mxu0 0
        %4873 = vmatpush1.bf16.msra.mxu0 0
        %4874 = vmatprep.subr.bf16.mxu0 0
        %4875 = vmatpush1.bf16.msra.mxu0 0
        %4876 = vmatprep.subr.bf16.mxu0 0
        %4877 = vmatpush1.bf16.msra.mxu0 0
        %4878 = vmatprep.subr.bf16.mxu0 0
        %4879 = vmatpush1.bf16.msra.mxu0 0
        %4880 = vmatprep.mubr.bf16.mxu0 0
        %4881 = vmatmul.mubr.bf16.gmra.mrb[0].mxu0 %v4836
        %v4882 = vpop.f32.mrb[0].mxu0
        %v4883 = vadd.f32 %v4847, %v4882
        %v4884 = vpop.f32.mrb[0].mxu0
        %v4885 = vpop.f32.mrb[0].mxu0
        %v4886 = vadd.f32 %v4847, %v4885
        %v4887 = vpop.f32.mrb[0].mxu0
        %4888 = vmatprep.mubr.bf16.mxu0 0
        %4889 = vmatmul.mubr.bf16.gmra.mrb[0].mxu0 %v4837
        %v4890 = vpop.f32.mrb[0].mxu0
        %v4891 = vadd.f32 %v4847, %v4890
        %v4892 = vpop.f32.mrb[0].mxu0
        %v4893 = vpop.f32.mrb[0].mxu0
        %v4894 = vadd.f32 %v4847, %v4893
        %v4895 = vpop.f32.mrb[0].mxu0
        %4896 = vmatprep.mubr.bf16.mxu0 0
        %4897 = vmatmul.mubr.bf16.gmra.mrb[0].mxu0 %v4838
        %v4898 = vpop.f32.mrb[0].mxu0
        %v4899 = vadd.f32 %v4847, %v4898
        %v4900 = vpop.f32.mrb[0].mxu0
        %v4901 = vpop.f32.mrb[0].mxu0
        %v4902 = vadd.f32 %v4847, %v4901
        %v4903 = vpop.f32.mrb[0].mxu0
        %4904 = vmatprep.mubr.bf16.mxu0 0
        %4905 = vmatmul.mubr.bf16.gmra.mrb[0].mxu0 %v4839
        %v4906 = vpop.f32.mrb[0].mxu0
        %v4907 = vadd.f32 %v4847, %v4906
        %v4908 = vpop.f32.mrb[0].mxu0
        %v4909 = vpop.f32.mrb[0].mxu0
        %v4910 = vadd.f32 %v4847, %v4909
        %v4911 = vpop.f32.mrb[0].mxu0
        %4912 = vmatprep.mubr.bf16.mxu0 0
        %4913 = vmatmul.mubr.bf16.gmra.mrb[0].mxu0 %v4840
        %v4914 = vpop.f32.mrb[0].mxu0
        %v4915 = vadd.f32 %v4847, %v4914
        %v4916 = vpop.f32.mrb[0].mxu0
        %v4917 = vpop.f32.mrb[0].mxu0
        %v4918 = vadd.f32 %v4847, %v4917
        %v4919 = vpop.f32.mrb[0].mxu0
        %4920 = vmatprep.mubr.bf16.mxu0 0
        %4921 = vmatmul.mubr.bf16.gmra.mrb[0].mxu0 %v4841
        %v4922 = vpop.f32.mrb[0].mxu0
        %v4923 = vadd.f32 %v4847, %v4922
        %v4924 = vpop.f32.mrb[0].mxu0
        %v4925 = vpop.f32.mrb[0].mxu0
        %v4926 = vadd.f32 %v4847, %v4925
        %v4927 = vpop.f32.mrb[0].mxu0
        %4928 = vmatprep.mubr.bf16.mxu0 0
        %4929 = vmatmul.mubr.bf16.gmra.mrb[0].mxu0 %v4842
        %v4930 = vpop.f32.mrb[0].mxu0
        %v4931 = vadd.f32 %v4847, %v4930
        %v4932 = vpop.f32.mrb[0].mxu0
        %v4933 = vpop.f32.mrb[0].mxu0
        %v4934 = vadd.f32 %v4847, %v4933
        %v4935 = vpop.f32.mrb[0].mxu0
        %4936 = vmatprep.mubr.bf16.mxu0 0
        %4937 = vmatmul.mubr.bf16.gmra.mrb[0].mxu0 %v4843
        %v4938 = vpop.f32.mrb[0].mxu0
        %v4939 = vadd.f32 %v4847, %v4938
        %v4940 = vpop.f32.mrb[0].mxu0
        %v4941 = vpop.f32.mrb[0].mxu0
        %v4942 = vadd.f32 %v4847, %v4941
        %v4943 = vpop.f32.mrb[0].mxu0
        %4944 = vdwg.mxu0
        %4945 = vmax.xlane.f32.xlu0 %v4883
        %v4946 = vpop.xlane.xlu0 %4945
        %4947 = vmax.xlane.f32.xlu0 %v4886
        %v4948 = vpop.xlane.xlu0 %4947
        %4949 = vmax.xlane.f32.xlu0 %v4891
        %v4950 = vpop.xlane.xlu0 %4949
        %4951 = vmax.xlane.f32.xlu0 %v4894
        %v4952 = vpop.xlane.xlu0 %4951
        %4953 = vmax.xlane.f32.xlu0 %v4899
        %v4954 = vpop.xlane.xlu0 %4953
        %4955 = vmax.xlane.f32.xlu0 %v4902
        %v4956 = vpop.xlane.xlu0 %4955
        %4957 = vmax.xlane.f32.xlu0 %v4907
        %v4958 = vpop.xlane.xlu0 %4957
        %4959 = vmax.xlane.f32.xlu0 %v4910
        %v4960 = vpop.xlane.xlu0 %4959
        %4961 = vmax.xlane.f32.xlu0 %v4915
        %v4962 = vpop.xlane.xlu0 %4961
        %4963 = vmax.xlane.f32.xlu0 %v4918
        %v4964 = vpop.xlane.xlu0 %4963
        %4965 = vmax.xlane.f32.xlu0 %v4923
        %v4966 = vpop.xlane.xlu0 %4965
        %4967 = vmax.xlane.f32.xlu0 %v4926
        %v4968 = vpop.xlane.xlu0 %4967
        %4969 = vmax.xlane.f32.xlu0 %v4931
        %v4970 = vpop.xlane.xlu0 %4969
        %4971 = vmax.xlane.f32.xlu0 %v4934
        %v4972 = vpop.xlane.xlu0 %4971
        %4973 = vmax.xlane.f32.xlu0 %v4939
        %v4974 = vpop.xlane.xlu0 %4973
        %4975 = vmax.xlane.f32.xlu0 %v4942
        %v4976 = vpop.xlane.xlu0 %4975
        %v4977 = vsub.f32 %v4883, %v4946
        %v4978 = vsub.f32 %v4886, %v4948
        %v4979 = vsub.f32 %v4891, %v4950
        %v4980 = vsub.f32 %v4894, %v4952
        %v4981 = vsub.f32 %v4899, %v4954
        %v4982 = vsub.f32 %v4902, %v4956
        %v4983 = vsub.f32 %v4907, %v4958
        %v4984 = vsub.f32 %v4910, %v4960
        %v4985 = vsub.f32 %v4915, %v4962
        %v4986 = vsub.f32 %v4918, %v4964
        %v4987 = vsub.f32 %v4923, %v4966
        %v4988 = vsub.f32 %v4926, %v4968
        %v4989 = vsub.f32 %v4931, %v4970
        %v4990 = vsub.f32 %v4934, %v4972
        %v4991 = vsub.f32 %v4939, %v4974
        %v4992 = vsub.f32 %v4942, %v4976
        %v4993 = vmul.f32 %v4977, 1.442695
        %v4994 = vpow.pop %v4993
        %v4995 = vmul.f32 %v4978, 1.442695
        %v4996 = vpow.pop %v4995
        %v4997 = vmul.f32 %v4979, 1.442695
        %v4998 = vpow.pop %v4997
        %v4999 = vmul.f32 %v4980, 1.442695
        %v5000 = vpow.pop %v4999
        %v5001 = vmul.f32 %v4981, 1.442695
        %v5002 = vpow.pop %v5001
        %v5003 = vmul.f32 %v4982, 1.442695
        %v5004 = vpow.pop %v5003
        %v5005 = vmul.f32 %v4983, 1.442695
        %v5006 = vpow.pop %v5005
        %v5007 = vmul.f32 %v4984, 1.442695
        %v5008 = vpow.pop %v5007
        %v5009 = vmul.f32 %v4985, 1.442695
        %v5010 = vpow.pop %v5009
        %v5011 = vmul.f32 %v4986, 1.442695
        %v5012 = vpow.pop %v5011
        %v5013 = vmul.f32 %v4987, 1.442695
        %v5014 = vpow.pop %v5013
        %v5015 = vmul.f32 %v4988, 1.442695
        %v5016 = vpow.pop %v5015
        %v5017 = vmul.f32 %v4989, 1.442695
        %v5018 = vpow.pop %v5017
        %v5019 = vmul.f32 %v4990, 1.442695
        %v5020 = vpow.pop %v5019
        %v5021 = vmul.f32 %v4991, 1.442695
        %v5022 = vpow.pop %v5021
        %v5023 = vmul.f32 %v4992, 1.442695
        %v5024 = vpow.pop %v5023
        %5025 = vadd.xlane.f32.xlu0 %v4994
        %v5026 = vpop.xlane.xlu0 %5025
        %5027 = vadd.xlane.f32.xlu0 %v4996
        %v5028 = vpop.xlane.xlu0 %5027
        %5029 = vadd.xlane.f32.xlu0 %v4998
        %v5030 = vpop.xlane.xlu0 %5029
        %5031 = vadd.xlane.f32.xlu0 %v5000
        %v5032 = vpop.xlane.xlu0 %5031
        %5033 = vadd.xlane.f32.xlu0 %v5002
        %v5034 = vpop.xlane.xlu0 %5033
        %5035 = vadd.xlane.f32.xlu0 %v5004
        %v5036 = vpop.xlane.xlu0 %5035
        %5037 = vadd.xlane.f32.xlu0 %v5006
        %v5038 = vpop.xlane.xlu0 %5037
        %5039 = vadd.xlane.f32.xlu0 %v5008
        %v5040 = vpop.xlane.xlu0 %5039
        %5041 = vadd.xlane.f32.xlu0 %v5010
        %v5042 = vpop.xlane.xlu0 %5041
        %5043 = vadd.xlane.f32.xlu0 %v5012
        %v5044 = vpop.xlane.xlu0 %5043
        %5045 = vadd.xlane.f32.xlu0 %v5014
        %v5046 = vpop.xlane.xlu0 %5045
        %5047 = vadd.xlane.f32.xlu0 %v5016
        %v5048 = vpop.xlane.xlu0 %5047
        %5049 = vadd.xlane.f32.xlu0 %v5018
        %v5050 = vpop.xlane.xlu0 %5049
        %5051 = vadd.xlane.f32.xlu0 %v5020
        %v5052 = vpop.xlane.xlu0 %5051
        %5053 = vadd.xlane.f32.xlu0 %v5022
        %v5054 = vpop.xlane.xlu0 %5053
        %5055 = vadd.xlane.f32.xlu0 %v5024
        %v5056 = vpop.xlane.xlu0 %5055
        %v5057 = vrcp.pop %v5026
        %v5058 = vrcp.pop %v5028
        %v5059 = vrcp.pop %v5030
        %v5060 = vrcp.pop %v5032
        %v5061 = vrcp.pop %v5034
        %v5062 = vrcp.pop %v5036
        %v5063 = vrcp.pop %v5038
        %v5064 = vrcp.pop %v5040
        %v5065 = vrcp.pop %v5042
        %v5066 = vrcp.pop %v5044
        %v5067 = vrcp.pop %v5046
        %v5068 = vrcp.pop %v5048
        %v5069 = vrcp.pop %v5050
        %v5070 = vrcp.pop %v5052
        %v5071 = vrcp.pop %v5054
        %v5072 = vrcp.pop %v5056
        %v5073 = vmul.f32 %v4994, %v5057
        %v5074 = vmul.f32 %v4996, %v5058
        %v5075 = vmul.f32 %v4998, %v5059
        %v5076 = vmul.f32 %v5000, %v5060
        %v5077 = vmul.f32 %v5002, %v5061
        %v5078 = vmul.f32 %v5004, %v5062
        %v5079 = vmul.f32 %v5006, %v5063
        %v5080 = vmul.f32 %v5008, %v5064
        %v5081 = vmul.f32 %v5010, %v5065
        %v5082 = vmul.f32 %v5012, %v5066
        %v5083 = vmul.f32 %v5014, %v5067
        %v5084 = vmul.f32 %v5016, %v5068
        %v5085 = vmul.f32 %v5018, %v5069
        %v5086 = vmul.f32 %v5020, %v5070
        %v5087 = vmul.f32 %v5022, %v5071
        %v5088 = vmul.f32 %v5024, %v5072
        %v5089 = vpack.c.bf16 %v5074, %v5073
        %v5090 = vpack.c.bf16 %v5076, %v5075
        %v5091 = vpack.c.bf16 %v5078, %v5077
        %v5092 = vpack.c.bf16 %v5080, %v5079
        %v5093 = vpack.c.bf16 %v5082, %v5081
        %v5094 = vpack.c.bf16 %v5084, %v5083
        %v5095 = vpack.c.bf16 %v5086, %v5085
        %v5096 = vpack.c.bf16 %v5088, %v5087
        %s5097 = scalar_lea.vmem [#allocation8], 448
        %v5098 = vld [vmem:[%s5097] sm:$0xf]
        %v5099 = vld [vmem:[%s5097 + $0x4] sm:$0xf]
        %v5100 = vld [vmem:[%s5097 + $0x8] sm:$0xf]
        %v5101 = vld [vmem:[%s5097 + $0xc] sm:$0xf]
        %v5102 = vld [vmem:[%s5097 + $0x10] sm:$0xf]
        %v5103 = vld [vmem:[%s5097 + $0x14] sm:$0xf]
        %v5104 = vld [vmem:[%s5097 + $0x18] sm:$0xf]
        %v5105 = vld [vmem:[%s5097 + $0x1c] sm:$0xf]
        %v5106 = vld [vmem:[%s5097 + $0x20] sm:$0xf]
        %v5107 = vld [vmem:[%s5097 + $0x24] sm:$0xf]
        %v5108 = vld [vmem:[%s5097 + $0x28] sm:$0xf]
        %v5109 = vld [vmem:[%s5097 + $0x2c] sm:$0xf]
        %v5110 = vld [vmem:[%s5097 + $0x30] sm:$0xf]
        %v5111 = vld [vmem:[%s5097 + $0x34] sm:$0xf]
        %v5112 = vld [vmem:[%s5097 + $0x38] sm:$0xf]
        %v5113 = vld [vmem:[%s5097 + $0x3c] sm:$0xf]
        %v5130 = vunpack.c.l.b16 %v5098
        %v5131 = vunpack.c.l.b16 %v5099
        %v5132 = vunpack.c.l.b16 %v5100
        %v5133 = vunpack.c.l.b16 %v5101
        %v5134 = vunpack.c.l.b16 %v5102
        %v5135 = vunpack.c.l.b16 %v5103
        %v5136 = vunpack.c.l.b16 %v5104
        %v5137 = vunpack.c.l.b16 %v5105
        %v5138 = vunpack.c.l.b16 %v5106
        %v5139 = vunpack.c.l.b16 %v5107
        %v5140 = vunpack.c.l.b16 %v5108
        %v5141 = vunpack.c.l.b16 %v5109
        %v5142 = vunpack.c.l.b16 %v5110
        %v5143 = vunpack.c.l.b16 %v5111
        %v5144 = vunpack.c.l.b16 %v5112
        %v5145 = vunpack.c.l.b16 %v5113
        %v5146 = vpack.c.b16 %v5131, %v5130
        %v5147 = vpack.c.b16 %v5133, %v5132
        %v5148 = vpack.c.b16 %v5135, %v5134
        %v5149 = vpack.c.b16 %v5137, %v5136
        %v5150 = vpack.c.b16 %v5139, %v5138
        %v5151 = vpack.c.b16 %v5141, %v5140
        %v5152 = vpack.c.b16 %v5143, %v5142
        %v5153 = vpack.c.b16 %v5145, %v5144
        %5162 = vmatprep.subr.bf16.mxu0 0
        %5163 = vmatpush1.bf16.msra.mxu0 %v5146
        %5164 = vmatprep.subr.bf16.mxu0 0
        %5165 = vmatpush1.bf16.msra.mxu0 %v5147
        %5166 = vmatprep.subr.bf16.mxu0 0
        %5167 = vmatpush1.bf16.msra.mxu0 %v5148
        %5168 = vmatprep.subr.bf16.mxu0 0
        %5169 = vmatpush1.bf16.msra.mxu0 %v5149
        %5170 = vmatprep.subr.bf16.mxu0 0
        %5171 = vmatpush1.bf16.msra.mxu0 %v5150
        %5172 = vmatprep.subr.bf16.mxu0 0
        %5173 = vmatpush1.bf16.msra.mxu0 %v5151
        %5174 = vmatprep.subr.bf16.mxu0 0
        %5175 = vmatpush1.bf16.msra.mxu0 %v5152
        %5176 = vmatprep.subr.bf16.mxu0 0
        %5177 = vmatpush1.bf16.msra.mxu0 %v5153
        %5178 = vmatprep.subr.bf16.mxu0 0
        %5179 = vmatpush1.bf16.msra.mxu0 0
        %5180 = vmatprep.subr.bf16.mxu0 0
        %5181 = vmatpush1.bf16.msra.mxu0 0
        %5182 = vmatprep.subr.bf16.mxu0 0
        %5183 = vmatpush1.bf16.msra.mxu0 0
        %5184 = vmatprep.subr.bf16.mxu0 0
        %5185 = vmatpush1.bf16.msra.mxu0 0
        %5186 = vmatprep.subr.bf16.mxu0 0
        %5187 = vmatpush1.bf16.msra.mxu0 0
        %5188 = vmatprep.subr.bf16.mxu0 0
        %5189 = vmatpush1.bf16.msra.mxu0 0
        %5190 = vmatprep.subr.bf16.mxu0 0
        %5191 = vmatpush1.bf16.msra.mxu0 0
        %5192 = vmatprep.subr.bf16.mxu0 0
        %5193 = vmatpush1.bf16.msra.mxu0 0
        %5194 = vmatprep.mubr.bf16.mxu0 0
        %5195 = vmatmul.mubr.bf16.gmra.mrb[0].mxu0 %v5089
        %v5196 = vpop.f32.mrb[0].mxu0
        %v5197 = vadd.f32 0.0, %v5196
        %v5198 = vpop.f32.mrb[0].mxu0
        %v5199 = vpop.f32.mrb[0].mxu0
        %v5200 = vadd.f32 0.0, %v5199
        %v5201 = vpop.f32.mrb[0].mxu0
        %5202 = vmatprep.mubr.bf16.mxu0 0
        %5203 = vmatmul.mubr.bf16.gmra.mrb[0].mxu0 %v5090
        %v5204 = vpop.f32.mrb[0].mxu0
        %v5205 = vadd.f32 0.0, %v5204
        %v5206 = vpop.f32.mrb[0].mxu0
        %v5207 = vpop.f32.mrb[0].mxu0
        %v5208 = vadd.f32 0.0, %v5207
        %v5209 = vpop.f32.mrb[0].mxu0
        %5210 = vmatprep.mubr.bf16.mxu0 0
        %5211 = vmatmul.mubr.bf16.gmra.mrb[0].mxu0 %v5091
        %v5212 = vpop.f32.mrb[0].mxu0
        %v5213 = vadd.f32 0.0, %v5212
        %v5214 = vpop.f32.mrb[0].mxu0
        %v5215 = vpop.f32.mrb[0].mxu0
        %v5216 = vadd.f32 0.0, %v5215
        %v5217 = vpop.f32.mrb[0].mxu0
        %5218 = vmatprep.mubr.bf16.mxu0 0
        %5219 = vmatmul.mubr.bf16.gmra.mrb[0].mxu0 %v5092
        %v5220 = vpop.f32.mrb[0].mxu0
        %v5221 = vadd.f32 0.0, %v5220
        %v5222 = vpop.f32.mrb[0].mxu0
        %v5223 = vpop.f32.mrb[0].mxu0
        %v5224 = vadd.f32 0.0, %v5223
        %v5225 = vpop.f32.mrb[0].mxu0
        %5226 = vmatprep.mubr.bf16.mxu0 0
        %5227 = vmatmul.mubr.bf16.gmra.mrb[0].mxu0 %v5093
        %v5228 = vpop.f32.mrb[0].mxu0
        %v5229 = vadd.f32 0.0, %v5228
        %v5230 = vpop.f32.mrb[0].mxu0
        %v5231 = vpop.f32.mrb[0].mxu0
        %v5232 = vadd.f32 0.0, %v5231
        %v5233 = vpop.f32.mrb[0].mxu0
        %5234 = vmatprep.mubr.bf16.mxu0 0
        %5235 = vmatmul.mubr.bf16.gmra.mrb[0].mxu0 %v5094
        %v5236 = vpop.f32.mrb[0].mxu0
        %v5237 = vadd.f32 0.0, %v5236
        %v5238 = vpop.f32.mrb[0].mxu0
        %v5239 = vpop.f32.mrb[0].mxu0
        %v5240 = vadd.f32 0.0, %v5239
        %v5241 = vpop.f32.mrb[0].mxu0
        %5242 = vmatprep.mubr.bf16.mxu0 0
        %5243 = vmatmul.mubr.bf16.gmra.mrb[0].mxu0 %v5095
        %v5244 = vpop.f32.mrb[0].mxu0
        %v5245 = vadd.f32 0.0, %v5244
        %v5246 = vpop.f32.mrb[0].mxu0
        %v5247 = vpop.f32.mrb[0].mxu0
        %v5248 = vadd.f32 0.0, %v5247
        %v5249 = vpop.f32.mrb[0].mxu0
        %5250 = vmatprep.mubr.bf16.mxu0 0
        %5251 = vmatmul.mubr.bf16.gmra.mrb[0].mxu0 %v5096
        %v5252 = vpop.f32.mrb[0].mxu0
        %v5253 = vadd.f32 0.0, %v5252
        %v5254 = vpop.f32.mrb[0].mxu0
        %v5255 = vpop.f32.mrb[0].mxu0
        %v5256 = vadd.f32 0.0, %v5255
        %v5257 = vpop.f32.mrb[0].mxu0
        %5258 = vdwg.mxu0
        %v5259 = vadd.f32 %v4658, %v5197
        %v5260 = vadd.f32 %v4659, %v5200
        %v5261 = vadd.f32 %v4660, %v5205
        %v5262 = vadd.f32 %v4661, %v5208
        %v5263 = vadd.f32 %v4662, %v5213
        %v5264 = vadd.f32 %v4663, %v5216
        %v5265 = vadd.f32 %v4664, %v5221
        %v5266 = vadd.f32 %v4665, %v5224
        %v5267 = vadd.f32 %v4666, %v5229
        %v5268 = vadd.f32 %v4667, %v5232
        %v5269 = vadd.f32 %v4668, %v5237
        %v5270 = vadd.f32 %v4669, %v5240
        %v5271 = vadd.f32 %v4670, %v5245
        %v5272 = vadd.f32 %v4671, %v5248
        %v5273 = vadd.f32 %v4672, %v5253
        %v5274 = vadd.f32 %v4673, %v5256
        %v5275 = vld [vmem:[%s5] sm:$0x1]
        %v5277 = vlaneseq
        %v5278 = vshrl.u32 %v5277, 7
        %v5279 = vsub.s32 0, %v5278
        %v5280 = vrot.slane %v5275, %v5279
        %v5282 = vadd.f32 %v5259, %v5280
        %v5283 = vadd.f32 %v5260, %v5280
        %v5284 = vadd.f32 %v5261, %v5280
        %v5285 = vadd.f32 %v5262, %v5280
        %v5286 = vadd.f32 %v5263, %v5280
        %v5287 = vadd.f32 %v5264, %v5280
        %v5288 = vadd.f32 %v5265, %v5280
        %v5289 = vadd.f32 %v5266, %v5280
        %v5290 = vadd.f32 %v5267, %v5280
        %v5291 = vadd.f32 %v5268, %v5280
        %v5292 = vadd.f32 %v5269, %v5280
        %v5293 = vadd.f32 %v5270, %v5280
        %v5294 = vadd.f32 %v5271, %v5280
        %v5295 = vadd.f32 %v5272, %v5280
        %v5296 = vadd.f32 %v5273, %v5280
        %v5297 = vadd.f32 %v5274, %v5280
        %5298 = vst [vmem:[%s367] sm:$0xff] %v5282
        %5299 = vst [vmem:[%s367 + $0x8] sm:$0xff] %v5283
        %5300 = vst [vmem:[%s367 + $0x10] sm:$0xff] %v5284
        %5301 = vst [vmem:[%s367 + $0x18] sm:$0xff] %v5285
        %5302 = vst [vmem:[%s367 + $0x20] sm:$0xff] %v5286
        %5303 = vst [vmem:[%s367 + $0x28] sm:$0xff] %v5287
        %5304 = vst [vmem:[%s367 + $0x30] sm:$0xff] %v5288
        %5305 = vst [vmem:[%s367 + $0x38] sm:$0xff] %v5289
        %5306 = vst [vmem:[%s367 + $0x40] sm:$0xff] %v5290
        %5307 = vst [vmem:[%s367 + $0x48] sm:$0xff] %v5291
        %5308 = vst [vmem:[%s367 + $0x50] sm:$0xff] %v5292
        %5309 = vst [vmem:[%s367 + $0x58] sm:$0xff] %v5293
        %5310 = vst [vmem:[%s367 + $0x60] sm:$0xff] %v5294
        %5311 = vst [vmem:[%s367 + $0x68] sm:$0xff] %v5295
        %5312 = vst [vmem:[%s367 + $0x70] sm:$0xff] %v5296
        %5313 = vst [vmem:[%s367 + $0x78] sm:$0xff] %v5297
        %s5314 = sand.u32 %s195, 1
        %s5315 = scalar_lea.sflag [#allocation4], %s5314
        %s5316 = sand.u32 %s195, 1
        %s5317 = smul.addr %s5316, 128
        %s5318 = scalar_lea.vmem [#allocation11], %s5317
        // Predicated region
        $region65: #{tpu_custom_call.1} parent=43 // pred_check
          %p5319 = pneg %p205
        $region66: #{tpu_custom_call.1} parent=43 // pred_check_branch
          %5321 = sbr.rel (%p5319) target = $region68
        $region67: #{tpu_custom_call.1} parent=43 // pred_region
          %s5322 = smul.u32 16, %s30
          %s5324 = ssub.s32 2048, 2048
          %5325 = vsyncadd %s5315, %s5324
          %s5326 = smul.addr %s29, 16
          %s5327 = sadd.s32 %s5322, %s5326
          %s5328 = smul.addr %s5327, 128
          %s5329 = scalar_lea.hbm %s6, %s5328
          %s5330 = sshll.u32 %s5318, 4
          %s5331 = int_to_ptr.vmem [resolvable:$true] %s5330
          %5336 = dma.vmem_to_hbm [thread:$0]  %s5331, 2048, %s5329, %s5315, 128, 128, 8
        $region68: #{tpu_custom_call.1} parent=43 // pred_fallthru
          _
      $region44: #{tpu_custom_call.1} parent=5 // pred_fallthru
        _
      %p5337 = scmp.le.s32.totalorder 2, %s20
      // Predicated region
      $region69: #{tpu_custom_call.1} parent=5 // pred_check
        %p5338 = pneg %p5337
      $region70: #{tpu_custom_call.1} parent=5 // pred_check_branch
        %5340 = sbr.rel (%p5338) target = $region72
      $region71: #{tpu_custom_call.1} parent=5 // pred_region
        %s5341 = ssub.s32 %s20, 2
        // Predicated region
        $region73: #{tpu_custom_call.1} parent=71 // pred_check
          %p5342 = pneg %p211
        $region74: #{tpu_custom_call.1} parent=71 // pred_check_branch
          %5344 = sbr.rel (%p5342) target = $region76
        $region75: #{tpu_custom_call.1} parent=71 // pred_region
          %s5345 = sand.u32 %s196, 1
          %s5346 = scalar_lea.sflag [#allocation4], %s5345
          %s5347 = sand.u32 %s196, 1
          %s5348 = smul.addr %s5347, 128
          %s5349 = scalar_lea.vmem [#allocation11], %s5348
          %5350 = dma.done %s5346, 2048
        $region76: #{tpu_custom_call.1} parent=71 // pred_fallthru
          _
      $region72: #{tpu_custom_call.1} parent=5 // pred_fallthru
        _
    $region6: #{tpu_custom_call.1} parent=1 // loop_footer
      %s24 = sadd.s32 1, %s20
    $region7: #{tpu_custom_call.1} parent=1 // loop_footer_branch
      %19 = sbr.rel target = $region3
    $region8: #{tpu_custom_call.1} parent=1 // loop_exit
      _
    %5351 = vsyncpa [#allocation3], 1
    %s5352 = scalar_lea.sflag [#allocation3], 1
    %5353 = vsyncpa %s5352, 1
    %5354 = vsyncpa [#allocation6], 1
    %5355 = vsyncpa [#allocation9], 1
    %5356 = vsyncpa [#allocation4], 1
    %s5357 = scalar_lea.sflag [#allocation4], 1
    %5358 = vsyncpa %s5357, 1

// kernel: tpu_custom_call.1
$region0: #{tpu_custom_call.1}
  #allocation0 [shape = 'u32[]', space=smem, size = 0x4, offset = 0x4, fixed_abs, tag = 'smem constant byte address 0x4 - core index']
  #allocation1 [shape = 'u32[144,128]{1,0:T(1,128)}', space=vmem, size = 0x12000, scoped, tag = 'internal scratch']
  %s0 = inlined_call_operand.hbm [shape: bf16[2,128,128], index: 0, kind: input, shape index: {}]
  %s1 = inlined_call_operand.hbm [shape: bf16[2,128,128], index: 1, kind: input, shape index: {}]
  %s2 = inlined_call_operand.hbm [shape: bf16[8,128,128], index: 2, kind: input, shape index: {}]
  %s3 = inlined_call_operand.hbm [shape: bf16[16,128,128], index: 3, kind: input, shape index: {}]
  %s4 = inlined_call_operand.hbm [shape: f32[2,8,128], index: 4, kind: input, shape index: {}]
  %s5 = inlined_call_operand.vmem [shape: f32[1,128], index: 5, kind: input, shape index: {}]
  %s6 = inlined_call_operand.hbm [shape: f32[2,128,128], index: 6, kind: output, shape index: {}]
  %s7 = sld [smem:[#allocation0]]
  $region77: #{tpu_custom_call.1} parent=0
    _
  %s9 = ssub.s32 1, %s7
  %s10 = scalar_select 0, %s9, %s7
  $region1: #{tpu_custom_call.1} parent=0
    #allocation2 [shape = 'u8[65536]{0}', space=vmem, size = 0x10000, scoped, tag = 'input window, operand 0']
    #allocation3 [shape = 's32[2]{0}', space=sflag, size = 0x8, scoped, tag = 'scoped memory for tpu_custom_call.1']
    #allocation4 [shape = 's32[2]{0}', space=sflag, size = 0x8, scoped, tag = 'scoped memory for tpu_custom_call.1']
    #allocation5 [shape = 'u8[65536]{0}', space=vmem, size = 0x10000, scoped, tag = 'input window, operand 1']
    #allocation6 [shape = 's32[2]{0}', space=sflag, size = 0x8, scoped, tag = 'scoped memory for tpu_custom_call.1']
    #allocation7 [shape = 'u8[262144]{0}', space=vmem, size = 0x40000, scoped, tag = 'input window, operand 2, single buffered']
    #allocation8 [shape = 'u8[524288]{0}', space=vmem, size = 0x80000, scoped, tag = 'input window, operand 3']
    #allocation9 [shape = 's32[2]{0}', space=sflag, size = 0x8, scoped, tag = 'scoped memory for tpu_custom_call.1']
    #allocation10 [shape = 'u8[8192]{0}', space=vmem, size = 0x2000, scoped, tag = 'input window, operand 4']
    #allocation11 [shape = 'u8[131072]{0}', space=vmem, size = 0x20000, scoped, tag = 'output window, operand 0']
    %11 = vsyncpa [#allocation3], 0
    %s12 = scalar_lea.sflag [#allocation3], 1
    %13 = vsyncpa %s12, 0
    %14 = vsyncpa [#allocation6], 0
    %s15 = scalar_lea.sflag [#allocation6], 1
    %16 = vsyncpa %s15, 0
    %17 = vsyncpa [#allocation9], 0
    %s18 = scalar_lea.sflag [#allocation9], 1
    %19 = vsyncpa %s18, 0
    %20 = vsyncpa [#allocation4], 0
    %s21 = scalar_lea.sflag [#allocation4], 1
    %22 = vsyncpa %s21, 0
    loop: start=0, step=1, limit=4
    $region2: #{tpu_custom_call.1} parent=1 // loop_pre_header
      _
    $region3: #{tpu_custom_call.1} parent=1 // loop_header
      %s24 = sphi 0, %s28
      %p25 = scmp.ge.s32.totalorder %s24, 4
      %s31 = sphi 0, %s43
      %s32 = sphi 0, %s39
      %s33 = sphi 0, %s31
      %s34 = sphi 0, %s32
      %s35 = sphi 0, %s33
      %s36 = sphi 0, %s34
      %s48 = sphi 0, %s50
      %s51 = sphi 0, %s48
      %s52 = sphi 0, %s51
      %s68 = sphi 0, %s52
      %s74 = sphi 0, %s76
      %s77 = sphi 0, %s74
      %s78 = sphi 0, %s77
      %s94 = sphi 0, %s78
      %s98 = sphi 0, %s98
      %s100 = sphi 0, %s98
      %s101 = sphi 0, %s100
      %s115 = sphi 0, %s101
      %s121 = sphi 0, %s123
      %s124 = sphi 0, %s121
      %s125 = sphi 0, %s124
      %s141 = sphi 0, %s125
      %s147 = sphi 0, %s149
      %s150 = sphi 0, %s147
      %s151 = sphi 0, %s150
      %s167 = sphi 0, %s151
      %s171 = sphi 0, %s171
      %s173 = sphi 0, %s171
      %s174 = sphi 0, %s173
      %s188 = sphi 0, %s174
      %s196 = sphi 0, %s198
      %s199 = sphi 0, %s196
      %s200 = sphi 0, %s199
      %s216 = sphi 0, %s200
    $region4: #{tpu_custom_call.1} parent=1 // loop_header_branch
      %27 = sbr.rel (%p25) target = $region8
    $region5: #{tpu_custom_call.1} parent=1 // loop_body
      %s29 = ssub.s32 %s24, 1
      %s30 = ssub.s32 %s24, 2
      %s37 = sadd.s32 1, %s32
      %p38 = scmp.ge.s32.totalorder %s37, 1
      %s39 = scalar_select %p38, 0, %s37
      %s40 = sadd.s32 1, %s31
      %s41 = scalar_select %p38, %s40, %s31
      %p42 = scmp.ge.s32.totalorder %s41, 2
      %s43 = scalar_select %p42, 0, %s41
      %s44 = ssub.s32 %s31, %s43
      %s45 = ssub.s32 %s32, %s39
      %s46 = sor.u32 %s44, %s45
      %p47 = scmp.eq.s32.totalorder %s46, 0
      %s49 = sadd.s32 %s48, 1
      %s50 = scalar_select %p47, %s48, %s49
      %p53 = pneg %p47
      %p54 = scmp.eq.s32.totalorder %s24, 1
      %p55 = por %p53, %p54
      %p56 = scmp.ne.s32.totalorder %s48, %s51
      %p57 = scmp.eq.s32.totalorder %s24, 0
      %p58 = por %p56, %p57
      %p59 = scmp.ne.s32.totalorder %s48, %s51
      %p60 = scmp.eq.s32.totalorder %s29, 1
      %p61 = por %p59, %p60
      %p62 = scmp.ne.s32.totalorder %s51, %s52
      %p63 = scmp.eq.s32.totalorder %s29, 0
      %p64 = por %p62, %p63
      %p65 = scmp.ne.s32.totalorder %s51, %s52
      %p66 = scmp.eq.s32.totalorder %s30, 1
      %p67 = por %p65, %p66
      %p69 = scmp.ne.s32.totalorder %s52, %s68
      %p70 = scmp.eq.s32.totalorder %s30, 0
      %p71 = por %p69, %p70
      %s72 = ssub.s32 %s31, %s43
      %p73 = scmp.eq.s32.totalorder %s72, 0
      %s75 = sadd.s32 %s74, 1
      %s76 = scalar_select %p73, %s74, %s75
      %p79 = pneg %p73
      %p80 = scmp.eq.s32.totalorder %s24, 1
      %p81 = por %p79, %p80
      %p82 = scmp.ne.s32.totalorder %s74, %s77
      %p83 = scmp.eq.s32.totalorder %s24, 0
      %p84 = por %p82, %p83
      %p85 = scmp.ne.s32.totalorder %s74, %s77
      %p86 = scmp.eq.s32.totalorder %s29, 1
      %p87 = por %p85, %p86
      %p88 = scmp.ne.s32.totalorder %s77, %s78
      %p89 = scmp.eq.s32.totalorder %s29, 0
      %p90 = por %p88, %p89
      %p91 = scmp.ne.s32.totalorder %s77, %s78
      %p92 = scmp.eq.s32.totalorder %s30, 1
      %p93 = por %p91, %p92
      %p95 = scmp.ne.s32.totalorder %s78, %s94
      %p96 = scmp.eq.s32.totalorder %s30, 0
      %p97 = por %p95, %p96
      %s99 = sadd.s32 %s98, 1
      %p102 = scmp.eq.s32.totalorder %s24, 1
      %p103 = scmp.ne.s32.totalorder %s98, %s100
      %p104 = scmp.eq.s32.totalorder %s24, 0
      %p105 = por %p103, %p104
      %p106 = scmp.ne.s32.totalorder %s98, %s100
      %p107 = scmp.eq.s32.totalorder %s29, 1
      %p108 = por %p106, %p107
      %p109 = scmp.ne.s32.totalorder %s100, %s101
      %p110 = scmp.eq.s32.totalorder %s29, 0
      %p111 = por %p109, %p110
      %p112 = scmp.ne.s32.totalorder %s100, %s101
      %p113 = scmp.eq.s32.totalorder %s30, 1
      %p114 = por %p112, %p113
      %p116 = scmp.ne.s32.totalorder %s101, %s115
      %p117 = scmp.eq.s32.totalorder %s30, 0
      %p118 = por %p116, %p117
      %s119 = ssub.s32 %s31, %s43
      %p120 = scmp.eq.s32.totalorder %s119, 0
      %s122 = sadd.s32 %s121, 1
      %s123 = scalar_select %p120, %s121, %s122
      %p126 = pneg %p120
      %p127 = scmp.eq.s32.totalorder %s24, 1
      %p128 = por %p126, %p127
      %p129 = scmp.ne.s32.totalorder %s121, %s124
      %p130 = scmp.eq.s32.totalorder %s24, 0
      %p131 = por %p129, %p130
      %p132 = scmp.ne.s32.totalorder %s121, %s124
      %p133 = scmp.eq.s32.totalorder %s29, 1
      %p134 = por %p132, %p133
      %p135 = scmp.ne.s32.totalorder %s124, %s125
      %p136 = scmp.eq.s32.totalorder %s29, 0
      %p137 = por %p135, %p136
      %p138 = scmp.ne.s32.totalorder %s124, %s125
      %p139 = scmp.eq.s32.totalorder %s30, 1
      %p140 = por %p138, %p139
      %p142 = scmp.ne.s32.totalorder %s125, %s141
      %p143 = scmp.eq.s32.totalorder %s30, 0
      %p144 = por %p142, %p143
      %s145 = ssub.s32 %s31, %s43
      %p146 = scmp.eq.s32.totalorder %s145, 0
      %s148 = sadd.s32 %s147, 1
      %s149 = scalar_select %p146, %s147, %s148
      %p152 = pneg %p146
      %p153 = scmp.eq.s32.totalorder %s24, 1
      %p154 = por %p152, %p153
      %p155 = scmp.ne.s32.totalorder %s147, %s150
      %p156 = scmp.eq.s32.totalorder %s24, 0
      %p157 = por %p155, %p156
      %p158 = scmp.ne.s32.totalorder %s147, %s150
      %p159 = scmp.eq.s32.totalorder %s29, 1
      %p160 = por %p158, %p159
      %p161 = scmp.ne.s32.totalorder %s150, %s151
      %p162 = scmp.eq.s32.totalorder %s29, 0
      %p163 = por %p161, %p162
      %p164 = scmp.ne.s32.totalorder %s150, %s151
      %p165 = scmp.eq.s32.totalorder %s30, 1
      %p166 = por %p164, %p165
      %p168 = scmp.ne.s32.totalorder %s151, %s167
      %p169 = scmp.eq.s32.totalorder %s30, 0
      %p170 = por %p168, %p169
      %s172 = sadd.s32 %s171, 1
      %p175 = scmp.eq.s32.totalorder %s24, 1
      %p176 = scmp.ne.s32.totalorder %s171, %s173
      %p177 = scmp.eq.s32.totalorder %s24, 0
      %p178 = por %p176, %p177
      %p179 = scmp.ne.s32.totalorder %s171, %s173
      %p180 = scmp.eq.s32.totalorder %s29, 1
      %p181 = por %p179, %p180
      %p182 = scmp.ne.s32.totalorder %s173, %s174
      %p183 = scmp.eq.s32.totalorder %s29, 0
      %p184 = por %p182, %p183
      %p185 = scmp.ne.s32.totalorder %s173, %s174
      %p186 = scmp.eq.s32.totalorder %s30, 1
      %p187 = por %p185, %p186
      %p189 = scmp.ne.s32.totalorder %s174, %s188
      %p190 = scmp.eq.s32.totalorder %s30, 0
      %p191 = por %p189, %p190
      %s192 = ssub.s32 %s31, %s43
      %s193 = ssub.s32 %s32, %s39
      %s194 = sor.u32 %s192, %s193
      %p195 = scmp.eq.s32.totalorder %s194, 0
      %s197 = sadd.s32 %s196, 1
      %s198 = scalar_select %p195, %s196, %s197
      %p201 = pneg %p195
      %p202 = scmp.eq.s32.totalorder %s24, 1
      %p203 = por %p201, %p202
      %p204 = scmp.ne.s32.totalorder %s196, %s199
      %p205 = scmp.eq.s32.totalorder %s24, 0
      %p206 = por %p204, %p205
      %p207 = scmp.ne.s32.totalorder %s196, %s199
      %p208 = scmp.eq.s32.totalorder %s29, 1
      %p209 = por %p207, %p208
      %p210 = scmp.ne.s32.totalorder %s199, %s200
      %p211 = scmp.eq.s32.totalorder %s29, 0
      %p212 = por %p210, %p211
      %p213 = scmp.ne.s32.totalorder %s199, %s200
      %p214 = scmp.eq.s32.totalorder %s30, 1
      %p215 = por %p213, %p214
      %p217 = scmp.ne.s32.totalorder %s200, %s216
      %p218 = scmp.eq.s32.totalorder %s30, 0
      %p219 = por %p217, %p218
      %p220 = scmp.le.s32.totalorder 1, %s24
      %p221 = scmp.lt.s32.totalorder %s24, 3
      %p222 = pnand %p220, %p221
      %p223 = pneg %p222
      // Predicated region
      $region9: #{tpu_custom_call.1} parent=5 // pred_check
        _
      $region10: #{tpu_custom_call.1} parent=5 // pred_check_branch
        %225 = sbr.rel (%p222) target = $region12
      $region11: #{tpu_custom_call.1} parent=5 // pred_region
        %s226 = ssub.s32 %s24, 1
        // Predicated region
        $region13: #{tpu_custom_call.1} parent=11 // pred_check
          %p227 = pneg %p111
        $region14: #{tpu_custom_call.1} parent=11 // pred_check_branch
          %229 = sbr.rel (%p227) target = $region16
        $region15: #{tpu_custom_call.1} parent=11 // pred_region
          %s231 = ssub.s32 8192, 8192
          %232 = vsyncadd [#allocation6], %s231
          %s233 = sshll.u32 [#allocation7], 4
          %s234 = int_to_ptr.vmem [resolvable:$true] %s233
          %239 = dma.hbm_to_vmem [thread:$0]  %s2, 8192, %s234, [#allocation6], 64, 64, 4
        $region16: #{tpu_custom_call.1} parent=11 // pred_fallthru
          _
        // Predicated region
        $region17: #{tpu_custom_call.1} parent=11 // pred_check
          %p240 = pneg %p184
        $region18: #{tpu_custom_call.1} parent=11 // pred_check_branch
          %242 = sbr.rel (%p240) target = $region20
        $region19: #{tpu_custom_call.1} parent=11 // pred_region
          _
        $region20: #{tpu_custom_call.1} parent=11 // pred_fallthru
          _
      $region12: #{tpu_custom_call.1} parent=5 // pred_fallthru
        _
      %p243 = scmp.lt.s32.totalorder %s24, 2
      // Predicated region
      $region21: #{tpu_custom_call.1} parent=5 // pred_check
        %p244 = pneg %p243
      $region22: #{tpu_custom_call.1} parent=5 // pred_check_branch
        %246 = sbr.rel (%p244) target = $region24
      $region23: #{tpu_custom_call.1} parent=5 // pred_region
        // Predicated region
        $region25: #{tpu_custom_call.1} parent=23 // pred_check
          %p247 = pneg %p58
        $region26: #{tpu_custom_call.1} parent=23 // pred_check_branch
          %249 = sbr.rel (%p247) target = $region28
        $region27: #{tpu_custom_call.1} parent=23 // pred_region
          %s250 = sand.u32 %s48, 1
          %s251 = scalar_lea.sflag [#allocation3], %s250
          %s252 = sand.u32 %s48, 1
          %s253 = smul.addr %s252, 64
          %s254 = scalar_lea.vmem [#allocation2], %s253
          %s255 = smul.u32 16, %s32
          %s257 = ssub.s32 1024, 1024
          %258 = vsyncadd %s251, %s257
          %s259 = smul.addr %s31, 16
          %s260 = sadd.s32 %s255, %s259
          %s261 = smul.addr %s260, 64
          %s262 = scalar_lea.hbm %s0, %s261
          %s263 = sshll.u32 %s254, 4
          %s264 = int_to_ptr.vmem [resolvable:$true] %s263
          %269 = dma.hbm_to_vmem [thread:$0]  %s262, 1024, %s264, %s251, 64, 64, 4
        $region28: #{tpu_custom_call.1} parent=23 // pred_fallthru
          _
        // Predicated region
        $region29: #{tpu_custom_call.1} parent=23 // pred_check
          %p270 = pneg %p84
        $region30: #{tpu_custom_call.1} parent=23 // pred_check_branch
          %272 = sbr.rel (%p270) target = $region32
        $region31: #{tpu_custom_call.1} parent=23 // pred_region
          %s273 = sand.u32 %s24, 1
          %s274 = scalar_lea.sflag [#allocation6], %s273
          %s275 = sand.u32 %s74, 1
          %s276 = smul.addr %s275, 64
          %s277 = scalar_lea.vmem [#allocation5], %s276
          %s279 = ssub.s32 1024, 1024
          %280 = vsyncadd %s274, %s279
          %s281 = smul.addr %s31, 16
          %s282 = smul.addr %s281, 64
          %s283 = scalar_lea.hbm %s1, %s282
          %s284 = sshll.u32 %s277, 4
          %s285 = int_to_ptr.vmem [resolvable:$true] %s284
          %290 = dma.hbm_to_vmem [thread:$0]  %s283, 1024, %s285, %s274, 64, 64, 4
        $region32: #{tpu_custom_call.1} parent=23 // pred_fallthru
          _
        // Predicated region
        $region33: #{tpu_custom_call.1} parent=23 // pred_check
          %p291 = pneg %p131
        $region34: #{tpu_custom_call.1} parent=23 // pred_check_branch
          %293 = sbr.rel (%p291) target = $region36
        $region35: #{tpu_custom_call.1} parent=23 // pred_region
          %s294 = sand.u32 %s24, 1
          %s295 = scalar_lea.sflag [#allocation9], %s294
          %s296 = sand.u32 %s121, 1
          %s297 = smul.addr %s296, 512
          %s298 = scalar_lea.vmem [#allocation8], %s297
          %s299 = smul.u32 8, %s31
          %s301 = ssub.s32 8192, 8192
          %302 = vsyncadd %s295, %s301
          %s303 = smul.addr %s299, 16
          %s304 = smul.addr %s303, 64
          %s305 = scalar_lea.hbm %s3, %s304
          %s306 = sshll.u32 %s298, 4
          %s307 = int_to_ptr.vmem [resolvable:$true] %s306
          %312 = dma.hbm_to_vmem [thread:$0]  %s305, 8192, %s307, %s295, 64, 64, 4
        $region36: #{tpu_custom_call.1} parent=23 // pred_fallthru
          _
        // Predicated region
        $region37: #{tpu_custom_call.1} parent=23 // pred_check
          %p313 = pneg %p157
        $region38: #{tpu_custom_call.1} parent=23 // pred_check_branch
          %315 = sbr.rel (%p313) target = $region40
        $region39: #{tpu_custom_call.1} parent=23 // pred_region
          %s316 = sand.u32 %s24, 1
          %s317 = scalar_lea.sflag [#allocation9], %s316
          %s318 = sand.u32 %s147, 1
          %s319 = smul.addr %s318, 8
          %s320 = scalar_lea.vmem [#allocation10], %s319
          %s322 = ssub.s32 128, 128
          %323 = vsyncadd %s317, %s322
          %s324 = smul.addr %s31, 128
          %s325 = scalar_lea.hbm %s4, %s324
          %s327 = sshll.u32 %s320, 4
          %s328 = int_to_ptr.vmem [resolvable:$true] %s327
          %330 = dma.hbm_to_vmem [thread:$0]  %s325, 128, %s328, %s317
        $region40: #{tpu_custom_call.1} parent=23 // pred_fallthru
          _
      $region24: #{tpu_custom_call.1} parent=5 // pred_fallthru
        _
      %p331 = scmp.le.s32.totalorder 1, %s24
      %p332 = scmp.lt.s32.totalorder %s24, 3
      %p333 = pnand %p331, %p332
      %p334 = pneg %p333
      // Predicated region
      $region41: #{tpu_custom_call.1} parent=5 // pred_check
        _
      $region42: #{tpu_custom_call.1} parent=5 // pred_check_branch
        %336 = sbr.rel (%p333) target = $region44
      $region43: #{tpu_custom_call.1} parent=5 // pred_region
        %s337 = ssub.s32 %s24, 1
        %s338 = sand.u32 %s51, 1
        %s339 = scalar_lea.sflag [#allocation3], %s338
        %s340 = sand.u32 %s51, 1
        %s341 = smul.addr %s340, 64
        %s342 = scalar_lea.vmem [#allocation2], %s341
        // Predicated region
        $region45: #{tpu_custom_call.1} parent=43 // pred_check
          %p343 = pneg %p64
        $region46: #{tpu_custom_call.1} parent=43 // pred_check_branch
          %345 = sbr.rel (%p343) target = $region48
        $region47: #{tpu_custom_call.1} parent=43 // pred_region
          %346 = dma.done %s339, 1024
        $region48: #{tpu_custom_call.1} parent=43 // pred_fallthru
          _
        %s347 = sand.u32 %s29, 1
        %s348 = scalar_lea.sflag [#allocation6], %s347
        %s349 = sand.u32 %s77, 1
        %s350 = smul.addr %s349, 64
        %s351 = scalar_lea.vmem [#allocation5], %s350
        // Predicated region
        $region49: #{tpu_custom_call.1} parent=43 // pred_check
          %p352 = pneg %p90
        $region50: #{tpu_custom_call.1} parent=43 // pred_check_branch
          %354 = sbr.rel (%p352) target = $region52
        $region51: #{tpu_custom_call.1} parent=43 // pred_region
          %355 = dma.done %s348, 1024
        $region52: #{tpu_custom_call.1} parent=43 // pred_fallthru
          _
        // Predicated region
        $region53: #{tpu_custom_call.1} parent=43 // pred_check
          %p356 = pneg %p111
        $region54: #{tpu_custom_call.1} parent=43 // pred_check_branch
          %358 = sbr.rel (%p356) target = $region56
        $region55: #{tpu_custom_call.1} parent=43 // pred_region
          %359 = dma.done [#allocation6], 8192
        $region56: #{tpu_custom_call.1} parent=43 // pred_fallthru
          _
        %s360 = sand.u32 %s29, 1
        %s361 = scalar_lea.sflag [#allocation9], %s360
        %s362 = sand.u32 %s124, 1
        %s363 = smul.addr %s362, 512
        %s364 = scalar_lea.vmem [#allocation8], %s363
        // Predicated region
        $region57: #{tpu_custom_call.1} parent=43 // pred_check
          %p365 = pneg %p137
        $region58: #{tpu_custom_call.1} parent=43 // pred_check_branch
          %367 = sbr.rel (%p365) target = $region60
        $region59: #{tpu_custom_call.1} parent=43 // pred_region
          %368 = dma.done %s361, 8192
        $region60: #{tpu_custom_call.1} parent=43 // pred_fallthru
          _
        %s369 = sand.u32 %s29, 1
        %s370 = scalar_lea.sflag [#allocation9], %s369
        %s371 = sand.u32 %s150, 1
        %s372 = smul.addr %s371, 8
        %s373 = scalar_lea.vmem [#allocation10], %s372
        // Predicated region
        $region61: #{tpu_custom_call.1} parent=43 // pred_check
          %p374 = pneg %p163
        $region62: #{tpu_custom_call.1} parent=43 // pred_check_branch
          %376 = sbr.rel (%p374) target = $region64
        $region63: #{tpu_custom_call.1} parent=43 // pred_region
          %377 = dma.done %s370, 128
        $region64: #{tpu_custom_call.1} parent=43 // pred_fallthru
          _
        %s378 = sand.u32 %s51, 1
        %s379 = scalar_lea.sflag [#allocation3], %s378
        %s380 = sand.u32 %s51, 1
        %s381 = smul.addr %s380, 64
        %s382 = scalar_lea.vmem [#allocation2], %s381
        %p383 = pneg %p64
        %p384 = pneg %p61
        %s385 = sand.u32 %s29, 1
        %s386 = scalar_lea.sflag [#allocation6], %s385
        %s387 = sand.u32 %s77, 1
        %s388 = smul.addr %s387, 64
        %s389 = scalar_lea.vmem [#allocation5], %s388
        %p390 = pneg %p90
        %p391 = pneg %p87
        %p392 = pneg %p111
        %p393 = pneg %p108
        %s394 = sand.u32 %s29, 1
        %s395 = scalar_lea.sflag [#allocation9], %s394
        %s396 = sand.u32 %s124, 1
        %s397 = smul.addr %s396, 512
        %s398 = scalar_lea.vmem [#allocation8], %s397
        %p399 = pneg %p137
        %p400 = pneg %p134
        %s401 = sand.u32 %s29, 1
        %s402 = scalar_lea.sflag [#allocation9], %s401
        %s403 = sand.u32 %s150, 1
        %s404 = smul.addr %s403, 8
        %s405 = scalar_lea.vmem [#allocation10], %s404
        %p406 = pneg %p163
        %p407 = pneg %p160
        %p408 = pneg %p184
        %p409 = pneg %p181
        %p410 = pneg %p212
        %p411 = pneg %p209
        %s412 = sand.u32 %s199, 1
        %s413 = scalar_lea.sflag [#allocation4], %s412
        %s414 = sand.u32 %s199, 1
        %s415 = smul.addr %s414, 128
        %s416 = scalar_lea.vmem [#allocation11], %s415
        %s417 = smul.u32 16, %s34
        %s418 = smul.u32 8, %s33
        %s419 = smul.u32 16, %s34
        %v421 = vld [vmem:[%s342] sm:$0xf]
        %v422 = vld [vmem:[%s342 + $0x4] sm:$0xf]
        %v423 = vld [vmem:[%s342 + $0x8] sm:$0xf]
        %v424 = vld [vmem:[%s342 + $0xc] sm:$0xf]
        %v425 = vld [vmem:[%s342 + $0x10] sm:$0xf]
        %v426 = vld [vmem:[%s342 + $0x14] sm:$0xf]
        %v427 = vld [vmem:[%s342 + $0x18] sm:$0xf]
        %v428 = vld [vmem:[%s342 + $0x1c] sm:$0xf]
        %v429 = vld [vmem:[%s342 + $0x20] sm:$0xf]
        %v430 = vld [vmem:[%s342 + $0x24] sm:$0xf]
        %v431 = vld [vmem:[%s342 + $0x28] sm:$0xf]
        %v432 = vld [vmem:[%s342 + $0x2c] sm:$0xf]
        %v433 = vld [vmem:[%s342 + $0x30] sm:$0xf]
        %v434 = vld [vmem:[%s342 + $0x34] sm:$0xf]
        %v435 = vld [vmem:[%s342 + $0x38] sm:$0xf]
        %v436 = vld [vmem:[%s342 + $0x3c] sm:$0xf]
        %v437 = vld [vmem:[%s351] sm:$0xf]
        %v438 = vld [vmem:[%s351 + $0x4] sm:$0xf]
        %v439 = vld [vmem:[%s351 + $0x8] sm:$0xf]
        %v440 = vld [vmem:[%s351 + $0xc] sm:$0xf]
        %v441 = vld [vmem:[%s351 + $0x10] sm:$0xf]
        %v442 = vld [vmem:[%s351 + $0x14] sm:$0xf]
        %v443 = vld [vmem:[%s351 + $0x18] sm:$0xf]
        %v444 = vld [vmem:[%s351 + $0x1c] sm:$0xf]
        %v445 = vld [vmem:[%s351 + $0x20] sm:$0xf]
        %v446 = vld [vmem:[%s351 + $0x24] sm:$0xf]
        %v447 = vld [vmem:[%s351 + $0x28] sm:$0xf]
        %v448 = vld [vmem:[%s351 + $0x2c] sm:$0xf]
        %v449 = vld [vmem:[%s351 + $0x30] sm:$0xf]
        %v450 = vld [vmem:[%s351 + $0x34] sm:$0xf]
        %v451 = vld [vmem:[%s351 + $0x38] sm:$0xf]
        %v452 = vld [vmem:[%s351 + $0x3c] sm:$0xf]
        %v453 = vld [vmem:[%s373] sm:$0xff]
        %v454 = vld [vmem:[#allocation7] sm:$0xf]
        %v455 = vld [vmem:[#allocation7 + $0x4] sm:$0xf]
        %v456 = vld [vmem:[#allocation7 + $0x8] sm:$0xf]
        %v457 = vld [vmem:[#allocation7 + $0xc] sm:$0xf]
        %v458 = vld [vmem:[#allocation7 + $0x10] sm:$0xf]
        %v459 = vld [vmem:[#allocation7 + $0x14] sm:$0xf]
        %v460 = vld [vmem:[#allocation7 + $0x18] sm:$0xf]
        %v461 = vld [vmem:[#allocation7 + $0x1c] sm:$0xf]
        %v462 = vld [vmem:[#allocation7 + $0x20] sm:$0xf]
        %v463 = vld [vmem:[#allocation7 + $0x24] sm:$0xf]
        %v464 = vld [vmem:[#allocation7 + $0x28] sm:$0xf]
        %v465 = vld [vmem:[#allocation7 + $0x2c] sm:$0xf]
        %v466 = vld [vmem:[#allocation7 + $0x30] sm:$0xf]
        %v467 = vld [vmem:[#allocation7 + $0x34] sm:$0xf]
        %v468 = vld [vmem:[#allocation7 + $0x38] sm:$0xf]
        %v469 = vld [vmem:[#allocation7 + $0x3c] sm:$0xf]
        %v486 = vunpack.c.l.b16 %v421
        %v487 = vunpack.c.l.b16 %v422
        %v488 = vunpack.c.l.b16 %v423
        %v489 = vunpack.c.l.b16 %v424
        %v490 = vunpack.c.l.b16 %v425
        %v491 = vunpack.c.l.b16 %v426
        %v492 = vunpack.c.l.b16 %v427
        %v493 = vunpack.c.l.b16 %v428
        %v494 = vunpack.c.l.b16 %v429
        %v495 = vunpack.c.l.b16 %v430
        %v496 = vunpack.c.l.b16 %v431
        %v497 = vunpack.c.l.b16 %v432
        %v498 = vunpack.c.l.b16 %v433
        %v499 = vunpack.c.l.b16 %v434
        %v500 = vunpack.c.l.b16 %v435
        %v501 = vunpack.c.l.b16 %v436
        %v502 = vpack.c.b16 %v487, %v486
        %v503 = vpack.c.b16 %v489, %v488
        %v504 = vpack.c.b16 %v491, %v490
        %v505 = vpack.c.b16 %v493, %v492
        %v506 = vpack.c.b16 %v495, %v494
        %v507 = vpack.c.b16 %v497, %v496
        %v508 = vpack.c.b16 %v499, %v498
        %v509 = vpack.c.b16 %v501, %v500
        %v534 = vunpack.c.l.b16 %v454
        %v535 = vunpack.c.l.b16 %v455
        %v536 = vunpack.c.l.b16 %v456
        %v537 = vunpack.c.l.b16 %v457
        %v538 = vunpack.c.l.b16 %v458
        %v539 = vunpack.c.l.b16 %v459
        %v540 = vunpack.c.l.b16 %v460
        %v541 = vunpack.c.l.b16 %v461
        %v542 = vunpack.c.l.b16 %v462
        %v543 = vunpack.c.l.b16 %v463
        %v544 = vunpack.c.l.b16 %v464
        %v545 = vunpack.c.l.b16 %v465
        %v546 = vunpack.c.l.b16 %v466
        %v547 = vunpack.c.l.b16 %v467
        %v548 = vunpack.c.l.b16 %v468
        %v549 = vunpack.c.l.b16 %v469
        %v550 = vpack.c.b16 %v535, %v534
        %v551 = vpack.c.b16 %v537, %v536
        %v552 = vpack.c.b16 %v539, %v538
        %v553 = vpack.c.b16 %v541, %v540
        %v554 = vpack.c.b16 %v543, %v542
        %v555 = vpack.c.b16 %v545, %v544
        %v556 = vpack.c.b16 %v547, %v546
        %v557 = vpack.c.b16 %v549, %v548
        %566 = vmatprep.subr.bf16.mxu0 0
        %567 = vmatpush1.bf16.msra.mxu0 %v550
        %568 = vmatprep.subr.bf16.mxu0 0
        %569 = vmatpush1.bf16.msra.mxu0 %v551
        %570 = vmatprep.subr.bf16.mxu0 0
        %571 = vmatpush1.bf16.msra.mxu0 %v552
        %572 = vmatprep.subr.bf16.mxu0 0
        %573 = vmatpush1.bf16.msra.mxu0 %v553
        %574 = vmatprep.subr.bf16.mxu0 0
        %575 = vmatpush1.bf16.msra.mxu0 %v554
        %576 = vmatprep.subr.bf16.mxu0 0
        %577 = vmatpush1.bf16.msra.mxu0 %v555
        %578 = vmatprep.subr.bf16.mxu0 0
        %579 = vmatpush1.bf16.msra.mxu0 %v556
        %580 = vmatprep.subr.bf16.mxu0 0
        %581 = vmatpush1.bf16.msra.mxu0 %v557
        %582 = vmatprep.subr.bf16.mxu0 0
        %583 = vmatpush1.bf16.msra.mxu0 0
        %584 = vmatprep.subr.bf16.mxu0 0
        %585 = vmatpush1.bf16.msra.mxu0 0
        %586 = vmatprep.subr.bf16.mxu0 0
        %587 = vmatpush1.bf16.msra.mxu0 0
        %588 = vmatprep.subr.bf16.mxu0 0
        %589 = vmatpush1.bf16.msra.mxu0 0
        %590 = vmatprep.subr.bf16.mxu0 0
        %591 = vmatpush1.bf16.msra.mxu0 0
        %592 = vmatprep.subr.bf16.mxu0 0
        %593 = vmatpush1.bf16.msra.mxu0 0
        %594 = vmatprep.subr.bf16.mxu0 0
        %595 = vmatpush1.bf16.msra.mxu0 0
        %596 = vmatprep.subr.bf16.mxu0 0
        %597 = vmatpush1.bf16.msra.mxu0 0
        %598 = vmatprep.mubr.bf16.mxu0 0
        %599 = vmatmul.mubr.bf16.gmra.mrb[0].mxu0 %v502
        %v600 = vpop.f32.mrb[0].mxu0
        %v601 = vadd.f32 0.0, %v600
        %v602 = vpop.f32.mrb[0].mxu0
        %v603 = vpop.f32.mrb[0].mxu0
        %v604 = vadd.f32 0.0, %v603
        %v605 = vpop.f32.mrb[0].mxu0
        %606 = vmatprep.mubr.bf16.mxu0 0
        %607 = vmatmul.mubr.bf16.gmra.mrb[0].mxu0 %v503
        %v608 = vpop.f32.mrb[0].mxu0
        %v609 = vadd.f32 0.0, %v608
        %v610 = vpop.f32.mrb[0].mxu0
        %v611 = vpop.f32.mrb[0].mxu0
        %v612 = vadd.f32 0.0, %v611
        %v613 = vpop.f32.mrb[0].mxu0
        %614 = vmatprep.mubr.bf16.mxu0 0
        %615 = vmatmul.mubr.bf16.gmra.mrb[0].mxu0 %v504
        %v616 = vpop.f32.mrb[0].mxu0
        %v617 = vadd.f32 0.0, %v616
        %v618 = vpop.f32.mrb[0].mxu0
        %v619 = vpop.f32.mrb[0].mxu0
        %v620 = vadd.f32 0.0, %v619
        %v621 = vpop.f32.mrb[0].mxu0
        %622 = vmatprep.mubr.bf16.mxu0 0
        %623 = vmatmul.mubr.bf16.gmra.mrb[0].mxu0 %v505
        %v624 = vpop.f32.mrb[0].mxu0
        %v625 = vadd.f32 0.0, %v624
        %v626 = vpop.f32.mrb[0].mxu0
        %v627 = vpop.f32.mrb[0].mxu0
        %v628 = vadd.f32 0.0, %v627
        %v629 = vpop.f32.mrb[0].mxu0
        %630 = vmatprep.mubr.bf16.mxu0 0
        %631 = vmatmul.mubr.bf16.gmra.mrb[0].mxu0 %v506
        %v632 = vpop.f32.mrb[0].mxu0
        %v633 = vadd.f32 0.0, %v632
        %v634 = vpop.f32.mrb[0].mxu0
        %v635 = vpop.f32.mrb[0].mxu0
        %v636 = vadd.f32 0.0, %v635
        %v637 = vpop.f32.mrb[0].mxu0
        %638 = vmatprep.mubr.bf16.mxu0 0
        %639 = vmatmul.mubr.bf16.gmra.mrb[0].mxu0 %v507
        %v640 = vpop.f32.mrb[0].mxu0
        %v641 = vadd.f32 0.0, %v640
        %v642 = vpop.f32.mrb[0].mxu0
        %v643 = vpop.f32.mrb[0].mxu0
        %v644 = vadd.f32 0.0, %v643
        %v645 = vpop.f32.mrb[0].mxu0
        %646 = vmatprep.mubr.bf16.mxu0 0
        %647 = vmatmul.mubr.bf16.gmra.mrb[0].mxu0 %v508
        %v648 = vpop.f32.mrb[0].mxu0
        %v649 = vadd.f32 0.0, %v648
        %v650 = vpop.f32.mrb[0].mxu0
        %v651 = vpop.f32.mrb[0].mxu0
        %v652 = vadd.f32 0.0, %v651
        %v653 = vpop.f32.mrb[0].mxu0
        %654 = vmatprep.mubr.bf16.mxu0 0
        %655 = vmatmul.mubr.bf16.gmra.mrb[0].mxu0 %v509
        %v656 = vpop.f32.mrb[0].mxu0
        %v657 = vadd.f32 0.0, %v656
        %v658 = vpop.f32.mrb[0].mxu0
        %v659 = vpop.f32.mrb[0].mxu0
        %v660 = vadd.f32 0.0, %v659
        %v661 = vpop.f32.mrb[0].mxu0
        %662 = vdwg.mxu0
        %v663 = vpack.c.bf16 %v604, %v601
        %v664 = vpack.c.bf16 %v612, %v609
        %v665 = vpack.c.bf16 %v620, %v617
        %v666 = vpack.c.bf16 %v628, %v625
        %v667 = vpack.c.bf16 %v636, %v633
        %v668 = vpack.c.bf16 %v644, %v641
        %v669 = vpack.c.bf16 %v652, %v649
        %v670 = vpack.c.bf16 %v660, %v657
        %v671 = vlaneseq
        %v672 = vshrl.u32 %v671, 7
        %v673 = vsub.s32 0, %v672
        %v674 = vrot.slane %v453, %v673
        %v691 = vunpack.c.l.b16 %v437
        %v692 = vunpack.c.l.b16 %v438
        %v693 = vunpack.c.l.b16 %v439
        %v694 = vunpack.c.l.b16 %v440
        %v695 = vunpack.c.l.b16 %v441
        %v696 = vunpack.c.l.b16 %v442
        %v697 = vunpack.c.l.b16 %v443
        %v698 = vunpack.c.l.b16 %v444
        %v699 = vunpack.c.l.b16 %v445
        %v700 = vunpack.c.l.b16 %v446
        %v701 = vunpack.c.l.b16 %v447
        %v702 = vunpack.c.l.b16 %v448
        %v703 = vunpack.c.l.b16 %v449
        %v704 = vunpack.c.l.b16 %v450
        %v705 = vunpack.c.l.b16 %v451
        %v706 = vunpack.c.l.b16 %v452
        %v707 = vpack.c.b16 %v692, %v691
        %v708 = vpack.c.b16 %v694, %v693
        %v709 = vpack.c.b16 %v696, %v695
        %v710 = vpack.c.b16 %v698, %v697
        %v711 = vpack.c.b16 %v700, %v699
        %v712 = vpack.c.b16 %v702, %v701
        %v713 = vpack.c.b16 %v704, %v703
        %v714 = vpack.c.b16 %v706, %v705
        %723 = vmatprep.subr.bf16.mxu0 0
        %724 = vmatpush1.bf16.msra.mxu0 %v707
        %725 = vmatprep.subr.bf16.mxu0 0
        %726 = vmatpush1.bf16.msra.mxu0 %v708
        %727 = vmatprep.subr.bf16.mxu0 0
        %728 = vmatpush1.bf16.msra.mxu0 %v709
        %729 = vmatprep.subr.bf16.mxu0 0
        %730 = vmatpush1.bf16.msra.mxu0 %v710
        %731 = vmatprep.subr.bf16.mxu0 0
        %732 = vmatpush1.bf16.msra.mxu0 %v711
        %733 = vmatprep.subr.bf16.mxu0 0
        %734 = vmatpush1.bf16.msra.mxu0 %v712
        %735 = vmatprep.subr.bf16.mxu0 0
        %736 = vmatpush1.bf16.msra.mxu0 %v713
        %737 = vmatprep.subr.bf16.mxu0 0
        %738 = vmatpush1.bf16.msra.mxu0 %v714
        %739 = vmatprep.subr.bf16.mxu0 0
        %740 = vmatpush1.bf16.msra.mxu0 0
        %741 = vmatprep.subr.bf16.mxu0 0
        %742 = vmatpush1.bf16.msra.mxu0 0
        %743 = vmatprep.subr.bf16.mxu0 0
        %744 = vmatpush1.bf16.msra.mxu0 0
        %745 = vmatprep.subr.bf16.mxu0 0
        %746 = vmatpush1.bf16.msra.mxu0 0
        %747 = vmatprep.subr.bf16.mxu0 0
        %748 = vmatpush1.bf16.msra.mxu0 0
        %749 = vmatprep.subr.bf16.mxu0 0
        %750 = vmatpush1.bf16.msra.mxu0 0
        %751 = vmatprep.subr.bf16.mxu0 0
        %752 = vmatpush1.bf16.msra.mxu0 0
        %753 = vmatprep.subr.bf16.mxu0 0
        %754 = vmatpush1.bf16.msra.mxu0 0
        %755 = vmatprep.mubr.bf16.mxu0 0
        %756 = vmatmul.mubr.bf16.gmra.mrb[0].mxu0 %v663
        %v757 = vpop.f32.mrb[0].mxu0
        %v758 = vadd.f32 %v674, %v757
        %v759 = vpop.f32.mrb[0].mxu0
        %v760 = vpop.f32.mrb[0].mxu0
        %v761 = vadd.f32 %v674, %v760
        %v762 = vpop.f32.mrb[0].mxu0
        %763 = vmatprep.mubr.bf16.mxu0 0
        %764 = vmatmul.mubr.bf16.gmra.mrb[0].mxu0 %v664
        %v765 = vpop.f32.mrb[0].mxu0
        %v766 = vadd.f32 %v674, %v765
        %v767 = vpop.f32.mrb[0].mxu0
        %v768 = vpop.f32.mrb[0].mxu0
        %v769 = vadd.f32 %v674, %v768
        %v770 = vpop.f32.mrb[0].mxu0
        %771 = vmatprep.mubr.bf16.mxu0 0
        %772 = vmatmul.mubr.bf16.gmra.mrb[0].mxu0 %v665
        %v773 = vpop.f32.mrb[0].mxu0
        %v774 = vadd.f32 %v674, %v773
        %v775 = vpop.f32.mrb[0].mxu0
        %v776 = vpop.f32.mrb[0].mxu0
        %v777 = vadd.f32 %v674, %v776
        %v778 = vpop.f32.mrb[0].mxu0
        %779 = vmatprep.mubr.bf16.mxu0 0
        %780 = vmatmul.mubr.bf16.gmra.mrb[0].mxu0 %v666
        %v781 = vpop.f32.mrb[0].mxu0
        %v782 = vadd.f32 %v674, %v781
        %v783 = vpop.f32.mrb[0].mxu0
        %v784 = vpop.f32.mrb[0].mxu0
        %v785 = vadd.f32 %v674, %v784
        %v786 = vpop.f32.mrb[0].mxu0
        %787 = vmatprep.mubr.bf16.mxu0 0
        %788 = vmatmul.mubr.bf16.gmra.mrb[0].mxu0 %v667
        %v789 = vpop.f32.mrb[0].mxu0
        %v790 = vadd.f32 %v674, %v789
        %v791 = vpop.f32.mrb[0].mxu0
        %v792 = vpop.f32.mrb[0].mxu0
        %v793 = vadd.f32 %v674, %v792
        %v794 = vpop.f32.mrb[0].mxu0
        %795 = vmatprep.mubr.bf16.mxu0 0
        %796 = vmatmul.mubr.bf16.gmra.mrb[0].mxu0 %v668
        %v797 = vpop.f32.mrb[0].mxu0
        %v798 = vadd.f32 %v674, %v797
        %v799 = vpop.f32.mrb[0].mxu0
        %v800 = vpop.f32.mrb[0].mxu0
        %v801 = vadd.f32 %v674, %v800
        %v802 = vpop.f32.mrb[0].mxu0
        %803 = vmatprep.mubr.bf16.mxu0 0
        %804 = vmatmul.mubr.bf16.gmra.mrb[0].mxu0 %v669
        %v805 = vpop.f32.mrb[0].mxu0
        %v806 = vadd.f32 %v674, %v805
        %v807 = vpop.f32.mrb[0].mxu0
        %v808 = vpop.f32.mrb[0].mxu0
        %v809 = vadd.f32 %v674, %v808
        %v810 = vpop.f32.mrb[0].mxu0
        %811 = vmatprep.mubr.bf16.mxu0 0
        %812 = vmatmul.mubr.bf16.gmra.mrb[0].mxu0 %v670
        %v813 = vpop.f32.mrb[0].mxu0
        %v814 = vadd.f32 %v674, %v813
        %v815 = vpop.f32.mrb[0].mxu0
        %v816 = vpop.f32.mrb[0].mxu0
        %v817 = vadd.f32 %v674, %v816
        %v818 = vpop.f32.mrb[0].mxu0
        %819 = vdwg.mxu0
        %820 = vmax.xlane.f32.xlu0 %v758
        %v821 = vpop.xlane.xlu0 %820
        %822 = vmax.xlane.f32.xlu0 %v761
        %v823 = vpop.xlane.xlu0 %822
        %824 = vmax.xlane.f32.xlu0 %v766
        %v825 = vpop.xlane.xlu0 %824
        %826 = vmax.xlane.f32.xlu0 %v769
        %v827 = vpop.xlane.xlu0 %826
        %828 = vmax.xlane.f32.xlu0 %v774
        %v829 = vpop.xlane.xlu0 %828
        %830 = vmax.xlane.f32.xlu0 %v777
        %v831 = vpop.xlane.xlu0 %830
        %832 = vmax.xlane.f32.xlu0 %v782
        %v833 = vpop.xlane.xlu0 %832
        %834 = vmax.xlane.f32.xlu0 %v785
        %v835 = vpop.xlane.xlu0 %834
        %836 = vmax.xlane.f32.xlu0 %v790
        %v837 = vpop.xlane.xlu0 %836
        %838 = vmax.xlane.f32.xlu0 %v793
        %v839 = vpop.xlane.xlu0 %838
        %840 = vmax.xlane.f32.xlu0 %v798
        %v841 = vpop.xlane.xlu0 %840
        %842 = vmax.xlane.f32.xlu0 %v801
        %v843 = vpop.xlane.xlu0 %842
        %844 = vmax.xlane.f32.xlu0 %v806
        %v845 = vpop.xlane.xlu0 %844
        %846 = vmax.xlane.f32.xlu0 %v809
        %v847 = vpop.xlane.xlu0 %846
        %848 = vmax.xlane.f32.xlu0 %v814
        %v849 = vpop.xlane.xlu0 %848
        %850 = vmax.xlane.f32.xlu0 %v817
        %v851 = vpop.xlane.xlu0 %850
        %v852 = vsub.f32 %v758, %v821
        %v853 = vsub.f32 %v761, %v823
        %v854 = vsub.f32 %v766, %v825
        %v855 = vsub.f32 %v769, %v827
        %v856 = vsub.f32 %v774, %v829
        %v857 = vsub.f32 %v777, %v831
        %v858 = vsub.f32 %v782, %v833
        %v859 = vsub.f32 %v785, %v835
        %v860 = vsub.f32 %v790, %v837
        %v861 = vsub.f32 %v793, %v839
        %v862 = vsub.f32 %v798, %v841
        %v863 = vsub.f32 %v801, %v843
        %v864 = vsub.f32 %v806, %v845
        %v865 = vsub.f32 %v809, %v847
        %v866 = vsub.f32 %v814, %v849
        %v867 = vsub.f32 %v817, %v851
        %v868 = vmul.f32 %v852, 1.442695
        %v869 = vpow.pop %v868
        %v870 = vmul.f32 %v853, 1.442695
        %v871 = vpow.pop %v870
        %v872 = vmul.f32 %v854, 1.442695
        %v873 = vpow.pop %v872
        %v874 = vmul.f32 %v855, 1.442695
        %v875 = vpow.pop %v874
        %v876 = vmul.f32 %v856, 1.442695
        %v877 = vpow.pop %v876
        %v878 = vmul.f32 %v857, 1.442695
        %v879 = vpow.pop %v878
        %v880 = vmul.f32 %v858, 1.442695
        %v881 = vpow.pop %v880
        %v882 = vmul.f32 %v859, 1.442695
        %v883 = vpow.pop %v882
        %v884 = vmul.f32 %v860, 1.442695
        %v885 = vpow.pop %v884
        %v886 = vmul.f32 %v861, 1.442695
        %v887 = vpow.pop %v886
        %v888 = vmul.f32 %v862, 1.442695
        %v889 = vpow.pop %v888
        %v890 = vmul.f32 %v863, 1.442695
        %v891 = vpow.pop %v890
        %v892 = vmul.f32 %v864, 1.442695
        %v893 = vpow.pop %v892
        %v894 = vmul.f32 %v865, 1.442695
        %v895 = vpow.pop %v894
        %v896 = vmul.f32 %v866, 1.442695
        %v897 = vpow.pop %v896
        %v898 = vmul.f32 %v867, 1.442695
        %v899 = vpow.pop %v898
        %900 = vadd.xlane.f32.xlu0 %v869
        %v901 = vpop.xlane.xlu0 %900
        %902 = vadd.xlane.f32.xlu0 %v871
        %v903 = vpop.xlane.xlu0 %902
        %904 = vadd.xlane.f32.xlu0 %v873
        %v905 = vpop.xlane.xlu0 %904
        %906 = vadd.xlane.f32.xlu0 %v875
        %v907 = vpop.xlane.xlu0 %906
        %908 = vadd.xlane.f32.xlu0 %v877
        %v909 = vpop.xlane.xlu0 %908
        %910 = vadd.xlane.f32.xlu0 %v879
        %v911 = vpop.xlane.xlu0 %910
        %912 = vadd.xlane.f32.xlu0 %v881
        %v913 = vpop.xlane.xlu0 %912
        %914 = vadd.xlane.f32.xlu0 %v883
        %v915 = vpop.xlane.xlu0 %914
        %916 = vadd.xlane.f32.xlu0 %v885
        %v917 = vpop.xlane.xlu0 %916
        %918 = vadd.xlane.f32.xlu0 %v887
        %v919 = vpop.xlane.xlu0 %918
        %920 = vadd.xlane.f32.xlu0 %v889
        %v921 = vpop.xlane.xlu0 %920
        %922 = vadd.xlane.f32.xlu0 %v891
        %v923 = vpop.xlane.xlu0 %922
        %924 = vadd.xlane.f32.xlu0 %v893
        %v925 = vpop.xlane.xlu0 %924
        %926 = vadd.xlane.f32.xlu0 %v895
        %v927 = vpop.xlane.xlu0 %926
        %928 = vadd.xlane.f32.xlu0 %v897
        %v929 = vpop.xlane.xlu0 %928
        %930 = vadd.xlane.f32.xlu0 %v899
        %v931 = vpop.xlane.xlu0 %930
        %v932 = vrcp.pop %v901
        %v933 = vrcp.pop %v903
        %v934 = vrcp.pop %v905
        %v935 = vrcp.pop %v907
        %v936 = vrcp.pop %v909
        %v937 = vrcp.pop %v911
        %v938 = vrcp.pop %v913
        %v939 = vrcp.pop %v915
        %v940 = vrcp.pop %v917
        %v941 = vrcp.pop %v919
        %v942 = vrcp.pop %v921
        %v943 = vrcp.pop %v923
        %v944 = vrcp.pop %v925
        %v945 = vrcp.pop %v927
        %v946 = vrcp.pop %v929
        %v947 = vrcp.pop %v931
        %v948 = vmul.f32 %v869, %v932
        %v949 = vmul.f32 %v871, %v933
        %v950 = vmul.f32 %v873, %v934
        %v951 = vmul.f32 %v875, %v935
        %v952 = vmul.f32 %v877, %v936
        %v953 = vmul.f32 %v879, %v937
        %v954 = vmul.f32 %v881, %v938
        %v955 = vmul.f32 %v883, %v939
        %v956 = vmul.f32 %v885, %v940
        %v957 = vmul.f32 %v887, %v941
        %v958 = vmul.f32 %v889, %v942
        %v959 = vmul.f32 %v891, %v943
        %v960 = vmul.f32 %v893, %v944
        %v961 = vmul.f32 %v895, %v945
        %v962 = vmul.f32 %v897, %v946
        %v963 = vmul.f32 %v899, %v947
        %v964 = vpack.c.bf16 %v949, %v948
        %v965 = vpack.c.bf16 %v951, %v950
        %v966 = vpack.c.bf16 %v953, %v952
        %v967 = vpack.c.bf16 %v955, %v954
        %v968 = vpack.c.bf16 %v957, %v956
        %v969 = vpack.c.bf16 %v959, %v958
        %v970 = vpack.c.bf16 %v961, %v960
        %v971 = vpack.c.bf16 %v963, %v962
        %v972 = vld [vmem:[%s364] sm:$0xf]
        %v973 = vld [vmem:[%s364 + $0x4] sm:$0xf]
        %v974 = vld [vmem:[%s364 + $0x8] sm:$0xf]
        %v975 = vld [vmem:[%s364 + $0xc] sm:$0xf]
        %v976 = vld [vmem:[%s364 + $0x10] sm:$0xf]
        %v977 = vld [vmem:[%s364 + $0x14] sm:$0xf]
        %v978 = vld [vmem:[%s364 + $0x18] sm:$0xf]
        %v979 = vld [vmem:[%s364 + $0x1c] sm:$0xf]
        %v980 = vld [vmem:[%s364 + $0x20] sm:$0xf]
        %v981 = vld [vmem:[%s364 + $0x24] sm:$0xf]
        %v982 = vld [vmem:[%s364 + $0x28] sm:$0xf]
        %v983 = vld [vmem:[%s364 + $0x2c] sm:$0xf]
        %v984 = vld [vmem:[%s364 + $0x30] sm:$0xf]
        %v985 = vld [vmem:[%s364 + $0x34] sm:$0xf]
        %v986 = vld [vmem:[%s364 + $0x38] sm:$0xf]
        %v987 = vld [vmem:[%s364 + $0x3c] sm:$0xf]
        %s988 = scalar_lea.vmem [#allocation7], 64
        %v989 = vld [vmem:[%s988] sm:$0xf]
        %v990 = vld [vmem:[%s988 + $0x4] sm:$0xf]
        %v991 = vld [vmem:[%s988 + $0x8] sm:$0xf]
        %v992 = vld [vmem:[%s988 + $0xc] sm:$0xf]
        %v993 = vld [vmem:[%s988 + $0x10] sm:$0xf]
        %v994 = vld [vmem:[%s988 + $0x14] sm:$0xf]
        %v995 = vld [vmem:[%s988 + $0x18] sm:$0xf]
        %v996 = vld [vmem:[%s988 + $0x1c] sm:$0xf]
        %v997 = vld [vmem:[%s988 + $0x20] sm:$0xf]
        %v998 = vld [vmem:[%s988 + $0x24] sm:$0xf]
        %v999 = vld [vmem:[%s988 + $0x28] sm:$0xf]
        %v1000 = vld [vmem:[%s988 + $0x2c] sm:$0xf]
        %v1001 = vld [vmem:[%s988 + $0x30] sm:$0xf]
        %v1002 = vld [vmem:[%s988 + $0x34] sm:$0xf]
        %v1003 = vld [vmem:[%s988 + $0x38] sm:$0xf]
        %v1004 = vld [vmem:[%s988 + $0x3c] sm:$0xf]
        %v1021 = vunpack.c.l.b16 %v989
        %v1022 = vunpack.c.l.b16 %v990
        %v1023 = vunpack.c.l.b16 %v991
        %v1024 = vunpack.c.l.b16 %v992
        %v1025 = vunpack.c.l.b16 %v993
        %v1026 = vunpack.c.l.b16 %v994
        %v1027 = vunpack.c.l.b16 %v995
        %v1028 = vunpack.c.l.b16 %v996
        %v1029 = vunpack.c.l.b16 %v997
        %v1030 = vunpack.c.l.b16 %v998
        %v1031 = vunpack.c.l.b16 %v999
        %v1032 = vunpack.c.l.b16 %v1000
        %v1033 = vunpack.c.l.b16 %v1001
        %v1034 = vunpack.c.l.b16 %v1002
        %v1035 = vunpack.c.l.b16 %v1003
        %v1036 = vunpack.c.l.b16 %v1004
        %v1037 = vpack.c.b16 %v1022, %v1021
        %v1038 = vpack.c.b16 %v1024, %v1023
        %v1039 = vpack.c.b16 %v1026, %v1025
        %v1040 = vpack.c.b16 %v1028, %v1027
        %v1041 = vpack.c.b16 %v1030, %v1029
        %v1042 = vpack.c.b16 %v1032, %v1031
        %v1043 = vpack.c.b16 %v1034, %v1033
        %v1044 = vpack.c.b16 %v1036, %v1035
        %1053 = vmatprep.subr.bf16.mxu0 0
        %1054 = vmatpush1.bf16.msra.mxu0 %v1037
        %1055 = vmatprep.subr.bf16.mxu0 0
        %1056 = vmatpush1.bf16.msra.mxu0 %v1038
        %1057 = vmatprep.subr.bf16.mxu0 0
        %1058 = vmatpush1.bf16.msra.mxu0 %v1039
        %1059 = vmatprep.subr.bf16.mxu0 0
        %1060 = vmatpush1.bf16.msra.mxu0 %v1040
        %1061 = vmatprep.subr.bf16.mxu0 0
        %1062 = vmatpush1.bf16.msra.mxu0 %v1041
        %1063 = vmatprep.subr.bf16.mxu0 0
        %1064 = vmatpush1.bf16.msra.mxu0 %v1042
        %1065 = vmatprep.subr.bf16.mxu0 0
        %1066 = vmatpush1.bf16.msra.mxu0 %v1043
        %1067 = vmatprep.subr.bf16.mxu0 0
        %1068 = vmatpush1.bf16.msra.mxu0 %v1044
        %1069 = vmatprep.subr.bf16.mxu0 0
        %1070 = vmatpush1.bf16.msra.mxu0 0
        %1071 = vmatprep.subr.bf16.mxu0 0
        %1072 = vmatpush1.bf16.msra.mxu0 0
        %1073 = vmatprep.subr.bf16.mxu0 0
        %1074 = vmatpush1.bf16.msra.mxu0 0
        %1075 = vmatprep.subr.bf16.mxu0 0
        %1076 = vmatpush1.bf16.msra.mxu0 0
        %1077 = vmatprep.subr.bf16.mxu0 0
        %1078 = vmatpush1.bf16.msra.mxu0 0
        %1079 = vmatprep.subr.bf16.mxu0 0
        %1080 = vmatpush1.bf16.msra.mxu0 0
        %1081 = vmatprep.subr.bf16.mxu0 0
        %1082 = vmatpush1.bf16.msra.mxu0 0
        %1083 = vmatprep.subr.bf16.mxu0 0
        %1084 = vmatpush1.bf16.msra.mxu0 0
        %1085 = vmatprep.mubr.bf16.mxu0 0
        %1086 = vmatmul.mubr.bf16.gmra.mrb[0].mxu0 %v502
        %v1087 = vpop.f32.mrb[0].mxu0
        %v1088 = vadd.f32 0.0, %v1087
        %v1089 = vpop.f32.mrb[0].mxu0
        %v1090 = vpop.f32.mrb[0].mxu0
        %v1091 = vadd.f32 0.0, %v1090
        %v1092 = vpop.f32.mrb[0].mxu0
        %1093 = vmatprep.mubr.bf16.mxu0 0
        %1094 = vmatmul.mubr.bf16.gmra.mrb[0].mxu0 %v503
        %v1095 = vpop.f32.mrb[0].mxu0
        %v1096 = vadd.f32 0.0, %v1095
        %v1097 = vpop.f32.mrb[0].mxu0
        %v1098 = vpop.f32.mrb[0].mxu0
        %v1099 = vadd.f32 0.0, %v1098
        %v1100 = vpop.f32.mrb[0].mxu0
        %1101 = vmatprep.mubr.bf16.mxu0 0
        %1102 = vmatmul.mubr.bf16.gmra.mrb[0].mxu0 %v504
        %v1103 = vpop.f32.mrb[0].mxu0
        %v1104 = vadd.f32 0.0, %v1103
        %v1105 = vpop.f32.mrb[0].mxu0
        %v1106 = vpop.f32.mrb[0].mxu0
        %v1107 = vadd.f32 0.0, %v1106
        %v1108 = vpop.f32.mrb[0].mxu0
        %1109 = vmatprep.mubr.bf16.mxu0 0
        %1110 = vmatmul.mubr.bf16.gmra.mrb[0].mxu0 %v505
        %v1111 = vpop.f32.mrb[0].mxu0
        %v1112 = vadd.f32 0.0, %v1111
        %v1113 = vpop.f32.mrb[0].mxu0
        %v1114 = vpop.f32.mrb[0].mxu0
        %v1115 = vadd.f32 0.0, %v1114
        %v1116 = vpop.f32.mrb[0].mxu0
        %1117 = vmatprep.mubr.bf16.mxu0 0
        %1118 = vmatmul.mubr.bf16.gmra.mrb[0].mxu0 %v506
        %v1119 = vpop.f32.mrb[0].mxu0
        %v1120 = vadd.f32 0.0, %v1119
        %v1121 = vpop.f32.mrb[0].mxu0
        %v1122 = vpop.f32.mrb[0].mxu0
        %v1123 = vadd.f32 0.0, %v1122
        %v1124 = vpop.f32.mrb[0].mxu0
        %1125 = vmatprep.mubr.bf16.mxu0 0
        %1126 = vmatmul.mubr.bf16.gmra.mrb[0].mxu0 %v507
        %v1127 = vpop.f32.mrb[0].mxu0
        %v1128 = vadd.f32 0.0, %v1127
        %v1129 = vpop.f32.mrb[0].mxu0
        %v1130 = vpop.f32.mrb[0].mxu0
        %v1131 = vadd.f32 0.0, %v1130
        %v1132 = vpop.f32.mrb[0].mxu0
        %1133 = vmatprep.mubr.bf16.mxu0 0
        %1134 = vmatmul.mubr.bf16.gmra.mrb[0].mxu0 %v508
        %v1135 = vpop.f32.mrb[0].mxu0
        %v1136 = vadd.f32 0.0, %v1135
        %v1137 = vpop.f32.mrb[0].mxu0
        %v1138 = vpop.f32.mrb[0].mxu0
        %v1139 = vadd.f32 0.0, %v1138
        %v1140 = vpop.f32.mrb[0].mxu0
        %1141 = vmatprep.mubr.bf16.mxu0 0
        %1142 = vmatmul.mubr.bf16.gmra.mrb[0].mxu0 %v509
        %v1143 = vpop.f32.mrb[0].mxu0
        %v1144 = vadd.f32 0.0, %v1143
        %v1145 = vpop.f32.mrb[0].mxu0
        %v1146 = vpop.f32.mrb[0].mxu0
        %v1147 = vadd.f32 0.0, %v1146
        %v1148 = vpop.f32.mrb[0].mxu0
        %1149 = vdwg.mxu0
        %v1150 = vpack.c.bf16 %v1091, %v1088
        %v1151 = vpack.c.bf16 %v1099, %v1096
        %v1152 = vpack.c.bf16 %v1107, %v1104
        %v1153 = vpack.c.bf16 %v1115, %v1112
        %v1154 = vpack.c.bf16 %v1123, %v1120
        %v1155 = vpack.c.bf16 %v1131, %v1128
        %v1156 = vpack.c.bf16 %v1139, %v1136
        %v1157 = vpack.c.bf16 %v1147, %v1144
        %v1158 = vlaneseq
        %v1159 = vshrl.u32 %v1158, 7
        %v1160 = vsub.s32 1, %v1159
        %v1161 = vrot.slane %v453, %v1160
        %1162 = vmatprep.subr.bf16.mxu0 0
        %1163 = vmatpush1.bf16.msra.mxu0 %v707
        %1164 = vmatprep.subr.bf16.mxu0 0
        %1165 = vmatpush1.bf16.msra.mxu0 %v708
        %1166 = vmatprep.subr.bf16.mxu0 0
        %1167 = vmatpush1.bf16.msra.mxu0 %v709
        %1168 = vmatprep.subr.bf16.mxu0 0
        %1169 = vmatpush1.bf16.msra.mxu0 %v710
        %1170 = vmatprep.subr.bf16.mxu0 0
        %1171 = vmatpush1.bf16.msra.mxu0 %v711
        %1172 = vmatprep.subr.bf16.mxu0 0
        %1173 = vmatpush1.bf16.msra.mxu0 %v712
        %1174 = vmatprep.subr.bf16.mxu0 0
        %1175 = vmatpush1.bf16.msra.mxu0 %v713
        %1176 = vmatprep.subr.bf16.mxu0 0
        %1177 = vmatpush1.bf16.msra.mxu0 %v714
        %1178 = vmatprep.subr.bf16.mxu0 0
        %1179 = vmatpush1.bf16.msra.mxu0 0
        %1180 = vmatprep.subr.bf16.mxu0 0
        %1181 = vmatpush1.bf16.msra.mxu0 0
        %1182 = vmatprep.subr.bf16.mxu0 0
        %1183 = vmatpush1.bf16.msra.mxu0 0
        %1184 = vmatprep.subr.bf16.mxu0 0
        %1185 = vmatpush1.bf16.msra.mxu0 0
        %1186 = vmatprep.subr.bf16.mxu0 0
        %1187 = vmatpush1.bf16.msra.mxu0 0
        %1188 = vmatprep.subr.bf16.mxu0 0
        %1189 = vmatpush1.bf16.msra.mxu0 0
        %1190 = vmatprep.subr.bf16.mxu0 0
        %1191 = vmatpush1.bf16.msra.mxu0 0
        %1192 = vmatprep.subr.bf16.mxu0 0
        %1193 = vmatpush1.bf16.msra.mxu0 0
        %1194 = vmatprep.mubr.bf16.mxu0 0
        %1195 = vmatmul.mubr.bf16.gmra.mrb[0].mxu0 %v1150
        %v1196 = vpop.f32.mrb[0].mxu0
        %v1197 = vadd.f32 %v1161, %v1196
        %v1198 = vpop.f32.mrb[0].mxu0
        %v1199 = vpop.f32.mrb[0].mxu0
        %v1200 = vadd.f32 %v1161, %v1199
        %v1201 = vpop.f32.mrb[0].mxu0
        %1202 = vmatprep.mubr.bf16.mxu0 0
        %1203 = vmatmul.mubr.bf16.gmra.mrb[0].mxu0 %v1151
        %v1204 = vpop.f32.mrb[0].mxu0
        %v1205 = vadd.f32 %v1161, %v1204
        %v1206 = vpop.f32.mrb[0].mxu0
        %v1207 = vpop.f32.mrb[0].mxu0
        %v1208 = vadd.f32 %v1161, %v1207
        %v1209 = vpop.f32.mrb[0].mxu0
        %1210 = vmatprep.mubr.bf16.mxu0 0
        %1211 = vmatmul.mubr.bf16.gmra.mrb[0].mxu0 %v1152
        %v1212 = vpop.f32.mrb[0].mxu0
        %v1213 = vadd.f32 %v1161, %v1212
        %v1214 = vpop.f32.mrb[0].mxu0
        %v1215 = vpop.f32.mrb[0].mxu0
        %v1216 = vadd.f32 %v1161, %v1215
        %v1217 = vpop.f32.mrb[0].mxu0
        %1218 = vmatprep.mubr.bf16.mxu0 0
        %1219 = vmatmul.mubr.bf16.gmra.mrb[0].mxu0 %v1153
        %v1220 = vpop.f32.mrb[0].mxu0
        %v1221 = vadd.f32 %v1161, %v1220
        %v1222 = vpop.f32.mrb[0].mxu0
        %v1223 = vpop.f32.mrb[0].mxu0
        %v1224 = vadd.f32 %v1161, %v1223
        %v1225 = vpop.f32.mrb[0].mxu0
        %1226 = vmatprep.mubr.bf16.mxu0 0
        %1227 = vmatmul.mubr.bf16.gmra.mrb[0].mxu0 %v1154
        %v1228 = vpop.f32.mrb[0].mxu0
        %v1229 = vadd.f32 %v1161, %v1228
        %v1230 = vpop.f32.mrb[0].mxu0
        %v1231 = vpop.f32.mrb[0].mxu0
        %v1232 = vadd.f32 %v1161, %v1231
        %v1233 = vpop.f32.mrb[0].mxu0
        %1234 = vmatprep.mubr.bf16.mxu0 0
        %1235 = vmatmul.mubr.bf16.gmra.mrb[0].mxu0 %v1155
        %v1236 = vpop.f32.mrb[0].mxu0
        %v1237 = vadd.f32 %v1161, %v1236
        %v1238 = vpop.f32.mrb[0].mxu0
        %v1239 = vpop.f32.mrb[0].mxu0
        %v1240 = vadd.f32 %v1161, %v1239
        %v1241 = vpop.f32.mrb[0].mxu0
        %1242 = vmatprep.mubr.bf16.mxu0 0
        %1243 = vmatmul.mubr.bf16.gmra.mrb[0].mxu0 %v1156
        %v1244 = vpop.f32.mrb[0].mxu0
        %v1245 = vadd.f32 %v1161, %v1244
        %v1246 = vpop.f32.mrb[0].mxu0
        %v1247 = vpop.f32.mrb[0].mxu0
        %v1248 = vadd.f32 %v1161, %v1247
        %v1249 = vpop.f32.mrb[0].mxu0
        %1250 = vmatprep.mubr.bf16.mxu0 0
        %1251 = vmatmul.mubr.bf16.gmra.mrb[0].mxu0 %v1157
        %v1252 = vpop.f32.mrb[0].mxu0
        %v1253 = vadd.f32 %v1161, %v1252
        %v1254 = vpop.f32.mrb[0].mxu0
        %v1255 = vpop.f32.mrb[0].mxu0
        %v1256 = vadd.f32 %v1161, %v1255
        %v1257 = vpop.f32.mrb[0].mxu0
        %1258 = vdwg.mxu0
        %1259 = vmax.xlane.f32.xlu0 %v1197
        %v1260 = vpop.xlane.xlu0 %1259
        %1261 = vmax.xlane.f32.xlu0 %v1200
        %v1262 = vpop.xlane.xlu0 %1261
        %1263 = vmax.xlane.f32.xlu0 %v1205
        %v1264 = vpop.xlane.xlu0 %1263
        %1265 = vmax.xlane.f32.xlu0 %v1208
        %v1266 = vpop.xlane.xlu0 %1265
        %1267 = vmax.xlane.f32.xlu0 %v1213
        %v1268 = vpop.xlane.xlu0 %1267
        %1269 = vmax.xlane.f32.xlu0 %v1216
        %v1270 = vpop.xlane.xlu0 %1269
        %1271 = vmax.xlane.f32.xlu0 %v1221
        %v1272 = vpop.xlane.xlu0 %1271
        %1273 = vmax.xlane.f32.xlu0 %v1224
        %v1274 = vpop.xlane.xlu0 %1273
        %1275 = vmax.xlane.f32.xlu0 %v1229
        %v1276 = vpop.xlane.xlu0 %1275
        %1277 = vmax.xlane.f32.xlu0 %v1232
        %v1278 = vpop.xlane.xlu0 %1277
        %1279 = vmax.xlane.f32.xlu0 %v1237
        %v1280 = vpop.xlane.xlu0 %1279
        %1281 = vmax.xlane.f32.xlu0 %v1240
        %v1282 = vpop.xlane.xlu0 %1281
        %1283 = vmax.xlane.f32.xlu0 %v1245
        %v1284 = vpop.xlane.xlu0 %1283
        %1285 = vmax.xlane.f32.xlu0 %v1248
        %v1286 = vpop.xlane.xlu0 %1285
        %1287 = vmax.xlane.f32.xlu0 %v1253
        %v1288 = vpop.xlane.xlu0 %1287
        %1289 = vmax.xlane.f32.xlu0 %v1256
        %v1290 = vpop.xlane.xlu0 %1289
        %v1291 = vsub.f32 %v1197, %v1260
        %v1292 = vsub.f32 %v1200, %v1262
        %v1293 = vsub.f32 %v1205, %v1264
        %v1294 = vsub.f32 %v1208, %v1266
        %v1295 = vsub.f32 %v1213, %v1268
        %v1296 = vsub.f32 %v1216, %v1270
        %v1297 = vsub.f32 %v1221, %v1272
        %v1298 = vsub.f32 %v1224, %v1274
        %v1299 = vsub.f32 %v1229, %v1276
        %v1300 = vsub.f32 %v1232, %v1278
        %v1301 = vsub.f32 %v1237, %v1280
        %v1302 = vsub.f32 %v1240, %v1282
        %v1303 = vsub.f32 %v1245, %v1284
        %v1304 = vsub.f32 %v1248, %v1286
        %v1305 = vsub.f32 %v1253, %v1288
        %v1306 = vsub.f32 %v1256, %v1290
        %v1307 = vmul.f32 %v1291, 1.442695
        %v1308 = vpow.pop %v1307
        %v1309 = vmul.f32 %v1292, 1.442695
        %v1310 = vpow.pop %v1309
        %v1311 = vmul.f32 %v1293, 1.442695
        %v1312 = vpow.pop %v1311
        %v1313 = vmul.f32 %v1294, 1.442695
        %v1314 = vpow.pop %v1313
        %v1315 = vmul.f32 %v1295, 1.442695
        %v1316 = vpow.pop %v1315
        %v1317 = vmul.f32 %v1296, 1.442695
        %v1318 = vpow.pop %v1317
        %v1319 = vmul.f32 %v1297, 1.442695
        %v1320 = vpow.pop %v1319
        %v1321 = vmul.f32 %v1298, 1.442695
        %v1322 = vpow.pop %v1321
        %v1323 = vmul.f32 %v1299, 1.442695
        %v1324 = vpow.pop %v1323
        %v1325 = vmul.f32 %v1300, 1.442695
        %v1326 = vpow.pop %v1325
        %v1327 = vmul.f32 %v1301, 1.442695
        %v1328 = vpow.pop %v1327
        %v1329 = vmul.f32 %v1302, 1.442695
        %v1330 = vpow.pop %v1329
        %v1331 = vmul.f32 %v1303, 1.442695
        %v1332 = vpow.pop %v1331
        %v1333 = vmul.f32 %v1304, 1.442695
        %v1334 = vpow.pop %v1333
        %v1335 = vmul.f32 %v1305, 1.442695
        %v1336 = vpow.pop %v1335
        %v1337 = vmul.f32 %v1306, 1.442695
        %v1338 = vpow.pop %v1337
        %1339 = vadd.xlane.f32.xlu0 %v1308
        %v1340 = vpop.xlane.xlu0 %1339
        %1341 = vadd.xlane.f32.xlu0 %v1310
        %v1342 = vpop.xlane.xlu0 %1341
        %1343 = vadd.xlane.f32.xlu0 %v1312
        %v1344 = vpop.xlane.xlu0 %1343
        %1345 = vadd.xlane.f32.xlu0 %v1314
        %v1346 = vpop.xlane.xlu0 %1345
        %1347 = vadd.xlane.f32.xlu0 %v1316
        %v1348 = vpop.xlane.xlu0 %1347
        %1349 = vadd.xlane.f32.xlu0 %v1318
        %v1350 = vpop.xlane.xlu0 %1349
        %1351 = vadd.xlane.f32.xlu0 %v1320
        %v1352 = vpop.xlane.xlu0 %1351
        %1353 = vadd.xlane.f32.xlu0 %v1322
        %v1354 = vpop.xlane.xlu0 %1353
        %1355 = vadd.xlane.f32.xlu0 %v1324
        %v1356 = vpop.xlane.xlu0 %1355
        %1357 = vadd.xlane.f32.xlu0 %v1326
        %v1358 = vpop.xlane.xlu0 %1357
        %1359 = vadd.xlane.f32.xlu0 %v1328
        %v1360 = vpop.xlane.xlu0 %1359
        %1361 = vadd.xlane.f32.xlu0 %v1330
        %v1362 = vpop.xlane.xlu0 %1361
        %1363 = vadd.xlane.f32.xlu0 %v1332
        %v1364 = vpop.xlane.xlu0 %1363
        %1365 = vadd.xlane.f32.xlu0 %v1334
        %v1366 = vpop.xlane.xlu0 %1365
        %1367 = vadd.xlane.f32.xlu0 %v1336
        %v1368 = vpop.xlane.xlu0 %1367
        %1369 = vadd.xlane.f32.xlu0 %v1338
        %v1370 = vpop.xlane.xlu0 %1369
        %v1371 = vrcp.pop %v1340
        %v1372 = vrcp.pop %v1342
        %v1373 = vrcp.pop %v1344
        %v1374 = vrcp.pop %v1346
        %v1375 = vrcp.pop %v1348
        %v1376 = vrcp.pop %v1350
        %v1377 = vrcp.pop %v1352
        %v1378 = vrcp.pop %v1354
        %v1379 = vrcp.pop %v1356
        %v1380 = vrcp.pop %v1358
        %v1381 = vrcp.pop %v1360
        %v1382 = vrcp.pop %v1362
        %v1383 = vrcp.pop %v1364
        %v1384 = vrcp.pop %v1366
        %v1385 = vrcp.pop %v1368
        %v1386 = vrcp.pop %v1370
        %v1387 = vmul.f32 %v1308, %v1371
        %v1388 = vmul.f32 %v1310, %v1372
        %v1389 = vmul.f32 %v1312, %v1373
        %v1390 = vmul.f32 %v1314, %v1374
        %v1391 = vmul.f32 %v1316, %v1375
        %v1392 = vmul.f32 %v1318, %v1376
        %v1393 = vmul.f32 %v1320, %v1377
        %v1394 = vmul.f32 %v1322, %v1378
        %v1395 = vmul.f32 %v1324, %v1379
        %v1396 = vmul.f32 %v1326, %v1380
        %v1397 = vmul.f32 %v1328, %v1381
        %v1398 = vmul.f32 %v1330, %v1382
        %v1399 = vmul.f32 %v1332, %v1383
        %v1400 = vmul.f32 %v1334, %v1384
        %v1401 = vmul.f32 %v1336, %v1385
        %v1402 = vmul.f32 %v1338, %v1386
        %v1403 = vpack.c.bf16 %v1388, %v1387
        %v1404 = vpack.c.bf16 %v1390, %v1389
        %v1405 = vpack.c.bf16 %v1392, %v1391
        %v1406 = vpack.c.bf16 %v1394, %v1393
        %v1407 = vpack.c.bf16 %v1396, %v1395
        %v1408 = vpack.c.bf16 %v1398, %v1397
        %v1409 = vpack.c.bf16 %v1400, %v1399
        %v1410 = vpack.c.bf16 %v1402, %v1401
        %s1411 = scalar_lea.vmem %s364, 64 [#allocation8]
        %v1412 = vld [vmem:[%s1411] sm:$0xf]
        %v1413 = vld [vmem:[%s1411 + $0x4] sm:$0xf]
        %v1414 = vld [vmem:[%s1411 + $0x8] sm:$0xf]
        %v1415 = vld [vmem:[%s1411 + $0xc] sm:$0xf]
        %v1416 = vld [vmem:[%s1411 + $0x10] sm:$0xf]
        %v1417 = vld [vmem:[%s1411 + $0x14] sm:$0xf]
        %v1418 = vld [vmem:[%s1411 + $0x18] sm:$0xf]
        %v1419 = vld [vmem:[%s1411 + $0x1c] sm:$0xf]
        %v1420 = vld [vmem:[%s1411 + $0x20] sm:$0xf]
        %v1421 = vld [vmem:[%s1411 + $0x24] sm:$0xf]
        %v1422 = vld [vmem:[%s1411 + $0x28] sm:$0xf]
        %v1423 = vld [vmem:[%s1411 + $0x2c] sm:$0xf]
        %v1424 = vld [vmem:[%s1411 + $0x30] sm:$0xf]
        %v1425 = vld [vmem:[%s1411 + $0x34] sm:$0xf]
        %v1426 = vld [vmem:[%s1411 + $0x38] sm:$0xf]
        %v1427 = vld [vmem:[%s1411 + $0x3c] sm:$0xf]
        %v1444 = vunpack.c.l.b16 %v1412
        %v1445 = vunpack.c.l.b16 %v1413
        %v1446 = vunpack.c.l.b16 %v1414
        %v1447 = vunpack.c.l.b16 %v1415
        %v1448 = vunpack.c.l.b16 %v1416
        %v1449 = vunpack.c.l.b16 %v1417
        %v1450 = vunpack.c.l.b16 %v1418
        %v1451 = vunpack.c.l.b16 %v1419
        %v1452 = vunpack.c.l.b16 %v1420
        %v1453 = vunpack.c.l.b16 %v1421
        %v1454 = vunpack.c.l.b16 %v1422
        %v1455 = vunpack.c.l.b16 %v1423
        %v1456 = vunpack.c.l.b16 %v1424
        %v1457 = vunpack.c.l.b16 %v1425
        %v1458 = vunpack.c.l.b16 %v1426
        %v1459 = vunpack.c.l.b16 %v1427
        %v1460 = vpack.c.b16 %v1445, %v1444
        %v1461 = vpack.c.b16 %v1447, %v1446
        %v1462 = vpack.c.b16 %v1449, %v1448
        %v1463 = vpack.c.b16 %v1451, %v1450
        %v1464 = vpack.c.b16 %v1453, %v1452
        %v1465 = vpack.c.b16 %v1455, %v1454
        %v1466 = vpack.c.b16 %v1457, %v1456
        %v1467 = vpack.c.b16 %v1459, %v1458
        %1476 = vmatprep.subr.bf16.mxu0 0
        %1477 = vmatpush1.bf16.msra.mxu0 %v1460
        %1478 = vmatprep.subr.bf16.mxu0 0
        %1479 = vmatpush1.bf16.msra.mxu0 %v1461
        %1480 = vmatprep.subr.bf16.mxu0 0
        %1481 = vmatpush1.bf16.msra.mxu0 %v1462
        %1482 = vmatprep.subr.bf16.mxu0 0
        %1483 = vmatpush1.bf16.msra.mxu0 %v1463
        %1484 = vmatprep.subr.bf16.mxu0 0
        %1485 = vmatpush1.bf16.msra.mxu0 %v1464
        %1486 = vmatprep.subr.bf16.mxu0 0
        %1487 = vmatpush1.bf16.msra.mxu0 %v1465
        %1488 = vmatprep.subr.bf16.mxu0 0
        %1489 = vmatpush1.bf16.msra.mxu0 %v1466
        %1490 = vmatprep.subr.bf16.mxu0 0
        %1491 = vmatpush1.bf16.msra.mxu0 %v1467
        %1492 = vmatprep.subr.bf16.mxu0 0
        %1493 = vmatpush1.bf16.msra.mxu0 0
        %1494 = vmatprep.subr.bf16.mxu0 0
        %1495 = vmatpush1.bf16.msra.mxu0 0
        %1496 = vmatprep.subr.bf16.mxu0 0
        %1497 = vmatpush1.bf16.msra.mxu0 0
        %1498 = vmatprep.subr.bf16.mxu0 0
        %1499 = vmatpush1.bf16.msra.mxu0 0
        %1500 = vmatprep.subr.bf16.mxu0 0
        %1501 = vmatpush1.bf16.msra.mxu0 0
        %1502 = vmatprep.subr.bf16.mxu0 0
        %1503 = vmatpush1.bf16.msra.mxu0 0
        %1504 = vmatprep.subr.bf16.mxu0 0
        %1505 = vmatpush1.bf16.msra.mxu0 0
        %1506 = vmatprep.subr.bf16.mxu0 0
        %1507 = vmatpush1.bf16.msra.mxu0 0
        %1508 = vmatprep.mubr.bf16.mxu0 0
        %1509 = vmatmul.mubr.bf16.gmra.mrb[0].mxu0 %v1403
        %v1510 = vpop.f32.mrb[0].mxu0
        %v1511 = vadd.f32 0.0, %v1510
        %v1512 = vpop.f32.mrb[0].mxu0
        %v1513 = vpop.f32.mrb[0].mxu0
        %v1514 = vadd.f32 0.0, %v1513
        %v1515 = vpop.f32.mrb[0].mxu0
        %1516 = vmatprep.mubr.bf16.mxu0 0
        %1517 = vmatmul.mubr.bf16.gmra.mrb[0].mxu0 %v1404
        %v1518 = vpop.f32.mrb[0].mxu0
        %v1519 = vadd.f32 0.0, %v1518
        %v1520 = vpop.f32.mrb[0].mxu0
        %v1521 = vpop.f32.mrb[0].mxu0
        %v1522 = vadd.f32 0.0, %v1521
        %v1523 = vpop.f32.mrb[0].mxu0
        %1524 = vmatprep.mubr.bf16.mxu0 0
        %1525 = vmatmul.mubr.bf16.gmra.mrb[0].mxu0 %v1405
        %v1526 = vpop.f32.mrb[0].mxu0
        %v1527 = vadd.f32 0.0, %v1526
        %v1528 = vpop.f32.mrb[0].mxu0
        %v1529 = vpop.f32.mrb[0].mxu0
        %v1530 = vadd.f32 0.0, %v1529
        %v1531 = vpop.f32.mrb[0].mxu0
        %1532 = vmatprep.mubr.bf16.mxu0 0
        %1533 = vmatmul.mubr.bf16.gmra.mrb[0].mxu0 %v1406
        %v1534 = vpop.f32.mrb[0].mxu0
        %v1535 = vadd.f32 0.0, %v1534
        %v1536 = vpop.f32.mrb[0].mxu0
        %v1537 = vpop.f32.mrb[0].mxu0
        %v1538 = vadd.f32 0.0, %v1537
        %v1539 = vpop.f32.mrb[0].mxu0
        %1540 = vmatprep.mubr.bf16.mxu0 0
        %1541 = vmatmul.mubr.bf16.gmra.mrb[0].mxu0 %v1407
        %v1542 = vpop.f32.mrb[0].mxu0
        %v1543 = vadd.f32 0.0, %v1542
        %v1544 = vpop.f32.mrb[0].mxu0
        %v1545 = vpop.f32.mrb[0].mxu0
        %v1546 = vadd.f32 0.0, %v1545
        %v1547 = vpop.f32.mrb[0].mxu0
        %1548 = vmatprep.mubr.bf16.mxu0 0
        %1549 = vmatmul.mubr.bf16.gmra.mrb[0].mxu0 %v1408
        %v1550 = vpop.f32.mrb[0].mxu0
        %v1551 = vadd.f32 0.0, %v1550
        %v1552 = vpop.f32.mrb[0].mxu0
        %v1553 = vpop.f32.mrb[0].mxu0
        %v1554 = vadd.f32 0.0, %v1553
        %v1555 = vpop.f32.mrb[0].mxu0
        %1556 = vmatprep.mubr.bf16.mxu0 0
        %1557 = vmatmul.mubr.bf16.gmra.mrb[0].mxu0 %v1409
        %v1558 = vpop.f32.mrb[0].mxu0
        %v1559 = vadd.f32 0.0, %v1558
        %v1560 = vpop.f32.mrb[0].mxu0
        %v1561 = vpop.f32.mrb[0].mxu0
        %v1562 = vadd.f32 0.0, %v1561
        %v1563 = vpop.f32.mrb[0].mxu0
        %1564 = vmatprep.mubr.bf16.mxu0 0
        %1565 = vmatmul.mubr.bf16.gmra.mrb[0].mxu0 %v1410
        %v1566 = vpop.f32.mrb[0].mxu0
        %v1567 = vadd.f32 0.0, %v1566
        %v1568 = vpop.f32.mrb[0].mxu0
        %v1569 = vpop.f32.mrb[0].mxu0
        %v1570 = vadd.f32 0.0, %v1569
        %v1571 = vpop.f32.mrb[0].mxu0
        %1572 = vdwg.mxu0
        %v1589 = vunpack.c.l.b16 %v972
        %v1590 = vunpack.c.l.b16 %v973
        %v1591 = vunpack.c.l.b16 %v974
        %v1592 = vunpack.c.l.b16 %v975
        %v1593 = vunpack.c.l.b16 %v976
        %v1594 = vunpack.c.l.b16 %v977
        %v1595 = vunpack.c.l.b16 %v978
        %v1596 = vunpack.c.l.b16 %v979
        %v1597 = vunpack.c.l.b16 %v980
        %v1598 = vunpack.c.l.b16 %v981
        %v1599 = vunpack.c.l.b16 %v982
        %v1600 = vunpack.c.l.b16 %v983
        %v1601 = vunpack.c.l.b16 %v984
        %v1602 = vunpack.c.l.b16 %v985
        %v1603 = vunpack.c.l.b16 %v986
        %v1604 = vunpack.c.l.b16 %v987
        %v1605 = vpack.c.b16 %v1590, %v1589
        %v1606 = vpack.c.b16 %v1592, %v1591
        %v1607 = vpack.c.b16 %v1594, %v1593
        %v1608 = vpack.c.b16 %v1596, %v1595
        %v1609 = vpack.c.b16 %v1598, %v1597
        %v1610 = vpack.c.b16 %v1600, %v1599
        %v1611 = vpack.c.b16 %v1602, %v1601
        %v1612 = vpack.c.b16 %v1604, %v1603
        %1621 = vmatprep.subr.bf16.mxu0 0
        %1622 = vmatpush1.bf16.msra.mxu0 %v1605
        %1623 = vmatprep.subr.bf16.mxu0 0
        %1624 = vmatpush1.bf16.msra.mxu0 %v1606
        %1625 = vmatprep.subr.bf16.mxu0 0
        %1626 = vmatpush1.bf16.msra.mxu0 %v1607
        %1627 = vmatprep.subr.bf16.mxu0 0
        %1628 = vmatpush1.bf16.msra.mxu0 %v1608
        %1629 = vmatprep.subr.bf16.mxu0 0
        %1630 = vmatpush1.bf16.msra.mxu0 %v1609
        %1631 = vmatprep.subr.bf16.mxu0 0
        %1632 = vmatpush1.bf16.msra.mxu0 %v1610
        %1633 = vmatprep.subr.bf16.mxu0 0
        %1634 = vmatpush1.bf16.msra.mxu0 %v1611
        %1635 = vmatprep.subr.bf16.mxu0 0
        %1636 = vmatpush1.bf16.msra.mxu0 %v1612
        %1637 = vmatprep.subr.bf16.mxu0 0
        %1638 = vmatpush1.bf16.msra.mxu0 0
        %1639 = vmatprep.subr.bf16.mxu0 0
        %1640 = vmatpush1.bf16.msra.mxu0 0
        %1641 = vmatprep.subr.bf16.mxu0 0
        %1642 = vmatpush1.bf16.msra.mxu0 0
        %1643 = vmatprep.subr.bf16.mxu0 0
        %1644 = vmatpush1.bf16.msra.mxu0 0
        %1645 = vmatprep.subr.bf16.mxu0 0
        %1646 = vmatpush1.bf16.msra.mxu0 0
        %1647 = vmatprep.subr.bf16.mxu0 0
        %1648 = vmatpush1.bf16.msra.mxu0 0
        %1649 = vmatprep.subr.bf16.mxu0 0
        %1650 = vmatpush1.bf16.msra.mxu0 0
        %1651 = vmatprep.subr.bf16.mxu0 0
        %1652 = vmatpush1.bf16.msra.mxu0 0
        %1653 = vmatprep.mubr.bf16.mxu0 0
        %1654 = vmatmul.mubr.bf16.gmra.mrb[0].mxu0 %v964
        %v1655 = vpop.f32.mrb[0].mxu0
        %v1656 = vadd.f32 %v1511, %v1655
        %v1657 = vpop.f32.mrb[0].mxu0
        %v1658 = vpop.f32.mrb[0].mxu0
        %v1659 = vadd.f32 %v1514, %v1658
        %v1660 = vpop.f32.mrb[0].mxu0
        %1661 = vmatprep.mubr.bf16.mxu0 0
        %1662 = vmatmul.mubr.bf16.gmra.mrb[0].mxu0 %v965
        %v1663 = vpop.f32.mrb[0].mxu0
        %v1664 = vadd.f32 %v1519, %v1663
        %v1665 = vpop.f32.mrb[0].mxu0
        %v1666 = vpop.f32.mrb[0].mxu0
        %v1667 = vadd.f32 %v1522, %v1666
        %v1668 = vpop.f32.mrb[0].mxu0
        %1669 = vmatprep.mubr.bf16.mxu0 0
        %1670 = vmatmul.mubr.bf16.gmra.mrb[0].mxu0 %v966
        %v1671 = vpop.f32.mrb[0].mxu0
        %v1672 = vadd.f32 %v1527, %v1671
        %v1673 = vpop.f32.mrb[0].mxu0
        %v1674 = vpop.f32.mrb[0].mxu0
        %v1675 = vadd.f32 %v1530, %v1674
        %v1676 = vpop.f32.mrb[0].mxu0
        %1677 = vmatprep.mubr.bf16.mxu0 0
        %1678 = vmatmul.mubr.bf16.gmra.mrb[0].mxu0 %v967
        %v1679 = vpop.f32.mrb[0].mxu0
        %v1680 = vadd.f32 %v1535, %v1679
        %v1681 = vpop.f32.mrb[0].mxu0
        %v1682 = vpop.f32.mrb[0].mxu0
        %v1683 = vadd.f32 %v1538, %v1682
        %v1684 = vpop.f32.mrb[0].mxu0
        %1685 = vmatprep.mubr.bf16.mxu0 0
        %1686 = vmatmul.mubr.bf16.gmra.mrb[0].mxu0 %v968
        %v1687 = vpop.f32.mrb[0].mxu0
        %v1688 = vadd.f32 %v1543, %v1687
        %v1689 = vpop.f32.mrb[0].mxu0
        %v1690 = vpop.f32.mrb[0].mxu0
        %v1691 = vadd.f32 %v1546, %v1690
        %v1692 = vpop.f32.mrb[0].mxu0
        %1693 = vmatprep.mubr.bf16.mxu0 0
        %1694 = vmatmul.mubr.bf16.gmra.mrb[0].mxu0 %v969
        %v1695 = vpop.f32.mrb[0].mxu0
        %v1696 = vadd.f32 %v1551, %v1695
        %v1697 = vpop.f32.mrb[0].mxu0
        %v1698 = vpop.f32.mrb[0].mxu0
        %v1699 = vadd.f32 %v1554, %v1698
        %v1700 = vpop.f32.mrb[0].mxu0
        %1701 = vmatprep.mubr.bf16.mxu0 0
        %1702 = vmatmul.mubr.bf16.gmra.mrb[0].mxu0 %v970
        %v1703 = vpop.f32.mrb[0].mxu0
        %v1704 = vadd.f32 %v1559, %v1703
        %v1705 = vpop.f32.mrb[0].mxu0
        %v1706 = vpop.f32.mrb[0].mxu0
        %v1707 = vadd.f32 %v1562, %v1706
        %v1708 = vpop.f32.mrb[0].mxu0
        %1709 = vmatprep.mubr.bf16.mxu0 0
        %1710 = vmatmul.mubr.bf16.gmra.mrb[0].mxu0 %v971
        %v1711 = vpop.f32.mrb[0].mxu0
        %v1712 = vadd.f32 %v1567, %v1711
        %v1713 = vpop.f32.mrb[0].mxu0
        %v1714 = vpop.f32.mrb[0].mxu0
        %v1715 = vadd.f32 %v1570, %v1714
        %v1716 = vpop.f32.mrb[0].mxu0
        %1717 = vdwg.mxu0
        %s1718 = scalar_lea.vmem [#allocation7], 128
        %v1719 = vld [vmem:[%s1718] sm:$0xf]
        %v1720 = vld [vmem:[%s1718 + $0x4] sm:$0xf]
        %v1721 = vld [vmem:[%s1718 + $0x8] sm:$0xf]
        %v1722 = vld [vmem:[%s1718 + $0xc] sm:$0xf]
        %v1723 = vld [vmem:[%s1718 + $0x10] sm:$0xf]
        %v1724 = vld [vmem:[%s1718 + $0x14] sm:$0xf]
        %v1725 = vld [vmem:[%s1718 + $0x18] sm:$0xf]
        %v1726 = vld [vmem:[%s1718 + $0x1c] sm:$0xf]
        %v1727 = vld [vmem:[%s1718 + $0x20] sm:$0xf]
        %v1728 = vld [vmem:[%s1718 + $0x24] sm:$0xf]
        %v1729 = vld [vmem:[%s1718 + $0x28] sm:$0xf]
        %v1730 = vld [vmem:[%s1718 + $0x2c] sm:$0xf]
        %v1731 = vld [vmem:[%s1718 + $0x30] sm:$0xf]
        %v1732 = vld [vmem:[%s1718 + $0x34] sm:$0xf]
        %v1733 = vld [vmem:[%s1718 + $0x38] sm:$0xf]
        %v1734 = vld [vmem:[%s1718 + $0x3c] sm:$0xf]
        %v1751 = vunpack.c.l.b16 %v1719
        %v1752 = vunpack.c.l.b16 %v1720
        %v1753 = vunpack.c.l.b16 %v1721
        %v1754 = vunpack.c.l.b16 %v1722
        %v1755 = vunpack.c.l.b16 %v1723
        %v1756 = vunpack.c.l.b16 %v1724
        %v1757 = vunpack.c.l.b16 %v1725
        %v1758 = vunpack.c.l.b16 %v1726
        %v1759 = vunpack.c.l.b16 %v1727
        %v1760 = vunpack.c.l.b16 %v1728
        %v1761 = vunpack.c.l.b16 %v1729
        %v1762 = vunpack.c.l.b16 %v1730
        %v1763 = vunpack.c.l.b16 %v1731
        %v1764 = vunpack.c.l.b16 %v1732
        %v1765 = vunpack.c.l.b16 %v1733
        %v1766 = vunpack.c.l.b16 %v1734
        %v1767 = vpack.c.b16 %v1752, %v1751
        %v1768 = vpack.c.b16 %v1754, %v1753
        %v1769 = vpack.c.b16 %v1756, %v1755
        %v1770 = vpack.c.b16 %v1758, %v1757
        %v1771 = vpack.c.b16 %v1760, %v1759
        %v1772 = vpack.c.b16 %v1762, %v1761
        %v1773 = vpack.c.b16 %v1764, %v1763
        %v1774 = vpack.c.b16 %v1766, %v1765
        %1783 = vmatprep.subr.bf16.mxu0 0
        %1784 = vmatpush1.bf16.msra.mxu0 %v1767
        %1785 = vmatprep.subr.bf16.mxu0 0
        %1786 = vmatpush1.bf16.msra.mxu0 %v1768
        %1787 = vmatprep.subr.bf16.mxu0 0
        %1788 = vmatpush1.bf16.msra.mxu0 %v1769
        %1789 = vmatprep.subr.bf16.mxu0 0
        %1790 = vmatpush1.bf16.msra.mxu0 %v1770
        %1791 = vmatprep.subr.bf16.mxu0 0
        %1792 = vmatpush1.bf16.msra.mxu0 %v1771
        %1793 = vmatprep.subr.bf16.mxu0 0
        %1794 = vmatpush1.bf16.msra.mxu0 %v1772
        %1795 = vmatprep.subr.bf16.mxu0 0
        %1796 = vmatpush1.bf16.msra.mxu0 %v1773
        %1797 = vmatprep.subr.bf16.mxu0 0
        %1798 = vmatpush1.bf16.msra.mxu0 %v1774
        %1799 = vmatprep.subr.bf16.mxu0 0
        %1800 = vmatpush1.bf16.msra.mxu0 0
        %1801 = vmatprep.subr.bf16.mxu0 0
        %1802 = vmatpush1.bf16.msra.mxu0 0
        %1803 = vmatprep.subr.bf16.mxu0 0
        %1804 = vmatpush1.bf16.msra.mxu0 0
        %1805 = vmatprep.subr.bf16.mxu0 0
        %1806 = vmatpush1.bf16.msra.mxu0 0
        %1807 = vmatprep.subr.bf16.mxu0 0
        %1808 = vmatpush1.bf16.msra.mxu0 0
        %1809 = vmatprep.subr.bf16.mxu0 0
        %1810 = vmatpush1.bf16.msra.mxu0 0
        %1811 = vmatprep.subr.bf16.mxu0 0
        %1812 = vmatpush1.bf16.msra.mxu0 0
        %1813 = vmatprep.subr.bf16.mxu0 0
        %1814 = vmatpush1.bf16.msra.mxu0 0
        %1815 = vmatprep.mubr.bf16.mxu0 0
        %1816 = vmatmul.mubr.bf16.gmra.mrb[0].mxu0 %v502
        %v1817 = vpop.f32.mrb[0].mxu0
        %v1818 = vadd.f32 0.0, %v1817
        %v1819 = vpop.f32.mrb[0].mxu0
        %v1820 = vpop.f32.mrb[0].mxu0
        %v1821 = vadd.f32 0.0, %v1820
        %v1822 = vpop.f32.mrb[0].mxu0
        %1823 = vmatprep.mubr.bf16.mxu0 0
        %1824 = vmatmul.mubr.bf16.gmra.mrb[0].mxu0 %v503
        %v1825 = vpop.f32.mrb[0].mxu0
        %v1826 = vadd.f32 0.0, %v1825
        %v1827 = vpop.f32.mrb[0].mxu0
        %v1828 = vpop.f32.mrb[0].mxu0
        %v1829 = vadd.f32 0.0, %v1828
        %v1830 = vpop.f32.mrb[0].mxu0
        %1831 = vmatprep.mubr.bf16.mxu0 0
        %1832 = vmatmul.mubr.bf16.gmra.mrb[0].mxu0 %v504
        %v1833 = vpop.f32.mrb[0].mxu0
        %v1834 = vadd.f32 0.0, %v1833
        %v1835 = vpop.f32.mrb[0].mxu0
        %v1836 = vpop.f32.mrb[0].mxu0
        %v1837 = vadd.f32 0.0, %v1836
        %v1838 = vpop.f32.mrb[0].mxu0
        %1839 = vmatprep.mubr.bf16.mxu0 0
        %1840 = vmatmul.mubr.bf16.gmra.mrb[0].mxu0 %v505
        %v1841 = vpop.f32.mrb[0].mxu0
        %v1842 = vadd.f32 0.0, %v1841
        %v1843 = vpop.f32.mrb[0].mxu0
        %v1844 = vpop.f32.mrb[0].mxu0
        %v1845 = vadd.f32 0.0, %v1844
        %v1846 = vpop.f32.mrb[0].mxu0
        %1847 = vmatprep.mubr.bf16.mxu0 0
        %1848 = vmatmul.mubr.bf16.gmra.mrb[0].mxu0 %v506
        %v1849 = vpop.f32.mrb[0].mxu0
        %v1850 = vadd.f32 0.0, %v1849
        %v1851 = vpop.f32.mrb[0].mxu0
        %v1852 = vpop.f32.mrb[0].mxu0
        %v1853 = vadd.f32 0.0, %v1852
        %v1854 = vpop.f32.mrb[0].mxu0
        %1855 = vmatprep.mubr.bf16.mxu0 0
        %1856 = vmatmul.mubr.bf16.gmra.mrb[0].mxu0 %v507
        %v1857 = vpop.f32.mrb[0].mxu0
        %v1858 = vadd.f32 0.0, %v1857
        %v1859 = vpop.f32.mrb[0].mxu0
        %v1860 = vpop.f32.mrb[0].mxu0
        %v1861 = vadd.f32 0.0, %v1860
        %v1862 = vpop.f32.mrb[0].mxu0
        %1863 = vmatprep.mubr.bf16.mxu0 0
        %1864 = vmatmul.mubr.bf16.gmra.mrb[0].mxu0 %v508
        %v1865 = vpop.f32.mrb[0].mxu0
        %v1866 = vadd.f32 0.0, %v1865
        %v1867 = vpop.f32.mrb[0].mxu0
        %v1868 = vpop.f32.mrb[0].mxu0
        %v1869 = vadd.f32 0.0, %v1868
        %v1870 = vpop.f32.mrb[0].mxu0
        %1871 = vmatprep.mubr.bf16.mxu0 0
        %1872 = vmatmul.mubr.bf16.gmra.mrb[0].mxu0 %v509
        %v1873 = vpop.f32.mrb[0].mxu0
        %v1874 = vadd.f32 0.0, %v1873
        %v1875 = vpop.f32.mrb[0].mxu0
        %v1876 = vpop.f32.mrb[0].mxu0
        %v1877 = vadd.f32 0.0, %v1876
        %v1878 = vpop.f32.mrb[0].mxu0
        %1879 = vdwg.mxu0
        %v1880 = vpack.c.bf16 %v1821, %v1818
        %v1881 = vpack.c.bf16 %v1829, %v1826
        %v1882 = vpack.c.bf16 %v1837, %v1834
        %v1883 = vpack.c.bf16 %v1845, %v1842
        %v1884 = vpack.c.bf16 %v1853, %v1850
        %v1885 = vpack.c.bf16 %v1861, %v1858
        %v1886 = vpack.c.bf16 %v1869, %v1866
        %v1887 = vpack.c.bf16 %v1877, %v1874
        %v1888 = vlaneseq
        %v1889 = vshrl.u32 %v1888, 7
        %v1890 = vsub.s32 2, %v1889
        %v1891 = vrot.slane %v453, %v1890
        %1892 = vmatprep.subr.bf16.mxu0 0
        %1893 = vmatpush1.bf16.msra.mxu0 %v707
        %1894 = vmatprep.subr.bf16.mxu0 0
        %1895 = vmatpush1.bf16.msra.mxu0 %v708
        %1896 = vmatprep.subr.bf16.mxu0 0
        %1897 = vmatpush1.bf16.msra.mxu0 %v709
        %1898 = vmatprep.subr.bf16.mxu0 0
        %1899 = vmatpush1.bf16.msra.mxu0 %v710
        %1900 = vmatprep.subr.bf16.mxu0 0
        %1901 = vmatpush1.bf16.msra.mxu0 %v711
        %1902 = vmatprep.subr.bf16.mxu0 0
        %1903 = vmatpush1.bf16.msra.mxu0 %v712
        %1904 = vmatprep.subr.bf16.mxu0 0
        %1905 = vmatpush1.bf16.msra.mxu0 %v713
        %1906 = vmatprep.subr.bf16.mxu0 0
        %1907 = vmatpush1.bf16.msra.mxu0 %v714
        %1908 = vmatprep.subr.bf16.mxu0 0
        %1909 = vmatpush1.bf16.msra.mxu0 0
        %1910 = vmatprep.subr.bf16.mxu0 0
        %1911 = vmatpush1.bf16.msra.mxu0 0
        %1912 = vmatprep.subr.bf16.mxu0 0
        %1913 = vmatpush1.bf16.msra.mxu0 0
        %1914 = vmatprep.subr.bf16.mxu0 0
        %1915 = vmatpush1.bf16.msra.mxu0 0
        %1916 = vmatprep.subr.bf16.mxu0 0
        %1917 = vmatpush1.bf16.msra.mxu0 0
        %1918 = vmatprep.subr.bf16.mxu0 0
        %1919 = vmatpush1.bf16.msra.mxu0 0
        %1920 = vmatprep.subr.bf16.mxu0 0
        %1921 = vmatpush1.bf16.msra.mxu0 0
        %1922 = vmatprep.subr.bf16.mxu0 0
        %1923 = vmatpush1.bf16.msra.mxu0 0
        %1924 = vmatprep.mubr.bf16.mxu0 0
        %1925 = vmatmul.mubr.bf16.gmra.mrb[0].mxu0 %v1880
        %v1926 = vpop.f32.mrb[0].mxu0
        %v1927 = vadd.f32 %v1891, %v1926
        %v1928 = vpop.f32.mrb[0].mxu0
        %v1929 = vpop.f32.mrb[0].mxu0
        %v1930 = vadd.f32 %v1891, %v1929
        %v1931 = vpop.f32.mrb[0].mxu0
        %1932 = vmatprep.mubr.bf16.mxu0 0
        %1933 = vmatmul.mubr.bf16.gmra.mrb[0].mxu0 %v1881
        %v1934 = vpop.f32.mrb[0].mxu0
        %v1935 = vadd.f32 %v1891, %v1934
        %v1936 = vpop.f32.mrb[0].mxu0
        %v1937 = vpop.f32.mrb[0].mxu0
        %v1938 = vadd.f32 %v1891, %v1937
        %v1939 = vpop.f32.mrb[0].mxu0
        %1940 = vmatprep.mubr.bf16.mxu0 0
        %1941 = vmatmul.mubr.bf16.gmra.mrb[0].mxu0 %v1882
        %v1942 = vpop.f32.mrb[0].mxu0
        %v1943 = vadd.f32 %v1891, %v1942
        %v1944 = vpop.f32.mrb[0].mxu0
        %v1945 = vpop.f32.mrb[0].mxu0
        %v1946 = vadd.f32 %v1891, %v1945
        %v1947 = vpop.f32.mrb[0].mxu0
        %1948 = vmatprep.mubr.bf16.mxu0 0
        %1949 = vmatmul.mubr.bf16.gmra.mrb[0].mxu0 %v1883
        %v1950 = vpop.f32.mrb[0].mxu0
        %v1951 = vadd.f32 %v1891, %v1950
        %v1952 = vpop.f32.mrb[0].mxu0
        %v1953 = vpop.f32.mrb[0].mxu0
        %v1954 = vadd.f32 %v1891, %v1953
        %v1955 = vpop.f32.mrb[0].mxu0
        %1956 = vmatprep.mubr.bf16.mxu0 0
        %1957 = vmatmul.mubr.bf16.gmra.mrb[0].mxu0 %v1884
        %v1958 = vpop.f32.mrb[0].mxu0
        %v1959 = vadd.f32 %v1891, %v1958
        %v1960 = vpop.f32.mrb[0].mxu0
        %v1961 = vpop.f32.mrb[0].mxu0
        %v1962 = vadd.f32 %v1891, %v1961
        %v1963 = vpop.f32.mrb[0].mxu0
        %1964 = vmatprep.mubr.bf16.mxu0 0
        %1965 = vmatmul.mubr.bf16.gmra.mrb[0].mxu0 %v1885
        %v1966 = vpop.f32.mrb[0].mxu0
        %v1967 = vadd.f32 %v1891, %v1966
        %v1968 = vpop.f32.mrb[0].mxu0
        %v1969 = vpop.f32.mrb[0].mxu0
        %v1970 = vadd.f32 %v1891, %v1969
        %v1971 = vpop.f32.mrb[0].mxu0
        %1972 = vmatprep.mubr.bf16.mxu0 0
        %1973 = vmatmul.mubr.bf16.gmra.mrb[0].mxu0 %v1886
        %v1974 = vpop.f32.mrb[0].mxu0
        %v1975 = vadd.f32 %v1891, %v1974
        %v1976 = vpop.f32.mrb[0].mxu0
        %v1977 = vpop.f32.mrb[0].mxu0
        %v1978 = vadd.f32 %v1891, %v1977
        %v1979 = vpop.f32.mrb[0].mxu0
        %1980 = vmatprep.mubr.bf16.mxu0 0
        %1981 = vmatmul.mubr.bf16.gmra.mrb[0].mxu0 %v1887
        %v1982 = vpop.f32.mrb[0].mxu0
        %v1983 = vadd.f32 %v1891, %v1982
        %v1984 = vpop.f32.mrb[0].mxu0
        %v1985 = vpop.f32.mrb[0].mxu0
        %v1986 = vadd.f32 %v1891, %v1985
        %v1987 = vpop.f32.mrb[0].mxu0
        %1988 = vdwg.mxu0
        %1989 = vmax.xlane.f32.xlu0 %v1927
        %v1990 = vpop.xlane.xlu0 %1989
        %1991 = vmax.xlane.f32.xlu0 %v1930
        %v1992 = vpop.xlane.xlu0 %1991
        %1993 = vmax.xlane.f32.xlu0 %v1935
        %v1994 = vpop.xlane.xlu0 %1993
        %1995 = vmax.xlane.f32.xlu0 %v1938
        %v1996 = vpop.xlane.xlu0 %1995
        %1997 = vmax.xlane.f32.xlu0 %v1943
        %v1998 = vpop.xlane.xlu0 %1997
        %1999 = vmax.xlane.f32.xlu0 %v1946
        %v2000 = vpop.xlane.xlu0 %1999
        %2001 = vmax.xlane.f32.xlu0 %v1951
        %v2002 = vpop.xlane.xlu0 %2001
        %2003 = vmax.xlane.f32.xlu0 %v1954
        %v2004 = vpop.xlane.xlu0 %2003
        %2005 = vmax.xlane.f32.xlu0 %v1959
        %v2006 = vpop.xlane.xlu0 %2005
        %2007 = vmax.xlane.f32.xlu0 %v1962
        %v2008 = vpop.xlane.xlu0 %2007
        %2009 = vmax.xlane.f32.xlu0 %v1967
        %v2010 = vpop.xlane.xlu0 %2009
        %2011 = vmax.xlane.f32.xlu0 %v1970
        %v2012 = vpop.xlane.xlu0 %2011
        %2013 = vmax.xlane.f32.xlu0 %v1975
        %v2014 = vpop.xlane.xlu0 %2013
        %2015 = vmax.xlane.f32.xlu0 %v1978
        %v2016 = vpop.xlane.xlu0 %2015
        %2017 = vmax.xlane.f32.xlu0 %v1983
        %v2018 = vpop.xlane.xlu0 %2017
        %2019 = vmax.xlane.f32.xlu0 %v1986
        %v2020 = vpop.xlane.xlu0 %2019
        %v2021 = vsub.f32 %v1927, %v1990
        %v2022 = vsub.f32 %v1930, %v1992
        %v2023 = vsub.f32 %v1935, %v1994
        %v2024 = vsub.f32 %v1938, %v1996
        %v2025 = vsub.f32 %v1943, %v1998
        %v2026 = vsub.f32 %v1946, %v2000
        %v2027 = vsub.f32 %v1951, %v2002
        %v2028 = vsub.f32 %v1954, %v2004
        %v2029 = vsub.f32 %v1959, %v2006
        %v2030 = vsub.f32 %v1962, %v2008
        %v2031 = vsub.f32 %v1967, %v2010
        %v2032 = vsub.f32 %v1970, %v2012
        %v2033 = vsub.f32 %v1975, %v2014
        %v2034 = vsub.f32 %v1978, %v2016
        %v2035 = vsub.f32 %v1983, %v2018
        %v2036 = vsub.f32 %v1986, %v2020
        %v2037 = vmul.f32 %v2021, 1.442695
        %v2038 = vpow.pop %v2037
        %v2039 = vmul.f32 %v2022, 1.442695
        %v2040 = vpow.pop %v2039
        %v2041 = vmul.f32 %v2023, 1.442695
        %v2042 = vpow.pop %v2041
        %v2043 = vmul.f32 %v2024, 1.442695
        %v2044 = vpow.pop %v2043
        %v2045 = vmul.f32 %v2025, 1.442695
        %v2046 = vpow.pop %v2045
        %v2047 = vmul.f32 %v2026, 1.442695
        %v2048 = vpow.pop %v2047
        %v2049 = vmul.f32 %v2027, 1.442695
        %v2050 = vpow.pop %v2049
        %v2051 = vmul.f32 %v2028, 1.442695
        %v2052 = vpow.pop %v2051
        %v2053 = vmul.f32 %v2029, 1.442695
        %v2054 = vpow.pop %v2053
        %v2055 = vmul.f32 %v2030, 1.442695
        %v2056 = vpow.pop %v2055
        %v2057 = vmul.f32 %v2031, 1.442695
        %v2058 = vpow.pop %v2057
        %v2059 = vmul.f32 %v2032, 1.442695
        %v2060 = vpow.pop %v2059
        %v2061 = vmul.f32 %v2033, 1.442695
        %v2062 = vpow.pop %v2061
        %v2063 = vmul.f32 %v2034, 1.442695
        %v2064 = vpow.pop %v2063
        %v2065 = vmul.f32 %v2035, 1.442695
        %v2066 = vpow.pop %v2065
        %v2067 = vmul.f32 %v2036, 1.442695
        %v2068 = vpow.pop %v2067
        %2069 = vadd.xlane.f32.xlu0 %v2038
        %v2070 = vpop.xlane.xlu0 %2069
        %2071 = vadd.xlane.f32.xlu0 %v2040
        %v2072 = vpop.xlane.xlu0 %2071
        %2073 = vadd.xlane.f32.xlu0 %v2042
        %v2074 = vpop.xlane.xlu0 %2073
        %2075 = vadd.xlane.f32.xlu0 %v2044
        %v2076 = vpop.xlane.xlu0 %2075
        %2077 = vadd.xlane.f32.xlu0 %v2046
        %v2078 = vpop.xlane.xlu0 %2077
        %2079 = vadd.xlane.f32.xlu0 %v2048
        %v2080 = vpop.xlane.xlu0 %2079
        %2081 = vadd.xlane.f32.xlu0 %v2050
        %v2082 = vpop.xlane.xlu0 %2081
        %2083 = vadd.xlane.f32.xlu0 %v2052
        %v2084 = vpop.xlane.xlu0 %2083
        %2085 = vadd.xlane.f32.xlu0 %v2054
        %v2086 = vpop.xlane.xlu0 %2085
        %2087 = vadd.xlane.f32.xlu0 %v2056
        %v2088 = vpop.xlane.xlu0 %2087
        %2089 = vadd.xlane.f32.xlu0 %v2058
        %v2090 = vpop.xlane.xlu0 %2089
        %2091 = vadd.xlane.f32.xlu0 %v2060
        %v2092 = vpop.xlane.xlu0 %2091
        %2093 = vadd.xlane.f32.xlu0 %v2062
        %v2094 = vpop.xlane.xlu0 %2093
        %2095 = vadd.xlane.f32.xlu0 %v2064
        %v2096 = vpop.xlane.xlu0 %2095
        %2097 = vadd.xlane.f32.xlu0 %v2066
        %v2098 = vpop.xlane.xlu0 %2097
        %2099 = vadd.xlane.f32.xlu0 %v2068
        %v2100 = vpop.xlane.xlu0 %2099
        %v2101 = vrcp.pop %v2070
        %v2102 = vrcp.pop %v2072
        %v2103 = vrcp.pop %v2074
        %v2104 = vrcp.pop %v2076
        %v2105 = vrcp.pop %v2078
        %v2106 = vrcp.pop %v2080
        %v2107 = vrcp.pop %v2082
        %v2108 = vrcp.pop %v2084
        %v2109 = vrcp.pop %v2086
        %v2110 = vrcp.pop %v2088
        %v2111 = vrcp.pop %v2090
        %v2112 = vrcp.pop %v2092
        %v2113 = vrcp.pop %v2094
        %v2114 = vrcp.pop %v2096
        %v2115 = vrcp.pop %v2098
        %v2116 = vrcp.pop %v2100
        %v2117 = vmul.f32 %v2038, %v2101
        %v2118 = vmul.f32 %v2040, %v2102
        %v2119 = vmul.f32 %v2042, %v2103
        %v2120 = vmul.f32 %v2044, %v2104
        %v2121 = vmul.f32 %v2046, %v2105
        %v2122 = vmul.f32 %v2048, %v2106
        %v2123 = vmul.f32 %v2050, %v2107
        %v2124 = vmul.f32 %v2052, %v2108
        %v2125 = vmul.f32 %v2054, %v2109
        %v2126 = vmul.f32 %v2056, %v2110
        %v2127 = vmul.f32 %v2058, %v2111
        %v2128 = vmul.f32 %v2060, %v2112
        %v2129 = vmul.f32 %v2062, %v2113
        %v2130 = vmul.f32 %v2064, %v2114
        %v2131 = vmul.f32 %v2066, %v2115
        %v2132 = vmul.f32 %v2068, %v2116
        %v2133 = vpack.c.bf16 %v2118, %v2117
        %v2134 = vpack.c.bf16 %v2120, %v2119
        %v2135 = vpack.c.bf16 %v2122, %v2121
        %v2136 = vpack.c.bf16 %v2124, %v2123
        %v2137 = vpack.c.bf16 %v2126, %v2125
        %v2138 = vpack.c.bf16 %v2128, %v2127
        %v2139 = vpack.c.bf16 %v2130, %v2129
        %v2140 = vpack.c.bf16 %v2132, %v2131
        %s2141 = scalar_lea.vmem %s364, 128 [#allocation8]
        %v2142 = vld [vmem:[%s2141] sm:$0xf]
        %v2143 = vld [vmem:[%s2141 + $0x4] sm:$0xf]
        %v2144 = vld [vmem:[%s2141 + $0x8] sm:$0xf]
        %v2145 = vld [vmem:[%s2141 + $0xc] sm:$0xf]
        %v2146 = vld [vmem:[%s2141 + $0x10] sm:$0xf]
        %v2147 = vld [vmem:[%s2141 + $0x14] sm:$0xf]
        %v2148 = vld [vmem:[%s2141 + $0x18] sm:$0xf]
        %v2149 = vld [vmem:[%s2141 + $0x1c] sm:$0xf]
        %v2150 = vld [vmem:[%s2141 + $0x20] sm:$0xf]
        %v2151 = vld [vmem:[%s2141 + $0x24] sm:$0xf]
        %v2152 = vld [vmem:[%s2141 + $0x28] sm:$0xf]
        %v2153 = vld [vmem:[%s2141 + $0x2c] sm:$0xf]
        %v2154 = vld [vmem:[%s2141 + $0x30] sm:$0xf]
        %v2155 = vld [vmem:[%s2141 + $0x34] sm:$0xf]
        %v2156 = vld [vmem:[%s2141 + $0x38] sm:$0xf]
        %v2157 = vld [vmem:[%s2141 + $0x3c] sm:$0xf]
        %v2174 = vunpack.c.l.b16 %v2142
        %v2175 = vunpack.c.l.b16 %v2143
        %v2176 = vunpack.c.l.b16 %v2144
        %v2177 = vunpack.c.l.b16 %v2145
        %v2178 = vunpack.c.l.b16 %v2146
        %v2179 = vunpack.c.l.b16 %v2147
        %v2180 = vunpack.c.l.b16 %v2148
        %v2181 = vunpack.c.l.b16 %v2149
        %v2182 = vunpack.c.l.b16 %v2150
        %v2183 = vunpack.c.l.b16 %v2151
        %v2184 = vunpack.c.l.b16 %v2152
        %v2185 = vunpack.c.l.b16 %v2153
        %v2186 = vunpack.c.l.b16 %v2154
        %v2187 = vunpack.c.l.b16 %v2155
        %v2188 = vunpack.c.l.b16 %v2156
        %v2189 = vunpack.c.l.b16 %v2157
        %v2190 = vpack.c.b16 %v2175, %v2174
        %v2191 = vpack.c.b16 %v2177, %v2176
        %v2192 = vpack.c.b16 %v2179, %v2178
        %v2193 = vpack.c.b16 %v2181, %v2180
        %v2194 = vpack.c.b16 %v2183, %v2182
        %v2195 = vpack.c.b16 %v2185, %v2184
        %v2196 = vpack.c.b16 %v2187, %v2186
        %v2197 = vpack.c.b16 %v2189, %v2188
        %2206 = vmatprep.subr.bf16.mxu0 0
        %2207 = vmatpush1.bf16.msra.mxu0 %v2190
        %2208 = vmatprep.subr.bf16.mxu0 0
        %2209 = vmatpush1.bf16.msra.mxu0 %v2191
        %2210 = vmatprep.subr.bf16.mxu0 0
        %2211 = vmatpush1.bf16.msra.mxu0 %v2192
        %2212 = vmatprep.subr.bf16.mxu0 0
        %2213 = vmatpush1.bf16.msra.mxu0 %v2193
        %2214 = vmatprep.subr.bf16.mxu0 0
        %2215 = vmatpush1.bf16.msra.mxu0 %v2194
        %2216 = vmatprep.subr.bf16.mxu0 0
        %2217 = vmatpush1.bf16.msra.mxu0 %v2195
        %2218 = vmatprep.subr.bf16.mxu0 0
        %2219 = vmatpush1.bf16.msra.mxu0 %v2196
        %2220 = vmatprep.subr.bf16.mxu0 0
        %2221 = vmatpush1.bf16.msra.mxu0 %v2197
        %2222 = vmatprep.subr.bf16.mxu0 0
        %2223 = vmatpush1.bf16.msra.mxu0 0
        %2224 = vmatprep.subr.bf16.mxu0 0
        %2225 = vmatpush1.bf16.msra.mxu0 0
        %2226 = vmatprep.subr.bf16.mxu0 0
        %2227 = vmatpush1.bf16.msra.mxu0 0
        %2228 = vmatprep.subr.bf16.mxu0 0
        %2229 = vmatpush1.bf16.msra.mxu0 0
        %2230 = vmatprep.subr.bf16.mxu0 0
        %2231 = vmatpush1.bf16.msra.mxu0 0
        %2232 = vmatprep.subr.bf16.mxu0 0
        %2233 = vmatpush1.bf16.msra.mxu0 0
        %2234 = vmatprep.subr.bf16.mxu0 0
        %2235 = vmatpush1.bf16.msra.mxu0 0
        %2236 = vmatprep.subr.bf16.mxu0 0
        %2237 = vmatpush1.bf16.msra.mxu0 0
        %2238 = vmatprep.mubr.bf16.mxu0 0
        %2239 = vmatmul.mubr.bf16.gmra.mrb[0].mxu0 %v2133
        %v2240 = vpop.f32.mrb[0].mxu0
        %v2241 = vadd.f32 0.0, %v2240
        %v2242 = vpop.f32.mrb[0].mxu0
        %v2243 = vpop.f32.mrb[0].mxu0
        %v2244 = vadd.f32 0.0, %v2243
        %v2245 = vpop.f32.mrb[0].mxu0
        %2246 = vmatprep.mubr.bf16.mxu0 0
        %2247 = vmatmul.mubr.bf16.gmra.mrb[0].mxu0 %v2134
        %v2248 = vpop.f32.mrb[0].mxu0
        %v2249 = vadd.f32 0.0, %v2248
        %v2250 = vpop.f32.mrb[0].mxu0
        %v2251 = vpop.f32.mrb[0].mxu0
        %v2252 = vadd.f32 0.0, %v2251
        %v2253 = vpop.f32.mrb[0].mxu0
        %2254 = vmatprep.mubr.bf16.mxu0 0
        %2255 = vmatmul.mubr.bf16.gmra.mrb[0].mxu0 %v2135
        %v2256 = vpop.f32.mrb[0].mxu0
        %v2257 = vadd.f32 0.0, %v2256
        %v2258 = vpop.f32.mrb[0].mxu0
        %v2259 = vpop.f32.mrb[0].mxu0
        %v2260 = vadd.f32 0.0, %v2259
        %v2261 = vpop.f32.mrb[0].mxu0
        %2262 = vmatprep.mubr.bf16.mxu0 0
        %2263 = vmatmul.mubr.bf16.gmra.mrb[0].mxu0 %v2136
        %v2264 = vpop.f32.mrb[0].mxu0
        %v2265 = vadd.f32 0.0, %v2264
        %v2266 = vpop.f32.mrb[0].mxu0
        %v2267 = vpop.f32.mrb[0].mxu0
        %v2268 = vadd.f32 0.0, %v2267
        %v2269 = vpop.f32.mrb[0].mxu0
        %2270 = vmatprep.mubr.bf16.mxu0 0
        %2271 = vmatmul.mubr.bf16.gmra.mrb[0].mxu0 %v2137
        %v2272 = vpop.f32.mrb[0].mxu0
        %v2273 = vadd.f32 0.0, %v2272
        %v2274 = vpop.f32.mrb[0].mxu0
        %v2275 = vpop.f32.mrb[0].mxu0
        %v2276 = vadd.f32 0.0, %v2275
        %v2277 = vpop.f32.mrb[0].mxu0
        %2278 = vmatprep.mubr.bf16.mxu0 0
        %2279 = vmatmul.mubr.bf16.gmra.mrb[0].mxu0 %v2138
        %v2280 = vpop.f32.mrb[0].mxu0
        %v2281 = vadd.f32 0.0, %v2280
        %v2282 = vpop.f32.mrb[0].mxu0
        %v2283 = vpop.f32.mrb[0].mxu0
        %v2284 = vadd.f32 0.0, %v2283
        %v2285 = vpop.f32.mrb[0].mxu0
        %2286 = vmatprep.mubr.bf16.mxu0 0
        %2287 = vmatmul.mubr.bf16.gmra.mrb[0].mxu0 %v2139
        %v2288 = vpop.f32.mrb[0].mxu0
        %v2289 = vadd.f32 0.0, %v2288
        %v2290 = vpop.f32.mrb[0].mxu0
        %v2291 = vpop.f32.mrb[0].mxu0
        %v2292 = vadd.f32 0.0, %v2291
        %v2293 = vpop.f32.mrb[0].mxu0
        %2294 = vmatprep.mubr.bf16.mxu0 0
        %2295 = vmatmul.mubr.bf16.gmra.mrb[0].mxu0 %v2140
        %v2296 = vpop.f32.mrb[0].mxu0
        %v2297 = vadd.f32 0.0, %v2296
        %v2298 = vpop.f32.mrb[0].mxu0
        %v2299 = vpop.f32.mrb[0].mxu0
        %v2300 = vadd.f32 0.0, %v2299
        %v2301 = vpop.f32.mrb[0].mxu0
        %2302 = vdwg.mxu0
        %v2303 = vadd.f32 %v1656, %v2241
        %v2304 = vadd.f32 %v1659, %v2244
        %v2305 = vadd.f32 %v1664, %v2249
        %v2306 = vadd.f32 %v1667, %v2252
        %v2307 = vadd.f32 %v1672, %v2257
        %v2308 = vadd.f32 %v1675, %v2260
        %v2309 = vadd.f32 %v1680, %v2265
        %v2310 = vadd.f32 %v1683, %v2268
        %v2311 = vadd.f32 %v1688, %v2273
        %v2312 = vadd.f32 %v1691, %v2276
        %v2313 = vadd.f32 %v1696, %v2281
        %v2314 = vadd.f32 %v1699, %v2284
        %v2315 = vadd.f32 %v1704, %v2289
        %v2316 = vadd.f32 %v1707, %v2292
        %v2317 = vadd.f32 %v1712, %v2297
        %v2318 = vadd.f32 %v1715, %v2300
        %s2319 = scalar_lea.vmem [#allocation7], 192
        %v2320 = vld [vmem:[%s2319] sm:$0xf]
        %v2321 = vld [vmem:[%s2319 + $0x4] sm:$0xf]
        %v2322 = vld [vmem:[%s2319 + $0x8] sm:$0xf]
        %v2323 = vld [vmem:[%s2319 + $0xc] sm:$0xf]
        %v2324 = vld [vmem:[%s2319 + $0x10] sm:$0xf]
        %v2325 = vld [vmem:[%s2319 + $0x14] sm:$0xf]
        %v2326 = vld [vmem:[%s2319 + $0x18] sm:$0xf]
        %v2327 = vld [vmem:[%s2319 + $0x1c] sm:$0xf]
        %v2328 = vld [vmem:[%s2319 + $0x20] sm:$0xf]
        %v2329 = vld [vmem:[%s2319 + $0x24] sm:$0xf]
        %v2330 = vld [vmem:[%s2319 + $0x28] sm:$0xf]
        %v2331 = vld [vmem:[%s2319 + $0x2c] sm:$0xf]
        %v2332 = vld [vmem:[%s2319 + $0x30] sm:$0xf]
        %v2333 = vld [vmem:[%s2319 + $0x34] sm:$0xf]
        %v2334 = vld [vmem:[%s2319 + $0x38] sm:$0xf]
        %v2335 = vld [vmem:[%s2319 + $0x3c] sm:$0xf]
        %v2352 = vunpack.c.l.b16 %v2320
        %v2353 = vunpack.c.l.b16 %v2321
        %v2354 = vunpack.c.l.b16 %v2322
        %v2355 = vunpack.c.l.b16 %v2323
        %v2356 = vunpack.c.l.b16 %v2324
        %v2357 = vunpack.c.l.b16 %v2325
        %v2358 = vunpack.c.l.b16 %v2326
        %v2359 = vunpack.c.l.b16 %v2327
        %v2360 = vunpack.c.l.b16 %v2328
        %v2361 = vunpack.c.l.b16 %v2329
        %v2362 = vunpack.c.l.b16 %v2330
        %v2363 = vunpack.c.l.b16 %v2331
        %v2364 = vunpack.c.l.b16 %v2332
        %v2365 = vunpack.c.l.b16 %v2333
        %v2366 = vunpack.c.l.b16 %v2334
        %v2367 = vunpack.c.l.b16 %v2335
        %v2368 = vpack.c.b16 %v2353, %v2352
        %v2369 = vpack.c.b16 %v2355, %v2354
        %v2370 = vpack.c.b16 %v2357, %v2356
        %v2371 = vpack.c.b16 %v2359, %v2358
        %v2372 = vpack.c.b16 %v2361, %v2360
        %v2373 = vpack.c.b16 %v2363, %v2362
        %v2374 = vpack.c.b16 %v2365, %v2364
        %v2375 = vpack.c.b16 %v2367, %v2366
        %2384 = vmatprep.subr.bf16.mxu0 0
        %2385 = vmatpush1.bf16.msra.mxu0 %v2368
        %2386 = vmatprep.subr.bf16.mxu0 0
        %2387 = vmatpush1.bf16.msra.mxu0 %v2369
        %2388 = vmatprep.subr.bf16.mxu0 0
        %2389 = vmatpush1.bf16.msra.mxu0 %v2370
        %2390 = vmatprep.subr.bf16.mxu0 0
        %2391 = vmatpush1.bf16.msra.mxu0 %v2371
        %2392 = vmatprep.subr.bf16.mxu0 0
        %2393 = vmatpush1.bf16.msra.mxu0 %v2372
        %2394 = vmatprep.subr.bf16.mxu0 0
        %2395 = vmatpush1.bf16.msra.mxu0 %v2373
        %2396 = vmatprep.subr.bf16.mxu0 0
        %2397 = vmatpush1.bf16.msra.mxu0 %v2374
        %2398 = vmatprep.subr.bf16.mxu0 0
        %2399 = vmatpush1.bf16.msra.mxu0 %v2375
        %2400 = vmatprep.subr.bf16.mxu0 0
        %2401 = vmatpush1.bf16.msra.mxu0 0
        %2402 = vmatprep.subr.bf16.mxu0 0
        %2403 = vmatpush1.bf16.msra.mxu0 0
        %2404 = vmatprep.subr.bf16.mxu0 0
        %2405 = vmatpush1.bf16.msra.mxu0 0
        %2406 = vmatprep.subr.bf16.mxu0 0
        %2407 = vmatpush1.bf16.msra.mxu0 0
        %2408 = vmatprep.subr.bf16.mxu0 0
        %2409 = vmatpush1.bf16.msra.mxu0 0
        %2410 = vmatprep.subr.bf16.mxu0 0
        %2411 = vmatpush1.bf16.msra.mxu0 0
        %2412 = vmatprep.subr.bf16.mxu0 0
        %2413 = vmatpush1.bf16.msra.mxu0 0
        %2414 = vmatprep.subr.bf16.mxu0 0
        %2415 = vmatpush1.bf16.msra.mxu0 0
        %2416 = vmatprep.mubr.bf16.mxu0 0
        %2417 = vmatmul.mubr.bf16.gmra.mrb[0].mxu0 %v502
        %v2418 = vpop.f32.mrb[0].mxu0
        %v2419 = vadd.f32 0.0, %v2418
        %v2420 = vpop.f32.mrb[0].mxu0
        %v2421 = vpop.f32.mrb[0].mxu0
        %v2422 = vadd.f32 0.0, %v2421
        %v2423 = vpop.f32.mrb[0].mxu0
        %2424 = vmatprep.mubr.bf16.mxu0 0
        %2425 = vmatmul.mubr.bf16.gmra.mrb[0].mxu0 %v503
        %v2426 = vpop.f32.mrb[0].mxu0
        %v2427 = vadd.f32 0.0, %v2426
        %v2428 = vpop.f32.mrb[0].mxu0
        %v2429 = vpop.f32.mrb[0].mxu0
        %v2430 = vadd.f32 0.0, %v2429
        %v2431 = vpop.f32.mrb[0].mxu0
        %2432 = vmatprep.mubr.bf16.mxu0 0
        %2433 = vmatmul.mubr.bf16.gmra.mrb[0].mxu0 %v504
        %v2434 = vpop.f32.mrb[0].mxu0
        %v2435 = vadd.f32 0.0, %v2434
        %v2436 = vpop.f32.mrb[0].mxu0
        %v2437 = vpop.f32.mrb[0].mxu0
        %v2438 = vadd.f32 0.0, %v2437
        %v2439 = vpop.f32.mrb[0].mxu0
        %2440 = vmatprep.mubr.bf16.mxu0 0
        %2441 = vmatmul.mubr.bf16.gmra.mrb[0].mxu0 %v505
        %v2442 = vpop.f32.mrb[0].mxu0
        %v2443 = vadd.f32 0.0, %v2442
        %v2444 = vpop.f32.mrb[0].mxu0
        %v2445 = vpop.f32.mrb[0].mxu0
        %v2446 = vadd.f32 0.0, %v2445
        %v2447 = vpop.f32.mrb[0].mxu0
        %2448 = vmatprep.mubr.bf16.mxu0 0
        %2449 = vmatmul.mubr.bf16.gmra.mrb[0].mxu0 %v506
        %v2450 = vpop.f32.mrb[0].mxu0
        %v2451 = vadd.f32 0.0, %v2450
        %v2452 = vpop.f32.mrb[0].mxu0
        %v2453 = vpop.f32.mrb[0].mxu0
        %v2454 = vadd.f32 0.0, %v2453
        %v2455 = vpop.f32.mrb[0].mxu0
        %2456 = vmatprep.mubr.bf16.mxu0 0
        %2457 = vmatmul.mubr.bf16.gmra.mrb[0].mxu0 %v507
        %v2458 = vpop.f32.mrb[0].mxu0
        %v2459 = vadd.f32 0.0, %v2458
        %v2460 = vpop.f32.mrb[0].mxu0
        %v2461 = vpop.f32.mrb[0].mxu0
        %v2462 = vadd.f32 0.0, %v2461
        %v2463 = vpop.f32.mrb[0].mxu0
        %2464 = vmatprep.mubr.bf16.mxu0 0
        %2465 = vmatmul.mubr.bf16.gmra.mrb[0].mxu0 %v508
        %v2466 = vpop.f32.mrb[0].mxu0
        %v2467 = vadd.f32 0.0, %v2466
        %v2468 = vpop.f32.mrb[0].mxu0
        %v2469 = vpop.f32.mrb[0].mxu0
        %v2470 = vadd.f32 0.0, %v2469
        %v2471 = vpop.f32.mrb[0].mxu0
        %2472 = vmatprep.mubr.bf16.mxu0 0
        %2473 = vmatmul.mubr.bf16.gmra.mrb[0].mxu0 %v509
        %v2474 = vpop.f32.mrb[0].mxu0
        %v2475 = vadd.f32 0.0, %v2474
        %v2476 = vpop.f32.mrb[0].mxu0
        %v2477 = vpop.f32.mrb[0].mxu0
        %v2478 = vadd.f32 0.0, %v2477
        %v2479 = vpop.f32.mrb[0].mxu0
        %2480 = vdwg.mxu0
        %v2481 = vpack.c.bf16 %v2422, %v2419
        %v2482 = vpack.c.bf16 %v2430, %v2427
        %v2483 = vpack.c.bf16 %v2438, %v2435
        %v2484 = vpack.c.bf16 %v2446, %v2443
        %v2485 = vpack.c.bf16 %v2454, %v2451
        %v2486 = vpack.c.bf16 %v2462, %v2459
        %v2487 = vpack.c.bf16 %v2470, %v2467
        %v2488 = vpack.c.bf16 %v2478, %v2475
        %v2489 = vlaneseq
        %v2490 = vshrl.u32 %v2489, 7
        %v2491 = vsub.s32 3, %v2490
        %v2492 = vrot.slane %v453, %v2491
        %2493 = vmatprep.subr.bf16.mxu0 0
        %2494 = vmatpush1.bf16.msra.mxu0 %v707
        %2495 = vmatprep.subr.bf16.mxu0 0
        %2496 = vmatpush1.bf16.msra.mxu0 %v708
        %2497 = vmatprep.subr.bf16.mxu0 0
        %2498 = vmatpush1.bf16.msra.mxu0 %v709
        %2499 = vmatprep.subr.bf16.mxu0 0
        %2500 = vmatpush1.bf16.msra.mxu0 %v710
        %2501 = vmatprep.subr.bf16.mxu0 0
        %2502 = vmatpush1.bf16.msra.mxu0 %v711
        %2503 = vmatprep.subr.bf16.mxu0 0
        %2504 = vmatpush1.bf16.msra.mxu0 %v712
        %2505 = vmatprep.subr.bf16.mxu0 0
        %2506 = vmatpush1.bf16.msra.mxu0 %v713
        %2507 = vmatprep.subr.bf16.mxu0 0
        %2508 = vmatpush1.bf16.msra.mxu0 %v714
        %2509 = vmatprep.subr.bf16.mxu0 0
        %2510 = vmatpush1.bf16.msra.mxu0 0
        %2511 = vmatprep.subr.bf16.mxu0 0
        %2512 = vmatpush1.bf16.msra.mxu0 0
        %2513 = vmatprep.subr.bf16.mxu0 0
        %2514 = vmatpush1.bf16.msra.mxu0 0
        %2515 = vmatprep.subr.bf16.mxu0 0
        %2516 = vmatpush1.bf16.msra.mxu0 0
        %2517 = vmatprep.subr.bf16.mxu0 0
        %2518 = vmatpush1.bf16.msra.mxu0 0
        %2519 = vmatprep.subr.bf16.mxu0 0
        %2520 = vmatpush1.bf16.msra.mxu0 0
        %2521 = vmatprep.subr.bf16.mxu0 0
        %2522 = vmatpush1.bf16.msra.mxu0 0
        %2523 = vmatprep.subr.bf16.mxu0 0
        %2524 = vmatpush1.bf16.msra.mxu0 0
        %2525 = vmatprep.mubr.bf16.mxu0 0
        %2526 = vmatmul.mubr.bf16.gmra.mrb[0].mxu0 %v2481
        %v2527 = vpop.f32.mrb[0].mxu0
        %v2528 = vadd.f32 %v2492, %v2527
        %v2529 = vpop.f32.mrb[0].mxu0
        %v2530 = vpop.f32.mrb[0].mxu0
        %v2531 = vadd.f32 %v2492, %v2530
        %v2532 = vpop.f32.mrb[0].mxu0
        %2533 = vmatprep.mubr.bf16.mxu0 0
        %2534 = vmatmul.mubr.bf16.gmra.mrb[0].mxu0 %v2482
        %v2535 = vpop.f32.mrb[0].mxu0
        %v2536 = vadd.f32 %v2492, %v2535
        %v2537 = vpop.f32.mrb[0].mxu0
        %v2538 = vpop.f32.mrb[0].mxu0
        %v2539 = vadd.f32 %v2492, %v2538
        %v2540 = vpop.f32.mrb[0].mxu0
        %2541 = vmatprep.mubr.bf16.mxu0 0
        %2542 = vmatmul.mubr.bf16.gmra.mrb[0].mxu0 %v2483
        %v2543 = vpop.f32.mrb[0].mxu0
        %v2544 = vadd.f32 %v2492, %v2543
        %v2545 = vpop.f32.mrb[0].mxu0
        %v2546 = vpop.f32.mrb[0].mxu0
        %v2547 = vadd.f32 %v2492, %v2546
        %v2548 = vpop.f32.mrb[0].mxu0
        %2549 = vmatprep.mubr.bf16.mxu0 0
        %2550 = vmatmul.mubr.bf16.gmra.mrb[0].mxu0 %v2484
        %v2551 = vpop.f32.mrb[0].mxu0
        %v2552 = vadd.f32 %v2492, %v2551
        %v2553 = vpop.f32.mrb[0].mxu0
        %v2554 = vpop.f32.mrb[0].mxu0
        %v2555 = vadd.f32 %v2492, %v2554
        %v2556 = vpop.f32.mrb[0].mxu0
        %2557 = vmatprep.mubr.bf16.mxu0 0
        %2558 = vmatmul.mubr.bf16.gmra.mrb[0].mxu0 %v2485
        %v2559 = vpop.f32.mrb[0].mxu0
        %v2560 = vadd.f32 %v2492, %v2559
        %v2561 = vpop.f32.mrb[0].mxu0
        %v2562 = vpop.f32.mrb[0].mxu0
        %v2563 = vadd.f32 %v2492, %v2562
        %v2564 = vpop.f32.mrb[0].mxu0
        %2565 = vmatprep.mubr.bf16.mxu0 0
        %2566 = vmatmul.mubr.bf16.gmra.mrb[0].mxu0 %v2486
        %v2567 = vpop.f32.mrb[0].mxu0
        %v2568 = vadd.f32 %v2492, %v2567
        %v2569 = vpop.f32.mrb[0].mxu0
        %v2570 = vpop.f32.mrb[0].mxu0
        %v2571 = vadd.f32 %v2492, %v2570
        %v2572 = vpop.f32.mrb[0].mxu0
        %2573 = vmatprep.mubr.bf16.mxu0 0
        %2574 = vmatmul.mubr.bf16.gmra.mrb[0].mxu0 %v2487
        %v2575 = vpop.f32.mrb[0].mxu0
        %v2576 = vadd.f32 %v2492, %v2575
        %v2577 = vpop.f32.mrb[0].mxu0
        %v2578 = vpop.f32.mrb[0].mxu0
        %v2579 = vadd.f32 %v2492, %v2578
        %v2580 = vpop.f32.mrb[0].mxu0
        %2581 = vmatprep.mubr.bf16.mxu0 0
        %2582 = vmatmul.mubr.bf16.gmra.mrb[0].mxu0 %v2488
        %v2583 = vpop.f32.mrb[0].mxu0
        %v2584 = vadd.f32 %v2492, %v2583
        %v2585 = vpop.f32.mrb[0].mxu0
        %v2586 = vpop.f32.mrb[0].mxu0
        %v2587 = vadd.f32 %v2492, %v2586
        %v2588 = vpop.f32.mrb[0].mxu0
        %2589 = vdwg.mxu0
        %2590 = vmax.xlane.f32.xlu0 %v2528
        %v2591 = vpop.xlane.xlu0 %2590
        %2592 = vmax.xlane.f32.xlu0 %v2531
        %v2593 = vpop.xlane.xlu0 %2592
        %2594 = vmax.xlane.f32.xlu0 %v2536
        %v2595 = vpop.xlane.xlu0 %2594
        %2596 = vmax.xlane.f32.xlu0 %v2539
        %v2597 = vpop.xlane.xlu0 %2596
        %2598 = vmax.xlane.f32.xlu0 %v2544
        %v2599 = vpop.xlane.xlu0 %2598
        %2600 = vmax.xlane.f32.xlu0 %v2547
        %v2601 = vpop.xlane.xlu0 %2600
        %2602 = vmax.xlane.f32.xlu0 %v2552
        %v2603 = vpop.xlane.xlu0 %2602
        %2604 = vmax.xlane.f32.xlu0 %v2555
        %v2605 = vpop.xlane.xlu0 %2604
        %2606 = vmax.xlane.f32.xlu0 %v2560
        %v2607 = vpop.xlane.xlu0 %2606
        %2608 = vmax.xlane.f32.xlu0 %v2563
        %v2609 = vpop.xlane.xlu0 %2608
        %2610 = vmax.xlane.f32.xlu0 %v2568
        %v2611 = vpop.xlane.xlu0 %2610
        %2612 = vmax.xlane.f32.xlu0 %v2571
        %v2613 = vpop.xlane.xlu0 %2612
        %2614 = vmax.xlane.f32.xlu0 %v2576
        %v2615 = vpop.xlane.xlu0 %2614
        %2616 = vmax.xlane.f32.xlu0 %v2579
        %v2617 = vpop.xlane.xlu0 %2616
        %2618 = vmax.xlane.f32.xlu0 %v2584
        %v2619 = vpop.xlane.xlu0 %2618
        %2620 = vmax.xlane.f32.xlu0 %v2587
        %v2621 = vpop.xlane.xlu0 %2620
        %v2622 = vsub.f32 %v2528, %v2591
        %v2623 = vsub.f32 %v2531, %v2593
        %v2624 = vsub.f32 %v2536, %v2595
        %v2625 = vsub.f32 %v2539, %v2597
        %v2626 = vsub.f32 %v2544, %v2599
        %v2627 = vsub.f32 %v2547, %v2601
        %v2628 = vsub.f32 %v2552, %v2603
        %v2629 = vsub.f32 %v2555, %v2605
        %v2630 = vsub.f32 %v2560, %v2607
        %v2631 = vsub.f32 %v2563, %v2609
        %v2632 = vsub.f32 %v2568, %v2611
        %v2633 = vsub.f32 %v2571, %v2613
        %v2634 = vsub.f32 %v2576, %v2615
        %v2635 = vsub.f32 %v2579, %v2617
        %v2636 = vsub.f32 %v2584, %v2619
        %v2637 = vsub.f32 %v2587, %v2621
        %v2638 = vmul.f32 %v2622, 1.442695
        %v2639 = vpow.pop %v2638
        %v2640 = vmul.f32 %v2623, 1.442695
        %v2641 = vpow.pop %v2640
        %v2642 = vmul.f32 %v2624, 1.442695
        %v2643 = vpow.pop %v2642
        %v2644 = vmul.f32 %v2625, 1.442695
        %v2645 = vpow.pop %v2644
        %v2646 = vmul.f32 %v2626, 1.442695
        %v2647 = vpow.pop %v2646
        %v2648 = vmul.f32 %v2627, 1.442695
        %v2649 = vpow.pop %v2648
        %v2650 = vmul.f32 %v2628, 1.442695
        %v2651 = vpow.pop %v2650
        %v2652 = vmul.f32 %v2629, 1.442695
        %v2653 = vpow.pop %v2652
        %v2654 = vmul.f32 %v2630, 1.442695
        %v2655 = vpow.pop %v2654
        %v2656 = vmul.f32 %v2631, 1.442695
        %v2657 = vpow.pop %v2656
        %v2658 = vmul.f32 %v2632, 1.442695
        %v2659 = vpow.pop %v2658
        %v2660 = vmul.f32 %v2633, 1.442695
        %v2661 = vpow.pop %v2660
        %v2662 = vmul.f32 %v2634, 1.442695
        %v2663 = vpow.pop %v2662
        %v2664 = vmul.f32 %v2635, 1.442695
        %v2665 = vpow.pop %v2664
        %v2666 = vmul.f32 %v2636, 1.442695
        %v2667 = vpow.pop %v2666
        %v2668 = vmul.f32 %v2637, 1.442695
        %v2669 = vpow.pop %v2668
        %2670 = vadd.xlane.f32.xlu0 %v2639
        %v2671 = vpop.xlane.xlu0 %2670
        %2672 = vadd.xlane.f32.xlu0 %v2641
        %v2673 = vpop.xlane.xlu0 %2672
        %2674 = vadd.xlane.f32.xlu0 %v2643
        %v2675 = vpop.xlane.xlu0 %2674
        %2676 = vadd.xlane.f32.xlu0 %v2645
        %v2677 = vpop.xlane.xlu0 %2676
        %2678 = vadd.xlane.f32.xlu0 %v2647
        %v2679 = vpop.xlane.xlu0 %2678
        %2680 = vadd.xlane.f32.xlu0 %v2649
        %v2681 = vpop.xlane.xlu0 %2680
        %2682 = vadd.xlane.f32.xlu0 %v2651
        %v2683 = vpop.xlane.xlu0 %2682
        %2684 = vadd.xlane.f32.xlu0 %v2653
        %v2685 = vpop.xlane.xlu0 %2684
        %2686 = vadd.xlane.f32.xlu0 %v2655
        %v2687 = vpop.xlane.xlu0 %2686
        %2688 = vadd.xlane.f32.xlu0 %v2657
        %v2689 = vpop.xlane.xlu0 %2688
        %2690 = vadd.xlane.f32.xlu0 %v2659
        %v2691 = vpop.xlane.xlu0 %2690
        %2692 = vadd.xlane.f32.xlu0 %v2661
        %v2693 = vpop.xlane.xlu0 %2692
        %2694 = vadd.xlane.f32.xlu0 %v2663
        %v2695 = vpop.xlane.xlu0 %2694
        %2696 = vadd.xlane.f32.xlu0 %v2665
        %v2697 = vpop.xlane.xlu0 %2696
        %2698 = vadd.xlane.f32.xlu0 %v2667
        %v2699 = vpop.xlane.xlu0 %2698
        %2700 = vadd.xlane.f32.xlu0 %v2669
        %v2701 = vpop.xlane.xlu0 %2700
        %v2702 = vrcp.pop %v2671
        %v2703 = vrcp.pop %v2673
        %v2704 = vrcp.pop %v2675
        %v2705 = vrcp.pop %v2677
        %v2706 = vrcp.pop %v2679
        %v2707 = vrcp.pop %v2681
        %v2708 = vrcp.pop %v2683
        %v2709 = vrcp.pop %v2685
        %v2710 = vrcp.pop %v2687
        %v2711 = vrcp.pop %v2689
        %v2712 = vrcp.pop %v2691
        %v2713 = vrcp.pop %v2693
        %v2714 = vrcp.pop %v2695
        %v2715 = vrcp.pop %v2697
        %v2716 = vrcp.pop %v2699
        %v2717 = vrcp.pop %v2701
        %v2718 = vmul.f32 %v2639, %v2702
        %v2719 = vmul.f32 %v2641, %v2703
        %v2720 = vmul.f32 %v2643, %v2704
        %v2721 = vmul.f32 %v2645, %v2705
        %v2722 = vmul.f32 %v2647, %v2706
        %v2723 = vmul.f32 %v2649, %v2707
        %v2724 = vmul.f32 %v2651, %v2708
        %v2725 = vmul.f32 %v2653, %v2709
        %v2726 = vmul.f32 %v2655, %v2710
        %v2727 = vmul.f32 %v2657, %v2711
        %v2728 = vmul.f32 %v2659, %v2712
        %v2729 = vmul.f32 %v2661, %v2713
        %v2730 = vmul.f32 %v2663, %v2714
        %v2731 = vmul.f32 %v2665, %v2715
        %v2732 = vmul.f32 %v2667, %v2716
        %v2733 = vmul.f32 %v2669, %v2717
        %v2734 = vpack.c.bf16 %v2719, %v2718
        %v2735 = vpack.c.bf16 %v2721, %v2720
        %v2736 = vpack.c.bf16 %v2723, %v2722
        %v2737 = vpack.c.bf16 %v2725, %v2724
        %v2738 = vpack.c.bf16 %v2727, %v2726
        %v2739 = vpack.c.bf16 %v2729, %v2728
        %v2740 = vpack.c.bf16 %v2731, %v2730
        %v2741 = vpack.c.bf16 %v2733, %v2732
        %s2742 = scalar_lea.vmem %s364, 192 [#allocation8]
        %v2743 = vld [vmem:[%s2742] sm:$0xf]
        %v2744 = vld [vmem:[%s2742 + $0x4] sm:$0xf]
        %v2745 = vld [vmem:[%s2742 + $0x8] sm:$0xf]
        %v2746 = vld [vmem:[%s2742 + $0xc] sm:$0xf]
        %v2747 = vld [vmem:[%s2742 + $0x10] sm:$0xf]
        %v2748 = vld [vmem:[%s2742 + $0x14] sm:$0xf]
        %v2749 = vld [vmem:[%s2742 + $0x18] sm:$0xf]
        %v2750 = vld [vmem:[%s2742 + $0x1c] sm:$0xf]
        %v2751 = vld [vmem:[%s2742 + $0x20] sm:$0xf]
        %v2752 = vld [vmem:[%s2742 + $0x24] sm:$0xf]
        %v2753 = vld [vmem:[%s2742 + $0x28] sm:$0xf]
        %v2754 = vld [vmem:[%s2742 + $0x2c] sm:$0xf]
        %v2755 = vld [vmem:[%s2742 + $0x30] sm:$0xf]
        %v2756 = vld [vmem:[%s2742 + $0x34] sm:$0xf]
        %v2757 = vld [vmem:[%s2742 + $0x38] sm:$0xf]
        %v2758 = vld [vmem:[%s2742 + $0x3c] sm:$0xf]
        %v2775 = vunpack.c.l.b16 %v2743
        %v2776 = vunpack.c.l.b16 %v2744
        %v2777 = vunpack.c.l.b16 %v2745
        %v2778 = vunpack.c.l.b16 %v2746
        %v2779 = vunpack.c.l.b16 %v2747
        %v2780 = vunpack.c.l.b16 %v2748
        %v2781 = vunpack.c.l.b16 %v2749
        %v2782 = vunpack.c.l.b16 %v2750
        %v2783 = vunpack.c.l.b16 %v2751
        %v2784 = vunpack.c.l.b16 %v2752
        %v2785 = vunpack.c.l.b16 %v2753
        %v2786 = vunpack.c.l.b16 %v2754
        %v2787 = vunpack.c.l.b16 %v2755
        %v2788 = vunpack.c.l.b16 %v2756
        %v2789 = vunpack.c.l.b16 %v2757
        %v2790 = vunpack.c.l.b16 %v2758
        %v2791 = vpack.c.b16 %v2776, %v2775
        %v2792 = vpack.c.b16 %v2778, %v2777
        %v2793 = vpack.c.b16 %v2780, %v2779
        %v2794 = vpack.c.b16 %v2782, %v2781
        %v2795 = vpack.c.b16 %v2784, %v2783
        %v2796 = vpack.c.b16 %v2786, %v2785
        %v2797 = vpack.c.b16 %v2788, %v2787
        %v2798 = vpack.c.b16 %v2790, %v2789
        %2807 = vmatprep.subr.bf16.mxu0 0
        %2808 = vmatpush1.bf16.msra.mxu0 %v2791
        %2809 = vmatprep.subr.bf16.mxu0 0
        %2810 = vmatpush1.bf16.msra.mxu0 %v2792
        %2811 = vmatprep.subr.bf16.mxu0 0
        %2812 = vmatpush1.bf16.msra.mxu0 %v2793
        %2813 = vmatprep.subr.bf16.mxu0 0
        %2814 = vmatpush1.bf16.msra.mxu0 %v2794
        %2815 = vmatprep.subr.bf16.mxu0 0
        %2816 = vmatpush1.bf16.msra.mxu0 %v2795
        %2817 = vmatprep.subr.bf16.mxu0 0
        %2818 = vmatpush1.bf16.msra.mxu0 %v2796
        %2819 = vmatprep.subr.bf16.mxu0 0
        %2820 = vmatpush1.bf16.msra.mxu0 %v2797
        %2821 = vmatprep.subr.bf16.mxu0 0
        %2822 = vmatpush1.bf16.msra.mxu0 %v2798
        %2823 = vmatprep.subr.bf16.mxu0 0
        %2824 = vmatpush1.bf16.msra.mxu0 0
        %2825 = vmatprep.subr.bf16.mxu0 0
        %2826 = vmatpush1.bf16.msra.mxu0 0
        %2827 = vmatprep.subr.bf16.mxu0 0
        %2828 = vmatpush1.bf16.msra.mxu0 0
        %2829 = vmatprep.subr.bf16.mxu0 0
        %2830 = vmatpush1.bf16.msra.mxu0 0
        %2831 = vmatprep.subr.bf16.mxu0 0
        %2832 = vmatpush1.bf16.msra.mxu0 0
        %2833 = vmatprep.subr.bf16.mxu0 0
        %2834 = vmatpush1.bf16.msra.mxu0 0
        %2835 = vmatprep.subr.bf16.mxu0 0
        %2836 = vmatpush1.bf16.msra.mxu0 0
        %2837 = vmatprep.subr.bf16.mxu0 0
        %2838 = vmatpush1.bf16.msra.mxu0 0
        %2839 = vmatprep.mubr.bf16.mxu0 0
        %2840 = vmatmul.mubr.bf16.gmra.mrb[0].mxu0 %v2734
        %v2841 = vpop.f32.mrb[0].mxu0
        %v2842 = vadd.f32 0.0, %v2841
        %v2843 = vpop.f32.mrb[0].mxu0
        %v2844 = vpop.f32.mrb[0].mxu0
        %v2845 = vadd.f32 0.0, %v2844
        %v2846 = vpop.f32.mrb[0].mxu0
        %2847 = vmatprep.mubr.bf16.mxu0 0
        %2848 = vmatmul.mubr.bf16.gmra.mrb[0].mxu0 %v2735
        %v2849 = vpop.f32.mrb[0].mxu0
        %v2850 = vadd.f32 0.0, %v2849
        %v2851 = vpop.f32.mrb[0].mxu0
        %v2852 = vpop.f32.mrb[0].mxu0
        %v2853 = vadd.f32 0.0, %v2852
        %v2854 = vpop.f32.mrb[0].mxu0
        %2855 = vmatprep.mubr.bf16.mxu0 0
        %2856 = vmatmul.mubr.bf16.gmra.mrb[0].mxu0 %v2736
        %v2857 = vpop.f32.mrb[0].mxu0
        %v2858 = vadd.f32 0.0, %v2857
        %v2859 = vpop.f32.mrb[0].mxu0
        %v2860 = vpop.f32.mrb[0].mxu0
        %v2861 = vadd.f32 0.0, %v2860
        %v2862 = vpop.f32.mrb[0].mxu0
        %2863 = vmatprep.mubr.bf16.mxu0 0
        %2864 = vmatmul.mubr.bf16.gmra.mrb[0].mxu0 %v2737
        %v2865 = vpop.f32.mrb[0].mxu0
        %v2866 = vadd.f32 0.0, %v2865
        %v2867 = vpop.f32.mrb[0].mxu0
        %v2868 = vpop.f32.mrb[0].mxu0
        %v2869 = vadd.f32 0.0, %v2868
        %v2870 = vpop.f32.mrb[0].mxu0
        %2871 = vmatprep.mubr.bf16.mxu0 0
        %2872 = vmatmul.mubr.bf16.gmra.mrb[0].mxu0 %v2738
        %v2873 = vpop.f32.mrb[0].mxu0
        %v2874 = vadd.f32 0.0, %v2873
        %v2875 = vpop.f32.mrb[0].mxu0
        %v2876 = vpop.f32.mrb[0].mxu0
        %v2877 = vadd.f32 0.0, %v2876
        %v2878 = vpop.f32.mrb[0].mxu0
        %2879 = vmatprep.mubr.bf16.mxu0 0
        %2880 = vmatmul.mubr.bf16.gmra.mrb[0].mxu0 %v2739
        %v2881 = vpop.f32.mrb[0].mxu0
        %v2882 = vadd.f32 0.0, %v2881
        %v2883 = vpop.f32.mrb[0].mxu0
        %v2884 = vpop.f32.mrb[0].mxu0
        %v2885 = vadd.f32 0.0, %v2884
        %v2886 = vpop.f32.mrb[0].mxu0
        %2887 = vmatprep.mubr.bf16.mxu0 0
        %2888 = vmatmul.mubr.bf16.gmra.mrb[0].mxu0 %v2740
        %v2889 = vpop.f32.mrb[0].mxu0
        %v2890 = vadd.f32 0.0, %v2889
        %v2891 = vpop.f32.mrb[0].mxu0
        %v2892 = vpop.f32.mrb[0].mxu0
        %v2893 = vadd.f32 0.0, %v2892
        %v2894 = vpop.f32.mrb[0].mxu0
        %2895 = vmatprep.mubr.bf16.mxu0 0
        %2896 = vmatmul.mubr.bf16.gmra.mrb[0].mxu0 %v2741
        %v2897 = vpop.f32.mrb[0].mxu0
        %v2898 = vadd.f32 0.0, %v2897
        %v2899 = vpop.f32.mrb[0].mxu0
        %v2900 = vpop.f32.mrb[0].mxu0
        %v2901 = vadd.f32 0.0, %v2900
        %v2902 = vpop.f32.mrb[0].mxu0
        %2903 = vdwg.mxu0
        %v2904 = vadd.f32 %v2303, %v2842
        %v2905 = vadd.f32 %v2304, %v2845
        %v2906 = vadd.f32 %v2305, %v2850
        %v2907 = vadd.f32 %v2306, %v2853
        %v2908 = vadd.f32 %v2307, %v2858
        %v2909 = vadd.f32 %v2308, %v2861
        %v2910 = vadd.f32 %v2309, %v2866
        %v2911 = vadd.f32 %v2310, %v2869
        %v2912 = vadd.f32 %v2311, %v2874
        %v2913 = vadd.f32 %v2312, %v2877
        %v2914 = vadd.f32 %v2313, %v2882
        %v2915 = vadd.f32 %v2314, %v2885
        %v2916 = vadd.f32 %v2315, %v2890
        %v2917 = vadd.f32 %v2316, %v2893
        %v2918 = vadd.f32 %v2317, %v2898
        %v2919 = vadd.f32 %v2318, %v2901
        %s2920 = scalar_lea.vmem [#allocation7], 256
        %v2921 = vld [vmem:[%s2920] sm:$0xf]
        %v2922 = vld [vmem:[%s2920 + $0x4] sm:$0xf]
        %v2923 = vld [vmem:[%s2920 + $0x8] sm:$0xf]
        %v2924 = vld [vmem:[%s2920 + $0xc] sm:$0xf]
        %v2925 = vld [vmem:[%s2920 + $0x10] sm:$0xf]
        %v2926 = vld [vmem:[%s2920 + $0x14] sm:$0xf]
        %v2927 = vld [vmem:[%s2920 + $0x18] sm:$0xf]
        %v2928 = vld [vmem:[%s2920 + $0x1c] sm:$0xf]
        %v2929 = vld [vmem:[%s2920 + $0x20] sm:$0xf]
        %v2930 = vld [vmem:[%s2920 + $0x24] sm:$0xf]
        %v2931 = vld [vmem:[%s2920 + $0x28] sm:$0xf]
        %v2932 = vld [vmem:[%s2920 + $0x2c] sm:$0xf]
        %v2933 = vld [vmem:[%s2920 + $0x30] sm:$0xf]
        %v2934 = vld [vmem:[%s2920 + $0x34] sm:$0xf]
        %v2935 = vld [vmem:[%s2920 + $0x38] sm:$0xf]
        %v2936 = vld [vmem:[%s2920 + $0x3c] sm:$0xf]
        %v2953 = vunpack.c.l.b16 %v2921
        %v2954 = vunpack.c.l.b16 %v2922
        %v2955 = vunpack.c.l.b16 %v2923
        %v2956 = vunpack.c.l.b16 %v2924
        %v2957 = vunpack.c.l.b16 %v2925
        %v2958 = vunpack.c.l.b16 %v2926
        %v2959 = vunpack.c.l.b16 %v2927
        %v2960 = vunpack.c.l.b16 %v2928
        %v2961 = vunpack.c.l.b16 %v2929
        %v2962 = vunpack.c.l.b16 %v2930
        %v2963 = vunpack.c.l.b16 %v2931
        %v2964 = vunpack.c.l.b16 %v2932
        %v2965 = vunpack.c.l.b16 %v2933
        %v2966 = vunpack.c.l.b16 %v2934
        %v2967 = vunpack.c.l.b16 %v2935
        %v2968 = vunpack.c.l.b16 %v2936
        %v2969 = vpack.c.b16 %v2954, %v2953
        %v2970 = vpack.c.b16 %v2956, %v2955
        %v2971 = vpack.c.b16 %v2958, %v2957
        %v2972 = vpack.c.b16 %v2960, %v2959
        %v2973 = vpack.c.b16 %v2962, %v2961
        %v2974 = vpack.c.b16 %v2964, %v2963
        %v2975 = vpack.c.b16 %v2966, %v2965
        %v2976 = vpack.c.b16 %v2968, %v2967
        %2985 = vmatprep.subr.bf16.mxu0 0
        %2986 = vmatpush1.bf16.msra.mxu0 %v2969
        %2987 = vmatprep.subr.bf16.mxu0 0
        %2988 = vmatpush1.bf16.msra.mxu0 %v2970
        %2989 = vmatprep.subr.bf16.mxu0 0
        %2990 = vmatpush1.bf16.msra.mxu0 %v2971
        %2991 = vmatprep.subr.bf16.mxu0 0
        %2992 = vmatpush1.bf16.msra.mxu0 %v2972
        %2993 = vmatprep.subr.bf16.mxu0 0
        %2994 = vmatpush1.bf16.msra.mxu0 %v2973
        %2995 = vmatprep.subr.bf16.mxu0 0
        %2996 = vmatpush1.bf16.msra.mxu0 %v2974
        %2997 = vmatprep.subr.bf16.mxu0 0
        %2998 = vmatpush1.bf16.msra.mxu0 %v2975
        %2999 = vmatprep.subr.bf16.mxu0 0
        %3000 = vmatpush1.bf16.msra.mxu0 %v2976
        %3001 = vmatprep.subr.bf16.mxu0 0
        %3002 = vmatpush1.bf16.msra.mxu0 0
        %3003 = vmatprep.subr.bf16.mxu0 0
        %3004 = vmatpush1.bf16.msra.mxu0 0
        %3005 = vmatprep.subr.bf16.mxu0 0
        %3006 = vmatpush1.bf16.msra.mxu0 0
        %3007 = vmatprep.subr.bf16.mxu0 0
        %3008 = vmatpush1.bf16.msra.mxu0 0
        %3009 = vmatprep.subr.bf16.mxu0 0
        %3010 = vmatpush1.bf16.msra.mxu0 0
        %3011 = vmatprep.subr.bf16.mxu0 0
        %3012 = vmatpush1.bf16.msra.mxu0 0
        %3013 = vmatprep.subr.bf16.mxu0 0
        %3014 = vmatpush1.bf16.msra.mxu0 0
        %3015 = vmatprep.subr.bf16.mxu0 0
        %3016 = vmatpush1.bf16.msra.mxu0 0
        %3017 = vmatprep.mubr.bf16.mxu0 0
        %3018 = vmatmul.mubr.bf16.gmra.mrb[0].mxu0 %v502
        %v3019 = vpop.f32.mrb[0].mxu0
        %v3020 = vadd.f32 0.0, %v3019
        %v3021 = vpop.f32.mrb[0].mxu0
        %v3022 = vpop.f32.mrb[0].mxu0
        %v3023 = vadd.f32 0.0, %v3022
        %v3024 = vpop.f32.mrb[0].mxu0
        %3025 = vmatprep.mubr.bf16.mxu0 0
        %3026 = vmatmul.mubr.bf16.gmra.mrb[0].mxu0 %v503
        %v3027 = vpop.f32.mrb[0].mxu0
        %v3028 = vadd.f32 0.0, %v3027
        %v3029 = vpop.f32.mrb[0].mxu0
        %v3030 = vpop.f32.mrb[0].mxu0
        %v3031 = vadd.f32 0.0, %v3030
        %v3032 = vpop.f32.mrb[0].mxu0
        %3033 = vmatprep.mubr.bf16.mxu0 0
        %3034 = vmatmul.mubr.bf16.gmra.mrb[0].mxu0 %v504
        %v3035 = vpop.f32.mrb[0].mxu0
        %v3036 = vadd.f32 0.0, %v3035
        %v3037 = vpop.f32.mrb[0].mxu0
        %v3038 = vpop.f32.mrb[0].mxu0
        %v3039 = vadd.f32 0.0, %v3038
        %v3040 = vpop.f32.mrb[0].mxu0
        %3041 = vmatprep.mubr.bf16.mxu0 0
        %3042 = vmatmul.mubr.bf16.gmra.mrb[0].mxu0 %v505
        %v3043 = vpop.f32.mrb[0].mxu0
        %v3044 = vadd.f32 0.0, %v3043
        %v3045 = vpop.f32.mrb[0].mxu0
        %v3046 = vpop.f32.mrb[0].mxu0
        %v3047 = vadd.f32 0.0, %v3046
        %v3048 = vpop.f32.mrb[0].mxu0
        %3049 = vmatprep.mubr.bf16.mxu0 0
        %3050 = vmatmul.mubr.bf16.gmra.mrb[0].mxu0 %v506
        %v3051 = vpop.f32.mrb[0].mxu0
        %v3052 = vadd.f32 0.0, %v3051
        %v3053 = vpop.f32.mrb[0].mxu0
        %v3054 = vpop.f32.mrb[0].mxu0
        %v3055 = vadd.f32 0.0, %v3054
        %v3056 = vpop.f32.mrb[0].mxu0
        %3057 = vmatprep.mubr.bf16.mxu0 0
        %3058 = vmatmul.mubr.bf16.gmra.mrb[0].mxu0 %v507
        %v3059 = vpop.f32.mrb[0].mxu0
        %v3060 = vadd.f32 0.0, %v3059
        %v3061 = vpop.f32.mrb[0].mxu0
        %v3062 = vpop.f32.mrb[0].mxu0
        %v3063 = vadd.f32 0.0, %v3062
        %v3064 = vpop.f32.mrb[0].mxu0
        %3065 = vmatprep.mubr.bf16.mxu0 0
        %3066 = vmatmul.mubr.bf16.gmra.mrb[0].mxu0 %v508
        %v3067 = vpop.f32.mrb[0].mxu0
        %v3068 = vadd.f32 0.0, %v3067
        %v3069 = vpop.f32.mrb[0].mxu0
        %v3070 = vpop.f32.mrb[0].mxu0
        %v3071 = vadd.f32 0.0, %v3070
        %v3072 = vpop.f32.mrb[0].mxu0
        %3073 = vmatprep.mubr.bf16.mxu0 0
        %3074 = vmatmul.mubr.bf16.gmra.mrb[0].mxu0 %v509
        %v3075 = vpop.f32.mrb[0].mxu0
        %v3076 = vadd.f32 0.0, %v3075
        %v3077 = vpop.f32.mrb[0].mxu0
        %v3078 = vpop.f32.mrb[0].mxu0
        %v3079 = vadd.f32 0.0, %v3078
        %v3080 = vpop.f32.mrb[0].mxu0
        %3081 = vdwg.mxu0
        %v3082 = vpack.c.bf16 %v3023, %v3020
        %v3083 = vpack.c.bf16 %v3031, %v3028
        %v3084 = vpack.c.bf16 %v3039, %v3036
        %v3085 = vpack.c.bf16 %v3047, %v3044
        %v3086 = vpack.c.bf16 %v3055, %v3052
        %v3087 = vpack.c.bf16 %v3063, %v3060
        %v3088 = vpack.c.bf16 %v3071, %v3068
        %v3089 = vpack.c.bf16 %v3079, %v3076
        %v3090 = vlaneseq
        %v3091 = vshrl.u32 %v3090, 7
        %v3092 = vsub.s32 4, %v3091
        %v3093 = vrot.slane %v453, %v3092
        %3094 = vmatprep.subr.bf16.mxu0 0
        %3095 = vmatpush1.bf16.msra.mxu0 %v707
        %3096 = vmatprep.subr.bf16.mxu0 0
        %3097 = vmatpush1.bf16.msra.mxu0 %v708
        %3098 = vmatprep.subr.bf16.mxu0 0
        %3099 = vmatpush1.bf16.msra.mxu0 %v709
        %3100 = vmatprep.subr.bf16.mxu0 0
        %3101 = vmatpush1.bf16.msra.mxu0 %v710
        %3102 = vmatprep.subr.bf16.mxu0 0
        %3103 = vmatpush1.bf16.msra.mxu0 %v711
        %3104 = vmatprep.subr.bf16.mxu0 0
        %3105 = vmatpush1.bf16.msra.mxu0 %v712
        %3106 = vmatprep.subr.bf16.mxu0 0
        %3107 = vmatpush1.bf16.msra.mxu0 %v713
        %3108 = vmatprep.subr.bf16.mxu0 0
        %3109 = vmatpush1.bf16.msra.mxu0 %v714
        %3110 = vmatprep.subr.bf16.mxu0 0
        %3111 = vmatpush1.bf16.msra.mxu0 0
        %3112 = vmatprep.subr.bf16.mxu0 0
        %3113 = vmatpush1.bf16.msra.mxu0 0
        %3114 = vmatprep.subr.bf16.mxu0 0
        %3115 = vmatpush1.bf16.msra.mxu0 0
        %3116 = vmatprep.subr.bf16.mxu0 0
        %3117 = vmatpush1.bf16.msra.mxu0 0
        %3118 = vmatprep.subr.bf16.mxu0 0
        %3119 = vmatpush1.bf16.msra.mxu0 0
        %3120 = vmatprep.subr.bf16.mxu0 0
        %3121 = vmatpush1.bf16.msra.mxu0 0
        %3122 = vmatprep.subr.bf16.mxu0 0
        %3123 = vmatpush1.bf16.msra.mxu0 0
        %3124 = vmatprep.subr.bf16.mxu0 0
        %3125 = vmatpush1.bf16.msra.mxu0 0
        %3126 = vmatprep.mubr.bf16.mxu0 0
        %3127 = vmatmul.mubr.bf16.gmra.mrb[0].mxu0 %v3082
        %v3128 = vpop.f32.mrb[0].mxu0
        %v3129 = vadd.f32 %v3093, %v3128
        %v3130 = vpop.f32.mrb[0].mxu0
        %v3131 = vpop.f32.mrb[0].mxu0
        %v3132 = vadd.f32 %v3093, %v3131
        %v3133 = vpop.f32.mrb[0].mxu0
        %3134 = vmatprep.mubr.bf16.mxu0 0
        %3135 = vmatmul.mubr.bf16.gmra.mrb[0].mxu0 %v3083
        %v3136 = vpop.f32.mrb[0].mxu0
        %v3137 = vadd.f32 %v3093, %v3136
        %v3138 = vpop.f32.mrb[0].mxu0
        %v3139 = vpop.f32.mrb[0].mxu0
        %v3140 = vadd.f32 %v3093, %v3139
        %v3141 = vpop.f32.mrb[0].mxu0
        %3142 = vmatprep.mubr.bf16.mxu0 0
        %3143 = vmatmul.mubr.bf16.gmra.mrb[0].mxu0 %v3084
        %v3144 = vpop.f32.mrb[0].mxu0
        %v3145 = vadd.f32 %v3093, %v3144
        %v3146 = vpop.f32.mrb[0].mxu0
        %v3147 = vpop.f32.mrb[0].mxu0
        %v3148 = vadd.f32 %v3093, %v3147
        %v3149 = vpop.f32.mrb[0].mxu0
        %3150 = vmatprep.mubr.bf16.mxu0 0
        %3151 = vmatmul.mubr.bf16.gmra.mrb[0].mxu0 %v3085
        %v3152 = vpop.f32.mrb[0].mxu0
        %v3153 = vadd.f32 %v3093, %v3152
        %v3154 = vpop.f32.mrb[0].mxu0
        %v3155 = vpop.f32.mrb[0].mxu0
        %v3156 = vadd.f32 %v3093, %v3155
        %v3157 = vpop.f32.mrb[0].mxu0
        %3158 = vmatprep.mubr.bf16.mxu0 0
        %3159 = vmatmul.mubr.bf16.gmra.mrb[0].mxu0 %v3086
        %v3160 = vpop.f32.mrb[0].mxu0
        %v3161 = vadd.f32 %v3093, %v3160
        %v3162 = vpop.f32.mrb[0].mxu0
        %v3163 = vpop.f32.mrb[0].mxu0
        %v3164 = vadd.f32 %v3093, %v3163
        %v3165 = vpop.f32.mrb[0].mxu0
        %3166 = vmatprep.mubr.bf16.mxu0 0
        %3167 = vmatmul.mubr.bf16.gmra.mrb[0].mxu0 %v3087
        %v3168 = vpop.f32.mrb[0].mxu0
        %v3169 = vadd.f32 %v3093, %v3168
        %v3170 = vpop.f32.mrb[0].mxu0
        %v3171 = vpop.f32.mrb[0].mxu0
        %v3172 = vadd.f32 %v3093, %v3171
        %v3173 = vpop.f32.mrb[0].mxu0
        %3174 = vmatprep.mubr.bf16.mxu0 0
        %3175 = vmatmul.mubr.bf16.gmra.mrb[0].mxu0 %v3088
        %v3176 = vpop.f32.mrb[0].mxu0
        %v3177 = vadd.f32 %v3093, %v3176
        %v3178 = vpop.f32.mrb[0].mxu0
        %v3179 = vpop.f32.mrb[0].mxu0
        %v3180 = vadd.f32 %v3093, %v3179
        %v3181 = vpop.f32.mrb[0].mxu0
        %3182 = vmatprep.mubr.bf16.mxu0 0
        %3183 = vmatmul.mubr.bf16.gmra.mrb[0].mxu0 %v3089
        %v3184 = vpop.f32.mrb[0].mxu0
        %v3185 = vadd.f32 %v3093, %v3184
        %v3186 = vpop.f32.mrb[0].mxu0
        %v3187 = vpop.f32.mrb[0].mxu0
        %v3188 = vadd.f32 %v3093, %v3187
        %v3189 = vpop.f32.mrb[0].mxu0
        %3190 = vdwg.mxu0
        %3191 = vmax.xlane.f32.xlu0 %v3129
        %v3192 = vpop.xlane.xlu0 %3191
        %3193 = vmax.xlane.f32.xlu0 %v3132
        %v3194 = vpop.xlane.xlu0 %3193
        %3195 = vmax.xlane.f32.xlu0 %v3137
        %v3196 = vpop.xlane.xlu0 %3195
        %3197 = vmax.xlane.f32.xlu0 %v3140
        %v3198 = vpop.xlane.xlu0 %3197
        %3199 = vmax.xlane.f32.xlu0 %v3145
        %v3200 = vpop.xlane.xlu0 %3199
        %3201 = vmax.xlane.f32.xlu0 %v3148
        %v3202 = vpop.xlane.xlu0 %3201
        %3203 = vmax.xlane.f32.xlu0 %v3153
        %v3204 = vpop.xlane.xlu0 %3203
        %3205 = vmax.xlane.f32.xlu0 %v3156
        %v3206 = vpop.xlane.xlu0 %3205
        %3207 = vmax.xlane.f32.xlu0 %v3161
        %v3208 = vpop.xlane.xlu0 %3207
        %3209 = vmax.xlane.f32.xlu0 %v3164
        %v3210 = vpop.xlane.xlu0 %3209
        %3211 = vmax.xlane.f32.xlu0 %v3169
        %v3212 = vpop.xlane.xlu0 %3211
        %3213 = vmax.xlane.f32.xlu0 %v3172
        %v3214 = vpop.xlane.xlu0 %3213
        %3215 = vmax.xlane.f32.xlu0 %v3177
        %v3216 = vpop.xlane.xlu0 %3215
        %3217 = vmax.xlane.f32.xlu0 %v3180
        %v3218 = vpop.xlane.xlu0 %3217
        %3219 = vmax.xlane.f32.xlu0 %v3185
        %v3220 = vpop.xlane.xlu0 %3219
        %3221 = vmax.xlane.f32.xlu0 %v3188
        %v3222 = vpop.xlane.xlu0 %3221
        %v3223 = vsub.f32 %v3129, %v3192
        %v3224 = vsub.f32 %v3132, %v3194
        %v3225 = vsub.f32 %v3137, %v3196
        %v3226 = vsub.f32 %v3140, %v3198
        %v3227 = vsub.f32 %v3145, %v3200
        %v3228 = vsub.f32 %v3148, %v3202
        %v3229 = vsub.f32 %v3153, %v3204
        %v3230 = vsub.f32 %v3156, %v3206
        %v3231 = vsub.f32 %v3161, %v3208
        %v3232 = vsub.f32 %v3164, %v3210
        %v3233 = vsub.f32 %v3169, %v3212
        %v3234 = vsub.f32 %v3172, %v3214
        %v3235 = vsub.f32 %v3177, %v3216
        %v3236 = vsub.f32 %v3180, %v3218
        %v3237 = vsub.f32 %v3185, %v3220
        %v3238 = vsub.f32 %v3188, %v3222
        %v3239 = vmul.f32 %v3223, 1.442695
        %v3240 = vpow.pop %v3239
        %v3241 = vmul.f32 %v3224, 1.442695
        %v3242 = vpow.pop %v3241
        %v3243 = vmul.f32 %v3225, 1.442695
        %v3244 = vpow.pop %v3243
        %v3245 = vmul.f32 %v3226, 1.442695
        %v3246 = vpow.pop %v3245
        %v3247 = vmul.f32 %v3227, 1.442695
        %v3248 = vpow.pop %v3247
        %v3249 = vmul.f32 %v3228, 1.442695
        %v3250 = vpow.pop %v3249
        %v3251 = vmul.f32 %v3229, 1.442695
        %v3252 = vpow.pop %v3251
        %v3253 = vmul.f32 %v3230, 1.442695
        %v3254 = vpow.pop %v3253
        %v3255 = vmul.f32 %v3231, 1.442695
        %v3256 = vpow.pop %v3255
        %v3257 = vmul.f32 %v3232, 1.442695
        %v3258 = vpow.pop %v3257
        %v3259 = vmul.f32 %v3233, 1.442695
        %v3260 = vpow.pop %v3259
        %v3261 = vmul.f32 %v3234, 1.442695
        %v3262 = vpow.pop %v3261
        %v3263 = vmul.f32 %v3235, 1.442695
        %v3264 = vpow.pop %v3263
        %v3265 = vmul.f32 %v3236, 1.442695
        %v3266 = vpow.pop %v3265
        %v3267 = vmul.f32 %v3237, 1.442695
        %v3268 = vpow.pop %v3267
        %v3269 = vmul.f32 %v3238, 1.442695
        %v3270 = vpow.pop %v3269
        %3271 = vadd.xlane.f32.xlu0 %v3240
        %v3272 = vpop.xlane.xlu0 %3271
        %3273 = vadd.xlane.f32.xlu0 %v3242
        %v3274 = vpop.xlane.xlu0 %3273
        %3275 = vadd.xlane.f32.xlu0 %v3244
        %v3276 = vpop.xlane.xlu0 %3275
        %3277 = vadd.xlane.f32.xlu0 %v3246
        %v3278 = vpop.xlane.xlu0 %3277
        %3279 = vadd.xlane.f32.xlu0 %v3248
        %v3280 = vpop.xlane.xlu0 %3279
        %3281 = vadd.xlane.f32.xlu0 %v3250
        %v3282 = vpop.xlane.xlu0 %3281
        %3283 = vadd.xlane.f32.xlu0 %v3252
        %v3284 = vpop.xlane.xlu0 %3283
        %3285 = vadd.xlane.f32.xlu0 %v3254
        %v3286 = vpop.xlane.xlu0 %3285
        %3287 = vadd.xlane.f32.xlu0 %v3256
        %v3288 = vpop.xlane.xlu0 %3287
        %3289 = vadd.xlane.f32.xlu0 %v3258
        %v3290 = vpop.xlane.xlu0 %3289
        %3291 = vadd.xlane.f32.xlu0 %v3260
        %v3292 = vpop.xlane.xlu0 %3291
        %3293 = vadd.xlane.f32.xlu0 %v3262
        %v3294 = vpop.xlane.xlu0 %3293
        %3295 = vadd.xlane.f32.xlu0 %v3264
        %v3296 = vpop.xlane.xlu0 %3295
        %3297 = vadd.xlane.f32.xlu0 %v3266
        %v3298 = vpop.xlane.xlu0 %3297
        %3299 = vadd.xlane.f32.xlu0 %v3268
        %v3300 = vpop.xlane.xlu0 %3299
        %3301 = vadd.xlane.f32.xlu0 %v3270
        %v3302 = vpop.xlane.xlu0 %3301
        %v3303 = vrcp.pop %v3272
        %v3304 = vrcp.pop %v3274
        %v3305 = vrcp.pop %v3276
        %v3306 = vrcp.pop %v3278
        %v3307 = vrcp.pop %v3280
        %v3308 = vrcp.pop %v3282
        %v3309 = vrcp.pop %v3284
        %v3310 = vrcp.pop %v3286
        %v3311 = vrcp.pop %v3288
        %v3312 = vrcp.pop %v3290
        %v3313 = vrcp.pop %v3292
        %v3314 = vrcp.pop %v3294
        %v3315 = vrcp.pop %v3296
        %v3316 = vrcp.pop %v3298
        %v3317 = vrcp.pop %v3300
        %v3318 = vrcp.pop %v3302
        %v3319 = vmul.f32 %v3240, %v3303
        %v3320 = vmul.f32 %v3242, %v3304
        %v3321 = vmul.f32 %v3244, %v3305
        %v3322 = vmul.f32 %v3246, %v3306
        %v3323 = vmul.f32 %v3248, %v3307
        %v3324 = vmul.f32 %v3250, %v3308
        %v3325 = vmul.f32 %v3252, %v3309
        %v3326 = vmul.f32 %v3254, %v3310
        %v3327 = vmul.f32 %v3256, %v3311
        %v3328 = vmul.f32 %v3258, %v3312
        %v3329 = vmul.f32 %v3260, %v3313
        %v3330 = vmul.f32 %v3262, %v3314
        %v3331 = vmul.f32 %v3264, %v3315
        %v3332 = vmul.f32 %v3266, %v3316
        %v3333 = vmul.f32 %v3268, %v3317
        %v3334 = vmul.f32 %v3270, %v3318
        %v3335 = vpack.c.bf16 %v3320, %v3319
        %v3336 = vpack.c.bf16 %v3322, %v3321
        %v3337 = vpack.c.bf16 %v3324, %v3323
        %v3338 = vpack.c.bf16 %v3326, %v3325
        %v3339 = vpack.c.bf16 %v3328, %v3327
        %v3340 = vpack.c.bf16 %v3330, %v3329
        %v3341 = vpack.c.bf16 %v3332, %v3331
        %v3342 = vpack.c.bf16 %v3334, %v3333
        %s3343 = scalar_lea.vmem %s364, 256 [#allocation8]
        %v3344 = vld [vmem:[%s3343] sm:$0xf]
        %v3345 = vld [vmem:[%s3343 + $0x4] sm:$0xf]
        %v3346 = vld [vmem:[%s3343 + $0x8] sm:$0xf]
        %v3347 = vld [vmem:[%s3343 + $0xc] sm:$0xf]
        %v3348 = vld [vmem:[%s3343 + $0x10] sm:$0xf]
        %v3349 = vld [vmem:[%s3343 + $0x14] sm:$0xf]
        %v3350 = vld [vmem:[%s3343 + $0x18] sm:$0xf]
        %v3351 = vld [vmem:[%s3343 + $0x1c] sm:$0xf]
        %v3352 = vld [vmem:[%s3343 + $0x20] sm:$0xf]
        %v3353 = vld [vmem:[%s3343 + $0x24] sm:$0xf]
        %v3354 = vld [vmem:[%s3343 + $0x28] sm:$0xf]
        %v3355 = vld [vmem:[%s3343 + $0x2c] sm:$0xf]
        %v3356 = vld [vmem:[%s3343 + $0x30] sm:$0xf]
        %v3357 = vld [vmem:[%s3343 + $0x34] sm:$0xf]
        %v3358 = vld [vmem:[%s3343 + $0x38] sm:$0xf]
        %v3359 = vld [vmem:[%s3343 + $0x3c] sm:$0xf]
        %v3376 = vunpack.c.l.b16 %v3344
        %v3377 = vunpack.c.l.b16 %v3345
        %v3378 = vunpack.c.l.b16 %v3346
        %v3379 = vunpack.c.l.b16 %v3347
        %v3380 = vunpack.c.l.b16 %v3348
        %v3381 = vunpack.c.l.b16 %v3349
        %v3382 = vunpack.c.l.b16 %v3350
        %v3383 = vunpack.c.l.b16 %v3351
        %v3384 = vunpack.c.l.b16 %v3352
        %v3385 = vunpack.c.l.b16 %v3353
        %v3386 = vunpack.c.l.b16 %v3354
        %v3387 = vunpack.c.l.b16 %v3355
        %v3388 = vunpack.c.l.b16 %v3356
        %v3389 = vunpack.c.l.b16 %v3357
        %v3390 = vunpack.c.l.b16 %v3358
        %v3391 = vunpack.c.l.b16 %v3359
        %v3392 = vpack.c.b16 %v3377, %v3376
        %v3393 = vpack.c.b16 %v3379, %v3378
        %v3394 = vpack.c.b16 %v3381, %v3380
        %v3395 = vpack.c.b16 %v3383, %v3382
        %v3396 = vpack.c.b16 %v3385, %v3384
        %v3397 = vpack.c.b16 %v3387, %v3386
        %v3398 = vpack.c.b16 %v3389, %v3388
        %v3399 = vpack.c.b16 %v3391, %v3390
        %3408 = vmatprep.subr.bf16.mxu0 0
        %3409 = vmatpush1.bf16.msra.mxu0 %v3392
        %3410 = vmatprep.subr.bf16.mxu0 0
        %3411 = vmatpush1.bf16.msra.mxu0 %v3393
        %3412 = vmatprep.subr.bf16.mxu0 0
        %3413 = vmatpush1.bf16.msra.mxu0 %v3394
        %3414 = vmatprep.subr.bf16.mxu0 0
        %3415 = vmatpush1.bf16.msra.mxu0 %v3395
        %3416 = vmatprep.subr.bf16.mxu0 0
        %3417 = vmatpush1.bf16.msra.mxu0 %v3396
        %3418 = vmatprep.subr.bf16.mxu0 0
        %3419 = vmatpush1.bf16.msra.mxu0 %v3397
        %3420 = vmatprep.subr.bf16.mxu0 0
        %3421 = vmatpush1.bf16.msra.mxu0 %v3398
        %3422 = vmatprep.subr.bf16.mxu0 0
        %3423 = vmatpush1.bf16.msra.mxu0 %v3399
        %3424 = vmatprep.subr.bf16.mxu0 0
        %3425 = vmatpush1.bf16.msra.mxu0 0
        %3426 = vmatprep.subr.bf16.mxu0 0
        %3427 = vmatpush1.bf16.msra.mxu0 0
        %3428 = vmatprep.subr.bf16.mxu0 0
        %3429 = vmatpush1.bf16.msra.mxu0 0
        %3430 = vmatprep.subr.bf16.mxu0 0
        %3431 = vmatpush1.bf16.msra.mxu0 0
        %3432 = vmatprep.subr.bf16.mxu0 0
        %3433 = vmatpush1.bf16.msra.mxu0 0
        %3434 = vmatprep.subr.bf16.mxu0 0
        %3435 = vmatpush1.bf16.msra.mxu0 0
        %3436 = vmatprep.subr.bf16.mxu0 0
        %3437 = vmatpush1.bf16.msra.mxu0 0
        %3438 = vmatprep.subr.bf16.mxu0 0
        %3439 = vmatpush1.bf16.msra.mxu0 0
        %3440 = vmatprep.mubr.bf16.mxu0 0
        %3441 = vmatmul.mubr.bf16.gmra.mrb[0].mxu0 %v3335
        %v3442 = vpop.f32.mrb[0].mxu0
        %v3443 = vadd.f32 0.0, %v3442
        %v3444 = vpop.f32.mrb[0].mxu0
        %v3445 = vpop.f32.mrb[0].mxu0
        %v3446 = vadd.f32 0.0, %v3445
        %v3447 = vpop.f32.mrb[0].mxu0
        %3448 = vmatprep.mubr.bf16.mxu0 0
        %3449 = vmatmul.mubr.bf16.gmra.mrb[0].mxu0 %v3336
        %v3450 = vpop.f32.mrb[0].mxu0
        %v3451 = vadd.f32 0.0, %v3450
        %v3452 = vpop.f32.mrb[0].mxu0
        %v3453 = vpop.f32.mrb[0].mxu0
        %v3454 = vadd.f32 0.0, %v3453
        %v3455 = vpop.f32.mrb[0].mxu0
        %3456 = vmatprep.mubr.bf16.mxu0 0
        %3457 = vmatmul.mubr.bf16.gmra.mrb[0].mxu0 %v3337
        %v3458 = vpop.f32.mrb[0].mxu0
        %v3459 = vadd.f32 0.0, %v3458
        %v3460 = vpop.f32.mrb[0].mxu0
        %v3461 = vpop.f32.mrb[0].mxu0
        %v3462 = vadd.f32 0.0, %v3461
        %v3463 = vpop.f32.mrb[0].mxu0
        %3464 = vmatprep.mubr.bf16.mxu0 0
        %3465 = vmatmul.mubr.bf16.gmra.mrb[0].mxu0 %v3338
        %v3466 = vpop.f32.mrb[0].mxu0
        %v3467 = vadd.f32 0.0, %v3466
        %v3468 = vpop.f32.mrb[0].mxu0
        %v3469 = vpop.f32.mrb[0].mxu0
        %v3470 = vadd.f32 0.0, %v3469
        %v3471 = vpop.f32.mrb[0].mxu0
        %3472 = vmatprep.mubr.bf16.mxu0 0
        %3473 = vmatmul.mubr.bf16.gmra.mrb[0].mxu0 %v3339
        %v3474 = vpop.f32.mrb[0].mxu0
        %v3475 = vadd.f32 0.0, %v3474
        %v3476 = vpop.f32.mrb[0].mxu0
        %v3477 = vpop.f32.mrb[0].mxu0
        %v3478 = vadd.f32 0.0, %v3477
        %v3479 = vpop.f32.mrb[0].mxu0
        %3480 = vmatprep.mubr.bf16.mxu0 0
        %3481 = vmatmul.mubr.bf16.gmra.mrb[0].mxu0 %v3340
        %v3482 = vpop.f32.mrb[0].mxu0
        %v3483 = vadd.f32 0.0, %v3482
        %v3484 = vpop.f32.mrb[0].mxu0
        %v3485 = vpop.f32.mrb[0].mxu0
        %v3486 = vadd.f32 0.0, %v3485
        %v3487 = vpop.f32.mrb[0].mxu0
        %3488 = vmatprep.mubr.bf16.mxu0 0
        %3489 = vmatmul.mubr.bf16.gmra.mrb[0].mxu0 %v3341
        %v3490 = vpop.f32.mrb[0].mxu0
        %v3491 = vadd.f32 0.0, %v3490
        %v3492 = vpop.f32.mrb[0].mxu0
        %v3493 = vpop.f32.mrb[0].mxu0
        %v3494 = vadd.f32 0.0, %v3493
        %v3495 = vpop.f32.mrb[0].mxu0
        %3496 = vmatprep.mubr.bf16.mxu0 0
        %3497 = vmatmul.mubr.bf16.gmra.mrb[0].mxu0 %v3342
        %v3498 = vpop.f32.mrb[0].mxu0
        %v3499 = vadd.f32 0.0, %v3498
        %v3500 = vpop.f32.mrb[0].mxu0
        %v3501 = vpop.f32.mrb[0].mxu0
        %v3502 = vadd.f32 0.0, %v3501
        %v3503 = vpop.f32.mrb[0].mxu0
        %3504 = vdwg.mxu0
        %v3505 = vadd.f32 %v2904, %v3443
        %v3506 = vadd.f32 %v2905, %v3446
        %v3507 = vadd.f32 %v2906, %v3451
        %v3508 = vadd.f32 %v2907, %v3454
        %v3509 = vadd.f32 %v2908, %v3459
        %v3510 = vadd.f32 %v2909, %v3462
        %v3511 = vadd.f32 %v2910, %v3467
        %v3512 = vadd.f32 %v2911, %v3470
        %v3513 = vadd.f32 %v2912, %v3475
        %v3514 = vadd.f32 %v2913, %v3478
        %v3515 = vadd.f32 %v2914, %v3483
        %v3516 = vadd.f32 %v2915, %v3486
        %v3517 = vadd.f32 %v2916, %v3491
        %v3518 = vadd.f32 %v2917, %v3494
        %v3519 = vadd.f32 %v2918, %v3499
        %v3520 = vadd.f32 %v2919, %v3502
        %s3521 = scalar_lea.vmem [#allocation7], 320
        %v3522 = vld [vmem:[%s3521] sm:$0xf]
        %v3523 = vld [vmem:[%s3521 + $0x4] sm:$0xf]
        %v3524 = vld [vmem:[%s3521 + $0x8] sm:$0xf]
        %v3525 = vld [vmem:[%s3521 + $0xc] sm:$0xf]
        %v3526 = vld [vmem:[%s3521 + $0x10] sm:$0xf]
        %v3527 = vld [vmem:[%s3521 + $0x14] sm:$0xf]
        %v3528 = vld [vmem:[%s3521 + $0x18] sm:$0xf]
        %v3529 = vld [vmem:[%s3521 + $0x1c] sm:$0xf]
        %v3530 = vld [vmem:[%s3521 + $0x20] sm:$0xf]
        %v3531 = vld [vmem:[%s3521 + $0x24] sm:$0xf]
        %v3532 = vld [vmem:[%s3521 + $0x28] sm:$0xf]
        %v3533 = vld [vmem:[%s3521 + $0x2c] sm:$0xf]
        %v3534 = vld [vmem:[%s3521 + $0x30] sm:$0xf]
        %v3535 = vld [vmem:[%s3521 + $0x34] sm:$0xf]
        %v3536 = vld [vmem:[%s3521 + $0x38] sm:$0xf]
        %v3537 = vld [vmem:[%s3521 + $0x3c] sm:$0xf]
        %v3554 = vunpack.c.l.b16 %v3522
        %v3555 = vunpack.c.l.b16 %v3523
        %v3556 = vunpack.c.l.b16 %v3524
        %v3557 = vunpack.c.l.b16 %v3525
        %v3558 = vunpack.c.l.b16 %v3526
        %v3559 = vunpack.c.l.b16 %v3527
        %v3560 = vunpack.c.l.b16 %v3528
        %v3561 = vunpack.c.l.b16 %v3529
        %v3562 = vunpack.c.l.b16 %v3530
        %v3563 = vunpack.c.l.b16 %v3531
        %v3564 = vunpack.c.l.b16 %v3532
        %v3565 = vunpack.c.l.b16 %v3533
        %v3566 = vunpack.c.l.b16 %v3534
        %v3567 = vunpack.c.l.b16 %v3535
        %v3568 = vunpack.c.l.b16 %v3536
        %v3569 = vunpack.c.l.b16 %v3537
        %v3570 = vpack.c.b16 %v3555, %v3554
        %v3571 = vpack.c.b16 %v3557, %v3556
        %v3572 = vpack.c.b16 %v3559, %v3558
        %v3573 = vpack.c.b16 %v3561, %v3560
        %v3574 = vpack.c.b16 %v3563, %v3562
        %v3575 = vpack.c.b16 %v3565, %v3564
        %v3576 = vpack.c.b16 %v3567, %v3566
        %v3577 = vpack.c.b16 %v3569, %v3568
        %3586 = vmatprep.subr.bf16.mxu0 0
        %3587 = vmatpush1.bf16.msra.mxu0 %v3570
        %3588 = vmatprep.subr.bf16.mxu0 0
        %3589 = vmatpush1.bf16.msra.mxu0 %v3571
        %3590 = vmatprep.subr.bf16.mxu0 0
        %3591 = vmatpush1.bf16.msra.mxu0 %v3572
        %3592 = vmatprep.subr.bf16.mxu0 0
        %3593 = vmatpush1.bf16.msra.mxu0 %v3573
        %3594 = vmatprep.subr.bf16.mxu0 0
        %3595 = vmatpush1.bf16.msra.mxu0 %v3574
        %3596 = vmatprep.subr.bf16.mxu0 0
        %3597 = vmatpush1.bf16.msra.mxu0 %v3575
        %3598 = vmatprep.subr.bf16.mxu0 0
        %3599 = vmatpush1.bf16.msra.mxu0 %v3576
        %3600 = vmatprep.subr.bf16.mxu0 0
        %3601 = vmatpush1.bf16.msra.mxu0 %v3577
        %3602 = vmatprep.subr.bf16.mxu0 0
        %3603 = vmatpush1.bf16.msra.mxu0 0
        %3604 = vmatprep.subr.bf16.mxu0 0
        %3605 = vmatpush1.bf16.msra.mxu0 0
        %3606 = vmatprep.subr.bf16.mxu0 0
        %3607 = vmatpush1.bf16.msra.mxu0 0
        %3608 = vmatprep.subr.bf16.mxu0 0
        %3609 = vmatpush1.bf16.msra.mxu0 0
        %3610 = vmatprep.subr.bf16.mxu0 0
        %3611 = vmatpush1.bf16.msra.mxu0 0
        %3612 = vmatprep.subr.bf16.mxu0 0
        %3613 = vmatpush1.bf16.msra.mxu0 0
        %3614 = vmatprep.subr.bf16.mxu0 0
        %3615 = vmatpush1.bf16.msra.mxu0 0
        %3616 = vmatprep.subr.bf16.mxu0 0
        %3617 = vmatpush1.bf16.msra.mxu0 0
        %3618 = vmatprep.mubr.bf16.mxu0 0
        %3619 = vmatmul.mubr.bf16.gmra.mrb[0].mxu0 %v502
        %v3620 = vpop.f32.mrb[0].mxu0
        %v3621 = vadd.f32 0.0, %v3620
        %v3622 = vpop.f32.mrb[0].mxu0
        %v3623 = vpop.f32.mrb[0].mxu0
        %v3624 = vadd.f32 0.0, %v3623
        %v3625 = vpop.f32.mrb[0].mxu0
        %3626 = vmatprep.mubr.bf16.mxu0 0
        %3627 = vmatmul.mubr.bf16.gmra.mrb[0].mxu0 %v503
        %v3628 = vpop.f32.mrb[0].mxu0
        %v3629 = vadd.f32 0.0, %v3628
        %v3630 = vpop.f32.mrb[0].mxu0
        %v3631 = vpop.f32.mrb[0].mxu0
        %v3632 = vadd.f32 0.0, %v3631
        %v3633 = vpop.f32.mrb[0].mxu0
        %3634 = vmatprep.mubr.bf16.mxu0 0
        %3635 = vmatmul.mubr.bf16.gmra.mrb[0].mxu0 %v504
        %v3636 = vpop.f32.mrb[0].mxu0
        %v3637 = vadd.f32 0.0, %v3636
        %v3638 = vpop.f32.mrb[0].mxu0
        %v3639 = vpop.f32.mrb[0].mxu0
        %v3640 = vadd.f32 0.0, %v3639
        %v3641 = vpop.f32.mrb[0].mxu0
        %3642 = vmatprep.mubr.bf16.mxu0 0
        %3643 = vmatmul.mubr.bf16.gmra.mrb[0].mxu0 %v505
        %v3644 = vpop.f32.mrb[0].mxu0
        %v3645 = vadd.f32 0.0, %v3644
        %v3646 = vpop.f32.mrb[0].mxu0
        %v3647 = vpop.f32.mrb[0].mxu0
        %v3648 = vadd.f32 0.0, %v3647
        %v3649 = vpop.f32.mrb[0].mxu0
        %3650 = vmatprep.mubr.bf16.mxu0 0
        %3651 = vmatmul.mubr.bf16.gmra.mrb[0].mxu0 %v506
        %v3652 = vpop.f32.mrb[0].mxu0
        %v3653 = vadd.f32 0.0, %v3652
        %v3654 = vpop.f32.mrb[0].mxu0
        %v3655 = vpop.f32.mrb[0].mxu0
        %v3656 = vadd.f32 0.0, %v3655
        %v3657 = vpop.f32.mrb[0].mxu0
        %3658 = vmatprep.mubr.bf16.mxu0 0
        %3659 = vmatmul.mubr.bf16.gmra.mrb[0].mxu0 %v507
        %v3660 = vpop.f32.mrb[0].mxu0
        %v3661 = vadd.f32 0.0, %v3660
        %v3662 = vpop.f32.mrb[0].mxu0
        %v3663 = vpop.f32.mrb[0].mxu0
        %v3664 = vadd.f32 0.0, %v3663
        %v3665 = vpop.f32.mrb[0].mxu0
        %3666 = vmatprep.mubr.bf16.mxu0 0
        %3667 = vmatmul.mubr.bf16.gmra.mrb[0].mxu0 %v508
        %v3668 = vpop.f32.mrb[0].mxu0
        %v3669 = vadd.f32 0.0, %v3668
        %v3670 = vpop.f32.mrb[0].mxu0
        %v3671 = vpop.f32.mrb[0].mxu0
        %v3672 = vadd.f32 0.0, %v3671
        %v3673 = vpop.f32.mrb[0].mxu0
        %3674 = vmatprep.mubr.bf16.mxu0 0
        %3675 = vmatmul.mubr.bf16.gmra.mrb[0].mxu0 %v509
        %v3676 = vpop.f32.mrb[0].mxu0
        %v3677 = vadd.f32 0.0, %v3676
        %v3678 = vpop.f32.mrb[0].mxu0
        %v3679 = vpop.f32.mrb[0].mxu0
        %v3680 = vadd.f32 0.0, %v3679
        %v3681 = vpop.f32.mrb[0].mxu0
        %3682 = vdwg.mxu0
        %v3683 = vpack.c.bf16 %v3624, %v3621
        %v3684 = vpack.c.bf16 %v3632, %v3629
        %v3685 = vpack.c.bf16 %v3640, %v3637
        %v3686 = vpack.c.bf16 %v3648, %v3645
        %v3687 = vpack.c.bf16 %v3656, %v3653
        %v3688 = vpack.c.bf16 %v3664, %v3661
        %v3689 = vpack.c.bf16 %v3672, %v3669
        %v3690 = vpack.c.bf16 %v3680, %v3677
        %v3691 = vlaneseq
        %v3692 = vshrl.u32 %v3691, 7
        %v3693 = vsub.s32 5, %v3692
        %v3694 = vrot.slane %v453, %v3693
        %3695 = vmatprep.subr.bf16.mxu0 0
        %3696 = vmatpush1.bf16.msra.mxu0 %v707
        %3697 = vmatprep.subr.bf16.mxu0 0
        %3698 = vmatpush1.bf16.msra.mxu0 %v708
        %3699 = vmatprep.subr.bf16.mxu0 0
        %3700 = vmatpush1.bf16.msra.mxu0 %v709
        %3701 = vmatprep.subr.bf16.mxu0 0
        %3702 = vmatpush1.bf16.msra.mxu0 %v710
        %3703 = vmatprep.subr.bf16.mxu0 0
        %3704 = vmatpush1.bf16.msra.mxu0 %v711
        %3705 = vmatprep.subr.bf16.mxu0 0
        %3706 = vmatpush1.bf16.msra.mxu0 %v712
        %3707 = vmatprep.subr.bf16.mxu0 0
        %3708 = vmatpush1.bf16.msra.mxu0 %v713
        %3709 = vmatprep.subr.bf16.mxu0 0
        %3710 = vmatpush1.bf16.msra.mxu0 %v714
        %3711 = vmatprep.subr.bf16.mxu0 0
        %3712 = vmatpush1.bf16.msra.mxu0 0
        %3713 = vmatprep.subr.bf16.mxu0 0
        %3714 = vmatpush1.bf16.msra.mxu0 0
        %3715 = vmatprep.subr.bf16.mxu0 0
        %3716 = vmatpush1.bf16.msra.mxu0 0
        %3717 = vmatprep.subr.bf16.mxu0 0
        %3718 = vmatpush1.bf16.msra.mxu0 0
        %3719 = vmatprep.subr.bf16.mxu0 0
        %3720 = vmatpush1.bf16.msra.mxu0 0
        %3721 = vmatprep.subr.bf16.mxu0 0
        %3722 = vmatpush1.bf16.msra.mxu0 0
        %3723 = vmatprep.subr.bf16.mxu0 0
        %3724 = vmatpush1.bf16.msra.mxu0 0
        %3725 = vmatprep.subr.bf16.mxu0 0
        %3726 = vmatpush1.bf16.msra.mxu0 0
        %3727 = vmatprep.mubr.bf16.mxu0 0
        %3728 = vmatmul.mubr.bf16.gmra.mrb[0].mxu0 %v3683
        %v3729 = vpop.f32.mrb[0].mxu0
        %v3730 = vadd.f32 %v3694, %v3729
        %v3731 = vpop.f32.mrb[0].mxu0
        %v3732 = vpop.f32.mrb[0].mxu0
        %v3733 = vadd.f32 %v3694, %v3732
        %v3734 = vpop.f32.mrb[0].mxu0
        %3735 = vmatprep.mubr.bf16.mxu0 0
        %3736 = vmatmul.mubr.bf16.gmra.mrb[0].mxu0 %v3684
        %v3737 = vpop.f32.mrb[0].mxu0
        %v3738 = vadd.f32 %v3694, %v3737
        %v3739 = vpop.f32.mrb[0].mxu0
        %v3740 = vpop.f32.mrb[0].mxu0
        %v3741 = vadd.f32 %v3694, %v3740
        %v3742 = vpop.f32.mrb[0].mxu0
        %3743 = vmatprep.mubr.bf16.mxu0 0
        %3744 = vmatmul.mubr.bf16.gmra.mrb[0].mxu0 %v3685
        %v3745 = vpop.f32.mrb[0].mxu0
        %v3746 = vadd.f32 %v3694, %v3745
        %v3747 = vpop.f32.mrb[0].mxu0
        %v3748 = vpop.f32.mrb[0].mxu0
        %v3749 = vadd.f32 %v3694, %v3748
        %v3750 = vpop.f32.mrb[0].mxu0
        %3751 = vmatprep.mubr.bf16.mxu0 0
        %3752 = vmatmul.mubr.bf16.gmra.mrb[0].mxu0 %v3686
        %v3753 = vpop.f32.mrb[0].mxu0
        %v3754 = vadd.f32 %v3694, %v3753
        %v3755 = vpop.f32.mrb[0].mxu0
        %v3756 = vpop.f32.mrb[0].mxu0
        %v3757 = vadd.f32 %v3694, %v3756
        %v3758 = vpop.f32.mrb[0].mxu0
        %3759 = vmatprep.mubr.bf16.mxu0 0
        %3760 = vmatmul.mubr.bf16.gmra.mrb[0].mxu0 %v3687
        %v3761 = vpop.f32.mrb[0].mxu0
        %v3762 = vadd.f32 %v3694, %v3761
        %v3763 = vpop.f32.mrb[0].mxu0
        %v3764 = vpop.f32.mrb[0].mxu0
        %v3765 = vadd.f32 %v3694, %v3764
        %v3766 = vpop.f32.mrb[0].mxu0
        %3767 = vmatprep.mubr.bf16.mxu0 0
        %3768 = vmatmul.mubr.bf16.gmra.mrb[0].mxu0 %v3688
        %v3769 = vpop.f32.mrb[0].mxu0
        %v3770 = vadd.f32 %v3694, %v3769
        %v3771 = vpop.f32.mrb[0].mxu0
        %v3772 = vpop.f32.mrb[0].mxu0
        %v3773 = vadd.f32 %v3694, %v3772
        %v3774 = vpop.f32.mrb[0].mxu0
        %3775 = vmatprep.mubr.bf16.mxu0 0
        %3776 = vmatmul.mubr.bf16.gmra.mrb[0].mxu0 %v3689
        %v3777 = vpop.f32.mrb[0].mxu0
        %v3778 = vadd.f32 %v3694, %v3777
        %v3779 = vpop.f32.mrb[0].mxu0
        %v3780 = vpop.f32.mrb[0].mxu0
        %v3781 = vadd.f32 %v3694, %v3780
        %v3782 = vpop.f32.mrb[0].mxu0
        %3783 = vmatprep.mubr.bf16.mxu0 0
        %3784 = vmatmul.mubr.bf16.gmra.mrb[0].mxu0 %v3690
        %v3785 = vpop.f32.mrb[0].mxu0
        %v3786 = vadd.f32 %v3694, %v3785
        %v3787 = vpop.f32.mrb[0].mxu0
        %v3788 = vpop.f32.mrb[0].mxu0
        %v3789 = vadd.f32 %v3694, %v3788
        %v3790 = vpop.f32.mrb[0].mxu0
        %3791 = vdwg.mxu0
        %3792 = vmax.xlane.f32.xlu0 %v3730
        %v3793 = vpop.xlane.xlu0 %3792
        %3794 = vmax.xlane.f32.xlu0 %v3733
        %v3795 = vpop.xlane.xlu0 %3794
        %3796 = vmax.xlane.f32.xlu0 %v3738
        %v3797 = vpop.xlane.xlu0 %3796
        %3798 = vmax.xlane.f32.xlu0 %v3741
        %v3799 = vpop.xlane.xlu0 %3798
        %3800 = vmax.xlane.f32.xlu0 %v3746
        %v3801 = vpop.xlane.xlu0 %3800
        %3802 = vmax.xlane.f32.xlu0 %v3749
        %v3803 = vpop.xlane.xlu0 %3802
        %3804 = vmax.xlane.f32.xlu0 %v3754
        %v3805 = vpop.xlane.xlu0 %3804
        %3806 = vmax.xlane.f32.xlu0 %v3757
        %v3807 = vpop.xlane.xlu0 %3806
        %3808 = vmax.xlane.f32.xlu0 %v3762
        %v3809 = vpop.xlane.xlu0 %3808
        %3810 = vmax.xlane.f32.xlu0 %v3765
        %v3811 = vpop.xlane.xlu0 %3810
        %3812 = vmax.xlane.f32.xlu0 %v3770
        %v3813 = vpop.xlane.xlu0 %3812
        %3814 = vmax.xlane.f32.xlu0 %v3773
        %v3815 = vpop.xlane.xlu0 %3814
        %3816 = vmax.xlane.f32.xlu0 %v3778
        %v3817 = vpop.xlane.xlu0 %3816
        %3818 = vmax.xlane.f32.xlu0 %v3781
        %v3819 = vpop.xlane.xlu0 %3818
        %3820 = vmax.xlane.f32.xlu0 %v3786
        %v3821 = vpop.xlane.xlu0 %3820
        %3822 = vmax.xlane.f32.xlu0 %v3789
        %v3823 = vpop.xlane.xlu0 %3822
        %v3824 = vsub.f32 %v3730, %v3793
        %v3825 = vsub.f32 %v3733, %v3795
        %v3826 = vsub.f32 %v3738, %v3797
        %v3827 = vsub.f32 %v3741, %v3799
        %v3828 = vsub.f32 %v3746, %v3801
        %v3829 = vsub.f32 %v3749, %v3803
        %v3830 = vsub.f32 %v3754, %v3805
        %v3831 = vsub.f32 %v3757, %v3807
        %v3832 = vsub.f32 %v3762, %v3809
        %v3833 = vsub.f32 %v3765, %v3811
        %v3834 = vsub.f32 %v3770, %v3813
        %v3835 = vsub.f32 %v3773, %v3815
        %v3836 = vsub.f32 %v3778, %v3817
        %v3837 = vsub.f32 %v3781, %v3819
        %v3838 = vsub.f32 %v3786, %v3821
        %v3839 = vsub.f32 %v3789, %v3823
        %v3840 = vmul.f32 %v3824, 1.442695
        %v3841 = vpow.pop %v3840
        %v3842 = vmul.f32 %v3825, 1.442695
        %v3843 = vpow.pop %v3842
        %v3844 = vmul.f32 %v3826, 1.442695
        %v3845 = vpow.pop %v3844
        %v3846 = vmul.f32 %v3827, 1.442695
        %v3847 = vpow.pop %v3846
        %v3848 = vmul.f32 %v3828, 1.442695
        %v3849 = vpow.pop %v3848
        %v3850 = vmul.f32 %v3829, 1.442695
        %v3851 = vpow.pop %v3850
        %v3852 = vmul.f32 %v3830, 1.442695
        %v3853 = vpow.pop %v3852
        %v3854 = vmul.f32 %v3831, 1.442695
        %v3855 = vpow.pop %v3854
        %v3856 = vmul.f32 %v3832, 1.442695
        %v3857 = vpow.pop %v3856
        %v3858 = vmul.f32 %v3833, 1.442695
        %v3859 = vpow.pop %v3858
        %v3860 = vmul.f32 %v3834, 1.442695
        %v3861 = vpow.pop %v3860
        %v3862 = vmul.f32 %v3835, 1.442695
        %v3863 = vpow.pop %v3862
        %v3864 = vmul.f32 %v3836, 1.442695
        %v3865 = vpow.pop %v3864
        %v3866 = vmul.f32 %v3837, 1.442695
        %v3867 = vpow.pop %v3866
        %v3868 = vmul.f32 %v3838, 1.442695
        %v3869 = vpow.pop %v3868
        %v3870 = vmul.f32 %v3839, 1.442695
        %v3871 = vpow.pop %v3870
        %3872 = vadd.xlane.f32.xlu0 %v3841
        %v3873 = vpop.xlane.xlu0 %3872
        %3874 = vadd.xlane.f32.xlu0 %v3843
        %v3875 = vpop.xlane.xlu0 %3874
        %3876 = vadd.xlane.f32.xlu0 %v3845
        %v3877 = vpop.xlane.xlu0 %3876
        %3878 = vadd.xlane.f32.xlu0 %v3847
        %v3879 = vpop.xlane.xlu0 %3878
        %3880 = vadd.xlane.f32.xlu0 %v3849
        %v3881 = vpop.xlane.xlu0 %3880
        %3882 = vadd.xlane.f32.xlu0 %v3851
        %v3883 = vpop.xlane.xlu0 %3882
        %3884 = vadd.xlane.f32.xlu0 %v3853
        %v3885 = vpop.xlane.xlu0 %3884
        %3886 = vadd.xlane.f32.xlu0 %v3855
        %v3887 = vpop.xlane.xlu0 %3886
        %3888 = vadd.xlane.f32.xlu0 %v3857
        %v3889 = vpop.xlane.xlu0 %3888
        %3890 = vadd.xlane.f32.xlu0 %v3859
        %v3891 = vpop.xlane.xlu0 %3890
        %3892 = vadd.xlane.f32.xlu0 %v3861
        %v3893 = vpop.xlane.xlu0 %3892
        %3894 = vadd.xlane.f32.xlu0 %v3863
        %v3895 = vpop.xlane.xlu0 %3894
        %3896 = vadd.xlane.f32.xlu0 %v3865
        %v3897 = vpop.xlane.xlu0 %3896
        %3898 = vadd.xlane.f32.xlu0 %v3867
        %v3899 = vpop.xlane.xlu0 %3898
        %3900 = vadd.xlane.f32.xlu0 %v3869
        %v3901 = vpop.xlane.xlu0 %3900
        %3902 = vadd.xlane.f32.xlu0 %v3871
        %v3903 = vpop.xlane.xlu0 %3902
        %v3904 = vrcp.pop %v3873
        %v3905 = vrcp.pop %v3875
        %v3906 = vrcp.pop %v3877
        %v3907 = vrcp.pop %v3879
        %v3908 = vrcp.pop %v3881
        %v3909 = vrcp.pop %v3883
        %v3910 = vrcp.pop %v3885
        %v3911 = vrcp.pop %v3887
        %v3912 = vrcp.pop %v3889
        %v3913 = vrcp.pop %v3891
        %v3914 = vrcp.pop %v3893
        %v3915 = vrcp.pop %v3895
        %v3916 = vrcp.pop %v3897
        %v3917 = vrcp.pop %v3899
        %v3918 = vrcp.pop %v3901
        %v3919 = vrcp.pop %v3903
        %v3920 = vmul.f32 %v3841, %v3904
        %v3921 = vmul.f32 %v3843, %v3905
        %v3922 = vmul.f32 %v3845, %v3906
        %v3923 = vmul.f32 %v3847, %v3907
        %v3924 = vmul.f32 %v3849, %v3908
        %v3925 = vmul.f32 %v3851, %v3909
        %v3926 = vmul.f32 %v3853, %v3910
        %v3927 = vmul.f32 %v3855, %v3911
        %v3928 = vmul.f32 %v3857, %v3912
        %v3929 = vmul.f32 %v3859, %v3913
        %v3930 = vmul.f32 %v3861, %v3914
        %v3931 = vmul.f32 %v3863, %v3915
        %v3932 = vmul.f32 %v3865, %v3916
        %v3933 = vmul.f32 %v3867, %v3917
        %v3934 = vmul.f32 %v3869, %v3918
        %v3935 = vmul.f32 %v3871, %v3919
        %v3936 = vpack.c.bf16 %v3921, %v3920
        %v3937 = vpack.c.bf16 %v3923, %v3922
        %v3938 = vpack.c.bf16 %v3925, %v3924
        %v3939 = vpack.c.bf16 %v3927, %v3926
        %v3940 = vpack.c.bf16 %v3929, %v3928
        %v3941 = vpack.c.bf16 %v3931, %v3930
        %v3942 = vpack.c.bf16 %v3933, %v3932
        %v3943 = vpack.c.bf16 %v3935, %v3934
        %s3944 = scalar_lea.vmem %s364, 320 [#allocation8]
        %v3945 = vld [vmem:[%s3944] sm:$0xf]
        %v3946 = vld [vmem:[%s3944 + $0x4] sm:$0xf]
        %v3947 = vld [vmem:[%s3944 + $0x8] sm:$0xf]
        %v3948 = vld [vmem:[%s3944 + $0xc] sm:$0xf]
        %v3949 = vld [vmem:[%s3944 + $0x10] sm:$0xf]
        %v3950 = vld [vmem:[%s3944 + $0x14] sm:$0xf]
        %v3951 = vld [vmem:[%s3944 + $0x18] sm:$0xf]
        %v3952 = vld [vmem:[%s3944 + $0x1c] sm:$0xf]
        %v3953 = vld [vmem:[%s3944 + $0x20] sm:$0xf]
        %v3954 = vld [vmem:[%s3944 + $0x24] sm:$0xf]
        %v3955 = vld [vmem:[%s3944 + $0x28] sm:$0xf]
        %v3956 = vld [vmem:[%s3944 + $0x2c] sm:$0xf]
        %v3957 = vld [vmem:[%s3944 + $0x30] sm:$0xf]
        %v3958 = vld [vmem:[%s3944 + $0x34] sm:$0xf]
        %v3959 = vld [vmem:[%s3944 + $0x38] sm:$0xf]
        %v3960 = vld [vmem:[%s3944 + $0x3c] sm:$0xf]
        %v3977 = vunpack.c.l.b16 %v3945
        %v3978 = vunpack.c.l.b16 %v3946
        %v3979 = vunpack.c.l.b16 %v3947
        %v3980 = vunpack.c.l.b16 %v3948
        %v3981 = vunpack.c.l.b16 %v3949
        %v3982 = vunpack.c.l.b16 %v3950
        %v3983 = vunpack.c.l.b16 %v3951
        %v3984 = vunpack.c.l.b16 %v3952
        %v3985 = vunpack.c.l.b16 %v3953
        %v3986 = vunpack.c.l.b16 %v3954
        %v3987 = vunpack.c.l.b16 %v3955
        %v3988 = vunpack.c.l.b16 %v3956
        %v3989 = vunpack.c.l.b16 %v3957
        %v3990 = vunpack.c.l.b16 %v3958
        %v3991 = vunpack.c.l.b16 %v3959
        %v3992 = vunpack.c.l.b16 %v3960
        %v3993 = vpack.c.b16 %v3978, %v3977
        %v3994 = vpack.c.b16 %v3980, %v3979
        %v3995 = vpack.c.b16 %v3982, %v3981
        %v3996 = vpack.c.b16 %v3984, %v3983
        %v3997 = vpack.c.b16 %v3986, %v3985
        %v3998 = vpack.c.b16 %v3988, %v3987
        %v3999 = vpack.c.b16 %v3990, %v3989
        %v4000 = vpack.c.b16 %v3992, %v3991
        %4009 = vmatprep.subr.bf16.mxu0 0
        %4010 = vmatpush1.bf16.msra.mxu0 %v3993
        %4011 = vmatprep.subr.bf16.mxu0 0
        %4012 = vmatpush1.bf16.msra.mxu0 %v3994
        %4013 = vmatprep.subr.bf16.mxu0 0
        %4014 = vmatpush1.bf16.msra.mxu0 %v3995
        %4015 = vmatprep.subr.bf16.mxu0 0
        %4016 = vmatpush1.bf16.msra.mxu0 %v3996
        %4017 = vmatprep.subr.bf16.mxu0 0
        %4018 = vmatpush1.bf16.msra.mxu0 %v3997
        %4019 = vmatprep.subr.bf16.mxu0 0
        %4020 = vmatpush1.bf16.msra.mxu0 %v3998
        %4021 = vmatprep.subr.bf16.mxu0 0
        %4022 = vmatpush1.bf16.msra.mxu0 %v3999
        %4023 = vmatprep.subr.bf16.mxu0 0
        %4024 = vmatpush1.bf16.msra.mxu0 %v4000
        %4025 = vmatprep.subr.bf16.mxu0 0
        %4026 = vmatpush1.bf16.msra.mxu0 0
        %4027 = vmatprep.subr.bf16.mxu0 0
        %4028 = vmatpush1.bf16.msra.mxu0 0
        %4029 = vmatprep.subr.bf16.mxu0 0
        %4030 = vmatpush1.bf16.msra.mxu0 0
        %4031 = vmatprep.subr.bf16.mxu0 0
        %4032 = vmatpush1.bf16.msra.mxu0 0
        %4033 = vmatprep.subr.bf16.mxu0 0
        %4034 = vmatpush1.bf16.msra.mxu0 0
        %4035 = vmatprep.subr.bf16.mxu0 0
        %4036 = vmatpush1.bf16.msra.mxu0 0
        %4037 = vmatprep.subr.bf16.mxu0 0
        %4038 = vmatpush1.bf16.msra.mxu0 0
        %4039 = vmatprep.subr.bf16.mxu0 0
        %4040 = vmatpush1.bf16.msra.mxu0 0
        %4041 = vmatprep.mubr.bf16.mxu0 0
        %4042 = vmatmul.mubr.bf16.gmra.mrb[0].mxu0 %v3936
        %v4043 = vpop.f32.mrb[0].mxu0
        %v4044 = vadd.f32 0.0, %v4043
        %v4045 = vpop.f32.mrb[0].mxu0
        %v4046 = vpop.f32.mrb[0].mxu0
        %v4047 = vadd.f32 0.0, %v4046
        %v4048 = vpop.f32.mrb[0].mxu0
        %4049 = vmatprep.mubr.bf16.mxu0 0
        %4050 = vmatmul.mubr.bf16.gmra.mrb[0].mxu0 %v3937
        %v4051 = vpop.f32.mrb[0].mxu0
        %v4052 = vadd.f32 0.0, %v4051
        %v4053 = vpop.f32.mrb[0].mxu0
        %v4054 = vpop.f32.mrb[0].mxu0
        %v4055 = vadd.f32 0.0, %v4054
        %v4056 = vpop.f32.mrb[0].mxu0
        %4057 = vmatprep.mubr.bf16.mxu0 0
        %4058 = vmatmul.mubr.bf16.gmra.mrb[0].mxu0 %v3938
        %v4059 = vpop.f32.mrb[0].mxu0
        %v4060 = vadd.f32 0.0, %v4059
        %v4061 = vpop.f32.mrb[0].mxu0
        %v4062 = vpop.f32.mrb[0].mxu0
        %v4063 = vadd.f32 0.0, %v4062
        %v4064 = vpop.f32.mrb[0].mxu0
        %4065 = vmatprep.mubr.bf16.mxu0 0
        %4066 = vmatmul.mubr.bf16.gmra.mrb[0].mxu0 %v3939
        %v4067 = vpop.f32.mrb[0].mxu0
        %v4068 = vadd.f32 0.0, %v4067
        %v4069 = vpop.f32.mrb[0].mxu0
        %v4070 = vpop.f32.mrb[0].mxu0
        %v4071 = vadd.f32 0.0, %v4070
        %v4072 = vpop.f32.mrb[0].mxu0
        %4073 = vmatprep.mubr.bf16.mxu0 0
        %4074 = vmatmul.mubr.bf16.gmra.mrb[0].mxu0 %v3940
        %v4075 = vpop.f32.mrb[0].mxu0
        %v4076 = vadd.f32 0.0, %v4075
        %v4077 = vpop.f32.mrb[0].mxu0
        %v4078 = vpop.f32.mrb[0].mxu0
        %v4079 = vadd.f32 0.0, %v4078
        %v4080 = vpop.f32.mrb[0].mxu0
        %4081 = vmatprep.mubr.bf16.mxu0 0
        %4082 = vmatmul.mubr.bf16.gmra.mrb[0].mxu0 %v3941
        %v4083 = vpop.f32.mrb[0].mxu0
        %v4084 = vadd.f32 0.0, %v4083
        %v4085 = vpop.f32.mrb[0].mxu0
        %v4086 = vpop.f32.mrb[0].mxu0
        %v4087 = vadd.f32 0.0, %v4086
        %v4088 = vpop.f32.mrb[0].mxu0
        %4089 = vmatprep.mubr.bf16.mxu0 0
        %4090 = vmatmul.mubr.bf16.gmra.mrb[0].mxu0 %v3942
        %v4091 = vpop.f32.mrb[0].mxu0
        %v4092 = vadd.f32 0.0, %v4091
        %v4093 = vpop.f32.mrb[0].mxu0
        %v4094 = vpop.f32.mrb[0].mxu0
        %v4095 = vadd.f32 0.0, %v4094
        %v4096 = vpop.f32.mrb[0].mxu0
        %4097 = vmatprep.mubr.bf16.mxu0 0
        %4098 = vmatmul.mubr.bf16.gmra.mrb[0].mxu0 %v3943
        %v4099 = vpop.f32.mrb[0].mxu0
        %v4100 = vadd.f32 0.0, %v4099
        %v4101 = vpop.f32.mrb[0].mxu0
        %v4102 = vpop.f32.mrb[0].mxu0
        %v4103 = vadd.f32 0.0, %v4102
        %v4104 = vpop.f32.mrb[0].mxu0
        %4105 = vdwg.mxu0
        %v4106 = vadd.f32 %v3505, %v4044
        %v4107 = vadd.f32 %v3506, %v4047
        %v4108 = vadd.f32 %v3507, %v4052
        %v4109 = vadd.f32 %v3508, %v4055
        %v4110 = vadd.f32 %v3509, %v4060
        %v4111 = vadd.f32 %v3510, %v4063
        %v4112 = vadd.f32 %v3511, %v4068
        %v4113 = vadd.f32 %v3512, %v4071
        %v4114 = vadd.f32 %v3513, %v4076
        %v4115 = vadd.f32 %v3514, %v4079
        %v4116 = vadd.f32 %v3515, %v4084
        %v4117 = vadd.f32 %v3516, %v4087
        %v4118 = vadd.f32 %v3517, %v4092
        %v4119 = vadd.f32 %v3518, %v4095
        %v4120 = vadd.f32 %v3519, %v4100
        %v4121 = vadd.f32 %v3520, %v4103
        %s4122 = scalar_lea.vmem [#allocation7], 384
        %v4123 = vld [vmem:[%s4122] sm:$0xf]
        %v4124 = vld [vmem:[%s4122 + $0x4] sm:$0xf]
        %v4125 = vld [vmem:[%s4122 + $0x8] sm:$0xf]
        %v4126 = vld [vmem:[%s4122 + $0xc] sm:$0xf]
        %v4127 = vld [vmem:[%s4122 + $0x10] sm:$0xf]
        %v4128 = vld [vmem:[%s4122 + $0x14] sm:$0xf]
        %v4129 = vld [vmem:[%s4122 + $0x18] sm:$0xf]
        %v4130 = vld [vmem:[%s4122 + $0x1c] sm:$0xf]
        %v4131 = vld [vmem:[%s4122 + $0x20] sm:$0xf]
        %v4132 = vld [vmem:[%s4122 + $0x24] sm:$0xf]
        %v4133 = vld [vmem:[%s4122 + $0x28] sm:$0xf]
        %v4134 = vld [vmem:[%s4122 + $0x2c] sm:$0xf]
        %v4135 = vld [vmem:[%s4122 + $0x30] sm:$0xf]
        %v4136 = vld [vmem:[%s4122 + $0x34] sm:$0xf]
        %v4137 = vld [vmem:[%s4122 + $0x38] sm:$0xf]
        %v4138 = vld [vmem:[%s4122 + $0x3c] sm:$0xf]
        %v4155 = vunpack.c.l.b16 %v4123
        %v4156 = vunpack.c.l.b16 %v4124
        %v4157 = vunpack.c.l.b16 %v4125
        %v4158 = vunpack.c.l.b16 %v4126
        %v4159 = vunpack.c.l.b16 %v4127
        %v4160 = vunpack.c.l.b16 %v4128
        %v4161 = vunpack.c.l.b16 %v4129
        %v4162 = vunpack.c.l.b16 %v4130
        %v4163 = vunpack.c.l.b16 %v4131
        %v4164 = vunpack.c.l.b16 %v4132
        %v4165 = vunpack.c.l.b16 %v4133
        %v4166 = vunpack.c.l.b16 %v4134
        %v4167 = vunpack.c.l.b16 %v4135
        %v4168 = vunpack.c.l.b16 %v4136
        %v4169 = vunpack.c.l.b16 %v4137
        %v4170 = vunpack.c.l.b16 %v4138
        %v4171 = vpack.c.b16 %v4156, %v4155
        %v4172 = vpack.c.b16 %v4158, %v4157
        %v4173 = vpack.c.b16 %v4160, %v4159
        %v4174 = vpack.c.b16 %v4162, %v4161
        %v4175 = vpack.c.b16 %v4164, %v4163
        %v4176 = vpack.c.b16 %v4166, %v4165
        %v4177 = vpack.c.b16 %v4168, %v4167
        %v4178 = vpack.c.b16 %v4170, %v4169
        %4187 = vmatprep.subr.bf16.mxu0 0
        %4188 = vmatpush1.bf16.msra.mxu0 %v4171
        %4189 = vmatprep.subr.bf16.mxu0 0
        %4190 = vmatpush1.bf16.msra.mxu0 %v4172
        %4191 = vmatprep.subr.bf16.mxu0 0
        %4192 = vmatpush1.bf16.msra.mxu0 %v4173
        %4193 = vmatprep.subr.bf16.mxu0 0
        %4194 = vmatpush1.bf16.msra.mxu0 %v4174
        %4195 = vmatprep.subr.bf16.mxu0 0
        %4196 = vmatpush1.bf16.msra.mxu0 %v4175
        %4197 = vmatprep.subr.bf16.mxu0 0
        %4198 = vmatpush1.bf16.msra.mxu0 %v4176
        %4199 = vmatprep.subr.bf16.mxu0 0
        %4200 = vmatpush1.bf16.msra.mxu0 %v4177
        %4201 = vmatprep.subr.bf16.mxu0 0
        %4202 = vmatpush1.bf16.msra.mxu0 %v4178
        %4203 = vmatprep.subr.bf16.mxu0 0
        %4204 = vmatpush1.bf16.msra.mxu0 0
        %4205 = vmatprep.subr.bf16.mxu0 0
        %4206 = vmatpush1.bf16.msra.mxu0 0
        %4207 = vmatprep.subr.bf16.mxu0 0
        %4208 = vmatpush1.bf16.msra.mxu0 0
        %4209 = vmatprep.subr.bf16.mxu0 0
        %4210 = vmatpush1.bf16.msra.mxu0 0
        %4211 = vmatprep.subr.bf16.mxu0 0
        %4212 = vmatpush1.bf16.msra.mxu0 0
        %4213 = vmatprep.subr.bf16.mxu0 0
        %4214 = vmatpush1.bf16.msra.mxu0 0
        %4215 = vmatprep.subr.bf16.mxu0 0
        %4216 = vmatpush1.bf16.msra.mxu0 0
        %4217 = vmatprep.subr.bf16.mxu0 0
        %4218 = vmatpush1.bf16.msra.mxu0 0
        %4219 = vmatprep.mubr.bf16.mxu0 0
        %4220 = vmatmul.mubr.bf16.gmra.mrb[0].mxu0 %v502
        %v4221 = vpop.f32.mrb[0].mxu0
        %v4222 = vadd.f32 0.0, %v4221
        %v4223 = vpop.f32.mrb[0].mxu0
        %v4224 = vpop.f32.mrb[0].mxu0
        %v4225 = vadd.f32 0.0, %v4224
        %v4226 = vpop.f32.mrb[0].mxu0
        %4227 = vmatprep.mubr.bf16.mxu0 0
        %4228 = vmatmul.mubr.bf16.gmra.mrb[0].mxu0 %v503
        %v4229 = vpop.f32.mrb[0].mxu0
        %v4230 = vadd.f32 0.0, %v4229
        %v4231 = vpop.f32.mrb[0].mxu0
        %v4232 = vpop.f32.mrb[0].mxu0
        %v4233 = vadd.f32 0.0, %v4232
        %v4234 = vpop.f32.mrb[0].mxu0
        %4235 = vmatprep.mubr.bf16.mxu0 0
        %4236 = vmatmul.mubr.bf16.gmra.mrb[0].mxu0 %v504
        %v4237 = vpop.f32.mrb[0].mxu0
        %v4238 = vadd.f32 0.0, %v4237
        %v4239 = vpop.f32.mrb[0].mxu0
        %v4240 = vpop.f32.mrb[0].mxu0
        %v4241 = vadd.f32 0.0, %v4240
        %v4242 = vpop.f32.mrb[0].mxu0
        %4243 = vmatprep.mubr.bf16.mxu0 0
        %4244 = vmatmul.mubr.bf16.gmra.mrb[0].mxu0 %v505
        %v4245 = vpop.f32.mrb[0].mxu0
        %v4246 = vadd.f32 0.0, %v4245
        %v4247 = vpop.f32.mrb[0].mxu0
        %v4248 = vpop.f32.mrb[0].mxu0
        %v4249 = vadd.f32 0.0, %v4248
        %v4250 = vpop.f32.mrb[0].mxu0
        %4251 = vmatprep.mubr.bf16.mxu0 0
        %4252 = vmatmul.mubr.bf16.gmra.mrb[0].mxu0 %v506
        %v4253 = vpop.f32.mrb[0].mxu0
        %v4254 = vadd.f32 0.0, %v4253
        %v4255 = vpop.f32.mrb[0].mxu0
        %v4256 = vpop.f32.mrb[0].mxu0
        %v4257 = vadd.f32 0.0, %v4256
        %v4258 = vpop.f32.mrb[0].mxu0
        %4259 = vmatprep.mubr.bf16.mxu0 0
        %4260 = vmatmul.mubr.bf16.gmra.mrb[0].mxu0 %v507
        %v4261 = vpop.f32.mrb[0].mxu0
        %v4262 = vadd.f32 0.0, %v4261
        %v4263 = vpop.f32.mrb[0].mxu0
        %v4264 = vpop.f32.mrb[0].mxu0
        %v4265 = vadd.f32 0.0, %v4264
        %v4266 = vpop.f32.mrb[0].mxu0
        %4267 = vmatprep.mubr.bf16.mxu0 0
        %4268 = vmatmul.mubr.bf16.gmra.mrb[0].mxu0 %v508
        %v4269 = vpop.f32.mrb[0].mxu0
        %v4270 = vadd.f32 0.0, %v4269
        %v4271 = vpop.f32.mrb[0].mxu0
        %v4272 = vpop.f32.mrb[0].mxu0
        %v4273 = vadd.f32 0.0, %v4272
        %v4274 = vpop.f32.mrb[0].mxu0
        %4275 = vmatprep.mubr.bf16.mxu0 0
        %4276 = vmatmul.mubr.bf16.gmra.mrb[0].mxu0 %v509
        %v4277 = vpop.f32.mrb[0].mxu0
        %v4278 = vadd.f32 0.0, %v4277
        %v4279 = vpop.f32.mrb[0].mxu0
        %v4280 = vpop.f32.mrb[0].mxu0
        %v4281 = vadd.f32 0.0, %v4280
        %v4282 = vpop.f32.mrb[0].mxu0
        %4283 = vdwg.mxu0
        %v4284 = vpack.c.bf16 %v4225, %v4222
        %v4285 = vpack.c.bf16 %v4233, %v4230
        %v4286 = vpack.c.bf16 %v4241, %v4238
        %v4287 = vpack.c.bf16 %v4249, %v4246
        %v4288 = vpack.c.bf16 %v4257, %v4254
        %v4289 = vpack.c.bf16 %v4265, %v4262
        %v4290 = vpack.c.bf16 %v4273, %v4270
        %v4291 = vpack.c.bf16 %v4281, %v4278
        %v4292 = vlaneseq
        %v4293 = vshrl.u32 %v4292, 7
        %v4294 = vsub.s32 6, %v4293
        %v4295 = vrot.slane %v453, %v4294
        %4296 = vmatprep.subr.bf16.mxu0 0
        %4297 = vmatpush1.bf16.msra.mxu0 %v707
        %4298 = vmatprep.subr.bf16.mxu0 0
        %4299 = vmatpush1.bf16.msra.mxu0 %v708
        %4300 = vmatprep.subr.bf16.mxu0 0
        %4301 = vmatpush1.bf16.msra.mxu0 %v709
        %4302 = vmatprep.subr.bf16.mxu0 0
        %4303 = vmatpush1.bf16.msra.mxu0 %v710
        %4304 = vmatprep.subr.bf16.mxu0 0
        %4305 = vmatpush1.bf16.msra.mxu0 %v711
        %4306 = vmatprep.subr.bf16.mxu0 0
        %4307 = vmatpush1.bf16.msra.mxu0 %v712
        %4308 = vmatprep.subr.bf16.mxu0 0
        %4309 = vmatpush1.bf16.msra.mxu0 %v713
        %4310 = vmatprep.subr.bf16.mxu0 0
        %4311 = vmatpush1.bf16.msra.mxu0 %v714
        %4312 = vmatprep.subr.bf16.mxu0 0
        %4313 = vmatpush1.bf16.msra.mxu0 0
        %4314 = vmatprep.subr.bf16.mxu0 0
        %4315 = vmatpush1.bf16.msra.mxu0 0
        %4316 = vmatprep.subr.bf16.mxu0 0
        %4317 = vmatpush1.bf16.msra.mxu0 0
        %4318 = vmatprep.subr.bf16.mxu0 0
        %4319 = vmatpush1.bf16.msra.mxu0 0
        %4320 = vmatprep.subr.bf16.mxu0 0
        %4321 = vmatpush1.bf16.msra.mxu0 0
        %4322 = vmatprep.subr.bf16.mxu0 0
        %4323 = vmatpush1.bf16.msra.mxu0 0
        %4324 = vmatprep.subr.bf16.mxu0 0
        %4325 = vmatpush1.bf16.msra.mxu0 0
        %4326 = vmatprep.subr.bf16.mxu0 0
        %4327 = vmatpush1.bf16.msra.mxu0 0
        %4328 = vmatprep.mubr.bf16.mxu0 0
        %4329 = vmatmul.mubr.bf16.gmra.mrb[0].mxu0 %v4284
        %v4330 = vpop.f32.mrb[0].mxu0
        %v4331 = vadd.f32 %v4295, %v4330
        %v4332 = vpop.f32.mrb[0].mxu0
        %v4333 = vpop.f32.mrb[0].mxu0
        %v4334 = vadd.f32 %v4295, %v4333
        %v4335 = vpop.f32.mrb[0].mxu0
        %4336 = vmatprep.mubr.bf16.mxu0 0
        %4337 = vmatmul.mubr.bf16.gmra.mrb[0].mxu0 %v4285
        %v4338 = vpop.f32.mrb[0].mxu0
        %v4339 = vadd.f32 %v4295, %v4338
        %v4340 = vpop.f32.mrb[0].mxu0
        %v4341 = vpop.f32.mrb[0].mxu0
        %v4342 = vadd.f32 %v4295, %v4341
        %v4343 = vpop.f32.mrb[0].mxu0
        %4344 = vmatprep.mubr.bf16.mxu0 0
        %4345 = vmatmul.mubr.bf16.gmra.mrb[0].mxu0 %v4286
        %v4346 = vpop.f32.mrb[0].mxu0
        %v4347 = vadd.f32 %v4295, %v4346
        %v4348 = vpop.f32.mrb[0].mxu0
        %v4349 = vpop.f32.mrb[0].mxu0
        %v4350 = vadd.f32 %v4295, %v4349
        %v4351 = vpop.f32.mrb[0].mxu0
        %4352 = vmatprep.mubr.bf16.mxu0 0
        %4353 = vmatmul.mubr.bf16.gmra.mrb[0].mxu0 %v4287
        %v4354 = vpop.f32.mrb[0].mxu0
        %v4355 = vadd.f32 %v4295, %v4354
        %v4356 = vpop.f32.mrb[0].mxu0
        %v4357 = vpop.f32.mrb[0].mxu0
        %v4358 = vadd.f32 %v4295, %v4357
        %v4359 = vpop.f32.mrb[0].mxu0
        %4360 = vmatprep.mubr.bf16.mxu0 0
        %4361 = vmatmul.mubr.bf16.gmra.mrb[0].mxu0 %v4288
        %v4362 = vpop.f32.mrb[0].mxu0
        %v4363 = vadd.f32 %v4295, %v4362
        %v4364 = vpop.f32.mrb[0].mxu0
        %v4365 = vpop.f32.mrb[0].mxu0
        %v4366 = vadd.f32 %v4295, %v4365
        %v4367 = vpop.f32.mrb[0].mxu0
        %4368 = vmatprep.mubr.bf16.mxu0 0
        %4369 = vmatmul.mubr.bf16.gmra.mrb[0].mxu0 %v4289
        %v4370 = vpop.f32.mrb[0].mxu0
        %v4371 = vadd.f32 %v4295, %v4370
        %v4372 = vpop.f32.mrb[0].mxu0
        %v4373 = vpop.f32.mrb[0].mxu0
        %v4374 = vadd.f32 %v4295, %v4373
        %v4375 = vpop.f32.mrb[0].mxu0
        %4376 = vmatprep.mubr.bf16.mxu0 0
        %4377 = vmatmul.mubr.bf16.gmra.mrb[0].mxu0 %v4290
        %v4378 = vpop.f32.mrb[0].mxu0
        %v4379 = vadd.f32 %v4295, %v4378
        %v4380 = vpop.f32.mrb[0].mxu0
        %v4381 = vpop.f32.mrb[0].mxu0
        %v4382 = vadd.f32 %v4295, %v4381
        %v4383 = vpop.f32.mrb[0].mxu0
        %4384 = vmatprep.mubr.bf16.mxu0 0
        %4385 = vmatmul.mubr.bf16.gmra.mrb[0].mxu0 %v4291
        %v4386 = vpop.f32.mrb[0].mxu0
        %v4387 = vadd.f32 %v4295, %v4386
        %v4388 = vpop.f32.mrb[0].mxu0
        %v4389 = vpop.f32.mrb[0].mxu0
        %v4390 = vadd.f32 %v4295, %v4389
        %v4391 = vpop.f32.mrb[0].mxu0
        %4392 = vdwg.mxu0
        %4393 = vmax.xlane.f32.xlu0 %v4331
        %v4394 = vpop.xlane.xlu0 %4393
        %4395 = vmax.xlane.f32.xlu0 %v4334
        %v4396 = vpop.xlane.xlu0 %4395
        %4397 = vmax.xlane.f32.xlu0 %v4339
        %v4398 = vpop.xlane.xlu0 %4397
        %4399 = vmax.xlane.f32.xlu0 %v4342
        %v4400 = vpop.xlane.xlu0 %4399
        %4401 = vmax.xlane.f32.xlu0 %v4347
        %v4402 = vpop.xlane.xlu0 %4401
        %4403 = vmax.xlane.f32.xlu0 %v4350
        %v4404 = vpop.xlane.xlu0 %4403
        %4405 = vmax.xlane.f32.xlu0 %v4355
        %v4406 = vpop.xlane.xlu0 %4405
        %4407 = vmax.xlane.f32.xlu0 %v4358
        %v4408 = vpop.xlane.xlu0 %4407
        %4409 = vmax.xlane.f32.xlu0 %v4363
        %v4410 = vpop.xlane.xlu0 %4409
        %4411 = vmax.xlane.f32.xlu0 %v4366
        %v4412 = vpop.xlane.xlu0 %4411
        %4413 = vmax.xlane.f32.xlu0 %v4371
        %v4414 = vpop.xlane.xlu0 %4413
        %4415 = vmax.xlane.f32.xlu0 %v4374
        %v4416 = vpop.xlane.xlu0 %4415
        %4417 = vmax.xlane.f32.xlu0 %v4379
        %v4418 = vpop.xlane.xlu0 %4417
        %4419 = vmax.xlane.f32.xlu0 %v4382
        %v4420 = vpop.xlane.xlu0 %4419
        %4421 = vmax.xlane.f32.xlu0 %v4387
        %v4422 = vpop.xlane.xlu0 %4421
        %4423 = vmax.xlane.f32.xlu0 %v4390
        %v4424 = vpop.xlane.xlu0 %4423
        %v4425 = vsub.f32 %v4331, %v4394
        %v4426 = vsub.f32 %v4334, %v4396
        %v4427 = vsub.f32 %v4339, %v4398
        %v4428 = vsub.f32 %v4342, %v4400
        %v4429 = vsub.f32 %v4347, %v4402
        %v4430 = vsub.f32 %v4350, %v4404
        %v4431 = vsub.f32 %v4355, %v4406
        %v4432 = vsub.f32 %v4358, %v4408
        %v4433 = vsub.f32 %v4363, %v4410
        %v4434 = vsub.f32 %v4366, %v4412
        %v4435 = vsub.f32 %v4371, %v4414
        %v4436 = vsub.f32 %v4374, %v4416
        %v4437 = vsub.f32 %v4379, %v4418
        %v4438 = vsub.f32 %v4382, %v4420
        %v4439 = vsub.f32 %v4387, %v4422
        %v4440 = vsub.f32 %v4390, %v4424
        %v4441 = vmul.f32 %v4425, 1.442695
        %v4442 = vpow.pop %v4441
        %v4443 = vmul.f32 %v4426, 1.442695
        %v4444 = vpow.pop %v4443
        %v4445 = vmul.f32 %v4427, 1.442695
        %v4446 = vpow.pop %v4445
        %v4447 = vmul.f32 %v4428, 1.442695
        %v4448 = vpow.pop %v4447
        %v4449 = vmul.f32 %v4429, 1.442695
        %v4450 = vpow.pop %v4449
        %v4451 = vmul.f32 %v4430, 1.442695
        %v4452 = vpow.pop %v4451
        %v4453 = vmul.f32 %v4431, 1.442695
        %v4454 = vpow.pop %v4453
        %v4455 = vmul.f32 %v4432, 1.442695
        %v4456 = vpow.pop %v4455
        %v4457 = vmul.f32 %v4433, 1.442695
        %v4458 = vpow.pop %v4457
        %v4459 = vmul.f32 %v4434, 1.442695
        %v4460 = vpow.pop %v4459
        %v4461 = vmul.f32 %v4435, 1.442695
        %v4462 = vpow.pop %v4461
        %v4463 = vmul.f32 %v4436, 1.442695
        %v4464 = vpow.pop %v4463
        %v4465 = vmul.f32 %v4437, 1.442695
        %v4466 = vpow.pop %v4465
        %v4467 = vmul.f32 %v4438, 1.442695
        %v4468 = vpow.pop %v4467
        %v4469 = vmul.f32 %v4439, 1.442695
        %v4470 = vpow.pop %v4469
        %v4471 = vmul.f32 %v4440, 1.442695
        %v4472 = vpow.pop %v4471
        %4473 = vadd.xlane.f32.xlu0 %v4442
        %v4474 = vpop.xlane.xlu0 %4473
        %4475 = vadd.xlane.f32.xlu0 %v4444
        %v4476 = vpop.xlane.xlu0 %4475
        %4477 = vadd.xlane.f32.xlu0 %v4446
        %v4478 = vpop.xlane.xlu0 %4477
        %4479 = vadd.xlane.f32.xlu0 %v4448
        %v4480 = vpop.xlane.xlu0 %4479
        %4481 = vadd.xlane.f32.xlu0 %v4450
        %v4482 = vpop.xlane.xlu0 %4481
        %4483 = vadd.xlane.f32.xlu0 %v4452
        %v4484 = vpop.xlane.xlu0 %4483
        %4485 = vadd.xlane.f32.xlu0 %v4454
        %v4486 = vpop.xlane.xlu0 %4485
        %4487 = vadd.xlane.f32.xlu0 %v4456
        %v4488 = vpop.xlane.xlu0 %4487
        %4489 = vadd.xlane.f32.xlu0 %v4458
        %v4490 = vpop.xlane.xlu0 %4489
        %4491 = vadd.xlane.f32.xlu0 %v4460
        %v4492 = vpop.xlane.xlu0 %4491
        %4493 = vadd.xlane.f32.xlu0 %v4462
        %v4494 = vpop.xlane.xlu0 %4493
        %4495 = vadd.xlane.f32.xlu0 %v4464
        %v4496 = vpop.xlane.xlu0 %4495
        %4497 = vadd.xlane.f32.xlu0 %v4466
        %v4498 = vpop.xlane.xlu0 %4497
        %4499 = vadd.xlane.f32.xlu0 %v4468
        %v4500 = vpop.xlane.xlu0 %4499
        %4501 = vadd.xlane.f32.xlu0 %v4470
        %v4502 = vpop.xlane.xlu0 %4501
        %4503 = vadd.xlane.f32.xlu0 %v4472
        %v4504 = vpop.xlane.xlu0 %4503
        %v4505 = vrcp.pop %v4474
        %v4506 = vrcp.pop %v4476
        %v4507 = vrcp.pop %v4478
        %v4508 = vrcp.pop %v4480
        %v4509 = vrcp.pop %v4482
        %v4510 = vrcp.pop %v4484
        %v4511 = vrcp.pop %v4486
        %v4512 = vrcp.pop %v4488
        %v4513 = vrcp.pop %v4490
        %v4514 = vrcp.pop %v4492
        %v4515 = vrcp.pop %v4494
        %v4516 = vrcp.pop %v4496
        %v4517 = vrcp.pop %v4498
        %v4518 = vrcp.pop %v4500
        %v4519 = vrcp.pop %v4502
        %v4520 = vrcp.pop %v4504
        %v4521 = vmul.f32 %v4442, %v4505
        %v4522 = vmul.f32 %v4444, %v4506
        %v4523 = vmul.f32 %v4446, %v4507
        %v4524 = vmul.f32 %v4448, %v4508
        %v4525 = vmul.f32 %v4450, %v4509
        %v4526 = vmul.f32 %v4452, %v4510
        %v4527 = vmul.f32 %v4454, %v4511
        %v4528 = vmul.f32 %v4456, %v4512
        %v4529 = vmul.f32 %v4458, %v4513
        %v4530 = vmul.f32 %v4460, %v4514
        %v4531 = vmul.f32 %v4462, %v4515
        %v4532 = vmul.f32 %v4464, %v4516
        %v4533 = vmul.f32 %v4466, %v4517
        %v4534 = vmul.f32 %v4468, %v4518
        %v4535 = vmul.f32 %v4470, %v4519
        %v4536 = vmul.f32 %v4472, %v4520
        %v4537 = vpack.c.bf16 %v4522, %v4521
        %v4538 = vpack.c.bf16 %v4524, %v4523
        %v4539 = vpack.c.bf16 %v4526, %v4525
        %v4540 = vpack.c.bf16 %v4528, %v4527
        %v4541 = vpack.c.bf16 %v4530, %v4529
        %v4542 = vpack.c.bf16 %v4532, %v4531
        %v4543 = vpack.c.bf16 %v4534, %v4533
        %v4544 = vpack.c.bf16 %v4536, %v4535
        %s4545 = scalar_lea.vmem %s364, 384 [#allocation8]
        %v4546 = vld [vmem:[%s4545] sm:$0xf]
        %v4547 = vld [vmem:[%s4545 + $0x4] sm:$0xf]
        %v4548 = vld [vmem:[%s4545 + $0x8] sm:$0xf]
        %v4549 = vld [vmem:[%s4545 + $0xc] sm:$0xf]
        %v4550 = vld [vmem:[%s4545 + $0x10] sm:$0xf]
        %v4551 = vld [vmem:[%s4545 + $0x14] sm:$0xf]
        %v4552 = vld [vmem:[%s4545 + $0x18] sm:$0xf]
        %v4553 = vld [vmem:[%s4545 + $0x1c] sm:$0xf]
        %v4554 = vld [vmem:[%s4545 + $0x20] sm:$0xf]
        %v4555 = vld [vmem:[%s4545 + $0x24] sm:$0xf]
        %v4556 = vld [vmem:[%s4545 + $0x28] sm:$0xf]
        %v4557 = vld [vmem:[%s4545 + $0x2c] sm:$0xf]
        %v4558 = vld [vmem:[%s4545 + $0x30] sm:$0xf]
        %v4559 = vld [vmem:[%s4545 + $0x34] sm:$0xf]
        %v4560 = vld [vmem:[%s4545 + $0x38] sm:$0xf]
        %v4561 = vld [vmem:[%s4545 + $0x3c] sm:$0xf]
        %v4578 = vunpack.c.l.b16 %v4546
        %v4579 = vunpack.c.l.b16 %v4547
        %v4580 = vunpack.c.l.b16 %v4548
        %v4581 = vunpack.c.l.b16 %v4549
        %v4582 = vunpack.c.l.b16 %v4550
        %v4583 = vunpack.c.l.b16 %v4551
        %v4584 = vunpack.c.l.b16 %v4552
        %v4585 = vunpack.c.l.b16 %v4553
        %v4586 = vunpack.c.l.b16 %v4554
        %v4587 = vunpack.c.l.b16 %v4555
        %v4588 = vunpack.c.l.b16 %v4556
        %v4589 = vunpack.c.l.b16 %v4557
        %v4590 = vunpack.c.l.b16 %v4558
        %v4591 = vunpack.c.l.b16 %v4559
        %v4592 = vunpack.c.l.b16 %v4560
        %v4593 = vunpack.c.l.b16 %v4561
        %v4594 = vpack.c.b16 %v4579, %v4578
        %v4595 = vpack.c.b16 %v4581, %v4580
        %v4596 = vpack.c.b16 %v4583, %v4582
        %v4597 = vpack.c.b16 %v4585, %v4584
        %v4598 = vpack.c.b16 %v4587, %v4586
        %v4599 = vpack.c.b16 %v4589, %v4588
        %v4600 = vpack.c.b16 %v4591, %v4590
        %v4601 = vpack.c.b16 %v4593, %v4592
        %4610 = vmatprep.subr.bf16.mxu0 0
        %4611 = vmatpush1.bf16.msra.mxu0 %v4594
        %4612 = vmatprep.subr.bf16.mxu0 0
        %4613 = vmatpush1.bf16.msra.mxu0 %v4595
        %4614 = vmatprep.subr.bf16.mxu0 0
        %4615 = vmatpush1.bf16.msra.mxu0 %v4596
        %4616 = vmatprep.subr.bf16.mxu0 0
        %4617 = vmatpush1.bf16.msra.mxu0 %v4597
        %4618 = vmatprep.subr.bf16.mxu0 0
        %4619 = vmatpush1.bf16.msra.mxu0 %v4598
        %4620 = vmatprep.subr.bf16.mxu0 0
        %4621 = vmatpush1.bf16.msra.mxu0 %v4599
        %4622 = vmatprep.subr.bf16.mxu0 0
        %4623 = vmatpush1.bf16.msra.mxu0 %v4600
        %4624 = vmatprep.subr.bf16.mxu0 0
        %4625 = vmatpush1.bf16.msra.mxu0 %v4601
        %4626 = vmatprep.subr.bf16.mxu0 0
        %4627 = vmatpush1.bf16.msra.mxu0 0
        %4628 = vmatprep.subr.bf16.mxu0 0
        %4629 = vmatpush1.bf16.msra.mxu0 0
        %4630 = vmatprep.subr.bf16.mxu0 0
        %4631 = vmatpush1.bf16.msra.mxu0 0
        %4632 = vmatprep.subr.bf16.mxu0 0
        %4633 = vmatpush1.bf16.msra.mxu0 0
        %4634 = vmatprep.subr.bf16.mxu0 0
        %4635 = vmatpush1.bf16.msra.mxu0 0
        %4636 = vmatprep.subr.bf16.mxu0 0
        %4637 = vmatpush1.bf16.msra.mxu0 0
        %4638 = vmatprep.subr.bf16.mxu0 0
        %4639 = vmatpush1.bf16.msra.mxu0 0
        %4640 = vmatprep.subr.bf16.mxu0 0
        %4641 = vmatpush1.bf16.msra.mxu0 0
        %4642 = vmatprep.mubr.bf16.mxu0 0
        %4643 = vmatmul.mubr.bf16.gmra.mrb[0].mxu0 %v4537
        %v4644 = vpop.f32.mrb[0].mxu0
        %v4645 = vadd.f32 0.0, %v4644
        %v4646 = vpop.f32.mrb[0].mxu0
        %v4647 = vpop.f32.mrb[0].mxu0
        %v4648 = vadd.f32 0.0, %v4647
        %v4649 = vpop.f32.mrb[0].mxu0
        %4650 = vmatprep.mubr.bf16.mxu0 0
        %4651 = vmatmul.mubr.bf16.gmra.mrb[0].mxu0 %v4538
        %v4652 = vpop.f32.mrb[0].mxu0
        %v4653 = vadd.f32 0.0, %v4652
        %v4654 = vpop.f32.mrb[0].mxu0
        %v4655 = vpop.f32.mrb[0].mxu0
        %v4656 = vadd.f32 0.0, %v4655
        %v4657 = vpop.f32.mrb[0].mxu0
        %4658 = vmatprep.mubr.bf16.mxu0 0
        %4659 = vmatmul.mubr.bf16.gmra.mrb[0].mxu0 %v4539
        %v4660 = vpop.f32.mrb[0].mxu0
        %v4661 = vadd.f32 0.0, %v4660
        %v4662 = vpop.f32.mrb[0].mxu0
        %v4663 = vpop.f32.mrb[0].mxu0
        %v4664 = vadd.f32 0.0, %v4663
        %v4665 = vpop.f32.mrb[0].mxu0
        %4666 = vmatprep.mubr.bf16.mxu0 0
        %4667 = vmatmul.mubr.bf16.gmra.mrb[0].mxu0 %v4540
        %v4668 = vpop.f32.mrb[0].mxu0
        %v4669 = vadd.f32 0.0, %v4668
        %v4670 = vpop.f32.mrb[0].mxu0
        %v4671 = vpop.f32.mrb[0].mxu0
        %v4672 = vadd.f32 0.0, %v4671
        %v4673 = vpop.f32.mrb[0].mxu0
        %4674 = vmatprep.mubr.bf16.mxu0 0
        %4675 = vmatmul.mubr.bf16.gmra.mrb[0].mxu0 %v4541
        %v4676 = vpop.f32.mrb[0].mxu0
        %v4677 = vadd.f32 0.0, %v4676
        %v4678 = vpop.f32.mrb[0].mxu0
        %v4679 = vpop.f32.mrb[0].mxu0
        %v4680 = vadd.f32 0.0, %v4679
        %v4681 = vpop.f32.mrb[0].mxu0
        %4682 = vmatprep.mubr.bf16.mxu0 0
        %4683 = vmatmul.mubr.bf16.gmra.mrb[0].mxu0 %v4542
        %v4684 = vpop.f32.mrb[0].mxu0
        %v4685 = vadd.f32 0.0, %v4684
        %v4686 = vpop.f32.mrb[0].mxu0
        %v4687 = vpop.f32.mrb[0].mxu0
        %v4688 = vadd.f32 0.0, %v4687
        %v4689 = vpop.f32.mrb[0].mxu0
        %4690 = vmatprep.mubr.bf16.mxu0 0
        %4691 = vmatmul.mubr.bf16.gmra.mrb[0].mxu0 %v4543
        %v4692 = vpop.f32.mrb[0].mxu0
        %v4693 = vadd.f32 0.0, %v4692
        %v4694 = vpop.f32.mrb[0].mxu0
        %v4695 = vpop.f32.mrb[0].mxu0
        %v4696 = vadd.f32 0.0, %v4695
        %v4697 = vpop.f32.mrb[0].mxu0
        %4698 = vmatprep.mubr.bf16.mxu0 0
        %4699 = vmatmul.mubr.bf16.gmra.mrb[0].mxu0 %v4544
        %v4700 = vpop.f32.mrb[0].mxu0
        %v4701 = vadd.f32 0.0, %v4700
        %v4702 = vpop.f32.mrb[0].mxu0
        %v4703 = vpop.f32.mrb[0].mxu0
        %v4704 = vadd.f32 0.0, %v4703
        %v4705 = vpop.f32.mrb[0].mxu0
        %4706 = vdwg.mxu0
        %v4707 = vadd.f32 %v4106, %v4645
        %v4708 = vadd.f32 %v4107, %v4648
        %v4709 = vadd.f32 %v4108, %v4653
        %v4710 = vadd.f32 %v4109, %v4656
        %v4711 = vadd.f32 %v4110, %v4661
        %v4712 = vadd.f32 %v4111, %v4664
        %v4713 = vadd.f32 %v4112, %v4669
        %v4714 = vadd.f32 %v4113, %v4672
        %v4715 = vadd.f32 %v4114, %v4677
        %v4716 = vadd.f32 %v4115, %v4680
        %v4717 = vadd.f32 %v4116, %v4685
        %v4718 = vadd.f32 %v4117, %v4688
        %v4719 = vadd.f32 %v4118, %v4693
        %v4720 = vadd.f32 %v4119, %v4696
        %v4721 = vadd.f32 %v4120, %v4701
        %v4722 = vadd.f32 %v4121, %v4704
        %s4723 = scalar_lea.vmem [#allocation7], 448
        %v4724 = vld [vmem:[%s4723] sm:$0xf]
        %v4725 = vld [vmem:[%s4723 + $0x4] sm:$0xf]
        %v4726 = vld [vmem:[%s4723 + $0x8] sm:$0xf]
        %v4727 = vld [vmem:[%s4723 + $0xc] sm:$0xf]
        %v4728 = vld [vmem:[%s4723 + $0x10] sm:$0xf]
        %v4729 = vld [vmem:[%s4723 + $0x14] sm:$0xf]
        %v4730 = vld [vmem:[%s4723 + $0x18] sm:$0xf]
        %v4731 = vld [vmem:[%s4723 + $0x1c] sm:$0xf]
        %v4732 = vld [vmem:[%s4723 + $0x20] sm:$0xf]
        %v4733 = vld [vmem:[%s4723 + $0x24] sm:$0xf]
        %v4734 = vld [vmem:[%s4723 + $0x28] sm:$0xf]
        %v4735 = vld [vmem:[%s4723 + $0x2c] sm:$0xf]
        %v4736 = vld [vmem:[%s4723 + $0x30] sm:$0xf]
        %v4737 = vld [vmem:[%s4723 + $0x34] sm:$0xf]
        %v4738 = vld [vmem:[%s4723 + $0x38] sm:$0xf]
        %v4739 = vld [vmem:[%s4723 + $0x3c] sm:$0xf]
        %v4756 = vunpack.c.l.b16 %v4724
        %v4757 = vunpack.c.l.b16 %v4725
        %v4758 = vunpack.c.l.b16 %v4726
        %v4759 = vunpack.c.l.b16 %v4727
        %v4760 = vunpack.c.l.b16 %v4728
        %v4761 = vunpack.c.l.b16 %v4729
        %v4762 = vunpack.c.l.b16 %v4730
        %v4763 = vunpack.c.l.b16 %v4731
        %v4764 = vunpack.c.l.b16 %v4732
        %v4765 = vunpack.c.l.b16 %v4733
        %v4766 = vunpack.c.l.b16 %v4734
        %v4767 = vunpack.c.l.b16 %v4735
        %v4768 = vunpack.c.l.b16 %v4736
        %v4769 = vunpack.c.l.b16 %v4737
        %v4770 = vunpack.c.l.b16 %v4738
        %v4771 = vunpack.c.l.b16 %v4739
        %v4772 = vpack.c.b16 %v4757, %v4756
        %v4773 = vpack.c.b16 %v4759, %v4758
        %v4774 = vpack.c.b16 %v4761, %v4760
        %v4775 = vpack.c.b16 %v4763, %v4762
        %v4776 = vpack.c.b16 %v4765, %v4764
        %v4777 = vpack.c.b16 %v4767, %v4766
        %v4778 = vpack.c.b16 %v4769, %v4768
        %v4779 = vpack.c.b16 %v4771, %v4770
        %4788 = vmatprep.subr.bf16.mxu0 0
        %4789 = vmatpush1.bf16.msra.mxu0 %v4772
        %4790 = vmatprep.subr.bf16.mxu0 0
        %4791 = vmatpush1.bf16.msra.mxu0 %v4773
        %4792 = vmatprep.subr.bf16.mxu0 0
        %4793 = vmatpush1.bf16.msra.mxu0 %v4774
        %4794 = vmatprep.subr.bf16.mxu0 0
        %4795 = vmatpush1.bf16.msra.mxu0 %v4775
        %4796 = vmatprep.subr.bf16.mxu0 0
        %4797 = vmatpush1.bf16.msra.mxu0 %v4776
        %4798 = vmatprep.subr.bf16.mxu0 0
        %4799 = vmatpush1.bf16.msra.mxu0 %v4777
        %4800 = vmatprep.subr.bf16.mxu0 0
        %4801 = vmatpush1.bf16.msra.mxu0 %v4778
        %4802 = vmatprep.subr.bf16.mxu0 0
        %4803 = vmatpush1.bf16.msra.mxu0 %v4779
        %4804 = vmatprep.subr.bf16.mxu0 0
        %4805 = vmatpush1.bf16.msra.mxu0 0
        %4806 = vmatprep.subr.bf16.mxu0 0
        %4807 = vmatpush1.bf16.msra.mxu0 0
        %4808 = vmatprep.subr.bf16.mxu0 0
        %4809 = vmatpush1.bf16.msra.mxu0 0
        %4810 = vmatprep.subr.bf16.mxu0 0
        %4811 = vmatpush1.bf16.msra.mxu0 0
        %4812 = vmatprep.subr.bf16.mxu0 0
        %4813 = vmatpush1.bf16.msra.mxu0 0
        %4814 = vmatprep.subr.bf16.mxu0 0
        %4815 = vmatpush1.bf16.msra.mxu0 0
        %4816 = vmatprep.subr.bf16.mxu0 0
        %4817 = vmatpush1.bf16.msra.mxu0 0
        %4818 = vmatprep.subr.bf16.mxu0 0
        %4819 = vmatpush1.bf16.msra.mxu0 0
        %4820 = vmatprep.mubr.bf16.mxu0 0
        %4821 = vmatmul.mubr.bf16.gmra.mrb[0].mxu0 %v502
        %v4822 = vpop.f32.mrb[0].mxu0
        %v4823 = vadd.f32 0.0, %v4822
        %v4824 = vpop.f32.mrb[0].mxu0
        %v4825 = vpop.f32.mrb[0].mxu0
        %v4826 = vadd.f32 0.0, %v4825
        %v4827 = vpop.f32.mrb[0].mxu0
        %4828 = vmatprep.mubr.bf16.mxu0 0
        %4829 = vmatmul.mubr.bf16.gmra.mrb[0].mxu0 %v503
        %v4830 = vpop.f32.mrb[0].mxu0
        %v4831 = vadd.f32 0.0, %v4830
        %v4832 = vpop.f32.mrb[0].mxu0
        %v4833 = vpop.f32.mrb[0].mxu0
        %v4834 = vadd.f32 0.0, %v4833
        %v4835 = vpop.f32.mrb[0].mxu0
        %4836 = vmatprep.mubr.bf16.mxu0 0
        %4837 = vmatmul.mubr.bf16.gmra.mrb[0].mxu0 %v504
        %v4838 = vpop.f32.mrb[0].mxu0
        %v4839 = vadd.f32 0.0, %v4838
        %v4840 = vpop.f32.mrb[0].mxu0
        %v4841 = vpop.f32.mrb[0].mxu0
        %v4842 = vadd.f32 0.0, %v4841
        %v4843 = vpop.f32.mrb[0].mxu0
        %4844 = vmatprep.mubr.bf16.mxu0 0
        %4845 = vmatmul.mubr.bf16.gmra.mrb[0].mxu0 %v505
        %v4846 = vpop.f32.mrb[0].mxu0
        %v4847 = vadd.f32 0.0, %v4846
        %v4848 = vpop.f32.mrb[0].mxu0
        %v4849 = vpop.f32.mrb[0].mxu0
        %v4850 = vadd.f32 0.0, %v4849
        %v4851 = vpop.f32.mrb[0].mxu0
        %4852 = vmatprep.mubr.bf16.mxu0 0
        %4853 = vmatmul.mubr.bf16.gmra.mrb[0].mxu0 %v506
        %v4854 = vpop.f32.mrb[0].mxu0
        %v4855 = vadd.f32 0.0, %v4854
        %v4856 = vpop.f32.mrb[0].mxu0
        %v4857 = vpop.f32.mrb[0].mxu0
        %v4858 = vadd.f32 0.0, %v4857
        %v4859 = vpop.f32.mrb[0].mxu0
        %4860 = vmatprep.mubr.bf16.mxu0 0
        %4861 = vmatmul.mubr.bf16.gmra.mrb[0].mxu0 %v507
        %v4862 = vpop.f32.mrb[0].mxu0
        %v4863 = vadd.f32 0.0, %v4862
        %v4864 = vpop.f32.mrb[0].mxu0
        %v4865 = vpop.f32.mrb[0].mxu0
        %v4866 = vadd.f32 0.0, %v4865
        %v4867 = vpop.f32.mrb[0].mxu0
        %4868 = vmatprep.mubr.bf16.mxu0 0
        %4869 = vmatmul.mubr.bf16.gmra.mrb[0].mxu0 %v508
        %v4870 = vpop.f32.mrb[0].mxu0
        %v4871 = vadd.f32 0.0, %v4870
        %v4872 = vpop.f32.mrb[0].mxu0
        %v4873 = vpop.f32.mrb[0].mxu0
        %v4874 = vadd.f32 0.0, %v4873
        %v4875 = vpop.f32.mrb[0].mxu0
        %4876 = vmatprep.mubr.bf16.mxu0 0
        %4877 = vmatmul.mubr.bf16.gmra.mrb[0].mxu0 %v509
        %v4878 = vpop.f32.mrb[0].mxu0
        %v4879 = vadd.f32 0.0, %v4878
        %v4880 = vpop.f32.mrb[0].mxu0
        %v4881 = vpop.f32.mrb[0].mxu0
        %v4882 = vadd.f32 0.0, %v4881
        %v4883 = vpop.f32.mrb[0].mxu0
        %4884 = vdwg.mxu0
        %v4885 = vpack.c.bf16 %v4826, %v4823
        %v4886 = vpack.c.bf16 %v4834, %v4831
        %v4887 = vpack.c.bf16 %v4842, %v4839
        %v4888 = vpack.c.bf16 %v4850, %v4847
        %v4889 = vpack.c.bf16 %v4858, %v4855
        %v4890 = vpack.c.bf16 %v4866, %v4863
        %v4891 = vpack.c.bf16 %v4874, %v4871
        %v4892 = vpack.c.bf16 %v4882, %v4879
        %v4893 = vlaneseq
        %v4894 = vshrl.u32 %v4893, 7
        %v4895 = vsub.s32 7, %v4894
        %v4896 = vrot.slane %v453, %v4895
        %4897 = vmatprep.subr.bf16.mxu0 0
        %4898 = vmatpush1.bf16.msra.mxu0 %v707
        %4899 = vmatprep.subr.bf16.mxu0 0
        %4900 = vmatpush1.bf16.msra.mxu0 %v708
        %4901 = vmatprep.subr.bf16.mxu0 0
        %4902 = vmatpush1.bf16.msra.mxu0 %v709
        %4903 = vmatprep.subr.bf16.mxu0 0
        %4904 = vmatpush1.bf16.msra.mxu0 %v710
        %4905 = vmatprep.subr.bf16.mxu0 0
        %4906 = vmatpush1.bf16.msra.mxu0 %v711
        %4907 = vmatprep.subr.bf16.mxu0 0
        %4908 = vmatpush1.bf16.msra.mxu0 %v712
        %4909 = vmatprep.subr.bf16.mxu0 0
        %4910 = vmatpush1.bf16.msra.mxu0 %v713
        %4911 = vmatprep.subr.bf16.mxu0 0
        %4912 = vmatpush1.bf16.msra.mxu0 %v714
        %4913 = vmatprep.subr.bf16.mxu0 0
        %4914 = vmatpush1.bf16.msra.mxu0 0
        %4915 = vmatprep.subr.bf16.mxu0 0
        %4916 = vmatpush1.bf16.msra.mxu0 0
        %4917 = vmatprep.subr.bf16.mxu0 0
        %4918 = vmatpush1.bf16.msra.mxu0 0
        %4919 = vmatprep.subr.bf16.mxu0 0
        %4920 = vmatpush1.bf16.msra.mxu0 0
        %4921 = vmatprep.subr.bf16.mxu0 0
        %4922 = vmatpush1.bf16.msra.mxu0 0
        %4923 = vmatprep.subr.bf16.mxu0 0
        %4924 = vmatpush1.bf16.msra.mxu0 0
        %4925 = vmatprep.subr.bf16.mxu0 0
        %4926 = vmatpush1.bf16.msra.mxu0 0
        %4927 = vmatprep.subr.bf16.mxu0 0
        %4928 = vmatpush1.bf16.msra.mxu0 0
        %4929 = vmatprep.mubr.bf16.mxu0 0
        %4930 = vmatmul.mubr.bf16.gmra.mrb[0].mxu0 %v4885
        %v4931 = vpop.f32.mrb[0].mxu0
        %v4932 = vadd.f32 %v4896, %v4931
        %v4933 = vpop.f32.mrb[0].mxu0
        %v4934 = vpop.f32.mrb[0].mxu0
        %v4935 = vadd.f32 %v4896, %v4934
        %v4936 = vpop.f32.mrb[0].mxu0
        %4937 = vmatprep.mubr.bf16.mxu0 0
        %4938 = vmatmul.mubr.bf16.gmra.mrb[0].mxu0 %v4886
        %v4939 = vpop.f32.mrb[0].mxu0
        %v4940 = vadd.f32 %v4896, %v4939
        %v4941 = vpop.f32.mrb[0].mxu0
        %v4942 = vpop.f32.mrb[0].mxu0
        %v4943 = vadd.f32 %v4896, %v4942
        %v4944 = vpop.f32.mrb[0].mxu0
        %4945 = vmatprep.mubr.bf16.mxu0 0
        %4946 = vmatmul.mubr.bf16.gmra.mrb[0].mxu0 %v4887
        %v4947 = vpop.f32.mrb[0].mxu0
        %v4948 = vadd.f32 %v4896, %v4947
        %v4949 = vpop.f32.mrb[0].mxu0
        %v4950 = vpop.f32.mrb[0].mxu0
        %v4951 = vadd.f32 %v4896, %v4950
        %v4952 = vpop.f32.mrb[0].mxu0
        %4953 = vmatprep.mubr.bf16.mxu0 0
        %4954 = vmatmul.mubr.bf16.gmra.mrb[0].mxu0 %v4888
        %v4955 = vpop.f32.mrb[0].mxu0
        %v4956 = vadd.f32 %v4896, %v4955
        %v4957 = vpop.f32.mrb[0].mxu0
        %v4958 = vpop.f32.mrb[0].mxu0
        %v4959 = vadd.f32 %v4896, %v4958
        %v4960 = vpop.f32.mrb[0].mxu0
        %4961 = vmatprep.mubr.bf16.mxu0 0
        %4962 = vmatmul.mubr.bf16.gmra.mrb[0].mxu0 %v4889
        %v4963 = vpop.f32.mrb[0].mxu0
        %v4964 = vadd.f32 %v4896, %v4963
        %v4965 = vpop.f32.mrb[0].mxu0
        %v4966 = vpop.f32.mrb[0].mxu0
        %v4967 = vadd.f32 %v4896, %v4966
        %v4968 = vpop.f32.mrb[0].mxu0
        %4969 = vmatprep.mubr.bf16.mxu0 0
        %4970 = vmatmul.mubr.bf16.gmra.mrb[0].mxu0 %v4890
        %v4971 = vpop.f32.mrb[0].mxu0
        %v4972 = vadd.f32 %v4896, %v4971
        %v4973 = vpop.f32.mrb[0].mxu0
        %v4974 = vpop.f32.mrb[0].mxu0
        %v4975 = vadd.f32 %v4896, %v4974
        %v4976 = vpop.f32.mrb[0].mxu0
        %4977 = vmatprep.mubr.bf16.mxu0 0
        %4978 = vmatmul.mubr.bf16.gmra.mrb[0].mxu0 %v4891
        %v4979 = vpop.f32.mrb[0].mxu0
        %v4980 = vadd.f32 %v4896, %v4979
        %v4981 = vpop.f32.mrb[0].mxu0
        %v4982 = vpop.f32.mrb[0].mxu0
        %v4983 = vadd.f32 %v4896, %v4982
        %v4984 = vpop.f32.mrb[0].mxu0
        %4985 = vmatprep.mubr.bf16.mxu0 0
        %4986 = vmatmul.mubr.bf16.gmra.mrb[0].mxu0 %v4892
        %v4987 = vpop.f32.mrb[0].mxu0
        %v4988 = vadd.f32 %v4896, %v4987
        %v4989 = vpop.f32.mrb[0].mxu0
        %v4990 = vpop.f32.mrb[0].mxu0
        %v4991 = vadd.f32 %v4896, %v4990
        %v4992 = vpop.f32.mrb[0].mxu0
        %4993 = vdwg.mxu0
        %4994 = vmax.xlane.f32.xlu0 %v4932
        %v4995 = vpop.xlane.xlu0 %4994
        %4996 = vmax.xlane.f32.xlu0 %v4935
        %v4997 = vpop.xlane.xlu0 %4996
        %4998 = vmax.xlane.f32.xlu0 %v4940
        %v4999 = vpop.xlane.xlu0 %4998
        %5000 = vmax.xlane.f32.xlu0 %v4943
        %v5001 = vpop.xlane.xlu0 %5000
        %5002 = vmax.xlane.f32.xlu0 %v4948
        %v5003 = vpop.xlane.xlu0 %5002
        %5004 = vmax.xlane.f32.xlu0 %v4951
        %v5005 = vpop.xlane.xlu0 %5004
        %5006 = vmax.xlane.f32.xlu0 %v4956
        %v5007 = vpop.xlane.xlu0 %5006
        %5008 = vmax.xlane.f32.xlu0 %v4959
        %v5009 = vpop.xlane.xlu0 %5008
        %5010 = vmax.xlane.f32.xlu0 %v4964
        %v5011 = vpop.xlane.xlu0 %5010
        %5012 = vmax.xlane.f32.xlu0 %v4967
        %v5013 = vpop.xlane.xlu0 %5012
        %5014 = vmax.xlane.f32.xlu0 %v4972
        %v5015 = vpop.xlane.xlu0 %5014
        %5016 = vmax.xlane.f32.xlu0 %v4975
        %v5017 = vpop.xlane.xlu0 %5016
        %5018 = vmax.xlane.f32.xlu0 %v4980
        %v5019 = vpop.xlane.xlu0 %5018
        %5020 = vmax.xlane.f32.xlu0 %v4983
        %v5021 = vpop.xlane.xlu0 %5020
        %5022 = vmax.xlane.f32.xlu0 %v4988
        %v5023 = vpop.xlane.xlu0 %5022
        %5024 = vmax.xlane.f32.xlu0 %v4991
        %v5025 = vpop.xlane.xlu0 %5024
        %v5026 = vsub.f32 %v4932, %v4995
        %v5027 = vsub.f32 %v4935, %v4997
        %v5028 = vsub.f32 %v4940, %v4999
        %v5029 = vsub.f32 %v4943, %v5001
        %v5030 = vsub.f32 %v4948, %v5003
        %v5031 = vsub.f32 %v4951, %v5005
        %v5032 = vsub.f32 %v4956, %v5007
        %v5033 = vsub.f32 %v4959, %v5009
        %v5034 = vsub.f32 %v4964, %v5011
        %v5035 = vsub.f32 %v4967, %v5013
        %v5036 = vsub.f32 %v4972, %v5015
        %v5037 = vsub.f32 %v4975, %v5017
        %v5038 = vsub.f32 %v4980, %v5019
        %v5039 = vsub.f32 %v4983, %v5021
        %v5040 = vsub.f32 %v4988, %v5023
        %v5041 = vsub.f32 %v4991, %v5025
        %v5042 = vmul.f32 %v5026, 1.442695
        %v5043 = vpow.pop %v5042
        %v5044 = vmul.f32 %v5027, 1.442695
        %v5045 = vpow.pop %v5044
        %v5046 = vmul.f32 %v5028, 1.442695
        %v5047 = vpow.pop %v5046
        %v5048 = vmul.f32 %v5029, 1.442695
        %v5049 = vpow.pop %v5048
        %v5050 = vmul.f32 %v5030, 1.442695
        %v5051 = vpow.pop %v5050
        %v5052 = vmul.f32 %v5031, 1.442695
        %v5053 = vpow.pop %v5052
        %v5054 = vmul.f32 %v5032, 1.442695
        %v5055 = vpow.pop %v5054
        %v5056 = vmul.f32 %v5033, 1.442695
        %v5057 = vpow.pop %v5056
        %v5058 = vmul.f32 %v5034, 1.442695
        %v5059 = vpow.pop %v5058
        %v5060 = vmul.f32 %v5035, 1.442695
        %v5061 = vpow.pop %v5060
        %v5062 = vmul.f32 %v5036, 1.442695
        %v5063 = vpow.pop %v5062
        %v5064 = vmul.f32 %v5037, 1.442695
        %v5065 = vpow.pop %v5064
        %v5066 = vmul.f32 %v5038, 1.442695
        %v5067 = vpow.pop %v5066
        %v5068 = vmul.f32 %v5039, 1.442695
        %v5069 = vpow.pop %v5068
        %v5070 = vmul.f32 %v5040, 1.442695
        %v5071 = vpow.pop %v5070
        %v5072 = vmul.f32 %v5041, 1.442695
        %v5073 = vpow.pop %v5072
        %5074 = vadd.xlane.f32.xlu0 %v5043
        %v5075 = vpop.xlane.xlu0 %5074
        %5076 = vadd.xlane.f32.xlu0 %v5045
        %v5077 = vpop.xlane.xlu0 %5076
        %5078 = vadd.xlane.f32.xlu0 %v5047
        %v5079 = vpop.xlane.xlu0 %5078
        %5080 = vadd.xlane.f32.xlu0 %v5049
        %v5081 = vpop.xlane.xlu0 %5080
        %5082 = vadd.xlane.f32.xlu0 %v5051
        %v5083 = vpop.xlane.xlu0 %5082
        %5084 = vadd.xlane.f32.xlu0 %v5053
        %v5085 = vpop.xlane.xlu0 %5084
        %5086 = vadd.xlane.f32.xlu0 %v5055
        %v5087 = vpop.xlane.xlu0 %5086
        %5088 = vadd.xlane.f32.xlu0 %v5057
        %v5089 = vpop.xlane.xlu0 %5088
        %5090 = vadd.xlane.f32.xlu0 %v5059
        %v5091 = vpop.xlane.xlu0 %5090
        %5092 = vadd.xlane.f32.xlu0 %v5061
        %v5093 = vpop.xlane.xlu0 %5092
        %5094 = vadd.xlane.f32.xlu0 %v5063
        %v5095 = vpop.xlane.xlu0 %5094
        %5096 = vadd.xlane.f32.xlu0 %v5065
        %v5097 = vpop.xlane.xlu0 %5096
        %5098 = vadd.xlane.f32.xlu0 %v5067
        %v5099 = vpop.xlane.xlu0 %5098
        %5100 = vadd.xlane.f32.xlu0 %v5069
        %v5101 = vpop.xlane.xlu0 %5100
        %5102 = vadd.xlane.f32.xlu0 %v5071
        %v5103 = vpop.xlane.xlu0 %5102
        %5104 = vadd.xlane.f32.xlu0 %v5073
        %v5105 = vpop.xlane.xlu0 %5104
        %v5106 = vrcp.pop %v5075
        %v5107 = vrcp.pop %v5077
        %v5108 = vrcp.pop %v5079
        %v5109 = vrcp.pop %v5081
        %v5110 = vrcp.pop %v5083
        %v5111 = vrcp.pop %v5085
        %v5112 = vrcp.pop %v5087
        %v5113 = vrcp.pop %v5089
        %v5114 = vrcp.pop %v5091
        %v5115 = vrcp.pop %v5093
        %v5116 = vrcp.pop %v5095
        %v5117 = vrcp.pop %v5097
        %v5118 = vrcp.pop %v5099
        %v5119 = vrcp.pop %v5101
        %v5120 = vrcp.pop %v5103
        %v5121 = vrcp.pop %v5105
        %v5122 = vmul.f32 %v5043, %v5106
        %v5123 = vmul.f32 %v5045, %v5107
        %v5124 = vmul.f32 %v5047, %v5108
        %v5125 = vmul.f32 %v5049, %v5109
        %v5126 = vmul.f32 %v5051, %v5110
        %v5127 = vmul.f32 %v5053, %v5111
        %v5128 = vmul.f32 %v5055, %v5112
        %v5129 = vmul.f32 %v5057, %v5113
        %v5130 = vmul.f32 %v5059, %v5114
        %v5131 = vmul.f32 %v5061, %v5115
        %v5132 = vmul.f32 %v5063, %v5116
        %v5133 = vmul.f32 %v5065, %v5117
        %v5134 = vmul.f32 %v5067, %v5118
        %v5135 = vmul.f32 %v5069, %v5119
        %v5136 = vmul.f32 %v5071, %v5120
        %v5137 = vmul.f32 %v5073, %v5121
        %v5138 = vpack.c.bf16 %v5123, %v5122
        %v5139 = vpack.c.bf16 %v5125, %v5124
        %v5140 = vpack.c.bf16 %v5127, %v5126
        %v5141 = vpack.c.bf16 %v5129, %v5128
        %v5142 = vpack.c.bf16 %v5131, %v5130
        %v5143 = vpack.c.bf16 %v5133, %v5132
        %v5144 = vpack.c.bf16 %v5135, %v5134
        %v5145 = vpack.c.bf16 %v5137, %v5136
        %s5146 = scalar_lea.vmem %s364, 448 [#allocation8]
        %v5147 = vld [vmem:[%s5146] sm:$0xf]
        %v5148 = vld [vmem:[%s5146 + $0x4] sm:$0xf]
        %v5149 = vld [vmem:[%s5146 + $0x8] sm:$0xf]
        %v5150 = vld [vmem:[%s5146 + $0xc] sm:$0xf]
        %v5151 = vld [vmem:[%s5146 + $0x10] sm:$0xf]
        %v5152 = vld [vmem:[%s5146 + $0x14] sm:$0xf]
        %v5153 = vld [vmem:[%s5146 + $0x18] sm:$0xf]
        %v5154 = vld [vmem:[%s5146 + $0x1c] sm:$0xf]
        %v5155 = vld [vmem:[%s5146 + $0x20] sm:$0xf]
        %v5156 = vld [vmem:[%s5146 + $0x24] sm:$0xf]
        %v5157 = vld [vmem:[%s5146 + $0x28] sm:$0xf]
        %v5158 = vld [vmem:[%s5146 + $0x2c] sm:$0xf]
        %v5159 = vld [vmem:[%s5146 + $0x30] sm:$0xf]
        %v5160 = vld [vmem:[%s5146 + $0x34] sm:$0xf]
        %v5161 = vld [vmem:[%s5146 + $0x38] sm:$0xf]
        %v5162 = vld [vmem:[%s5146 + $0x3c] sm:$0xf]
        %v5179 = vunpack.c.l.b16 %v5147
        %v5180 = vunpack.c.l.b16 %v5148
        %v5181 = vunpack.c.l.b16 %v5149
        %v5182 = vunpack.c.l.b16 %v5150
        %v5183 = vunpack.c.l.b16 %v5151
        %v5184 = vunpack.c.l.b16 %v5152
        %v5185 = vunpack.c.l.b16 %v5153
        %v5186 = vunpack.c.l.b16 %v5154
        %v5187 = vunpack.c.l.b16 %v5155
        %v5188 = vunpack.c.l.b16 %v5156
        %v5189 = vunpack.c.l.b16 %v5157
        %v5190 = vunpack.c.l.b16 %v5158
        %v5191 = vunpack.c.l.b16 %v5159
        %v5192 = vunpack.c.l.b16 %v5160
        %v5193 = vunpack.c.l.b16 %v5161
        %v5194 = vunpack.c.l.b16 %v5162
        %v5195 = vpack.c.b16 %v5180, %v5179
        %v5196 = vpack.c.b16 %v5182, %v5181
        %v5197 = vpack.c.b16 %v5184, %v5183
        %v5198 = vpack.c.b16 %v5186, %v5185
        %v5199 = vpack.c.b16 %v5188, %v5187
        %v5200 = vpack.c.b16 %v5190, %v5189
        %v5201 = vpack.c.b16 %v5192, %v5191
        %v5202 = vpack.c.b16 %v5194, %v5193
        %5211 = vmatprep.subr.bf16.mxu0 0
        %5212 = vmatpush1.bf16.msra.mxu0 %v5195
        %5213 = vmatprep.subr.bf16.mxu0 0
        %5214 = vmatpush1.bf16.msra.mxu0 %v5196
        %5215 = vmatprep.subr.bf16.mxu0 0
        %5216 = vmatpush1.bf16.msra.mxu0 %v5197
        %5217 = vmatprep.subr.bf16.mxu0 0
        %5218 = vmatpush1.bf16.msra.mxu0 %v5198
        %5219 = vmatprep.subr.bf16.mxu0 0
        %5220 = vmatpush1.bf16.msra.mxu0 %v5199
        %5221 = vmatprep.subr.bf16.mxu0 0
        %5222 = vmatpush1.bf16.msra.mxu0 %v5200
        %5223 = vmatprep.subr.bf16.mxu0 0
        %5224 = vmatpush1.bf16.msra.mxu0 %v5201
        %5225 = vmatprep.subr.bf16.mxu0 0
        %5226 = vmatpush1.bf16.msra.mxu0 %v5202
        %5227 = vmatprep.subr.bf16.mxu0 0
        %5228 = vmatpush1.bf16.msra.mxu0 0
        %5229 = vmatprep.subr.bf16.mxu0 0
        %5230 = vmatpush1.bf16.msra.mxu0 0
        %5231 = vmatprep.subr.bf16.mxu0 0
        %5232 = vmatpush1.bf16.msra.mxu0 0
        %5233 = vmatprep.subr.bf16.mxu0 0
        %5234 = vmatpush1.bf16.msra.mxu0 0
        %5235 = vmatprep.subr.bf16.mxu0 0
        %5236 = vmatpush1.bf16.msra.mxu0 0
        %5237 = vmatprep.subr.bf16.mxu0 0
        %5238 = vmatpush1.bf16.msra.mxu0 0
        %5239 = vmatprep.subr.bf16.mxu0 0
        %5240 = vmatpush1.bf16.msra.mxu0 0
        %5241 = vmatprep.subr.bf16.mxu0 0
        %5242 = vmatpush1.bf16.msra.mxu0 0
        %5243 = vmatprep.mubr.bf16.mxu0 0
        %5244 = vmatmul.mubr.bf16.gmra.mrb[0].mxu0 %v5138
        %v5245 = vpop.f32.mrb[0].mxu0
        %v5246 = vadd.f32 0.0, %v5245
        %v5247 = vpop.f32.mrb[0].mxu0
        %v5248 = vpop.f32.mrb[0].mxu0
        %v5249 = vadd.f32 0.0, %v5248
        %v5250 = vpop.f32.mrb[0].mxu0
        %5251 = vmatprep.mubr.bf16.mxu0 0
        %5252 = vmatmul.mubr.bf16.gmra.mrb[0].mxu0 %v5139
        %v5253 = vpop.f32.mrb[0].mxu0
        %v5254 = vadd.f32 0.0, %v5253
        %v5255 = vpop.f32.mrb[0].mxu0
        %v5256 = vpop.f32.mrb[0].mxu0
        %v5257 = vadd.f32 0.0, %v5256
        %v5258 = vpop.f32.mrb[0].mxu0
        %5259 = vmatprep.mubr.bf16.mxu0 0
        %5260 = vmatmul.mubr.bf16.gmra.mrb[0].mxu0 %v5140
        %v5261 = vpop.f32.mrb[0].mxu0
        %v5262 = vadd.f32 0.0, %v5261
        %v5263 = vpop.f32.mrb[0].mxu0
        %v5264 = vpop.f32.mrb[0].mxu0
        %v5265 = vadd.f32 0.0, %v5264
        %v5266 = vpop.f32.mrb[0].mxu0
        %5267 = vmatprep.mubr.bf16.mxu0 0
        %5268 = vmatmul.mubr.bf16.gmra.mrb[0].mxu0 %v5141
        %v5269 = vpop.f32.mrb[0].mxu0
        %v5270 = vadd.f32 0.0, %v5269
        %v5271 = vpop.f32.mrb[0].mxu0
        %v5272 = vpop.f32.mrb[0].mxu0
        %v5273 = vadd.f32 0.0, %v5272
        %v5274 = vpop.f32.mrb[0].mxu0
        %5275 = vmatprep.mubr.bf16.mxu0 0
        %5276 = vmatmul.mubr.bf16.gmra.mrb[0].mxu0 %v5142
        %v5277 = vpop.f32.mrb[0].mxu0
        %v5278 = vadd.f32 0.0, %v5277
        %v5279 = vpop.f32.mrb[0].mxu0
        %v5280 = vpop.f32.mrb[0].mxu0
        %v5281 = vadd.f32 0.0, %v5280
        %v5282 = vpop.f32.mrb[0].mxu0
        %5283 = vmatprep.mubr.bf16.mxu0 0
        %5284 = vmatmul.mubr.bf16.gmra.mrb[0].mxu0 %v5143
        %v5285 = vpop.f32.mrb[0].mxu0
        %v5286 = vadd.f32 0.0, %v5285
        %v5287 = vpop.f32.mrb[0].mxu0
        %v5288 = vpop.f32.mrb[0].mxu0
        %v5289 = vadd.f32 0.0, %v5288
        %v5290 = vpop.f32.mrb[0].mxu0
        %5291 = vmatprep.mubr.bf16.mxu0 0
        %5292 = vmatmul.mubr.bf16.gmra.mrb[0].mxu0 %v5144
        %v5293 = vpop.f32.mrb[0].mxu0
        %v5294 = vadd.f32 0.0, %v5293
        %v5295 = vpop.f32.mrb[0].mxu0
        %v5296 = vpop.f32.mrb[0].mxu0
        %v5297 = vadd.f32 0.0, %v5296
        %v5298 = vpop.f32.mrb[0].mxu0
        %5299 = vmatprep.mubr.bf16.mxu0 0
        %5300 = vmatmul.mubr.bf16.gmra.mrb[0].mxu0 %v5145
        %v5301 = vpop.f32.mrb[0].mxu0
        %v5302 = vadd.f32 0.0, %v5301
        %v5303 = vpop.f32.mrb[0].mxu0
        %v5304 = vpop.f32.mrb[0].mxu0
        %v5305 = vadd.f32 0.0, %v5304
        %v5306 = vpop.f32.mrb[0].mxu0
        %5307 = vdwg.mxu0
        %v5308 = vadd.f32 %v4707, %v5246
        %v5309 = vadd.f32 %v4708, %v5249
        %v5310 = vadd.f32 %v4709, %v5254
        %v5311 = vadd.f32 %v4710, %v5257
        %v5312 = vadd.f32 %v4711, %v5262
        %v5313 = vadd.f32 %v4712, %v5265
        %v5314 = vadd.f32 %v4713, %v5270
        %v5315 = vadd.f32 %v4714, %v5273
        %v5316 = vadd.f32 %v4715, %v5278
        %v5317 = vadd.f32 %v4716, %v5281
        %v5318 = vadd.f32 %v4717, %v5286
        %v5319 = vadd.f32 %v4718, %v5289
        %v5320 = vadd.f32 %v4719, %v5294
        %v5321 = vadd.f32 %v4720, %v5297
        %v5322 = vadd.f32 %v4721, %v5302
        %v5323 = vadd.f32 %v4722, %v5305
        %v5324 = vld [vmem:[%s5] sm:$0x1]
        %v5326 = vlaneseq
        %v5327 = vshrl.u32 %v5326, 7
        %v5328 = vsub.s32 0, %v5327
        %v5329 = vrot.slane %v5324, %v5328
        %v5331 = vadd.f32 %v5308, %v5329
        %v5332 = vadd.f32 %v5309, %v5329
        %v5333 = vadd.f32 %v5310, %v5329
        %v5334 = vadd.f32 %v5311, %v5329
        %v5335 = vadd.f32 %v5312, %v5329
        %v5336 = vadd.f32 %v5313, %v5329
        %v5337 = vadd.f32 %v5314, %v5329
        %v5338 = vadd.f32 %v5315, %v5329
        %v5339 = vadd.f32 %v5316, %v5329
        %v5340 = vadd.f32 %v5317, %v5329
        %v5341 = vadd.f32 %v5318, %v5329
        %v5342 = vadd.f32 %v5319, %v5329
        %v5343 = vadd.f32 %v5320, %v5329
        %v5344 = vadd.f32 %v5321, %v5329
        %v5345 = vadd.f32 %v5322, %v5329
        %v5346 = vadd.f32 %v5323, %v5329
        %5347 = vst [vmem:[%s416] sm:$0xff] %v5331
        %5348 = vst [vmem:[%s416 + $0x8] sm:$0xff] %v5332
        %5349 = vst [vmem:[%s416 + $0x10] sm:$0xff] %v5333
        %5350 = vst [vmem:[%s416 + $0x18] sm:$0xff] %v5334
        %5351 = vst [vmem:[%s416 + $0x20] sm:$0xff] %v5335
        %5352 = vst [vmem:[%s416 + $0x28] sm:$0xff] %v5336
        %5353 = vst [vmem:[%s416 + $0x30] sm:$0xff] %v5337
        %5354 = vst [vmem:[%s416 + $0x38] sm:$0xff] %v5338
        %5355 = vst [vmem:[%s416 + $0x40] sm:$0xff] %v5339
        %5356 = vst [vmem:[%s416 + $0x48] sm:$0xff] %v5340
        %5357 = vst [vmem:[%s416 + $0x50] sm:$0xff] %v5341
        %5358 = vst [vmem:[%s416 + $0x58] sm:$0xff] %v5342
        %5359 = vst [vmem:[%s416 + $0x60] sm:$0xff] %v5343
        %5360 = vst [vmem:[%s416 + $0x68] sm:$0xff] %v5344
        %5361 = vst [vmem:[%s416 + $0x70] sm:$0xff] %v5345
        %5362 = vst [vmem:[%s416 + $0x78] sm:$0xff] %v5346
        %s5363 = sand.u32 %s199, 1
        %s5364 = scalar_lea.sflag [#allocation4], %s5363
        %s5365 = sand.u32 %s199, 1
        %s5366 = smul.addr %s5365, 128
        %s5367 = scalar_lea.vmem [#allocation11], %s5366
        // Predicated region
        $region65: #{tpu_custom_call.1} parent=43 // pred_check
          %p5368 = pneg %p209
        $region66: #{tpu_custom_call.1} parent=43 // pred_check_branch
          %5370 = sbr.rel (%p5368) target = $region68
        $region67: #{tpu_custom_call.1} parent=43 // pred_region
          %s5371 = smul.u32 16, %s34
          %s5373 = ssub.s32 2048, 2048
          %5374 = vsyncadd %s5364, %s5373
          %s5375 = smul.addr %s33, 16
          %s5376 = sadd.s32 %s5371, %s5375
          %s5377 = smul.addr %s5376, 128
          %s5378 = scalar_lea.hbm %s6, %s5377
          %s5379 = sshll.u32 %s5367, 4
          %s5380 = int_to_ptr.vmem [resolvable:$true] %s5379
          %5385 = dma.vmem_to_hbm [thread:$0]  %s5380, 2048, %s5378, %s5364, 128, 128, 8
        $region68: #{tpu_custom_call.1} parent=43 // pred_fallthru
          _
      $region44: #{tpu_custom_call.1} parent=5 // pred_fallthru
        _
      %p5386 = scmp.le.s32.totalorder 2, %s24
      // Predicated region
      $region69: #{tpu_custom_call.1} parent=5 // pred_check
        %p5387 = pneg %p5386
      $region70: #{tpu_custom_call.1} parent=5 // pred_check_branch
        %5389 = sbr.rel (%p5387) target = $region72
      $region71: #{tpu_custom_call.1} parent=5 // pred_region
        %s5390 = ssub.s32 %s24, 2
        // Predicated region
        $region73: #{tpu_custom_call.1} parent=71 // pred_check
          %p5391 = pneg %p215
        $region74: #{tpu_custom_call.1} parent=71 // pred_check_branch
          %5393 = sbr.rel (%p5391) target = $region76
        $region75: #{tpu_custom_call.1} parent=71 // pred_region
          %s5394 = sand.u32 %s200, 1
          %s5395 = scalar_lea.sflag [#allocation4], %s5394
          %s5396 = sand.u32 %s200, 1
          %s5397 = smul.addr %s5396, 128
          %s5398 = scalar_lea.vmem [#allocation11], %s5397
          %5399 = dma.done %s5395, 2048
        $region76: #{tpu_custom_call.1} parent=71 // pred_fallthru
          _
      $region72: #{tpu_custom_call.1} parent=5 // pred_fallthru
        _
    $region6: #{tpu_custom_call.1} parent=1 // loop_footer
      %s28 = sadd.s32 1, %s24
    $region7: #{tpu_custom_call.1} parent=1 // loop_footer_branch
      %23 = sbr.rel target = $region3
    $region8: #{tpu_custom_call.1} parent=1 // loop_exit
      _
    %5400 = vsyncpa [#allocation3], 1
    %s5401 = scalar_lea.sflag [#allocation3], 1
    %5402 = vsyncpa %s5401, 1
    %5403 = vsyncpa [#allocation6], 1
    %s5404 = scalar_lea.sflag [#allocation6], 1
    %5405 = vsyncpa %s5404, 1
    %5406 = vsyncpa [#allocation9], 1
    %s5407 = scalar_lea.sflag [#allocation9], 1
    %5408 = vsyncpa %s5407, 1
    %5409 = vsyncpa [#allocation4], 1
    %s5410 = scalar_lea.sflag [#allocation4], 1
    %5411 = vsyncpa %s5410, 1

</llo_original>
